<compile_context>
chip_gen: v7x
topology: tpu7x:2x2x1
jax: 0.10.0
libtpu: 0.0.40
codegen_flags: <defaults>
</compile_context>

<pallas_src>
import math

import jax
import jax.numpy as jnp
from jax.experimental import pallas as pl
from jax.experimental.pallas import tpu as pltpu


# ---- fixed layout constants (input images are 3x32x32, as the module implies)
_P1_ROWS = 800      # 4 pooling phases x 200 rows (196 valid 14x14 + 4 pad)
_P1_COLS = 75       # conv1 patch size: 3 * 5 * 5, column order (ci, kh, kw)
_POOL1_ROWS = 200   # pooled1: rows 0..195 valid = 14x14 raster (i*14 + j)
_CONV2_ROWS = 136   # conv2 base raster rows b = oh2*14 + ow2 (oh2 <= 9)
_POOL2_ROWS = 121   # shifted-max rows; valid anchors at b = 28*i2 + 2*j2


# ------------------------------ fused kernel -------------------------------

def _net_kernel(p1_ref, w1_ref, b1_ref, w2s_ref, b2_ref,
                wf1s_ref, bf1_ref, wf2_ref, bf2_ref, wf3_ref, bf3_ref,
                out_ref):
    f32 = jnp.float32

    # conv1: one GEMM; rows = phase-blocked 28x28 output positions.
    y1 = jnp.dot(p1_ref[...], w1_ref[...], preferred_element_type=f32)
    y1 = jnp.maximum(y1 + b1_ref[...], 0.0)                       # (800, 6)

    # pool1: max over the 4 contiguous phase blocks -> 14x14 raster.
    pooled1 = jnp.maximum(jnp.maximum(y1[0:200], y1[200:400]),
                          jnp.maximum(y1[400:600], y1[600:800]))  # (200, 6)

    # conv2: 25 shifted slabs of pooled1, accumulated small matmuls.
    acc2 = jnp.zeros((_CONV2_ROWS, 16), f32)
    for k in range(25):
        off = (k // 5) * 14 + (k % 5)
        acc2 = acc2 + jnp.dot(pooled1[off:off + _CONV2_ROWS],
                              w2s_ref[k], preferred_element_type=f32)
    y2 = jnp.maximum(acc2 + b2_ref[...], 0.0)                     # (136, 16)

    # pool2: shifted max; valid pooled values sit at rows 28*i2 + 2*j2.
    m = jnp.maximum(jnp.maximum(y2[0:121], y2[1:122]),
                    jnp.maximum(y2[14:135], y2[15:136]))          # (121, 16)

    # fc1: gather the 25 pool2 anchors and contract (per-anchor GEMMs).
    acc1 = jnp.zeros((1, 120), f32)
    for t in range(25):
        a = 28 * (t // 5) + 2 * (t % 5)
        acc1 = acc1 + jnp.dot(m[a:a + 1], wf1s_ref[t],
                              preferred_element_type=f32)
    h1 = jnp.maximum(acc1 + bf1_ref[...], 0.0)                    # (1, 120)

    # fc2 / fc3.
    h2 = jnp.maximum(jnp.dot(h1, wf2_ref[...], preferred_element_type=f32)
                     + bf2_ref[...], 0.0)                         # (1, 84)
    out_ref[...] = (jnp.dot(h2, wf3_ref[...], preferred_element_type=f32)
                    + bf3_ref[...])                               # (1, 3)


# ------------------------------- JAX wrapper --------------------------------

def _build_p1(x):
    # Phase-blocked im2col of the conv1 input.
    # Rows: 4 blocks of 200 -> block (u, v) holds conv1 outputs (2i+u, 2j+v)
    # in 14x14 raster order (i*14 + j), plus 4 zero pad rows per block.
    # Cols: (ci, kh, kw).
    n = x.shape[0]
    pat = jnp.stack([x[:, :, kh:kh + 28, kw:kw + 28]
                     for kh in range(5) for kw in range(5)], axis=-1)
    pat = pat.reshape(n, 3, 14, 2, 14, 2, 25)        # (N, ci, i, u, j, v, k)
    pat = pat.transpose(0, 3, 5, 2, 4, 1, 6)         # (N, u, v, i, j, ci, k)
    pat = pat.reshape(n, 4, 196, 75)
    pat = jnp.pad(pat, ((0, 0), (0, 0), (0, 4), (0, 0)))
    return pat.reshape(n, _P1_ROWS, _P1_COLS)


@jax.jit
def net_forward(params, x):
    n = x.shape[0]
    p1 = _build_p1(x)

    # Weight re-layouts (tiny, done once per call in the wrapper).
    w1m = params["conv1_w"].reshape(6, 75).T                         # (75, 6)
    b1 = params["conv1_b"].reshape(1, 6)
    w2s = params["conv2_w"].transpose(2, 3, 1, 0).reshape(25, 6, 16)  # [k,ci,co]
    b2 = params["conv2_b"].reshape(1, 16)
    wf1s = params["fc1_w"].reshape(120, 16, 25).transpose(2, 1, 0)    # [m,co,f]
    bf1 = params["fc1_b"].reshape(1, 120)
    wf2 = params["fc2_w"].T                                          # (120, 84)
    bf2 = params["fc2_b"].reshape(1, 84)
    wf3 = params["fc3_w"].T                                          # (84, 3)
    bf3 = params["fc3_b"].reshape(1, 3)

    out = pl.pallas_call(
        _net_kernel,
        out_shape=jax.ShapeDtypeStruct((n, 1, 3), jnp.float32),
        grid=(n,),
        in_specs=[
            pl.BlockSpec((None, _P1_ROWS, _P1_COLS), lambda i: (i, 0, 0)),
            pl.BlockSpec((75, 6), lambda i: (0, 0)),
            pl.BlockSpec((1, 6), lambda i: (0, 0)),
            pl.BlockSpec((25, 6, 16), lambda i: (0, 0, 0)),
            pl.BlockSpec((1, 16), lambda i: (0, 0)),
            pl.BlockSpec((25, 16, 120), lambda i: (0, 0, 0)),
            pl.BlockSpec((1, 120), lambda i: (0, 0)),
            pl.BlockSpec((120, 84), lambda i: (0, 0)),
            pl.BlockSpec((1, 84), lambda i: (0, 0)),
            pl.BlockSpec((84, 3), lambda i: (0, 0)),
            pl.BlockSpec((1, 3), lambda i: (0, 0)),
        ],
        out_specs=pl.BlockSpec((None, 1, 3), lambda i: (i, 0, 0)),
        compiler_params=pltpu.CompilerParams(
            dimension_semantics=("parallel",)),
    )(p1, w1m, b1, w2s, b2, wf1s, bf1, wf2, bf2, wf3, bf3)
    return out.reshape(n, 3)


# -------------------------- params / reference -----------------------------

def init_params(key):
    def uniform(k, shape, fan_in):
        bound = 1.0 / math.sqrt(fan_in)
        return jax.random.uniform(k, shape, jnp.float32, -bound, bound)

    ks = jax.random.split(key, 10)
    return {
        "conv1_w": uniform(ks[0], (6, 3, 5, 5), 3 * 25),
        "conv1_b": uniform(ks[1], (6,), 3 * 25),
        "conv2_w": uniform(ks[2], (16, 6, 5, 5), 6 * 25),
        "conv2_b": uniform(ks[3], (16,), 6 * 25),
        "fc1_w": uniform(ks[4], (120, 16 * 5 * 5), 16 * 5 * 5),
        "fc1_b": uniform(ks[5], (120,), 16 * 5 * 5),
        "fc2_w": uniform(ks[6], (84, 120), 120),
        "fc2_b": uniform(ks[7], (84,), 120),
        "fc3_w": uniform(ks[8], (3, 84), 84),
        "fc3_b": uniform(ks[9], (3,), 84),
    }


@jax.jit
def net_forward_ref(params, x):
    # Pure-JAX reference for sanity checking the Pallas kernel.
    def conv(x, w, b):
        y = jax.lax.conv_general_dilated(
            x, w, (1, 1), "VALID", dimension_numbers=("NCHW", "OIHW", "NCHW"))
        return jax.nn.relu(y + b[None, :, None, None])

    def pool(x):
        return jax.lax.reduce_window(
            x, -jnp.inf, jax.lax.max, (1, 1, 2, 2), (1, 1, 2, 2), "VALID")

    x = pool(conv(x, params["conv1_w"], params["conv1_b"]))
    x = pool(conv(x, params["conv2_w"], params["conv2_b"]))
    x = x.reshape(x.shape[0], -1)
    x = jax.nn.relu(x @ params["fc1_w"].T + params["fc1_b"])
    x = jax.nn.relu(x @ params["fc2_w"].T + params["fc2_b"])
    return x @ params["fc3_w"].T + params["fc3_b"]


if __name__ == "__main__":
    key = jax.random.PRNGKey(0)
    pkey, xkey = jax.random.split(key)
    params = init_params(pkey)
    # Module implies (N, 3, 32, 32): 32 -conv5-> 28 -pool-> 14 -conv5-> 10 -pool-> 5
    x = jax.random.normal(xkey, (2, 3, 32, 32), jnp.float32)

    out = jax.block_until_ready(net_forward(params, x))
    assert out.shape == (2, 3), out.shape
    assert bool(jnp.all(jnp.isfinite(out)))

    ref = jax.block_until_ready(net_forward_ref(params, x))
    assert jnp.allclose(out, ref, rtol=2e-2, atol=2e-2), (out, ref)

    print("KERNEL_OK")
</pallas_src>

<mosaic_0001>
module attributes {stable_mosaic.version = 11 : i64} {
  func.func @_net_kernel(%arg0: i32, %arg1: memref<1x800x75xf32, #tpu.memory_space<vmem>>, %arg2: memref<75x6xf32, #tpu.memory_space<vmem>>, %arg3: memref<1x6xf32, #tpu.memory_space<vmem>>, %arg4: memref<25x6x16xf32, #tpu.memory_space<vmem>>, %arg5: memref<1x16xf32, #tpu.memory_space<vmem>>, %arg6: memref<25x16x120xf32, #tpu.memory_space<vmem>>, %arg7: memref<1x120xf32, #tpu.memory_space<vmem>>, %arg8: memref<120x84xf32, #tpu.memory_space<vmem>>, %arg9: memref<1x84xf32, #tpu.memory_space<vmem>>, %arg10: memref<84x3xf32, #tpu.memory_space<vmem>>, %arg11: memref<1x3xf32, #tpu.memory_space<vmem>>, %arg12: memref<1x1x3xf32, #tpu.memory_space<vmem>>) attributes {dimension_semantics = [#tpu.dimension_semantics<parallel>], iteration_bounds = array<i64: 2>, scalar_prefetch = 0 : i64, scratch_operands = 0 : i64, tpu.core_type = #tpu.core_type<tc>, window_params = [{transform_indices = @transform_0, window_bounds = array<i64: 1, 800, 75>}, {pipeline_mode = #tpu.pipeline_mode<synchronous>, transform_indices = @transform_1, window_bounds = array<i64: 75, 6>}, {pipeline_mode = #tpu.pipeline_mode<synchronous>, transform_indices = @transform_2, window_bounds = array<i64: 1, 6>}, {pipeline_mode = #tpu.pipeline_mode<synchronous>, transform_indices = @transform_3, window_bounds = array<i64: 25, 6, 16>}, {pipeline_mode = #tpu.pipeline_mode<synchronous>, transform_indices = @transform_4, window_bounds = array<i64: 1, 16>}, {pipeline_mode = #tpu.pipeline_mode<synchronous>, transform_indices = @transform_5, window_bounds = array<i64: 25, 16, 120>}, {pipeline_mode = #tpu.pipeline_mode<synchronous>, transform_indices = @transform_6, window_bounds = array<i64: 1, 120>}, {pipeline_mode = #tpu.pipeline_mode<synchronous>, transform_indices = @transform_7, window_bounds = array<i64: 120, 84>}, {pipeline_mode = #tpu.pipeline_mode<synchronous>, transform_indices = @transform_8, window_bounds = array<i64: 1, 84>}, {pipeline_mode = #tpu.pipeline_mode<synchronous>, transform_indices = @transform_9, window_bounds = array<i64: 84, 3>}, {pipeline_mode = #tpu.pipeline_mode<synchronous>, transform_indices = @transform_10, window_bounds = array<i64: 1, 3>}, {transform_indices = @transform_11, window_bounds = array<i64: 1, 1, 3>}]} {
    %c0 = arith.constant 0 : index
    %c0_0 = arith.constant 0 : index
    %c0_1 = arith.constant 0 : index
    %0 = vector.load %arg1[%c0, %c0_0, %c0_1] : memref<1x800x75xf32, #tpu.memory_space<vmem>>, vector<1x800x75xf32>
    %1 = vector.shape_cast %0 : vector<1x800x75xf32> to vector<800x75xf32>
    %c0_2 = arith.constant 0 : index
    %c0_3 = arith.constant 0 : index
    %2 = vector.load %arg2[%c0_2, %c0_3] : memref<75x6xf32, #tpu.memory_space<vmem>>, vector<75x6xf32>
    %cst = arith.constant dense<0.000000e+00> : vector<800x6xf32>
    %3 = tpu.matmul %1, %2, %cst {dimension_numbers = #tpu.dot_dimension_numbers<[1], [0], [0], [1], [0, 0, 1, 1], [], []>} : vector<800x75xf32>, vector<75x6xf32>, vector<800x6xf32> -> vector<800x6xf32>
    %c0_4 = arith.constant 0 : index
    %c0_5 = arith.constant 0 : index
    %4 = vector.load %arg3[%c0_4, %c0_5] : memref<1x6xf32, #tpu.memory_space<vmem>>, vector<1x6xf32>
    %5 = vector.broadcast %4 : vector<1x6xf32> to vector<800x6xf32>
    %6 = arith.addf %3, %5 : vector<800x6xf32>
    %cst_6 = arith.constant 0.000000e+00 : f32
    %7 = vector.broadcast %cst_6 : f32 to vector<800x6xf32>
    %8 = arith.maximumf %6, %7 : vector<800x6xf32>
    %9 = vector.extract_strided_slice %8 {offsets = [0, 0], sizes = [200, 6], strides = [1, 1]} : vector<800x6xf32> to vector<200x6xf32>
    %10 = vector.extract_strided_slice %8 {offsets = [200, 0], sizes = [200, 6], strides = [1, 1]} : vector<800x6xf32> to vector<200x6xf32>
    %11 = arith.maximumf %9, %10 : vector<200x6xf32>
    %12 = vector.extract_strided_slice %8 {offsets = [400, 0], sizes = [200, 6], strides = [1, 1]} : vector<800x6xf32> to vector<200x6xf32>
    %13 = vector.extract_strided_slice %8 {offsets = [600, 0], sizes = [200, 6], strides = [1, 1]} : vector<800x6xf32> to vector<200x6xf32>
    %14 = arith.maximumf %12, %13 : vector<200x6xf32>
    %15 = arith.maximumf %11, %14 : vector<200x6xf32>
    %cst_7 = arith.constant 0.000000e+00 : f32
    %16 = vector.broadcast %cst_7 : f32 to vector<136x16xf32>
    %17 = vector.extract_strided_slice %15 {offsets = [0, 0], sizes = [136, 6], strides = [1, 1]} : vector<200x6xf32> to vector<136x6xf32>
    %c0_8 = arith.constant 0 : index
    %c0_9 = arith.constant 0 : index
    %c0_10 = arith.constant 0 : index
    %18 = vector.load %arg4[%c0_8, %c0_9, %c0_10] : memref<25x6x16xf32, #tpu.memory_space<vmem>>, vector<1x6x16xf32>
    %19 = vector.shape_cast %18 : vector<1x6x16xf32> to vector<6x16xf32>
    %cst_11 = arith.constant dense<0.000000e+00> : vector<136x16xf32>
    %20 = tpu.matmul %17, %19, %cst_11 {dimension_numbers = #tpu.dot_dimension_numbers<[1], [0], [0], [1], [0, 0, 1, 1], [], []>} : vector<136x6xf32>, vector<6x16xf32>, vector<136x16xf32> -> vector<136x16xf32>
    %21 = arith.addf %16, %20 : vector<136x16xf32>
    %22 = vector.extract_strided_slice %15 {offsets = [1, 0], sizes = [136, 6], strides = [1, 1]} : vector<200x6xf32> to vector<136x6xf32>
    %c1 = arith.constant 1 : index
    %c0_12 = arith.constant 0 : index
    %c0_13 = arith.constant 0 : index
    %23 = vector.load %arg4[%c1, %c0_12, %c0_13] : memref<25x6x16xf32, #tpu.memory_space<vmem>>, vector<1x6x16xf32>
    %24 = vector.shape_cast %23 : vector<1x6x16xf32> to vector<6x16xf32>
    %cst_14 = arith.constant dense<0.000000e+00> : vector<136x16xf32>
    %25 = tpu.matmul %22, %24, %cst_14 {dimension_numbers = #tpu.dot_dimension_numbers<[1], [0], [0], [1], [0, 0, 1, 1], [], []>} : vector<136x6xf32>, vector<6x16xf32>, vector<136x16xf32> -> vector<136x16xf32>
    %26 = arith.addf %21, %25 : vector<136x16xf32>
    %27 = vector.extract_strided_slice %15 {offsets = [2, 0], sizes = [136, 6], strides = [1, 1]} : vector<200x6xf32> to vector<136x6xf32>
    %c2 = arith.constant 2 : index
    %c0_15 = arith.constant 0 : index
    %c0_16 = arith.constant 0 : index
    %28 = vector.load %arg4[%c2, %c0_15, %c0_16] : memref<25x6x16xf32, #tpu.memory_space<vmem>>, vector<1x6x16xf32>
    %29 = vector.shape_cast %28 : vector<1x6x16xf32> to vector<6x16xf32>
    %cst_17 = arith.constant dense<0.000000e+00> : vector<136x16xf32>
    %30 = tpu.matmul %27, %29, %cst_17 {dimension_numbers = #tpu.dot_dimension_numbers<[1], [0], [0], [1], [0, 0, 1, 1], [], []>} : vector<136x6xf32>, vector<6x16xf32>, vector<136x16xf32> -> vector<136x16xf32>
    %31 = arith.addf %26, %30 : vector<136x16xf32>
    %32 = vector.extract_strided_slice %15 {offsets = [3, 0], sizes = [136, 6], strides = [1, 1]} : vector<200x6xf32> to vector<136x6xf32>
    %c3 = arith.constant 3 : index
    %c0_18 = arith.constant 0 : index
    %c0_19 = arith.constant 0 : index
    %33 = vector.load %arg4[%c3, %c0_18, %c0_19] : memref<25x6x16xf32, #tpu.memory_space<vmem>>, vector<1x6x16xf32>
    %34 = vector.shape_cast %33 : vector<1x6x16xf32> to vector<6x16xf32>
    %cst_20 = arith.constant dense<0.000000e+00> : vector<136x16xf32>
    %35 = tpu.matmul %32, %34, %cst_20 {dimension_numbers = #tpu.dot_dimension_numbers<[1], [0], [0], [1], [0, 0, 1, 1], [], []>} : vector<136x6xf32>, vector<6x16xf32>, vector<136x16xf32> -> vector<136x16xf32>
    %36 = arith.addf %31, %35 : vector<136x16xf32>
    %37 = vector.extract_strided_slice %15 {offsets = [4, 0], sizes = [136, 6], strides = [1, 1]} : vector<200x6xf32> to vector<136x6xf32>
    %c4 = arith.constant 4 : index
    %c0_21 = arith.constant 0 : index
    %c0_22 = arith.constant 0 : index
    %38 = vector.load %arg4[%c4, %c0_21, %c0_22] : memref<25x6x16xf32, #tpu.memory_space<vmem>>, vector<1x6x16xf32>
    %39 = vector.shape_cast %38 : vector<1x6x16xf32> to vector<6x16xf32>
    %cst_23 = arith.constant dense<0.000000e+00> : vector<136x16xf32>
    %40 = tpu.matmul %37, %39, %cst_23 {dimension_numbers = #tpu.dot_dimension_numbers<[1], [0], [0], [1], [0, 0, 1, 1], [], []>} : vector<136x6xf32>, vector<6x16xf32>, vector<136x16xf32> -> vector<136x16xf32>
    %41 = arith.addf %36, %40 : vector<136x16xf32>
    %42 = vector.extract_strided_slice %15 {offsets = [14, 0], sizes = [136, 6], strides = [1, 1]} : vector<200x6xf32> to vector<136x6xf32>
    %c5 = arith.constant 5 : index
    %c0_24 = arith.constant 0 : index
    %c0_25 = arith.constant 0 : index
    %43 = vector.load %arg4[%c5, %c0_24, %c0_25] : memref<25x6x16xf32, #tpu.memory_space<vmem>>, vector<1x6x16xf32>
    %44 = vector.shape_cast %43 : vector<1x6x16xf32> to vector<6x16xf32>
    %cst_26 = arith.constant dense<0.000000e+00> : vector<136x16xf32>
    %45 = tpu.matmul %42, %44, %cst_26 {dimension_numbers = #tpu.dot_dimension_numbers<[1], [0], [0], [1], [0, 0, 1, 1], [], []>} : vector<136x6xf32>, vector<6x16xf32>, vector<136x16xf32> -> vector<136x16xf32>
    %46 = arith.addf %41, %45 : vector<136x16xf32>
    %47 = vector.extract_strided_slice %15 {offsets = [15, 0], sizes = [136, 6], strides = [1, 1]} : vector<200x6xf32> to vector<136x6xf32>
    %c6 = arith.constant 6 : index
    %c0_27 = arith.constant 0 : index
    %c0_28 = arith.constant 0 : index
    %48 = vector.load %arg4[%c6, %c0_27, %c0_28] : memref<25x6x16xf32, #tpu.memory_space<vmem>>, vector<1x6x16xf32>
    %49 = vector.shape_cast %48 : vector<1x6x16xf32> to vector<6x16xf32>
    %cst_29 = arith.constant dense<0.000000e+00> : vector<136x16xf32>
    %50 = tpu.matmul %47, %49, %cst_29 {dimension_numbers = #tpu.dot_dimension_numbers<[1], [0], [0], [1], [0, 0, 1, 1], [], []>} : vector<136x6xf32>, vector<6x16xf32>, vector<136x16xf32> -> vector<136x16xf32>
    %51 = arith.addf %46, %50 : vector<136x16xf32>
    %52 = vector.extract_strided_slice %15 {offsets = [16, 0], sizes = [136, 6], strides = [1, 1]} : vector<200x6xf32> to vector<136x6xf32>
    %c7 = arith.constant 7 : index
    %c0_30 = arith.constant 0 : index
    %c0_31 = arith.constant 0 : index
    %53 = vector.load %arg4[%c7, %c0_30, %c0_31] : memref<25x6x16xf32, #tpu.memory_space<vmem>>, vector<1x6x16xf32>
    %54 = vector.shape_cast %53 : vector<1x6x16xf32> to vector<6x16xf32>
    %cst_32 = arith.constant dense<0.000000e+00> : vector<136x16xf32>
    %55 = tpu.matmul %52, %54, %cst_32 {dimension_numbers = #tpu.dot_dimension_numbers<[1], [0], [0], [1], [0, 0, 1, 1], [], []>} : vector<136x6xf32>, vector<6x16xf32>, vector<136x16xf32> -> vector<136x16xf32>
    %56 = arith.addf %51, %55 : vector<136x16xf32>
    %57 = vector.extract_strided_slice %15 {offsets = [17, 0], sizes = [136, 6], strides = [1, 1]} : vector<200x6xf32> to vector<136x6xf32>
    %c8 = arith.constant 8 : index
    %c0_33 = arith.constant 0 : index
    %c0_34 = arith.constant 0 : index
    %58 = vector.load %arg4[%c8, %c0_33, %c0_34] : memref<25x6x16xf32, #tpu.memory_space<vmem>>, vector<1x6x16xf32>
    %59 = vector.shape_cast %58 : vector<1x6x16xf32> to vector<6x16xf32>
    %cst_35 = arith.constant dense<0.000000e+00> : vector<136x16xf32>
    %60 = tpu.matmul %57, %59, %cst_35 {dimension_numbers = #tpu.dot_dimension_numbers<[1], [0], [0], [1], [0, 0, 1, 1], [], []>} : vector<136x6xf32>, vector<6x16xf32>, vector<136x16xf32> -> vector<136x16xf32>
    %61 = arith.addf %56, %60 : vector<136x16xf32>
    %62 = vector.extract_strided_slice %15 {offsets = [18, 0], sizes = [136, 6], strides = [1, 1]} : vector<200x6xf32> to vector<136x6xf32>
    %c9 = arith.constant 9 : index
    %c0_36 = arith.constant 0 : index
    %c0_37 = arith.constant 0 : index
    %63 = vector.load %arg4[%c9, %c0_36, %c0_37] : memref<25x6x16xf32, #tpu.memory_space<vmem>>, vector<1x6x16xf32>
    %64 = vector.shape_cast %63 : vector<1x6x16xf32> to vector<6x16xf32>
    %cst_38 = arith.constant dense<0.000000e+00> : vector<136x16xf32>
    %65 = tpu.matmul %62, %64, %cst_38 {dimension_numbers = #tpu.dot_dimension_numbers<[1], [0], [0], [1], [0, 0, 1, 1], [], []>} : vector<136x6xf32>, vector<6x16xf32>, vector<136x16xf32> -> vector<136x16xf32>
    %66 = arith.addf %61, %65 : vector<136x16xf32>
    %67 = vector.extract_strided_slice %15 {offsets = [28, 0], sizes = [136, 6], strides = [1, 1]} : vector<200x6xf32> to vector<136x6xf32>
    %c10 = arith.constant 10 : index
    %c0_39 = arith.constant 0 : index
    %c0_40 = arith.constant 0 : index
    %68 = vector.load %arg4[%c10, %c0_39, %c0_40] : memref<25x6x16xf32, #tpu.memory_space<vmem>>, vector<1x6x16xf32>
    %69 = vector.shape_cast %68 : vector<1x6x16xf32> to vector<6x16xf32>
    %cst_41 = arith.constant dense<0.000000e+00> : vector<136x16xf32>
    %70 = tpu.matmul %67, %69, %cst_41 {dimension_numbers = #tpu.dot_dimension_numbers<[1], [0], [0], [1], [0, 0, 1, 1], [], []>} : vector<136x6xf32>, vector<6x16xf32>, vector<136x16xf32> -> vector<136x16xf32>
    %71 = arith.addf %66, %70 : vector<136x16xf32>
    %72 = vector.extract_strided_slice %15 {offsets = [29, 0], sizes = [136, 6], strides = [1, 1]} : vector<200x6xf32> to vector<136x6xf32>
    %c11 = arith.constant 11 : index
    %c0_42 = arith.constant 0 : index
    %c0_43 = arith.constant 0 : index
    %73 = vector.load %arg4[%c11, %c0_42, %c0_43] : memref<25x6x16xf32, #tpu.memory_space<vmem>>, vector<1x6x16xf32>
    %74 = vector.shape_cast %73 : vector<1x6x16xf32> to vector<6x16xf32>
    %cst_44 = arith.constant dense<0.000000e+00> : vector<136x16xf32>
    %75 = tpu.matmul %72, %74, %cst_44 {dimension_numbers = #tpu.dot_dimension_numbers<[1], [0], [0], [1], [0, 0, 1, 1], [], []>} : vector<136x6xf32>, vector<6x16xf32>, vector<136x16xf32> -> vector<136x16xf32>
    %76 = arith.addf %71, %75 : vector<136x16xf32>
    %77 = vector.extract_strided_slice %15 {offsets = [30, 0], sizes = [136, 6], strides = [1, 1]} : vector<200x6xf32> to vector<136x6xf32>
    %c12 = arith.constant 12 : index
    %c0_45 = arith.constant 0 : index
    %c0_46 = arith.constant 0 : index
    %78 = vector.load %arg4[%c12, %c0_45, %c0_46] : memref<25x6x16xf32, #tpu.memory_space<vmem>>, vector<1x6x16xf32>
    %79 = vector.shape_cast %78 : vector<1x6x16xf32> to vector<6x16xf32>
    %cst_47 = arith.constant dense<0.000000e+00> : vector<136x16xf32>
    %80 = tpu.matmul %77, %79, %cst_47 {dimension_numbers = #tpu.dot_dimension_numbers<[1], [0], [0], [1], [0, 0, 1, 1], [], []>} : vector<136x6xf32>, vector<6x16xf32>, vector<136x16xf32> -> vector<136x16xf32>
    %81 = arith.addf %76, %80 : vector<136x16xf32>
    %82 = vector.extract_strided_slice %15 {offsets = [31, 0], sizes = [136, 6], strides = [1, 1]} : vector<200x6xf32> to vector<136x6xf32>
    %c13 = arith.constant 13 : index
    %c0_48 = arith.constant 0 : index
    %c0_49 = arith.constant 0 : index
    %83 = vector.load %arg4[%c13, %c0_48, %c0_49] : memref<25x6x16xf32, #tpu.memory_space<vmem>>, vector<1x6x16xf32>
    %84 = vector.shape_cast %83 : vector<1x6x16xf32> to vector<6x16xf32>
    %cst_50 = arith.constant dense<0.000000e+00> : vector<136x16xf32>
    %85 = tpu.matmul %82, %84, %cst_50 {dimension_numbers = #tpu.dot_dimension_numbers<[1], [0], [0], [1], [0, 0, 1, 1], [], []>} : vector<136x6xf32>, vector<6x16xf32>, vector<136x16xf32> -> vector<136x16xf32>
    %86 = arith.addf %81, %85 : vector<136x16xf32>
    %87 = vector.extract_strided_slice %15 {offsets = [32, 0], sizes = [136, 6], strides = [1, 1]} : vector<200x6xf32> to vector<136x6xf32>
    %c14 = arith.constant 14 : index
    %c0_51 = arith.constant 0 : index
    %c0_52 = arith.constant 0 : index
    %88 = vector.load %arg4[%c14, %c0_51, %c0_52] : memref<25x6x16xf32, #tpu.memory_space<vmem>>, vector<1x6x16xf32>
    %89 = vector.shape_cast %88 : vector<1x6x16xf32> to vector<6x16xf32>
    %cst_53 = arith.constant dense<0.000000e+00> : vector<136x16xf32>
    %90 = tpu.matmul %87, %89, %cst_53 {dimension_numbers = #tpu.dot_dimension_numbers<[1], [0], [0], [1], [0, 0, 1, 1], [], []>} : vector<136x6xf32>, vector<6x16xf32>, vector<136x16xf32> -> vector<136x16xf32>
    %91 = arith.addf %86, %90 : vector<136x16xf32>
    %92 = vector.extract_strided_slice %15 {offsets = [42, 0], sizes = [136, 6], strides = [1, 1]} : vector<200x6xf32> to vector<136x6xf32>
    %c15 = arith.constant 15 : index
    %c0_54 = arith.constant 0 : index
    %c0_55 = arith.constant 0 : index
    %93 = vector.load %arg4[%c15, %c0_54, %c0_55] : memref<25x6x16xf32, #tpu.memory_space<vmem>>, vector<1x6x16xf32>
    %94 = vector.shape_cast %93 : vector<1x6x16xf32> to vector<6x16xf32>
    %cst_56 = arith.constant dense<0.000000e+00> : vector<136x16xf32>
    %95 = tpu.matmul %92, %94, %cst_56 {dimension_numbers = #tpu.dot_dimension_numbers<[1], [0], [0], [1], [0, 0, 1, 1], [], []>} : vector<136x6xf32>, vector<6x16xf32>, vector<136x16xf32> -> vector<136x16xf32>
    %96 = arith.addf %91, %95 : vector<136x16xf32>
    %97 = vector.extract_strided_slice %15 {offsets = [43, 0], sizes = [136, 6], strides = [1, 1]} : vector<200x6xf32> to vector<136x6xf32>
    %c16 = arith.constant 16 : index
    %c0_57 = arith.constant 0 : index
    %c0_58 = arith.constant 0 : index
    %98 = vector.load %arg4[%c16, %c0_57, %c0_58] : memref<25x6x16xf32, #tpu.memory_space<vmem>>, vector<1x6x16xf32>
    %99 = vector.shape_cast %98 : vector<1x6x16xf32> to vector<6x16xf32>
    %cst_59 = arith.constant dense<0.000000e+00> : vector<136x16xf32>
    %100 = tpu.matmul %97, %99, %cst_59 {dimension_numbers = #tpu.dot_dimension_numbers<[1], [0], [0], [1], [0, 0, 1, 1], [], []>} : vector<136x6xf32>, vector<6x16xf32>, vector<136x16xf32> -> vector<136x16xf32>
    %101 = arith.addf %96, %100 : vector<136x16xf32>
    %102 = vector.extract_strided_slice %15 {offsets = [44, 0], sizes = [136, 6], strides = [1, 1]} : vector<200x6xf32> to vector<136x6xf32>
    %c17 = arith.constant 17 : index
    %c0_60 = arith.constant 0 : index
    %c0_61 = arith.constant 0 : index
    %103 = vector.load %arg4[%c17, %c0_60, %c0_61] : memref<25x6x16xf32, #tpu.memory_space<vmem>>, vector<1x6x16xf32>
    %104 = vector.shape_cast %103 : vector<1x6x16xf32> to vector<6x16xf32>
    %cst_62 = arith.constant dense<0.000000e+00> : vector<136x16xf32>
    %105 = tpu.matmul %102, %104, %cst_62 {dimension_numbers = #tpu.dot_dimension_numbers<[1], [0], [0], [1], [0, 0, 1, 1], [], []>} : vector<136x6xf32>, vector<6x16xf32>, vector<136x16xf32> -> vector<136x16xf32>
    %106 = arith.addf %101, %105 : vector<136x16xf32>
    %107 = vector.extract_strided_slice %15 {offsets = [45, 0], sizes = [136, 6], strides = [1, 1]} : vector<200x6xf32> to vector<136x6xf32>
    %c18 = arith.constant 18 : index
    %c0_63 = arith.constant 0 : index
    %c0_64 = arith.constant 0 : index
    %108 = vector.load %arg4[%c18, %c0_63, %c0_64] : memref<25x6x16xf32, #tpu.memory_space<vmem>>, vector<1x6x16xf32>
    %109 = vector.shape_cast %108 : vector<1x6x16xf32> to vector<6x16xf32>
    %cst_65 = arith.constant dense<0.000000e+00> : vector<136x16xf32>
    %110 = tpu.matmul %107, %109, %cst_65 {dimension_numbers = #tpu.dot_dimension_numbers<[1], [0], [0], [1], [0, 0, 1, 1], [], []>} : vector<136x6xf32>, vector<6x16xf32>, vector<136x16xf32> -> vector<136x16xf32>
    %111 = arith.addf %106, %110 : vector<136x16xf32>
    %112 = vector.extract_strided_slice %15 {offsets = [46, 0], sizes = [136, 6], strides = [1, 1]} : vector<200x6xf32> to vector<136x6xf32>
    %c19 = arith.constant 19 : index
    %c0_66 = arith.constant 0 : index
    %c0_67 = arith.constant 0 : index
    %113 = vector.load %arg4[%c19, %c0_66, %c0_67] : memref<25x6x16xf32, #tpu.memory_space<vmem>>, vector<1x6x16xf32>
    %114 = vector.shape_cast %113 : vector<1x6x16xf32> to vector<6x16xf32>
    %cst_68 = arith.constant dense<0.000000e+00> : vector<136x16xf32>
    %115 = tpu.matmul %112, %114, %cst_68 {dimension_numbers = #tpu.dot_dimension_numbers<[1], [0], [0], [1], [0, 0, 1, 1], [], []>} : vector<136x6xf32>, vector<6x16xf32>, vector<136x16xf32> -> vector<136x16xf32>
    %116 = arith.addf %111, %115 : vector<136x16xf32>
    %117 = vector.extract_strided_slice %15 {offsets = [56, 0], sizes = [136, 6], strides = [1, 1]} : vector<200x6xf32> to vector<136x6xf32>
    %c20 = arith.constant 20 : index
    %c0_69 = arith.constant 0 : index
    %c0_70 = arith.constant 0 : index
    %118 = vector.load %arg4[%c20, %c0_69, %c0_70] : memref<25x6x16xf32, #tpu.memory_space<vmem>>, vector<1x6x16xf32>
    %119 = vector.shape_cast %118 : vector<1x6x16xf32> to vector<6x16xf32>
    %cst_71 = arith.constant dense<0.000000e+00> : vector<136x16xf32>
    %120 = tpu.matmul %117, %119, %cst_71 {dimension_numbers = #tpu.dot_dimension_numbers<[1], [0], [0], [1], [0, 0, 1, 1], [], []>} : vector<136x6xf32>, vector<6x16xf32>, vector<136x16xf32> -> vector<136x16xf32>
    %121 = arith.addf %116, %120 : vector<136x16xf32>
    %122 = vector.extract_strided_slice %15 {offsets = [57, 0], sizes = [136, 6], strides = [1, 1]} : vector<200x6xf32> to vector<136x6xf32>
    %c21 = arith.constant 21 : index
    %c0_72 = arith.constant 0 : index
    %c0_73 = arith.constant 0 : index
    %123 = vector.load %arg4[%c21, %c0_72, %c0_73] : memref<25x6x16xf32, #tpu.memory_space<vmem>>, vector<1x6x16xf32>
    %124 = vector.shape_cast %123 : vector<1x6x16xf32> to vector<6x16xf32>
    %cst_74 = arith.constant dense<0.000000e+00> : vector<136x16xf32>
    %125 = tpu.matmul %122, %124, %cst_74 {dimension_numbers = #tpu.dot_dimension_numbers<[1], [0], [0], [1], [0, 0, 1, 1], [], []>} : vector<136x6xf32>, vector<6x16xf32>, vector<136x16xf32> -> vector<136x16xf32>
    %126 = arith.addf %121, %125 : vector<136x16xf32>
    %127 = vector.extract_strided_slice %15 {offsets = [58, 0], sizes = [136, 6], strides = [1, 1]} : vector<200x6xf32> to vector<136x6xf32>
    %c22 = arith.constant 22 : index
    %c0_75 = arith.constant 0 : index
    %c0_76 = arith.constant 0 : index
    %128 = vector.load %arg4[%c22, %c0_75, %c0_76] : memref<25x6x16xf32, #tpu.memory_space<vmem>>, vector<1x6x16xf32>
    %129 = vector.shape_cast %128 : vector<1x6x16xf32> to vector<6x16xf32>
    %cst_77 = arith.constant dense<0.000000e+00> : vector<136x16xf32>
    %130 = tpu.matmul %127, %129, %cst_77 {dimension_numbers = #tpu.dot_dimension_numbers<[1], [0], [0], [1], [0, 0, 1, 1], [], []>} : vector<136x6xf32>, vector<6x16xf32>, vector<136x16xf32> -> vector<136x16xf32>
    %131 = arith.addf %126, %130 : vector<136x16xf32>
    %132 = vector.extract_strided_slice %15 {offsets = [59, 0], sizes = [136, 6], strides = [1, 1]} : vector<200x6xf32> to vector<136x6xf32>
    %c23 = arith.constant 23 : index
    %c0_78 = arith.constant 0 : index
    %c0_79 = arith.constant 0 : index
    %133 = vector.load %arg4[%c23, %c0_78, %c0_79] : memref<25x6x16xf32, #tpu.memory_space<vmem>>, vector<1x6x16xf32>
    %134 = vector.shape_cast %133 : vector<1x6x16xf32> to vector<6x16xf32>
    %cst_80 = arith.constant dense<0.000000e+00> : vector<136x16xf32>
    %135 = tpu.matmul %132, %134, %cst_80 {dimension_numbers = #tpu.dot_dimension_numbers<[1], [0], [0], [1], [0, 0, 1, 1], [], []>} : vector<136x6xf32>, vector<6x16xf32>, vector<136x16xf32> -> vector<136x16xf32>
    %136 = arith.addf %131, %135 : vector<136x16xf32>
    %137 = vector.extract_strided_slice %15 {offsets = [60, 0], sizes = [136, 6], strides = [1, 1]} : vector<200x6xf32> to vector<136x6xf32>
    %c24 = arith.constant 24 : index
    %c0_81 = arith.constant 0 : index
    %c0_82 = arith.constant 0 : index
    %138 = vector.load %arg4[%c24, %c0_81, %c0_82] : memref<25x6x16xf32, #tpu.memory_space<vmem>>, vector<1x6x16xf32>
    %139 = vector.shape_cast %138 : vector<1x6x16xf32> to vector<6x16xf32>
    %cst_83 = arith.constant dense<0.000000e+00> : vector<136x16xf32>
    %140 = tpu.matmul %137, %139, %cst_83 {dimension_numbers = #tpu.dot_dimension_numbers<[1], [0], [0], [1], [0, 0, 1, 1], [], []>} : vector<136x6xf32>, vector<6x16xf32>, vector<136x16xf32> -> vector<136x16xf32>
    %141 = arith.addf %136, %140 : vector<136x16xf32>
    %c0_84 = arith.constant 0 : index
    %c0_85 = arith.constant 0 : index
    %142 = vector.load %arg5[%c0_84, %c0_85] : memref<1x16xf32, #tpu.memory_space<vmem>>, vector<1x16xf32>
    %143 = vector.broadcast %142 : vector<1x16xf32> to vector<136x16xf32>
    %144 = arith.addf %141, %143 : vector<136x16xf32>
    %cst_86 = arith.constant 0.000000e+00 : f32
    %145 = vector.broadcast %cst_86 : f32 to vector<136x16xf32>
    %146 = arith.maximumf %144, %145 : vector<136x16xf32>
    %147 = vector.extract_strided_slice %146 {offsets = [0, 0], sizes = [121, 16], strides = [1, 1]} : vector<136x16xf32> to vector<121x16xf32>
    %148 = vector.extract_strided_slice %146 {offsets = [1, 0], sizes = [121, 16], strides = [1, 1]} : vector<136x16xf32> to vector<121x16xf32>
    %149 = arith.maximumf %147, %148 : vector<121x16xf32>
    %150 = vector.extract_strided_slice %146 {offsets = [14, 0], sizes = [121, 16], strides = [1, 1]} : vector<136x16xf32> to vector<121x16xf32>
    %151 = vector.extract_strided_slice %146 {offsets = [15, 0], sizes = [121, 16], strides = [1, 1]} : vector<136x16xf32> to vector<121x16xf32>
    %152 = arith.maximumf %150, %151 : vector<121x16xf32>
    %153 = arith.maximumf %149, %152 : vector<121x16xf32>
    %cst_87 = arith.constant 0.000000e+00 : f32
    %154 = vector.broadcast %cst_87 : f32 to vector<1x120xf32>
    %155 = vector.extract_strided_slice %153 {offsets = [0, 0], sizes = [1, 16], strides = [1, 1]} : vector<121x16xf32> to vector<1x16xf32>
    %c0_88 = arith.constant 0 : index
    %c0_89 = arith.constant 0 : index
    %c0_90 = arith.constant 0 : index
    %156 = vector.load %arg6[%c0_88, %c0_89, %c0_90] : memref<25x16x120xf32, #tpu.memory_space<vmem>>, vector<1x16x120xf32>
    %157 = vector.shape_cast %156 : vector<1x16x120xf32> to vector<16x120xf32>
    %cst_91 = arith.constant dense<0.000000e+00> : vector<1x120xf32>
    %158 = tpu.matmul %155, %157, %cst_91 {dimension_numbers = #tpu.dot_dimension_numbers<[1], [0], [0], [1], [0, 0, 1, 1], [], []>} : vector<1x16xf32>, vector<16x120xf32>, vector<1x120xf32> -> vector<1x120xf32>
    %159 = arith.addf %154, %158 : vector<1x120xf32>
    %160 = vector.extract_strided_slice %153 {offsets = [2, 0], sizes = [1, 16], strides = [1, 1]} : vector<121x16xf32> to vector<1x16xf32>
    %c1_92 = arith.constant 1 : index
    %c0_93 = arith.constant 0 : index
    %c0_94 = arith.constant 0 : index
    %161 = vector.load %arg6[%c1_92, %c0_93, %c0_94] : memref<25x16x120xf32, #tpu.memory_space<vmem>>, vector<1x16x120xf32>
    %162 = vector.shape_cast %161 : vector<1x16x120xf32> to vector<16x120xf32>
    %cst_95 = arith.constant dense<0.000000e+00> : vector<1x120xf32>
    %163 = tpu.matmul %160, %162, %cst_95 {dimension_numbers = #tpu.dot_dimension_numbers<[1], [0], [0], [1], [0, 0, 1, 1], [], []>} : vector<1x16xf32>, vector<16x120xf32>, vector<1x120xf32> -> vector<1x120xf32>
    %164 = arith.addf %159, %163 : vector<1x120xf32>
    %165 = vector.extract_strided_slice %153 {offsets = [4, 0], sizes = [1, 16], strides = [1, 1]} : vector<121x16xf32> to vector<1x16xf32>
    %c2_96 = arith.constant 2 : index
    %c0_97 = arith.constant 0 : index
    %c0_98 = arith.constant 0 : index
    %166 = vector.load %arg6[%c2_96, %c0_97, %c0_98] : memref<25x16x120xf32, #tpu.memory_space<vmem>>, vector<1x16x120xf32>
    %167 = vector.shape_cast %166 : vector<1x16x120xf32> to vector<16x120xf32>
    %cst_99 = arith.constant dense<0.000000e+00> : vector<1x120xf32>
    %168 = tpu.matmul %165, %167, %cst_99 {dimension_numbers = #tpu.dot_dimension_numbers<[1], [0], [0], [1], [0, 0, 1, 1], [], []>} : vector<1x16xf32>, vector<16x120xf32>, vector<1x120xf32> -> vector<1x120xf32>
    %169 = arith.addf %164, %168 : vector<1x120xf32>
    %170 = vector.extract_strided_slice %153 {offsets = [6, 0], sizes = [1, 16], strides = [1, 1]} : vector<121x16xf32> to vector<1x16xf32>
    %c3_100 = arith.constant 3 : index
    %c0_101 = arith.constant 0 : index
    %c0_102 = arith.constant 0 : index
    %171 = vector.load %arg6[%c3_100, %c0_101, %c0_102] : memref<25x16x120xf32, #tpu.memory_space<vmem>>, vector<1x16x120xf32>
    %172 = vector.shape_cast %171 : vector<1x16x120xf32> to vector<16x120xf32>
    %cst_103 = arith.constant dense<0.000000e+00> : vector<1x120xf32>
    %173 = tpu.matmul %170, %172, %cst_103 {dimension_numbers = #tpu.dot_dimension_numbers<[1], [0], [0], [1], [0, 0, 1, 1], [], []>} : vector<1x16xf32>, vector<16x120xf32>, vector<1x120xf32> -> vector<1x120xf32>
    %174 = arith.addf %169, %173 : vector<1x120xf32>
    %175 = vector.extract_strided_slice %153 {offsets = [8, 0], sizes = [1, 16], strides = [1, 1]} : vector<121x16xf32> to vector<1x16xf32>
    %c4_104 = arith.constant 4 : index
    %c0_105 = arith.constant 0 : index
    %c0_106 = arith.constant 0 : index
    %176 = vector.load %arg6[%c4_104, %c0_105, %c0_106] : memref<25x16x120xf32, #tpu.memory_space<vmem>>, vector<1x16x120xf32>
    %177 = vector.shape_cast %176 : vector<1x16x120xf32> to vector<16x120xf32>
    %cst_107 = arith.constant dense<0.000000e+00> : vector<1x120xf32>
    %178 = tpu.matmul %175, %177, %cst_107 {dimension_numbers = #tpu.dot_dimension_numbers<[1], [0], [0], [1], [0, 0, 1, 1], [], []>} : vector<1x16xf32>, vector<16x120xf32>, vector<1x120xf32> -> vector<1x120xf32>
    %179 = arith.addf %174, %178 : vector<1x120xf32>
    %180 = vector.extract_strided_slice %153 {offsets = [28, 0], sizes = [1, 16], strides = [1, 1]} : vector<121x16xf32> to vector<1x16xf32>
    %c5_108 = arith.constant 5 : index
    %c0_109 = arith.constant 0 : index
    %c0_110 = arith.constant 0 : index
    %181 = vector.load %arg6[%c5_108, %c0_109, %c0_110] : memref<25x16x120xf32, #tpu.memory_space<vmem>>, vector<1x16x120xf32>
    %182 = vector.shape_cast %181 : vector<1x16x120xf32> to vector<16x120xf32>
    %cst_111 = arith.constant dense<0.000000e+00> : vector<1x120xf32>
    %183 = tpu.matmul %180, %182, %cst_111 {dimension_numbers = #tpu.dot_dimension_numbers<[1], [0], [0], [1], [0, 0, 1, 1], [], []>} : vector<1x16xf32>, vector<16x120xf32>, vector<1x120xf32> -> vector<1x120xf32>
    %184 = arith.addf %179, %183 : vector<1x120xf32>
    %185 = vector.extract_strided_slice %153 {offsets = [30, 0], sizes = [1, 16], strides = [1, 1]} : vector<121x16xf32> to vector<1x16xf32>
    %c6_112 = arith.constant 6 : index
    %c0_113 = arith.constant 0 : index
    %c0_114 = arith.constant 0 : index
    %186 = vector.load %arg6[%c6_112, %c0_113, %c0_114] : memref<25x16x120xf32, #tpu.memory_space<vmem>>, vector<1x16x120xf32>
    %187 = vector.shape_cast %186 : vector<1x16x120xf32> to vector<16x120xf32>
    %cst_115 = arith.constant dense<0.000000e+00> : vector<1x120xf32>
    %188 = tpu.matmul %185, %187, %cst_115 {dimension_numbers = #tpu.dot_dimension_numbers<[1], [0], [0], [1], [0, 0, 1, 1], [], []>} : vector<1x16xf32>, vector<16x120xf32>, vector<1x120xf32> -> vector<1x120xf32>
    %189 = arith.addf %184, %188 : vector<1x120xf32>
    %190 = vector.extract_strided_slice %153 {offsets = [32, 0], sizes = [1, 16], strides = [1, 1]} : vector<121x16xf32> to vector<1x16xf32>
    %c7_116 = arith.constant 7 : index
    %c0_117 = arith.constant 0 : index
    %c0_118 = arith.constant 0 : index
    %191 = vector.load %arg6[%c7_116, %c0_117, %c0_118] : memref<25x16x120xf32, #tpu.memory_space<vmem>>, vector<1x16x120xf32>
    %192 = vector.shape_cast %191 : vector<1x16x120xf32> to vector<16x120xf32>
    %cst_119 = arith.constant dense<0.000000e+00> : vector<1x120xf32>
    %193 = tpu.matmul %190, %192, %cst_119 {dimension_numbers = #tpu.dot_dimension_numbers<[1], [0], [0], [1], [0, 0, 1, 1], [], []>} : vector<1x16xf32>, vector<16x120xf32>, vector<1x120xf32> -> vector<1x120xf32>
    %194 = arith.addf %189, %193 : vector<1x120xf32>
    %195 = vector.extract_strided_slice %153 {offsets = [34, 0], sizes = [1, 16], strides = [1, 1]} : vector<121x16xf32> to vector<1x16xf32>
    %c8_120 = arith.constant 8 : index
    %c0_121 = arith.constant 0 : index
    %c0_122 = arith.constant 0 : index
    %196 = vector.load %arg6[%c8_120, %c0_121, %c0_122] : memref<25x16x120xf32, #tpu.memory_space<vmem>>, vector<1x16x120xf32>
    %197 = vector.shape_cast %196 : vector<1x16x120xf32> to vector<16x120xf32>
    %cst_123 = arith.constant dense<0.000000e+00> : vector<1x120xf32>
    %198 = tpu.matmul %195, %197, %cst_123 {dimension_numbers = #tpu.dot_dimension_numbers<[1], [0], [0], [1], [0, 0, 1, 1], [], []>} : vector<1x16xf32>, vector<16x120xf32>, vector<1x120xf32> -> vector<1x120xf32>
    %199 = arith.addf %194, %198 : vector<1x120xf32>
    %200 = vector.extract_strided_slice %153 {offsets = [36, 0], sizes = [1, 16], strides = [1, 1]} : vector<121x16xf32> to vector<1x16xf32>
    %c9_124 = arith.constant 9 : index
    %c0_125 = arith.constant 0 : index
    %c0_126 = arith.constant 0 : index
    %201 = vector.load %arg6[%c9_124, %c0_125, %c0_126] : memref<25x16x120xf32, #tpu.memory_space<vmem>>, vector<1x16x120xf32>
    %202 = vector.shape_cast %201 : vector<1x16x120xf32> to vector<16x120xf32>
    %cst_127 = arith.constant dense<0.000000e+00> : vector<1x120xf32>
    %203 = tpu.matmul %200, %202, %cst_127 {dimension_numbers = #tpu.dot_dimension_numbers<[1], [0], [0], [1], [0, 0, 1, 1], [], []>} : vector<1x16xf32>, vector<16x120xf32>, vector<1x120xf32> -> vector<1x120xf32>
    %204 = arith.addf %199, %203 : vector<1x120xf32>
    %205 = vector.extract_strided_slice %153 {offsets = [56, 0], sizes = [1, 16], strides = [1, 1]} : vector<121x16xf32> to vector<1x16xf32>
    %c10_128 = arith.constant 10 : index
    %c0_129 = arith.constant 0 : index
    %c0_130 = arith.constant 0 : index
    %206 = vector.load %arg6[%c10_128, %c0_129, %c0_130] : memref<25x16x120xf32, #tpu.memory_space<vmem>>, vector<1x16x120xf32>
    %207 = vector.shape_cast %206 : vector<1x16x120xf32> to vector<16x120xf32>
    %cst_131 = arith.constant dense<0.000000e+00> : vector<1x120xf32>
    %208 = tpu.matmul %205, %207, %cst_131 {dimension_numbers = #tpu.dot_dimension_numbers<[1], [0], [0], [1], [0, 0, 1, 1], [], []>} : vector<1x16xf32>, vector<16x120xf32>, vector<1x120xf32> -> vector<1x120xf32>
    %209 = arith.addf %204, %208 : vector<1x120xf32>
    %210 = vector.extract_strided_slice %153 {offsets = [58, 0], sizes = [1, 16], strides = [1, 1]} : vector<121x16xf32> to vector<1x16xf32>
    %c11_132 = arith.constant 11 : index
    %c0_133 = arith.constant 0 : index
    %c0_134 = arith.constant 0 : index
    %211 = vector.load %arg6[%c11_132, %c0_133, %c0_134] : memref<25x16x120xf32, #tpu.memory_space<vmem>>, vector<1x16x120xf32>
    %212 = vector.shape_cast %211 : vector<1x16x120xf32> to vector<16x120xf32>
    %cst_135 = arith.constant dense<0.000000e+00> : vector<1x120xf32>
    %213 = tpu.matmul %210, %212, %cst_135 {dimension_numbers = #tpu.dot_dimension_numbers<[1], [0], [0], [1], [0, 0, 1, 1], [], []>} : vector<1x16xf32>, vector<16x120xf32>, vector<1x120xf32> -> vector<1x120xf32>
    %214 = arith.addf %209, %213 : vector<1x120xf32>
    %215 = vector.extract_strided_slice %153 {offsets = [60, 0], sizes = [1, 16], strides = [1, 1]} : vector<121x16xf32> to vector<1x16xf32>
    %c12_136 = arith.constant 12 : index
    %c0_137 = arith.constant 0 : index
    %c0_138 = arith.constant 0 : index
    %216 = vector.load %arg6[%c12_136, %c0_137, %c0_138] : memref<25x16x120xf32, #tpu.memory_space<vmem>>, vector<1x16x120xf32>
    %217 = vector.shape_cast %216 : vector<1x16x120xf32> to vector<16x120xf32>
    %cst_139 = arith.constant dense<0.000000e+00> : vector<1x120xf32>
    %218 = tpu.matmul %215, %217, %cst_139 {dimension_numbers = #tpu.dot_dimension_numbers<[1], [0], [0], [1], [0, 0, 1, 1], [], []>} : vector<1x16xf32>, vector<16x120xf32>, vector<1x120xf32> -> vector<1x120xf32>
    %219 = arith.addf %214, %218 : vector<1x120xf32>
    %220 = vector.extract_strided_slice %153 {offsets = [62, 0], sizes = [1, 16], strides = [1, 1]} : vector<121x16xf32> to vector<1x16xf32>
    %c13_140 = arith.constant 13 : index
    %c0_141 = arith.constant 0 : index
    %c0_142 = arith.constant 0 : index
    %221 = vector.load %arg6[%c13_140, %c0_141, %c0_142] : memref<25x16x120xf32, #tpu.memory_space<vmem>>, vector<1x16x120xf32>
    %222 = vector.shape_cast %221 : vector<1x16x120xf32> to vector<16x120xf32>
    %cst_143 = arith.constant dense<0.000000e+00> : vector<1x120xf32>
    %223 = tpu.matmul %220, %222, %cst_143 {dimension_numbers = #tpu.dot_dimension_numbers<[1], [0], [0], [1], [0, 0, 1, 1], [], []>} : vector<1x16xf32>, vector<16x120xf32>, vector<1x120xf32> -> vector<1x120xf32>
    %224 = arith.addf %219, %223 : vector<1x120xf32>
    %225 = vector.extract_strided_slice %153 {offsets = [64, 0], sizes = [1, 16], strides = [1, 1]} : vector<121x16xf32> to vector<1x16xf32>
    %c14_144 = arith.constant 14 : index
    %c0_145 = arith.constant 0 : index
    %c0_146 = arith.constant 0 : index
    %226 = vector.load %arg6[%c14_144, %c0_145, %c0_146] : memref<25x16x120xf32, #tpu.memory_space<vmem>>, vector<1x16x120xf32>
    %227 = vector.shape_cast %226 : vector<1x16x120xf32> to vector<16x120xf32>
    %cst_147 = arith.constant dense<0.000000e+00> : vector<1x120xf32>
    %228 = tpu.matmul %225, %227, %cst_147 {dimension_numbers = #tpu.dot_dimension_numbers<[1], [0], [0], [1], [0, 0, 1, 1], [], []>} : vector<1x16xf32>, vector<16x120xf32>, vector<1x120xf32> -> vector<1x120xf32>
    %229 = arith.addf %224, %228 : vector<1x120xf32>
    %230 = vector.extract_strided_slice %153 {offsets = [84, 0], sizes = [1, 16], strides = [1, 1]} : vector<121x16xf32> to vector<1x16xf32>
    %c15_148 = arith.constant 15 : index
    %c0_149 = arith.constant 0 : index
    %c0_150 = arith.constant 0 : index
    %231 = vector.load %arg6[%c15_148, %c0_149, %c0_150] : memref<25x16x120xf32, #tpu.memory_space<vmem>>, vector<1x16x120xf32>
    %232 = vector.shape_cast %231 : vector<1x16x120xf32> to vector<16x120xf32>
    %cst_151 = arith.constant dense<0.000000e+00> : vector<1x120xf32>
    %233 = tpu.matmul %230, %232, %cst_151 {dimension_numbers = #tpu.dot_dimension_numbers<[1], [0], [0], [1], [0, 0, 1, 1], [], []>} : vector<1x16xf32>, vector<16x120xf32>, vector<1x120xf32> -> vector<1x120xf32>
    %234 = arith.addf %229, %233 : vector<1x120xf32>
    %235 = vector.extract_strided_slice %153 {offsets = [86, 0], sizes = [1, 16], strides = [1, 1]} : vector<121x16xf32> to vector<1x16xf32>
    %c16_152 = arith.constant 16 : index
    %c0_153 = arith.constant 0 : index
    %c0_154 = arith.constant 0 : index
    %236 = vector.load %arg6[%c16_152, %c0_153, %c0_154] : memref<25x16x120xf32, #tpu.memory_space<vmem>>, vector<1x16x120xf32>
    %237 = vector.shape_cast %236 : vector<1x16x120xf32> to vector<16x120xf32>
    %cst_155 = arith.constant dense<0.000000e+00> : vector<1x120xf32>
    %238 = tpu.matmul %235, %237, %cst_155 {dimension_numbers = #tpu.dot_dimension_numbers<[1], [0], [0], [1], [0, 0, 1, 1], [], []>} : vector<1x16xf32>, vector<16x120xf32>, vector<1x120xf32> -> vector<1x120xf32>
    %239 = arith.addf %234, %238 : vector<1x120xf32>
    %240 = vector.extract_strided_slice %153 {offsets = [88, 0], sizes = [1, 16], strides = [1, 1]} : vector<121x16xf32> to vector<1x16xf32>
    %c17_156 = arith.constant 17 : index
    %c0_157 = arith.constant 0 : index
    %c0_158 = arith.constant 0 : index
    %241 = vector.load %arg6[%c17_156, %c0_157, %c0_158] : memref<25x16x120xf32, #tpu.memory_space<vmem>>, vector<1x16x120xf32>
    %242 = vector.shape_cast %241 : vector<1x16x120xf32> to vector<16x120xf32>
    %cst_159 = arith.constant dense<0.000000e+00> : vector<1x120xf32>
    %243 = tpu.matmul %240, %242, %cst_159 {dimension_numbers = #tpu.dot_dimension_numbers<[1], [0], [0], [1], [0, 0, 1, 1], [], []>} : vector<1x16xf32>, vector<16x120xf32>, vector<1x120xf32> -> vector<1x120xf32>
    %244 = arith.addf %239, %243 : vector<1x120xf32>
    %245 = vector.extract_strided_slice %153 {offsets = [90, 0], sizes = [1, 16], strides = [1, 1]} : vector<121x16xf32> to vector<1x16xf32>
    %c18_160 = arith.constant 18 : index
    %c0_161 = arith.constant 0 : index
    %c0_162 = arith.constant 0 : index
    %246 = vector.load %arg6[%c18_160, %c0_161, %c0_162] : memref<25x16x120xf32, #tpu.memory_space<vmem>>, vector<1x16x120xf32>
    %247 = vector.shape_cast %246 : vector<1x16x120xf32> to vector<16x120xf32>
    %cst_163 = arith.constant dense<0.000000e+00> : vector<1x120xf32>
    %248 = tpu.matmul %245, %247, %cst_163 {dimension_numbers = #tpu.dot_dimension_numbers<[1], [0], [0], [1], [0, 0, 1, 1], [], []>} : vector<1x16xf32>, vector<16x120xf32>, vector<1x120xf32> -> vector<1x120xf32>
    %249 = arith.addf %244, %248 : vector<1x120xf32>
    %250 = vector.extract_strided_slice %153 {offsets = [92, 0], sizes = [1, 16], strides = [1, 1]} : vector<121x16xf32> to vector<1x16xf32>
    %c19_164 = arith.constant 19 : index
    %c0_165 = arith.constant 0 : index
    %c0_166 = arith.constant 0 : index
    %251 = vector.load %arg6[%c19_164, %c0_165, %c0_166] : memref<25x16x120xf32, #tpu.memory_space<vmem>>, vector<1x16x120xf32>
    %252 = vector.shape_cast %251 : vector<1x16x120xf32> to vector<16x120xf32>
    %cst_167 = arith.constant dense<0.000000e+00> : vector<1x120xf32>
    %253 = tpu.matmul %250, %252, %cst_167 {dimension_numbers = #tpu.dot_dimension_numbers<[1], [0], [0], [1], [0, 0, 1, 1], [], []>} : vector<1x16xf32>, vector<16x120xf32>, vector<1x120xf32> -> vector<1x120xf32>
    %254 = arith.addf %249, %253 : vector<1x120xf32>
    %255 = vector.extract_strided_slice %153 {offsets = [112, 0], sizes = [1, 16], strides = [1, 1]} : vector<121x16xf32> to vector<1x16xf32>
    %c20_168 = arith.constant 20 : index
    %c0_169 = arith.constant 0 : index
    %c0_170 = arith.constant 0 : index
    %256 = vector.load %arg6[%c20_168, %c0_169, %c0_170] : memref<25x16x120xf32, #tpu.memory_space<vmem>>, vector<1x16x120xf32>
    %257 = vector.shape_cast %256 : vector<1x16x120xf32> to vector<16x120xf32>
    %cst_171 = arith.constant dense<0.000000e+00> : vector<1x120xf32>
    %258 = tpu.matmul %255, %257, %cst_171 {dimension_numbers = #tpu.dot_dimension_numbers<[1], [0], [0], [1], [0, 0, 1, 1], [], []>} : vector<1x16xf32>, vector<16x120xf32>, vector<1x120xf32> -> vector<1x120xf32>
    %259 = arith.addf %254, %258 : vector<1x120xf32>
    %260 = vector.extract_strided_slice %153 {offsets = [114, 0], sizes = [1, 16], strides = [1, 1]} : vector<121x16xf32> to vector<1x16xf32>
    %c21_172 = arith.constant 21 : index
    %c0_173 = arith.constant 0 : index
    %c0_174 = arith.constant 0 : index
    %261 = vector.load %arg6[%c21_172, %c0_173, %c0_174] : memref<25x16x120xf32, #tpu.memory_space<vmem>>, vector<1x16x120xf32>
    %262 = vector.shape_cast %261 : vector<1x16x120xf32> to vector<16x120xf32>
    %cst_175 = arith.constant dense<0.000000e+00> : vector<1x120xf32>
    %263 = tpu.matmul %260, %262, %cst_175 {dimension_numbers = #tpu.dot_dimension_numbers<[1], [0], [0], [1], [0, 0, 1, 1], [], []>} : vector<1x16xf32>, vector<16x120xf32>, vector<1x120xf32> -> vector<1x120xf32>
    %264 = arith.addf %259, %263 : vector<1x120xf32>
    %265 = vector.extract_strided_slice %153 {offsets = [116, 0], sizes = [1, 16], strides = [1, 1]} : vector<121x16xf32> to vector<1x16xf32>
    %c22_176 = arith.constant 22 : index
    %c0_177 = arith.constant 0 : index
    %c0_178 = arith.constant 0 : index
    %266 = vector.load %arg6[%c22_176, %c0_177, %c0_178] : memref<25x16x120xf32, #tpu.memory_space<vmem>>, vector<1x16x120xf32>
    %267 = vector.shape_cast %266 : vector<1x16x120xf32> to vector<16x120xf32>
    %cst_179 = arith.constant dense<0.000000e+00> : vector<1x120xf32>
    %268 = tpu.matmul %265, %267, %cst_179 {dimension_numbers = #tpu.dot_dimension_numbers<[1], [0], [0], [1], [0, 0, 1, 1], [], []>} : vector<1x16xf32>, vector<16x120xf32>, vector<1x120xf32> -> vector<1x120xf32>
    %269 = arith.addf %264, %268 : vector<1x120xf32>
    %270 = vector.extract_strided_slice %153 {offsets = [118, 0], sizes = [1, 16], strides = [1, 1]} : vector<121x16xf32> to vector<1x16xf32>
    %c23_180 = arith.constant 23 : index
    %c0_181 = arith.constant 0 : index
    %c0_182 = arith.constant 0 : index
    %271 = vector.load %arg6[%c23_180, %c0_181, %c0_182] : memref<25x16x120xf32, #tpu.memory_space<vmem>>, vector<1x16x120xf32>
    %272 = vector.shape_cast %271 : vector<1x16x120xf32> to vector<16x120xf32>
    %cst_183 = arith.constant dense<0.000000e+00> : vector<1x120xf32>
    %273 = tpu.matmul %270, %272, %cst_183 {dimension_numbers = #tpu.dot_dimension_numbers<[1], [0], [0], [1], [0, 0, 1, 1], [], []>} : vector<1x16xf32>, vector<16x120xf32>, vector<1x120xf32> -> vector<1x120xf32>
    %274 = arith.addf %269, %273 : vector<1x120xf32>
    %275 = vector.extract_strided_slice %153 {offsets = [120, 0], sizes = [1, 16], strides = [1, 1]} : vector<121x16xf32> to vector<1x16xf32>
    %c24_184 = arith.constant 24 : index
    %c0_185 = arith.constant 0 : index
    %c0_186 = arith.constant 0 : index
    %276 = vector.load %arg6[%c24_184, %c0_185, %c0_186] : memref<25x16x120xf32, #tpu.memory_space<vmem>>, vector<1x16x120xf32>
    %277 = vector.shape_cast %276 : vector<1x16x120xf32> to vector<16x120xf32>
    %cst_187 = arith.constant dense<0.000000e+00> : vector<1x120xf32>
    %278 = tpu.matmul %275, %277, %cst_187 {dimension_numbers = #tpu.dot_dimension_numbers<[1], [0], [0], [1], [0, 0, 1, 1], [], []>} : vector<1x16xf32>, vector<16x120xf32>, vector<1x120xf32> -> vector<1x120xf32>
    %279 = arith.addf %274, %278 : vector<1x120xf32>
    %c0_188 = arith.constant 0 : index
    %c0_189 = arith.constant 0 : index
    %280 = vector.load %arg7[%c0_188, %c0_189] : memref<1x120xf32, #tpu.memory_space<vmem>>, vector<1x120xf32>
    %281 = arith.addf %279, %280 : vector<1x120xf32>
    %cst_190 = arith.constant 0.000000e+00 : f32
    %282 = vector.broadcast %cst_190 : f32 to vector<1x120xf32>
    %283 = arith.maximumf %281, %282 : vector<1x120xf32>
    %c0_191 = arith.constant 0 : index
    %c0_192 = arith.constant 0 : index
    %284 = vector.load %arg8[%c0_191, %c0_192] : memref<120x84xf32, #tpu.memory_space<vmem>>, vector<120x84xf32>
    %cst_193 = arith.constant dense<0.000000e+00> : vector<1x84xf32>
    %285 = tpu.matmul %283, %284, %cst_193 {dimension_numbers = #tpu.dot_dimension_numbers<[1], [0], [0], [1], [0, 0, 1, 1], [], []>} : vector<1x120xf32>, vector<120x84xf32>, vector<1x84xf32> -> vector<1x84xf32>
    %c0_194 = arith.constant 0 : index
    %c0_195 = arith.constant 0 : index
    %286 = vector.load %arg9[%c0_194, %c0_195] : memref<1x84xf32, #tpu.memory_space<vmem>>, vector<1x84xf32>
    %287 = arith.addf %285, %286 : vector<1x84xf32>
    %cst_196 = arith.constant 0.000000e+00 : f32
    %288 = vector.broadcast %cst_196 : f32 to vector<1x84xf32>
    %289 = arith.maximumf %287, %288 : vector<1x84xf32>
    %c0_197 = arith.constant 0 : index
    %c0_198 = arith.constant 0 : index
    %290 = vector.load %arg10[%c0_197, %c0_198] : memref<84x3xf32, #tpu.memory_space<vmem>>, vector<84x3xf32>
    %cst_199 = arith.constant dense<0.000000e+00> : vector<1x3xf32>
    %291 = tpu.matmul %289, %290, %cst_199 {dimension_numbers = #tpu.dot_dimension_numbers<[1], [0], [0], [1], [0, 0, 1, 1], [], []>} : vector<1x84xf32>, vector<84x3xf32>, vector<1x3xf32> -> vector<1x3xf32>
    %c0_200 = arith.constant 0 : index
    %c0_201 = arith.constant 0 : index
    %292 = vector.load %arg11[%c0_200, %c0_201] : memref<1x3xf32, #tpu.memory_space<vmem>>, vector<1x3xf32>
    %293 = arith.addf %291, %292 : vector<1x3xf32>
    %c0_202 = arith.constant 0 : index
    %c0_203 = arith.constant 0 : index
    %c0_204 = arith.constant 0 : index
    %294 = vector.load %arg12[%c0_202, %c0_203, %c0_204] : memref<1x1x3xf32, #tpu.memory_space<vmem>>, vector<1x1x3xf32>
    %295 = vector.shape_cast %294 : vector<1x1x3xf32> to vector<1x3xf32>
    %296 = vector.shape_cast %293 : vector<1x3xf32> to vector<1x1x3xf32>
    tpu.vector_store %arg12[%c0_202, %c0_203, %c0_204], %296 {strides = array<i32>} : memref<1x1x3xf32, #tpu.memory_space<vmem>>, vector<1x1x3xf32>,
    return
  }
  func.func @transform_0(%arg0: i32) -> (i32, i32, i32) {
    %c0_i32 = arith.constant 0 : i32
    %c0_i32_0 = arith.constant 0 : i32
    %c0_i32_1 = arith.constant 0 : i32
    return %arg0, %c0_i32, %c0_i32_0 : i32, i32, i32
  }
  func.func @transform_1(%arg0: i32) -> (i32, i32) {
    %c0_i32 = arith.constant 0 : i32
    %c0_i32_0 = arith.constant 0 : i32
    %c0_i32_1 = arith.constant 0 : i32
    return %c0_i32, %c0_i32_0 : i32, i32
  }
  func.func @transform_2(%arg0: i32) -> (i32, i32) {
    %c0_i32 = arith.constant 0 : i32
    %c0_i32_0 = arith.constant 0 : i32
    %c0_i32_1 = arith.constant 0 : i32
    return %c0_i32, %c0_i32_0 : i32, i32
  }
  func.func @transform_3(%arg0: i32) -> (i32, i32, i32) {
    %c0_i32 = arith.constant 0 : i32
    %c0_i32_0 = arith.constant 0 : i32
    %c0_i32_1 = arith.constant 0 : i32
    %c0_i32_2 = arith.constant 0 : i32
    return %c0_i32, %c0_i32_0, %c0_i32_1 : i32, i32, i32
  }
  func.func @transform_4(%arg0: i32) -> (i32, i32) {
    %c0_i32 = arith.constant 0 : i32
    %c0_i32_0 = arith.constant 0 : i32
    %c0_i32_1 = arith.constant 0 : i32
    return %c0_i32, %c0_i32_0 : i32, i32
  }
  func.func @transform_5(%arg0: i32) -> (i32, i32, i32) {
    %c0_i32 = arith.constant 0 : i32
    %c0_i32_0 = arith.constant 0 : i32
    %c0_i32_1 = arith.constant 0 : i32
    %c0_i32_2 = arith.constant 0 : i32
    return %c0_i32, %c0_i32_0, %c0_i32_1 : i32, i32, i32
  }
  func.func @transform_6(%arg0: i32) -> (i32, i32) {
    %c0_i32 = arith.constant 0 : i32
    %c0_i32_0 = arith.constant 0 : i32
    %c0_i32_1 = arith.constant 0 : i32
    return %c0_i32, %c0_i32_0 : i32, i32
  }
  func.func @transform_7(%arg0: i32) -> (i32, i32) {
    %c0_i32 = arith.constant 0 : i32
    %c0_i32_0 = arith.constant 0 : i32
    %c0_i32_1 = arith.constant 0 : i32
    return %c0_i32, %c0_i32_0 : i32, i32
  }
  func.func @transform_8(%arg0: i32) -> (i32, i32) {
    %c0_i32 = arith.constant 0 : i32
    %c0_i32_0 = arith.constant 0 : i32
    %c0_i32_1 = arith.constant 0 : i32
    return %c0_i32, %c0_i32_0 : i32, i32
  }
  func.func @transform_9(%arg0: i32) -> (i32, i32) {
    %c0_i32 = arith.constant 0 : i32
    %c0_i32_0 = arith.constant 0 : i32
    %c0_i32_1 = arith.constant 0 : i32
    return %c0_i32, %c0_i32_0 : i32, i32
  }
  func.func @transform_10(%arg0: i32) -> (i32, i32) {
    %c0_i32 = arith.constant 0 : i32
    %c0_i32_0 = arith.constant 0 : i32
    %c0_i32_1 = arith.constant 0 : i32
    return %c0_i32, %c0_i32_0 : i32, i32
  }
  func.func @transform_11(%arg0: i32) -> (i32, i32, i32) {
    %c0_i32 = arith.constant 0 : i32
    %c0_i32_0 = arith.constant 0 : i32
    %c0_i32_1 = arith.constant 0 : i32
    return %arg0, %c0_i32, %c0_i32_0 : i32, i32, i32
  }
}

</mosaic_0001>

<llo_original>
// kernel: net_forward.1
$region0: #{net_forward.1}
  #allocation0 [shape = 'u32[]', space=smem, size = 0x4, offset = 0x4, fixed_abs, tag = 'smem constant byte address 0x4 - core index']
  #allocation1 [shape = 'u32[144,128]{1,0:T(1,128)}', space=vmem, size = 0x12000, scoped, tag = 'internal scratch']
  %s0 = inlined_call_operand.vmem [shape: f32[2,800,75], index: 0, kind: input, shape index: {}]
  %s1 = inlined_call_operand.vmem [shape: f32[75,6], index: 1, kind: input, shape index: {}]
  %s2 = inlined_call_operand.vmem [shape: f32[1,6], index: 2, kind: input, shape index: {}]
  %s3 = inlined_call_operand.vmem [shape: f32[25,6,16], index: 3, kind: input, shape index: {}]
  %s4 = inlined_call_operand.vmem [shape: f32[1,16], index: 4, kind: input, shape index: {}]
  %s5 = inlined_call_operand.vmem [shape: f32[25,16,120], index: 5, kind: input, shape index: {}]
  %s6 = inlined_call_operand.vmem [shape: f32[1,120], index: 6, kind: input, shape index: {}]
  %s7 = inlined_call_operand.vmem [shape: f32[120,84], index: 7, kind: input, shape index: {}]
  %s8 = inlined_call_operand.vmem [shape: f32[1,84], index: 8, kind: input, shape index: {}]
  %s9 = inlined_call_operand.vmem [shape: f32[84,3], index: 9, kind: input, shape index: {}]
  %s10 = inlined_call_operand.vmem [shape: f32[1,3], index: 10, kind: input, shape index: {}]
  %s11 = inlined_call_operand.hbm [shape: f32[2,1,3], index: 11, kind: output, shape index: {}]
  %s12 = sld [smem:[#allocation0]]
  $region77: #{net_forward.1} parent=0
    _
  %s14 = ssub.s32 1, %s12
  %s15 = scalar_select 0, %s14, %s12
  $region1: #{net_forward.1} parent=0
    #allocation2 [shape = 'u8[1024]{0}', space=vmem, size = 0x400, scoped, tag = 'output window, operand 0']
    #allocation3 [shape = 's32[2]{0}', space=sflag, size = 0x8, scoped, tag = 'scoped memory for net_forward.1']
    %16 = vsyncpa [#allocation3], 0
    %s17 = scalar_lea.sflag [#allocation3], 1
    %18 = vsyncpa %s17, 0
    loop: start=0, step=1, limit=4
    $region2: #{net_forward.1} parent=1 // loop_pre_header
      _
    $region3: #{net_forward.1} parent=1 // loop_header
      %s20 = sphi 0, %s24
      %p21 = scmp.ge.s32.totalorder %s20, 4
      %s30 = sphi 0, %s32
      %s33 = sphi 0, %s30
      %s34 = sphi 0, %s33
      %s50 = sphi 0, %s34
      %s54 = sphi 0, %s54
      %s56 = sphi 0, %s54
      %s57 = sphi 0, %s56
      %s71 = sphi 0, %s57
      %s75 = sphi 0, %s75
      %s77 = sphi 0, %s75
      %s78 = sphi 0, %s77
      %s92 = sphi 0, %s78
      %s96 = sphi 0, %s96
      %s98 = sphi 0, %s96
      %s99 = sphi 0, %s98
      %s113 = sphi 0, %s99
      %s117 = sphi 0, %s117
      %s119 = sphi 0, %s117
      %s120 = sphi 0, %s119
      %s134 = sphi 0, %s120
      %s138 = sphi 0, %s138
      %s140 = sphi 0, %s138
      %s141 = sphi 0, %s140
      %s155 = sphi 0, %s141
      %s159 = sphi 0, %s159
      %s161 = sphi 0, %s159
      %s162 = sphi 0, %s161
      %s176 = sphi 0, %s162
      %s180 = sphi 0, %s180
      %s182 = sphi 0, %s180
      %s183 = sphi 0, %s182
      %s197 = sphi 0, %s183
      %s201 = sphi 0, %s201
      %s203 = sphi 0, %s201
      %s204 = sphi 0, %s203
      %s218 = sphi 0, %s204
      %s222 = sphi 0, %s222
      %s224 = sphi 0, %s222
      %s225 = sphi 0, %s224
      %s239 = sphi 0, %s225
      %s243 = sphi 0, %s243
      %s245 = sphi 0, %s243
      %s246 = sphi 0, %s245
      %s260 = sphi 0, %s246
      %s266 = sphi 0, %s268
      %s269 = sphi 0, %s266
      %s270 = sphi 0, %s269
      %s286 = sphi 0, %s270
    $region4: #{net_forward.1} parent=1 // loop_header_branch
      %23 = sbr.rel (%p21) target = $region8
    $region5: #{net_forward.1} parent=1 // loop_body
      %s25 = ssub.s32 %s20, 1
      %s26 = ssub.s32 %s20, 2
      %s27 = sadd.s32 %s20, 1
      %s28 = ssub.s32 %s20, %s27
      %p29 = scmp.eq.s32.totalorder %s28, 0
      %s31 = sadd.s32 %s30, 1
      %s32 = scalar_select %p29, %s30, %s31
      %p35 = pneg %p29
      %p36 = scmp.eq.s32.totalorder %s20, 1
      %p37 = por %p35, %p36
      %p38 = scmp.ne.s32.totalorder %s30, %s33
      %p39 = scmp.eq.s32.totalorder %s20, 0
      %p40 = por %p38, %p39
      %p41 = scmp.ne.s32.totalorder %s30, %s33
      %p42 = scmp.eq.s32.totalorder %s25, 1
      %p43 = por %p41, %p42
      %p44 = scmp.ne.s32.totalorder %s33, %s34
      %p45 = scmp.eq.s32.totalorder %s25, 0
      %p46 = por %p44, %p45
      %p47 = scmp.ne.s32.totalorder %s33, %s34
      %p48 = scmp.eq.s32.totalorder %s26, 1
      %p49 = por %p47, %p48
      %p51 = scmp.ne.s32.totalorder %s34, %s50
      %p52 = scmp.eq.s32.totalorder %s26, 0
      %p53 = por %p51, %p52
      %s55 = sadd.s32 %s54, 1
      %p58 = scmp.eq.s32.totalorder %s20, 1
      %p59 = scmp.ne.s32.totalorder %s54, %s56
      %p60 = scmp.eq.s32.totalorder %s20, 0
      %p61 = por %p59, %p60
      %p62 = scmp.ne.s32.totalorder %s54, %s56
      %p63 = scmp.eq.s32.totalorder %s25, 1
      %p64 = por %p62, %p63
      %p65 = scmp.ne.s32.totalorder %s56, %s57
      %p66 = scmp.eq.s32.totalorder %s25, 0
      %p67 = por %p65, %p66
      %p68 = scmp.ne.s32.totalorder %s56, %s57
      %p69 = scmp.eq.s32.totalorder %s26, 1
      %p70 = por %p68, %p69
      %p72 = scmp.ne.s32.totalorder %s57, %s71
      %p73 = scmp.eq.s32.totalorder %s26, 0
      %p74 = por %p72, %p73
      %s76 = sadd.s32 %s75, 1
      %p79 = scmp.eq.s32.totalorder %s20, 1
      %p80 = scmp.ne.s32.totalorder %s75, %s77
      %p81 = scmp.eq.s32.totalorder %s20, 0
      %p82 = por %p80, %p81
      %p83 = scmp.ne.s32.totalorder %s75, %s77
      %p84 = scmp.eq.s32.totalorder %s25, 1
      %p85 = por %p83, %p84
      %p86 = scmp.ne.s32.totalorder %s77, %s78
      %p87 = scmp.eq.s32.totalorder %s25, 0
      %p88 = por %p86, %p87
      %p89 = scmp.ne.s32.totalorder %s77, %s78
      %p90 = scmp.eq.s32.totalorder %s26, 1
      %p91 = por %p89, %p90
      %p93 = scmp.ne.s32.totalorder %s78, %s92
      %p94 = scmp.eq.s32.totalorder %s26, 0
      %p95 = por %p93, %p94
      %s97 = sadd.s32 %s96, 1
      %p100 = scmp.eq.s32.totalorder %s20, 1
      %p101 = scmp.ne.s32.totalorder %s96, %s98
      %p102 = scmp.eq.s32.totalorder %s20, 0
      %p103 = por %p101, %p102
      %p104 = scmp.ne.s32.totalorder %s96, %s98
      %p105 = scmp.eq.s32.totalorder %s25, 1
      %p106 = por %p104, %p105
      %p107 = scmp.ne.s32.totalorder %s98, %s99
      %p108 = scmp.eq.s32.totalorder %s25, 0
      %p109 = por %p107, %p108
      %p110 = scmp.ne.s32.totalorder %s98, %s99
      %p111 = scmp.eq.s32.totalorder %s26, 1
      %p112 = por %p110, %p111
      %p114 = scmp.ne.s32.totalorder %s99, %s113
      %p115 = scmp.eq.s32.totalorder %s26, 0
      %p116 = por %p114, %p115
      %s118 = sadd.s32 %s117, 1
      %p121 = scmp.eq.s32.totalorder %s20, 1
      %p122 = scmp.ne.s32.totalorder %s117, %s119
      %p123 = scmp.eq.s32.totalorder %s20, 0
      %p124 = por %p122, %p123
      %p125 = scmp.ne.s32.totalorder %s117, %s119
      %p126 = scmp.eq.s32.totalorder %s25, 1
      %p127 = por %p125, %p126
      %p128 = scmp.ne.s32.totalorder %s119, %s120
      %p129 = scmp.eq.s32.totalorder %s25, 0
      %p130 = por %p128, %p129
      %p131 = scmp.ne.s32.totalorder %s119, %s120
      %p132 = scmp.eq.s32.totalorder %s26, 1
      %p133 = por %p131, %p132
      %p135 = scmp.ne.s32.totalorder %s120, %s134
      %p136 = scmp.eq.s32.totalorder %s26, 0
      %p137 = por %p135, %p136
      %s139 = sadd.s32 %s138, 1
      %p142 = scmp.eq.s32.totalorder %s20, 1
      %p143 = scmp.ne.s32.totalorder %s138, %s140
      %p144 = scmp.eq.s32.totalorder %s20, 0
      %p145 = por %p143, %p144
      %p146 = scmp.ne.s32.totalorder %s138, %s140
      %p147 = scmp.eq.s32.totalorder %s25, 1
      %p148 = por %p146, %p147
      %p149 = scmp.ne.s32.totalorder %s140, %s141
      %p150 = scmp.eq.s32.totalorder %s25, 0
      %p151 = por %p149, %p150
      %p152 = scmp.ne.s32.totalorder %s140, %s141
      %p153 = scmp.eq.s32.totalorder %s26, 1
      %p154 = por %p152, %p153
      %p156 = scmp.ne.s32.totalorder %s141, %s155
      %p157 = scmp.eq.s32.totalorder %s26, 0
      %p158 = por %p156, %p157
      %s160 = sadd.s32 %s159, 1
      %p163 = scmp.eq.s32.totalorder %s20, 1
      %p164 = scmp.ne.s32.totalorder %s159, %s161
      %p165 = scmp.eq.s32.totalorder %s20, 0
      %p166 = por %p164, %p165
      %p167 = scmp.ne.s32.totalorder %s159, %s161
      %p168 = scmp.eq.s32.totalorder %s25, 1
      %p169 = por %p167, %p168
      %p170 = scmp.ne.s32.totalorder %s161, %s162
      %p171 = scmp.eq.s32.totalorder %s25, 0
      %p172 = por %p170, %p171
      %p173 = scmp.ne.s32.totalorder %s161, %s162
      %p174 = scmp.eq.s32.totalorder %s26, 1
      %p175 = por %p173, %p174
      %p177 = scmp.ne.s32.totalorder %s162, %s176
      %p178 = scmp.eq.s32.totalorder %s26, 0
      %p179 = por %p177, %p178
      %s181 = sadd.s32 %s180, 1
      %p184 = scmp.eq.s32.totalorder %s20, 1
      %p185 = scmp.ne.s32.totalorder %s180, %s182
      %p186 = scmp.eq.s32.totalorder %s20, 0
      %p187 = por %p185, %p186
      %p188 = scmp.ne.s32.totalorder %s180, %s182
      %p189 = scmp.eq.s32.totalorder %s25, 1
      %p190 = por %p188, %p189
      %p191 = scmp.ne.s32.totalorder %s182, %s183
      %p192 = scmp.eq.s32.totalorder %s25, 0
      %p193 = por %p191, %p192
      %p194 = scmp.ne.s32.totalorder %s182, %s183
      %p195 = scmp.eq.s32.totalorder %s26, 1
      %p196 = por %p194, %p195
      %p198 = scmp.ne.s32.totalorder %s183, %s197
      %p199 = scmp.eq.s32.totalorder %s26, 0
      %p200 = por %p198, %p199
      %s202 = sadd.s32 %s201, 1
      %p205 = scmp.eq.s32.totalorder %s20, 1
      %p206 = scmp.ne.s32.totalorder %s201, %s203
      %p207 = scmp.eq.s32.totalorder %s20, 0
      %p208 = por %p206, %p207
      %p209 = scmp.ne.s32.totalorder %s201, %s203
      %p210 = scmp.eq.s32.totalorder %s25, 1
      %p211 = por %p209, %p210
      %p212 = scmp.ne.s32.totalorder %s203, %s204
      %p213 = scmp.eq.s32.totalorder %s25, 0
      %p214 = por %p212, %p213
      %p215 = scmp.ne.s32.totalorder %s203, %s204
      %p216 = scmp.eq.s32.totalorder %s26, 1
      %p217 = por %p215, %p216
      %p219 = scmp.ne.s32.totalorder %s204, %s218
      %p220 = scmp.eq.s32.totalorder %s26, 0
      %p221 = por %p219, %p220
      %s223 = sadd.s32 %s222, 1
      %p226 = scmp.eq.s32.totalorder %s20, 1
      %p227 = scmp.ne.s32.totalorder %s222, %s224
      %p228 = scmp.eq.s32.totalorder %s20, 0
      %p229 = por %p227, %p228
      %p230 = scmp.ne.s32.totalorder %s222, %s224
      %p231 = scmp.eq.s32.totalorder %s25, 1
      %p232 = por %p230, %p231
      %p233 = scmp.ne.s32.totalorder %s224, %s225
      %p234 = scmp.eq.s32.totalorder %s25, 0
      %p235 = por %p233, %p234
      %p236 = scmp.ne.s32.totalorder %s224, %s225
      %p237 = scmp.eq.s32.totalorder %s26, 1
      %p238 = por %p236, %p237
      %p240 = scmp.ne.s32.totalorder %s225, %s239
      %p241 = scmp.eq.s32.totalorder %s26, 0
      %p242 = por %p240, %p241
      %s244 = sadd.s32 %s243, 1
      %p247 = scmp.eq.s32.totalorder %s20, 1
      %p248 = scmp.ne.s32.totalorder %s243, %s245
      %p249 = scmp.eq.s32.totalorder %s20, 0
      %p250 = por %p248, %p249
      %p251 = scmp.ne.s32.totalorder %s243, %s245
      %p252 = scmp.eq.s32.totalorder %s25, 1
      %p253 = por %p251, %p252
      %p254 = scmp.ne.s32.totalorder %s245, %s246
      %p255 = scmp.eq.s32.totalorder %s25, 0
      %p256 = por %p254, %p255
      %p257 = scmp.ne.s32.totalorder %s245, %s246
      %p258 = scmp.eq.s32.totalorder %s26, 1
      %p259 = por %p257, %p258
      %p261 = scmp.ne.s32.totalorder %s246, %s260
      %p262 = scmp.eq.s32.totalorder %s26, 0
      %p263 = por %p261, %p262
      %s264 = ssub.s32 %s20, %s27
      %p265 = scmp.eq.s32.totalorder %s264, 0
      %s267 = sadd.s32 %s266, 1
      %s268 = scalar_select %p265, %s266, %s267
      %p271 = pneg %p265
      %p272 = scmp.eq.s32.totalorder %s20, 1
      %p273 = por %p271, %p272
      %p274 = scmp.ne.s32.totalorder %s266, %s269
      %p275 = scmp.eq.s32.totalorder %s20, 0
      %p276 = por %p274, %p275
      %p277 = scmp.ne.s32.totalorder %s266, %s269
      %p278 = scmp.eq.s32.totalorder %s25, 1
      %p279 = por %p277, %p278
      %p280 = scmp.ne.s32.totalorder %s269, %s270
      %p281 = scmp.eq.s32.totalorder %s25, 0
      %p282 = por %p280, %p281
      %p283 = scmp.ne.s32.totalorder %s269, %s270
      %p284 = scmp.eq.s32.totalorder %s26, 1
      %p285 = por %p283, %p284
      %p287 = scmp.ne.s32.totalorder %s270, %s286
      %p288 = scmp.eq.s32.totalorder %s26, 0
      %p289 = por %p287, %p288
      %p290 = scmp.le.s32.totalorder 1, %s20
      %p291 = scmp.lt.s32.totalorder %s20, 3
      %p292 = pnand %p290, %p291
      %p293 = pneg %p292
      // Predicated region
      $region9: #{net_forward.1} parent=5 // pred_check
        _
      $region10: #{net_forward.1} parent=5 // pred_check_branch
        %295 = sbr.rel (%p292) target = $region12
      $region11: #{net_forward.1} parent=5 // pred_region
        %s296 = ssub.s32 %s20, 1
        // Predicated region
        $region13: #{net_forward.1} parent=11 // pred_check
          %p297 = pneg %p67
        $region14: #{net_forward.1} parent=11 // pred_check_branch
          %299 = sbr.rel (%p297) target = $region16
        $region15: #{net_forward.1} parent=11 // pred_region
          _
        $region16: #{net_forward.1} parent=11 // pred_fallthru
          _
        // Predicated region
        $region17: #{net_forward.1} parent=11 // pred_check
          %p300 = pneg %p88
        $region18: #{net_forward.1} parent=11 // pred_check_branch
          %302 = sbr.rel (%p300) target = $region20
        $region19: #{net_forward.1} parent=11 // pred_region
          _
        $region20: #{net_forward.1} parent=11 // pred_fallthru
          _
        // Predicated region
        $region21: #{net_forward.1} parent=11 // pred_check
          %p303 = pneg %p109
        $region22: #{net_forward.1} parent=11 // pred_check_branch
          %305 = sbr.rel (%p303) target = $region24
        $region23: #{net_forward.1} parent=11 // pred_region
          _
        $region24: #{net_forward.1} parent=11 // pred_fallthru
          _
        // Predicated region
        $region25: #{net_forward.1} parent=11 // pred_check
          %p306 = pneg %p130
        $region26: #{net_forward.1} parent=11 // pred_check_branch
          %308 = sbr.rel (%p306) target = $region28
        $region27: #{net_forward.1} parent=11 // pred_region
          _
        $region28: #{net_forward.1} parent=11 // pred_fallthru
          _
        // Predicated region
        $region29: #{net_forward.1} parent=11 // pred_check
          %p309 = pneg %p151
        $region30: #{net_forward.1} parent=11 // pred_check_branch
          %311 = sbr.rel (%p309) target = $region32
        $region31: #{net_forward.1} parent=11 // pred_region
          _
        $region32: #{net_forward.1} parent=11 // pred_fallthru
          _
        // Predicated region
        $region33: #{net_forward.1} parent=11 // pred_check
          %p312 = pneg %p172
        $region34: #{net_forward.1} parent=11 // pred_check_branch
          %314 = sbr.rel (%p312) target = $region36
        $region35: #{net_forward.1} parent=11 // pred_region
          _
        $region36: #{net_forward.1} parent=11 // pred_fallthru
          _
        // Predicated region
        $region37: #{net_forward.1} parent=11 // pred_check
          %p315 = pneg %p193
        $region38: #{net_forward.1} parent=11 // pred_check_branch
          %317 = sbr.rel (%p315) target = $region40
        $region39: #{net_forward.1} parent=11 // pred_region
          _
        $region40: #{net_forward.1} parent=11 // pred_fallthru
          _
        // Predicated region
        $region41: #{net_forward.1} parent=11 // pred_check
          %p318 = pneg %p214
        $region42: #{net_forward.1} parent=11 // pred_check_branch
          %320 = sbr.rel (%p318) target = $region44
        $region43: #{net_forward.1} parent=11 // pred_region
          _
        $region44: #{net_forward.1} parent=11 // pred_fallthru
          _
        // Predicated region
        $region45: #{net_forward.1} parent=11 // pred_check
          %p321 = pneg %p235
        $region46: #{net_forward.1} parent=11 // pred_check_branch
          %323 = sbr.rel (%p321) target = $region48
        $region47: #{net_forward.1} parent=11 // pred_region
          _
        $region48: #{net_forward.1} parent=11 // pred_fallthru
          _
        // Predicated region
        $region49: #{net_forward.1} parent=11 // pred_check
          %p324 = pneg %p256
        $region50: #{net_forward.1} parent=11 // pred_check_branch
          %326 = sbr.rel (%p324) target = $region52
        $region51: #{net_forward.1} parent=11 // pred_region
          _
        $region52: #{net_forward.1} parent=11 // pred_fallthru
          _
      $region12: #{net_forward.1} parent=5 // pred_fallthru
        _
      %p327 = scmp.lt.s32.totalorder %s20, 2
      // Predicated region
      $region53: #{net_forward.1} parent=5 // pred_check
        %p328 = pneg %p327
      $region54: #{net_forward.1} parent=5 // pred_check_branch
        %330 = sbr.rel (%p328) target = $region56
      $region55: #{net_forward.1} parent=5 // pred_region
        // Predicated region
        $region57: #{net_forward.1} parent=55 // pred_check
          %p331 = pneg %p40
        $region58: #{net_forward.1} parent=55 // pred_check_branch
          %333 = sbr.rel (%p331) target = $region60
        $region59: #{net_forward.1} parent=55 // pred_region
          %p334 = scmp.lt.s32.totalorder %s20, 1
          %s335 = scalar_select %p334, %s20, 1
          %s336 = smul.addr %s335, 100
          %s337 = smul.addr %s336, 8
          %s338 = scalar_lea.vmem %s0, %s337
        $region60: #{net_forward.1} parent=55 // pred_fallthru
          _
      $region56: #{net_forward.1} parent=5 // pred_fallthru
        _
      %p339 = scmp.le.s32.totalorder 1, %s20
      %p340 = scmp.lt.s32.totalorder %s20, 3
      %p341 = pnand %p339, %p340
      %p342 = pneg %p341
      // Predicated region
      $region61: #{net_forward.1} parent=5 // pred_check
        _
      $region62: #{net_forward.1} parent=5 // pred_check_branch
        %344 = sbr.rel (%p341) target = $region64
      $region63: #{net_forward.1} parent=5 // pred_region
        %s345 = ssub.s32 %s20, 1
        %p346 = scmp.lt.s32.totalorder %s25, 1
        %s347 = scalar_select %p346, %s25, 1
        %s348 = smul.addr %s347, 100
        %s349 = smul.addr %s348, 8
        %s350 = scalar_lea.vmem %s0, %s349
        %p351 = pneg %p46
        %p352 = pneg %p43
        %p353 = pneg %p67
        %p354 = pneg %p64
        %p355 = pneg %p88
        %p356 = pneg %p85
        %p357 = pneg %p109
        %p358 = pneg %p106
        %p359 = pneg %p130
        %p360 = pneg %p127
        %p361 = pneg %p151
        %p362 = pneg %p148
        %p363 = pneg %p172
        %p364 = pneg %p169
        %p365 = pneg %p193
        %p366 = pneg %p190
        %p367 = pneg %p214
        %p368 = pneg %p211
        %p369 = pneg %p235
        %p370 = pneg %p232
        %p371 = pneg %p256
        %p372 = pneg %p253
        %p373 = pneg %p282
        %p374 = pneg %p279
        %s375 = sand.u32 %s269, 1
        %s376 = scalar_lea.sflag [#allocation3], %s375
        %s377 = sand.u32 %s269, 1
        %s378 = scalar_lea.vmem [#allocation2], %s377
        %p379 = scmp.lt.s32.totalorder %s25, 1
        %s380 = scalar_select %p379, %s25, 1
        %s381 = smul.addr %s380, 100
        %s382 = smul.addr %s381, 8
        %s383 = scalar_lea.vmem %s0, %s382
        %v384 = vld [vmem:[%s383] sm:$0xff]
        %v385 = vld [vmem:[%s383 + $0x8] sm:$0xff]
        %v386 = vld [vmem:[%s383 + $0x10] sm:$0xff]
        %v387 = vld [vmem:[%s383 + $0x18] sm:$0xff]
        %v388 = vld [vmem:[%s383 + $0x20] sm:$0xff]
        %v389 = vld [vmem:[%s383 + $0x28] sm:$0xff]
        %v390 = vld [vmem:[%s383 + $0x30] sm:$0xff]
        %v391 = vld [vmem:[%s383 + $0x38] sm:$0xff]
        %v392 = vld [vmem:[%s383 + $0x40] sm:$0xff]
        %v393 = vld [vmem:[%s383 + $0x48] sm:$0xff]
        %v394 = vld [vmem:[%s383 + $0x50] sm:$0xff]
        %v395 = vld [vmem:[%s383 + $0x58] sm:$0xff]
        %v396 = vld [vmem:[%s383 + $0x60] sm:$0xff]
        %v397 = vld [vmem:[%s383 + $0x68] sm:$0xff]
        %v398 = vld [vmem:[%s383 + $0x70] sm:$0xff]
        %v399 = vld [vmem:[%s383 + $0x78] sm:$0xff]
        %v400 = vld [vmem:[%s383 + $0x80] sm:$0xff]
        %v401 = vld [vmem:[%s383 + $0x88] sm:$0xff]
        %v402 = vld [vmem:[%s383 + $0x90] sm:$0xff]
        %v403 = vld [vmem:[%s383 + $0x98] sm:$0xff]
        %v404 = vld [vmem:[%s383 + $0xa0] sm:$0xff]
        %v405 = vld [vmem:[%s383 + $0xa8] sm:$0xff]
        %v406 = vld [vmem:[%s383 + $0xb0] sm:$0xff]
        %v407 = vld [vmem:[%s383 + $0xb8] sm:$0xff]
        %v408 = vld [vmem:[%s383 + $0xc0] sm:$0xff]
        %v409 = vld [vmem:[%s383 + $0xc8] sm:$0xff]
        %v410 = vld [vmem:[%s383 + $0xd0] sm:$0xff]
        %v411 = vld [vmem:[%s383 + $0xd8] sm:$0xff]
        %v412 = vld [vmem:[%s383 + $0xe0] sm:$0xff]
        %v413 = vld [vmem:[%s383 + $0xe8] sm:$0xff]
        %v414 = vld [vmem:[%s383 + $0xf0] sm:$0xff]
        %v415 = vld [vmem:[%s383 + $0xf8] sm:$0xff]
        %v416 = vld [vmem:[%s383 + $0x100] sm:$0xff]
        %v417 = vld [vmem:[%s383 + $0x108] sm:$0xff]
        %v418 = vld [vmem:[%s383 + $0x110] sm:$0xff]
        %v419 = vld [vmem:[%s383 + $0x118] sm:$0xff]
        %v420 = vld [vmem:[%s383 + $0x120] sm:$0xff]
        %v421 = vld [vmem:[%s383 + $0x128] sm:$0xff]
        %v422 = vld [vmem:[%s383 + $0x130] sm:$0xff]
        %v423 = vld [vmem:[%s383 + $0x138] sm:$0xff]
        %v424 = vld [vmem:[%s383 + $0x140] sm:$0xff]
        %v425 = vld [vmem:[%s383 + $0x148] sm:$0xff]
        %v426 = vld [vmem:[%s383 + $0x150] sm:$0xff]
        %v427 = vld [vmem:[%s383 + $0x158] sm:$0xff]
        %v428 = vld [vmem:[%s383 + $0x160] sm:$0xff]
        %v429 = vld [vmem:[%s383 + $0x168] sm:$0xff]
        %v430 = vld [vmem:[%s383 + $0x170] sm:$0xff]
        %v431 = vld [vmem:[%s383 + $0x178] sm:$0xff]
        %v432 = vld [vmem:[%s383 + $0x180] sm:$0xff]
        %v433 = vld [vmem:[%s383 + $0x188] sm:$0xff]
        %v434 = vld [vmem:[%s383 + $0x190] sm:$0xff]
        %v435 = vld [vmem:[%s383 + $0x198] sm:$0xff]
        %v436 = vld [vmem:[%s383 + $0x1a0] sm:$0xff]
        %v437 = vld [vmem:[%s383 + $0x1a8] sm:$0xff]
        %v438 = vld [vmem:[%s383 + $0x1b0] sm:$0xff]
        %v439 = vld [vmem:[%s383 + $0x1b8] sm:$0xff]
        %v440 = vld [vmem:[%s383 + $0x1c0] sm:$0xff]
        %v441 = vld [vmem:[%s383 + $0x1c8] sm:$0xff]
        %v442 = vld [vmem:[%s383 + $0x1d0] sm:$0xff]
        %v443 = vld [vmem:[%s383 + $0x1d8] sm:$0xff]
        %v444 = vld [vmem:[%s383 + $0x1e0] sm:$0xff]
        %v445 = vld [vmem:[%s383 + $0x1e8] sm:$0xff]
        %v446 = vld [vmem:[%s383 + $0x1f0] sm:$0xff]
        %v447 = vld [vmem:[%s383 + $0x1f8] sm:$0xff]
        %v448 = vld [vmem:[%s383 + $0x200] sm:$0xff]
        %v449 = vld [vmem:[%s383 + $0x208] sm:$0xff]
        %v450 = vld [vmem:[%s383 + $0x210] sm:$0xff]
        %v451 = vld [vmem:[%s383 + $0x218] sm:$0xff]
        %v452 = vld [vmem:[%s383 + $0x220] sm:$0xff]
        %v453 = vld [vmem:[%s383 + $0x228] sm:$0xff]
        %v454 = vld [vmem:[%s383 + $0x230] sm:$0xff]
        %v455 = vld [vmem:[%s383 + $0x238] sm:$0xff]
        %v456 = vld [vmem:[%s383 + $0x240] sm:$0xff]
        %v457 = vld [vmem:[%s383 + $0x248] sm:$0xff]
        %v458 = vld [vmem:[%s383 + $0x250] sm:$0xff]
        %v459 = vld [vmem:[%s383 + $0x258] sm:$0xff]
        %v460 = vld [vmem:[%s383 + $0x260] sm:$0xff]
        %v461 = vld [vmem:[%s383 + $0x268] sm:$0xff]
        %v462 = vld [vmem:[%s383 + $0x270] sm:$0xff]
        %v463 = vld [vmem:[%s383 + $0x278] sm:$0xff]
        %v464 = vld [vmem:[%s383 + $0x280] sm:$0xff]
        %v465 = vld [vmem:[%s383 + $0x288] sm:$0xff]
        %v466 = vld [vmem:[%s383 + $0x290] sm:$0xff]
        %v467 = vld [vmem:[%s383 + $0x298] sm:$0xff]
        %v468 = vld [vmem:[%s383 + $0x2a0] sm:$0xff]
        %v469 = vld [vmem:[%s383 + $0x2a8] sm:$0xff]
        %v470 = vld [vmem:[%s383 + $0x2b0] sm:$0xff]
        %v471 = vld [vmem:[%s383 + $0x2b8] sm:$0xff]
        %v472 = vld [vmem:[%s383 + $0x2c0] sm:$0xff]
        %v473 = vld [vmem:[%s383 + $0x2c8] sm:$0xff]
        %v474 = vld [vmem:[%s383 + $0x2d0] sm:$0xff]
        %v475 = vld [vmem:[%s383 + $0x2d8] sm:$0xff]
        %v476 = vld [vmem:[%s383 + $0x2e0] sm:$0xff]
        %v477 = vld [vmem:[%s383 + $0x2e8] sm:$0xff]
        %v478 = vld [vmem:[%s383 + $0x2f0] sm:$0xff]
        %v479 = vld [vmem:[%s383 + $0x2f8] sm:$0xff]
        %v480 = vld [vmem:[%s383 + $0x300] sm:$0xff]
        %v481 = vld [vmem:[%s383 + $0x308] sm:$0xff]
        %v482 = vld [vmem:[%s383 + $0x310] sm:$0xff]
        %v483 = vld [vmem:[%s383 + $0x318] sm:$0xff]
        %v484 = vld [vmem:[%s1] sm:$0xff]
        %v485 = vld [vmem:[%s1 + $0x8] sm:$0xff]
        %v486 = vld [vmem:[%s1 + $0x10] sm:$0xff]
        %v487 = vld [vmem:[%s1 + $0x18] sm:$0xff]
        %v488 = vld [vmem:[%s1 + $0x20] sm:$0xff]
        %v489 = vld [vmem:[%s1 + $0x28] sm:$0xff]
        %v490 = vld [vmem:[%s1 + $0x30] sm:$0xff]
        %v491 = vld [vmem:[%s1 + $0x38] sm:$0xff]
        %v492 = vld [vmem:[%s1 + $0x40] sm:$0xff]
        %v493 = vld [vmem:[%s1 + $0x48] sm:$0x7]
        %v494 = vld [vmem:[%s2] sm:$0x1]
        %v496 = vlaneseq
        %v497 = vshrl.u32 %v496, 7
        %v498 = vsub.s32 0, %v497
        %v499 = vrot.slane %v494, %v498
        %vm501 = vcmask 613376
        %v503 = vsel %vm501, %v384, 0
        %v506 = vsel %vm501, %v385, 0
        %v509 = vsel %vm501, %v386, 0
        %v512 = vsel %vm501, %v387, 0
        %v515 = vsel %vm501, %v388, 0
        %v518 = vsel %vm501, %v389, 0
        %v521 = vsel %vm501, %v390, 0
        %v524 = vsel %vm501, %v391, 0
        %v527 = vsel %vm501, %v392, 0
        %v530 = vsel %vm501, %v393, 0
        %v533 = vsel %vm501, %v394, 0
        %v536 = vsel %vm501, %v395, 0
        %v539 = vsel %vm501, %v396, 0
        %v542 = vsel %vm501, %v397, 0
        %v545 = vsel %vm501, %v398, 0
        %v548 = vsel %vm501, %v399, 0
        %v551 = vsel %vm501, %v400, 0
        %v554 = vsel %vm501, %v401, 0
        %v557 = vsel %vm501, %v402, 0
        %v560 = vsel %vm501, %v403, 0
        %v563 = vsel %vm501, %v404, 0
        %v566 = vsel %vm501, %v405, 0
        %v569 = vsel %vm501, %v406, 0
        %v572 = vsel %vm501, %v407, 0
        %v575 = vsel %vm501, %v408, 0
        %v578 = vsel %vm501, %v409, 0
        %v581 = vsel %vm501, %v410, 0
        %v584 = vsel %vm501, %v411, 0
        %v587 = vsel %vm501, %v412, 0
        %v590 = vsel %vm501, %v413, 0
        %v593 = vsel %vm501, %v414, 0
        %v596 = vsel %vm501, %v415, 0
        %v599 = vsel %vm501, %v416, 0
        %v602 = vsel %vm501, %v417, 0
        %v605 = vsel %vm501, %v418, 0
        %v608 = vsel %vm501, %v419, 0
        %v611 = vsel %vm501, %v420, 0
        %v614 = vsel %vm501, %v421, 0
        %v617 = vsel %vm501, %v422, 0
        %v620 = vsel %vm501, %v423, 0
        %v623 = vsel %vm501, %v424, 0
        %v626 = vsel %vm501, %v425, 0
        %v629 = vsel %vm501, %v426, 0
        %v632 = vsel %vm501, %v427, 0
        %v635 = vsel %vm501, %v428, 0
        %v638 = vsel %vm501, %v429, 0
        %v641 = vsel %vm501, %v430, 0
        %v644 = vsel %vm501, %v431, 0
        %v647 = vsel %vm501, %v432, 0
        %v650 = vsel %vm501, %v433, 0
        %v653 = vsel %vm501, %v434, 0
        %v656 = vsel %vm501, %v435, 0
        %v659 = vsel %vm501, %v436, 0
        %v662 = vsel %vm501, %v437, 0
        %v665 = vsel %vm501, %v438, 0
        %v668 = vsel %vm501, %v439, 0
        %v671 = vsel %vm501, %v440, 0
        %v674 = vsel %vm501, %v441, 0
        %v677 = vsel %vm501, %v442, 0
        %v680 = vsel %vm501, %v443, 0
        %v683 = vsel %vm501, %v444, 0
        %v686 = vsel %vm501, %v445, 0
        %v689 = vsel %vm501, %v446, 0
        %v692 = vsel %vm501, %v447, 0
        %v695 = vsel %vm501, %v448, 0
        %v698 = vsel %vm501, %v449, 0
        %v701 = vsel %vm501, %v450, 0
        %v704 = vsel %vm501, %v451, 0
        %v707 = vsel %vm501, %v452, 0
        %v710 = vsel %vm501, %v453, 0
        %v713 = vsel %vm501, %v454, 0
        %v716 = vsel %vm501, %v455, 0
        %v719 = vsel %vm501, %v456, 0
        %v722 = vsel %vm501, %v457, 0
        %v725 = vsel %vm501, %v458, 0
        %v728 = vsel %vm501, %v459, 0
        %v731 = vsel %vm501, %v460, 0
        %v734 = vsel %vm501, %v461, 0
        %v737 = vsel %vm501, %v462, 0
        %v740 = vsel %vm501, %v463, 0
        %v743 = vsel %vm501, %v464, 0
        %v746 = vsel %vm501, %v465, 0
        %v749 = vsel %vm501, %v466, 0
        %v752 = vsel %vm501, %v467, 0
        %v755 = vsel %vm501, %v468, 0
        %v758 = vsel %vm501, %v469, 0
        %v761 = vsel %vm501, %v470, 0
        %v764 = vsel %vm501, %v471, 0
        %v767 = vsel %vm501, %v472, 0
        %v770 = vsel %vm501, %v473, 0
        %v773 = vsel %vm501, %v474, 0
        %v776 = vsel %vm501, %v475, 0
        %v779 = vsel %vm501, %v476, 0
        %v782 = vsel %vm501, %v477, 0
        %v785 = vsel %vm501, %v478, 0
        %v788 = vsel %vm501, %v479, 0
        %v791 = vsel %vm501, %v480, 0
        %v794 = vsel %vm501, %v481, 0
        %v797 = vsel %vm501, %v482, 0
        %v800 = vsel %vm501, %v483, 0
        %vm802 = vcmask 1042432
        %v804 = vsel %vm802, %v493, 0
        %806 = vmatprep.subr.mxu0 0.0
        %807 = vmatpush1.msra.mxu0 %v484
        %808 = vmatprep.subr.mxu0 0.0
        %809 = vmatpush1.msra.mxu0 %v485
        %810 = vmatprep.subr.mxu0 0.0
        %811 = vmatpush1.msra.mxu0 %v486
        %812 = vmatprep.subr.mxu0 0.0
        %813 = vmatpush1.msra.mxu0 %v487
        %814 = vmatprep.subr.mxu0 0.0
        %815 = vmatpush1.msra.mxu0 %v488
        %816 = vmatprep.subr.mxu0 0.0
        %817 = vmatpush1.msra.mxu0 %v489
        %818 = vmatprep.subr.mxu0 0.0
        %819 = vmatpush1.msra.mxu0 %v490
        %820 = vmatprep.subr.mxu0 0.0
        %821 = vmatpush1.msra.mxu0 %v491
        %822 = vmatprep.subr.mxu0 0.0
        %823 = vmatpush1.msra.mxu0 %v492
        %824 = vmatprep.subr.mxu0 0.0
        %825 = vmatpush1.msra.mxu0 %v804
        %826 = vmatprep.subr.mxu0 0.0
        %827 = vmatpush1.msra.mxu0 0.0
        %828 = vmatprep.subr.mxu0 0.0
        %829 = vmatpush1.msra.mxu0 0.0
        %830 = vmatprep.subr.mxu0 0.0
        %831 = vmatpush1.msra.mxu0 0.0
        %832 = vmatprep.subr.mxu0 0.0
        %833 = vmatpush1.msra.mxu0 0.0
        %834 = vmatprep.subr.mxu0 0.0
        %835 = vmatpush1.msra.mxu0 0.0
        %836 = vmatprep.subr.mxu0 0.0
        %837 = vmatpush1.msra.mxu0 0.0
        %838 = vmatprep.subr.mxu0 0.0
        %839 = vmatpush1.msra.mxu0 0.0
        %840 = vmatprep.subr.mxu0 0.0
        %841 = vmatpush1.msra.mxu0 0.0
        %842 = vmatprep.subr.mxu0 0.0
        %843 = vmatpush1.msra.mxu0 0.0
        %844 = vmatprep.subr.mxu0 0.0
        %845 = vmatpush1.msra.mxu0 0.0
        %846 = vmatprep.subr.mxu0 0.0
        %847 = vmatpush1.msra.mxu0 0.0
        %848 = vmatprep.subr.mxu0 0.0
        %849 = vmatpush1.msra.mxu0 0.0
        %850 = vmatprep.subr.mxu0 0.0
        %851 = vmatpush1.msra.mxu0 0.0
        %852 = vmatprep.subr.mxu0 0.0
        %853 = vmatpush1.msra.mxu0 0.0
        %854 = vmatprep.subr.mxu0 0.0
        %855 = vmatpush1.msra.mxu0 0.0
        %856 = vmatprep.subr.mxu0 0.0
        %857 = vmatpush1.msra.mxu0 0.0
        %858 = vmatprep.subr.mxu0 0.0
        %859 = vmatpush1.msra.mxu0 0.0
        %860 = vmatprep.subr.mxu0 0.0
        %861 = vmatpush1.msra.mxu0 0.0
        %862 = vmatprep.subr.mxu0 0.0
        %863 = vmatpush1.msra.mxu0 0.0
        %864 = vmatprep.subr.mxu0 0.0
        %865 = vmatpush1.msra.mxu0 0.0
        %866 = vmatprep.subr.mxu0 0.0
        %867 = vmatpush1.msra.mxu0 0.0
        %868 = vmatprep.subr.mxu0 0.0
        %869 = vmatpush1.msra.mxu0 0.0
        %870 = vmatprep.mubr.f32.mxu0 0.0
        %871 = vmatmul.mubr.f32.gmra.mrb[0].mxu0 %v503
        %v872 = vpop.f32.mrb[0].mxu0
        %v873 = vadd.f32 %v499, %v872
        %v874 = vpop.f32.mrb[0].mxu0
        %875 = vmatprep.mubr.f32.mxu0 0.0
        %876 = vmatmul.mubr.f32.gmra.mrb[0].mxu0 %v506
        %v877 = vpop.f32.mrb[0].mxu0
        %v878 = vadd.f32 %v499, %v877
        %v879 = vpop.f32.mrb[0].mxu0
        %880 = vmatprep.mubr.f32.mxu0 0.0
        %881 = vmatmul.mubr.f32.gmra.mrb[0].mxu0 %v509
        %v882 = vpop.f32.mrb[0].mxu0
        %v883 = vadd.f32 %v499, %v882
        %v884 = vpop.f32.mrb[0].mxu0
        %885 = vmatprep.mubr.f32.mxu0 0.0
        %886 = vmatmul.mubr.f32.gmra.mrb[0].mxu0 %v512
        %v887 = vpop.f32.mrb[0].mxu0
        %v888 = vadd.f32 %v499, %v887
        %v889 = vpop.f32.mrb[0].mxu0
        %890 = vmatprep.mubr.f32.mxu0 0.0
        %891 = vmatmul.mubr.f32.gmra.mrb[0].mxu0 %v515
        %v892 = vpop.f32.mrb[0].mxu0
        %v893 = vadd.f32 %v499, %v892
        %v894 = vpop.f32.mrb[0].mxu0
        %895 = vmatprep.mubr.f32.mxu0 0.0
        %896 = vmatmul.mubr.f32.gmra.mrb[0].mxu0 %v518
        %v897 = vpop.f32.mrb[0].mxu0
        %v898 = vadd.f32 %v499, %v897
        %v899 = vpop.f32.mrb[0].mxu0
        %900 = vmatprep.mubr.f32.mxu0 0.0
        %901 = vmatmul.mubr.f32.gmra.mrb[0].mxu0 %v521
        %v902 = vpop.f32.mrb[0].mxu0
        %v903 = vadd.f32 %v499, %v902
        %v904 = vpop.f32.mrb[0].mxu0
        %905 = vmatprep.mubr.f32.mxu0 0.0
        %906 = vmatmul.mubr.f32.gmra.mrb[0].mxu0 %v524
        %v907 = vpop.f32.mrb[0].mxu0
        %v908 = vadd.f32 %v499, %v907
        %v909 = vpop.f32.mrb[0].mxu0
        %910 = vmatprep.mubr.f32.mxu0 0.0
        %911 = vmatmul.mubr.f32.gmra.mrb[0].mxu0 %v527
        %v912 = vpop.f32.mrb[0].mxu0
        %v913 = vadd.f32 %v499, %v912
        %v914 = vpop.f32.mrb[0].mxu0
        %915 = vmatprep.mubr.f32.mxu0 0.0
        %916 = vmatmul.mubr.f32.gmra.mrb[0].mxu0 %v530
        %v917 = vpop.f32.mrb[0].mxu0
        %v918 = vadd.f32 %v499, %v917
        %v919 = vpop.f32.mrb[0].mxu0
        %920 = vmatprep.mubr.f32.mxu0 0.0
        %921 = vmatmul.mubr.f32.gmra.mrb[0].mxu0 %v533
        %v922 = vpop.f32.mrb[0].mxu0
        %v923 = vadd.f32 %v499, %v922
        %v924 = vpop.f32.mrb[0].mxu0
        %925 = vmatprep.mubr.f32.mxu0 0.0
        %926 = vmatmul.mubr.f32.gmra.mrb[0].mxu0 %v536
        %v927 = vpop.f32.mrb[0].mxu0
        %v928 = vadd.f32 %v499, %v927
        %v929 = vpop.f32.mrb[0].mxu0
        %930 = vmatprep.mubr.f32.mxu0 0.0
        %931 = vmatmul.mubr.f32.gmra.mrb[0].mxu0 %v539
        %v932 = vpop.f32.mrb[0].mxu0
        %v933 = vadd.f32 %v499, %v932
        %v934 = vpop.f32.mrb[0].mxu0
        %935 = vmatprep.mubr.f32.mxu0 0.0
        %936 = vmatmul.mubr.f32.gmra.mrb[0].mxu0 %v542
        %v937 = vpop.f32.mrb[0].mxu0
        %v938 = vadd.f32 %v499, %v937
        %v939 = vpop.f32.mrb[0].mxu0
        %940 = vmatprep.mubr.f32.mxu0 0.0
        %941 = vmatmul.mubr.f32.gmra.mrb[0].mxu0 %v545
        %v942 = vpop.f32.mrb[0].mxu0
        %v943 = vadd.f32 %v499, %v942
        %v944 = vpop.f32.mrb[0].mxu0
        %945 = vmatprep.mubr.f32.mxu0 0.0
        %946 = vmatmul.mubr.f32.gmra.mrb[0].mxu0 %v548
        %v947 = vpop.f32.mrb[0].mxu0
        %v948 = vadd.f32 %v499, %v947
        %v949 = vpop.f32.mrb[0].mxu0
        %950 = vmatprep.mubr.f32.mxu0 0.0
        %951 = vmatmul.mubr.f32.gmra.mrb[0].mxu0 %v551
        %v952 = vpop.f32.mrb[0].mxu0
        %v953 = vadd.f32 %v499, %v952
        %v954 = vpop.f32.mrb[0].mxu0
        %955 = vmatprep.mubr.f32.mxu0 0.0
        %956 = vmatmul.mubr.f32.gmra.mrb[0].mxu0 %v554
        %v957 = vpop.f32.mrb[0].mxu0
        %v958 = vadd.f32 %v499, %v957
        %v959 = vpop.f32.mrb[0].mxu0
        %960 = vmatprep.mubr.f32.mxu0 0.0
        %961 = vmatmul.mubr.f32.gmra.mrb[0].mxu0 %v557
        %v962 = vpop.f32.mrb[0].mxu0
        %v963 = vadd.f32 %v499, %v962
        %v964 = vpop.f32.mrb[0].mxu0
        %965 = vmatprep.mubr.f32.mxu0 0.0
        %966 = vmatmul.mubr.f32.gmra.mrb[0].mxu0 %v560
        %v967 = vpop.f32.mrb[0].mxu0
        %v968 = vadd.f32 %v499, %v967
        %v969 = vpop.f32.mrb[0].mxu0
        %970 = vmatprep.mubr.f32.mxu0 0.0
        %971 = vmatmul.mubr.f32.gmra.mrb[0].mxu0 %v563
        %v972 = vpop.f32.mrb[0].mxu0
        %v973 = vadd.f32 %v499, %v972
        %v974 = vpop.f32.mrb[0].mxu0
        %975 = vmatprep.mubr.f32.mxu0 0.0
        %976 = vmatmul.mubr.f32.gmra.mrb[0].mxu0 %v566
        %v977 = vpop.f32.mrb[0].mxu0
        %v978 = vadd.f32 %v499, %v977
        %v979 = vpop.f32.mrb[0].mxu0
        %980 = vmatprep.mubr.f32.mxu0 0.0
        %981 = vmatmul.mubr.f32.gmra.mrb[0].mxu0 %v569
        %v982 = vpop.f32.mrb[0].mxu0
        %v983 = vadd.f32 %v499, %v982
        %v984 = vpop.f32.mrb[0].mxu0
        %985 = vmatprep.mubr.f32.mxu0 0.0
        %986 = vmatmul.mubr.f32.gmra.mrb[0].mxu0 %v572
        %v987 = vpop.f32.mrb[0].mxu0
        %v988 = vadd.f32 %v499, %v987
        %v989 = vpop.f32.mrb[0].mxu0
        %990 = vmatprep.mubr.f32.mxu0 0.0
        %991 = vmatmul.mubr.f32.gmra.mrb[0].mxu0 %v575
        %v992 = vpop.f32.mrb[0].mxu0
        %v993 = vadd.f32 %v499, %v992
        %v994 = vpop.f32.mrb[0].mxu0
        %995 = vmatprep.mubr.f32.mxu0 0.0
        %996 = vmatmul.mubr.f32.gmra.mrb[0].mxu0 %v578
        %v997 = vpop.f32.mrb[0].mxu0
        %v998 = vadd.f32 %v499, %v997
        %v999 = vpop.f32.mrb[0].mxu0
        %1000 = vmatprep.mubr.f32.mxu0 0.0
        %1001 = vmatmul.mubr.f32.gmra.mrb[0].mxu0 %v581
        %v1002 = vpop.f32.mrb[0].mxu0
        %v1003 = vadd.f32 %v499, %v1002
        %v1004 = vpop.f32.mrb[0].mxu0
        %1005 = vmatprep.mubr.f32.mxu0 0.0
        %1006 = vmatmul.mubr.f32.gmra.mrb[0].mxu0 %v584
        %v1007 = vpop.f32.mrb[0].mxu0
        %v1008 = vadd.f32 %v499, %v1007
        %v1009 = vpop.f32.mrb[0].mxu0
        %1010 = vmatprep.mubr.f32.mxu0 0.0
        %1011 = vmatmul.mubr.f32.gmra.mrb[0].mxu0 %v587
        %v1012 = vpop.f32.mrb[0].mxu0
        %v1013 = vadd.f32 %v499, %v1012
        %v1014 = vpop.f32.mrb[0].mxu0
        %1015 = vmatprep.mubr.f32.mxu0 0.0
        %1016 = vmatmul.mubr.f32.gmra.mrb[0].mxu0 %v590
        %v1017 = vpop.f32.mrb[0].mxu0
        %v1018 = vadd.f32 %v499, %v1017
        %v1019 = vpop.f32.mrb[0].mxu0
        %1020 = vmatprep.mubr.f32.mxu0 0.0
        %1021 = vmatmul.mubr.f32.gmra.mrb[0].mxu0 %v593
        %v1022 = vpop.f32.mrb[0].mxu0
        %v1023 = vadd.f32 %v499, %v1022
        %v1024 = vpop.f32.mrb[0].mxu0
        %1025 = vmatprep.mubr.f32.mxu0 0.0
        %1026 = vmatmul.mubr.f32.gmra.mrb[0].mxu0 %v596
        %v1027 = vpop.f32.mrb[0].mxu0
        %v1028 = vadd.f32 %v499, %v1027
        %v1029 = vpop.f32.mrb[0].mxu0
        %1030 = vmatprep.mubr.f32.mxu0 0.0
        %1031 = vmatmul.mubr.f32.gmra.mrb[0].mxu0 %v599
        %v1032 = vpop.f32.mrb[0].mxu0
        %v1033 = vadd.f32 %v499, %v1032
        %v1034 = vpop.f32.mrb[0].mxu0
        %1035 = vmatprep.mubr.f32.mxu0 0.0
        %1036 = vmatmul.mubr.f32.gmra.mrb[0].mxu0 %v602
        %v1037 = vpop.f32.mrb[0].mxu0
        %v1038 = vadd.f32 %v499, %v1037
        %v1039 = vpop.f32.mrb[0].mxu0
        %1040 = vmatprep.mubr.f32.mxu0 0.0
        %1041 = vmatmul.mubr.f32.gmra.mrb[0].mxu0 %v605
        %v1042 = vpop.f32.mrb[0].mxu0
        %v1043 = vadd.f32 %v499, %v1042
        %v1044 = vpop.f32.mrb[0].mxu0
        %1045 = vmatprep.mubr.f32.mxu0 0.0
        %1046 = vmatmul.mubr.f32.gmra.mrb[0].mxu0 %v608
        %v1047 = vpop.f32.mrb[0].mxu0
        %v1048 = vadd.f32 %v499, %v1047
        %v1049 = vpop.f32.mrb[0].mxu0
        %1050 = vmatprep.mubr.f32.mxu0 0.0
        %1051 = vmatmul.mubr.f32.gmra.mrb[0].mxu0 %v611
        %v1052 = vpop.f32.mrb[0].mxu0
        %v1053 = vadd.f32 %v499, %v1052
        %v1054 = vpop.f32.mrb[0].mxu0
        %1055 = vmatprep.mubr.f32.mxu0 0.0
        %1056 = vmatmul.mubr.f32.gmra.mrb[0].mxu0 %v614
        %v1057 = vpop.f32.mrb[0].mxu0
        %v1058 = vadd.f32 %v499, %v1057
        %v1059 = vpop.f32.mrb[0].mxu0
        %1060 = vmatprep.mubr.f32.mxu0 0.0
        %1061 = vmatmul.mubr.f32.gmra.mrb[0].mxu0 %v617
        %v1062 = vpop.f32.mrb[0].mxu0
        %v1063 = vadd.f32 %v499, %v1062
        %v1064 = vpop.f32.mrb[0].mxu0
        %1065 = vmatprep.mubr.f32.mxu0 0.0
        %1066 = vmatmul.mubr.f32.gmra.mrb[0].mxu0 %v620
        %v1067 = vpop.f32.mrb[0].mxu0
        %v1068 = vadd.f32 %v499, %v1067
        %v1069 = vpop.f32.mrb[0].mxu0
        %1070 = vmatprep.mubr.f32.mxu0 0.0
        %1071 = vmatmul.mubr.f32.gmra.mrb[0].mxu0 %v623
        %v1072 = vpop.f32.mrb[0].mxu0
        %v1073 = vadd.f32 %v499, %v1072
        %v1074 = vpop.f32.mrb[0].mxu0
        %1075 = vmatprep.mubr.f32.mxu0 0.0
        %1076 = vmatmul.mubr.f32.gmra.mrb[0].mxu0 %v626
        %v1077 = vpop.f32.mrb[0].mxu0
        %v1078 = vadd.f32 %v499, %v1077
        %v1079 = vpop.f32.mrb[0].mxu0
        %1080 = vmatprep.mubr.f32.mxu0 0.0
        %1081 = vmatmul.mubr.f32.gmra.mrb[0].mxu0 %v629
        %v1082 = vpop.f32.mrb[0].mxu0
        %v1083 = vadd.f32 %v499, %v1082
        %v1084 = vpop.f32.mrb[0].mxu0
        %1085 = vmatprep.mubr.f32.mxu0 0.0
        %1086 = vmatmul.mubr.f32.gmra.mrb[0].mxu0 %v632
        %v1087 = vpop.f32.mrb[0].mxu0
        %v1088 = vadd.f32 %v499, %v1087
        %v1089 = vpop.f32.mrb[0].mxu0
        %1090 = vmatprep.mubr.f32.mxu0 0.0
        %1091 = vmatmul.mubr.f32.gmra.mrb[0].mxu0 %v635
        %v1092 = vpop.f32.mrb[0].mxu0
        %v1093 = vadd.f32 %v499, %v1092
        %v1094 = vpop.f32.mrb[0].mxu0
        %1095 = vmatprep.mubr.f32.mxu0 0.0
        %1096 = vmatmul.mubr.f32.gmra.mrb[0].mxu0 %v638
        %v1097 = vpop.f32.mrb[0].mxu0
        %v1098 = vadd.f32 %v499, %v1097
        %v1099 = vpop.f32.mrb[0].mxu0
        %1100 = vmatprep.mubr.f32.mxu0 0.0
        %1101 = vmatmul.mubr.f32.gmra.mrb[0].mxu0 %v641
        %v1102 = vpop.f32.mrb[0].mxu0
        %v1103 = vadd.f32 %v499, %v1102
        %v1104 = vpop.f32.mrb[0].mxu0
        %1105 = vmatprep.mubr.f32.mxu0 0.0
        %1106 = vmatmul.mubr.f32.gmra.mrb[0].mxu0 %v644
        %v1107 = vpop.f32.mrb[0].mxu0
        %v1108 = vadd.f32 %v499, %v1107
        %v1109 = vpop.f32.mrb[0].mxu0
        %1110 = vmatprep.mubr.f32.mxu0 0.0
        %1111 = vmatmul.mubr.f32.gmra.mrb[0].mxu0 %v647
        %v1112 = vpop.f32.mrb[0].mxu0
        %v1113 = vadd.f32 %v499, %v1112
        %v1114 = vpop.f32.mrb[0].mxu0
        %1115 = vmatprep.mubr.f32.mxu0 0.0
        %1116 = vmatmul.mubr.f32.gmra.mrb[0].mxu0 %v650
        %v1117 = vpop.f32.mrb[0].mxu0
        %v1118 = vadd.f32 %v499, %v1117
        %v1119 = vpop.f32.mrb[0].mxu0
        %1120 = vmatprep.mubr.f32.mxu0 0.0
        %1121 = vmatmul.mubr.f32.gmra.mrb[0].mxu0 %v653
        %v1122 = vpop.f32.mrb[0].mxu0
        %v1123 = vadd.f32 %v499, %v1122
        %v1124 = vpop.f32.mrb[0].mxu0
        %1125 = vmatprep.mubr.f32.mxu0 0.0
        %1126 = vmatmul.mubr.f32.gmra.mrb[0].mxu0 %v656
        %v1127 = vpop.f32.mrb[0].mxu0
        %v1128 = vadd.f32 %v499, %v1127
        %v1129 = vpop.f32.mrb[0].mxu0
        %1130 = vmatprep.mubr.f32.mxu0 0.0
        %1131 = vmatmul.mubr.f32.gmra.mrb[0].mxu0 %v659
        %v1132 = vpop.f32.mrb[0].mxu0
        %v1133 = vadd.f32 %v499, %v1132
        %v1134 = vpop.f32.mrb[0].mxu0
        %1135 = vmatprep.mubr.f32.mxu0 0.0
        %1136 = vmatmul.mubr.f32.gmra.mrb[0].mxu0 %v662
        %v1137 = vpop.f32.mrb[0].mxu0
        %v1138 = vadd.f32 %v499, %v1137
        %v1139 = vpop.f32.mrb[0].mxu0
        %1140 = vmatprep.mubr.f32.mxu0 0.0
        %1141 = vmatmul.mubr.f32.gmra.mrb[0].mxu0 %v665
        %v1142 = vpop.f32.mrb[0].mxu0
        %v1143 = vadd.f32 %v499, %v1142
        %v1144 = vpop.f32.mrb[0].mxu0
        %1145 = vmatprep.mubr.f32.mxu0 0.0
        %1146 = vmatmul.mubr.f32.gmra.mrb[0].mxu0 %v668
        %v1147 = vpop.f32.mrb[0].mxu0
        %v1148 = vadd.f32 %v499, %v1147
        %v1149 = vpop.f32.mrb[0].mxu0
        %1150 = vmatprep.mubr.f32.mxu0 0.0
        %1151 = vmatmul.mubr.f32.gmra.mrb[0].mxu0 %v671
        %v1152 = vpop.f32.mrb[0].mxu0
        %v1153 = vadd.f32 %v499, %v1152
        %v1154 = vpop.f32.mrb[0].mxu0
        %1155 = vmatprep.mubr.f32.mxu0 0.0
        %1156 = vmatmul.mubr.f32.gmra.mrb[0].mxu0 %v674
        %v1157 = vpop.f32.mrb[0].mxu0
        %v1158 = vadd.f32 %v499, %v1157
        %v1159 = vpop.f32.mrb[0].mxu0
        %1160 = vmatprep.mubr.f32.mxu0 0.0
        %1161 = vmatmul.mubr.f32.gmra.mrb[0].mxu0 %v677
        %v1162 = vpop.f32.mrb[0].mxu0
        %v1163 = vadd.f32 %v499, %v1162
        %v1164 = vpop.f32.mrb[0].mxu0
        %1165 = vmatprep.mubr.f32.mxu0 0.0
        %1166 = vmatmul.mubr.f32.gmra.mrb[0].mxu0 %v680
        %v1167 = vpop.f32.mrb[0].mxu0
        %v1168 = vadd.f32 %v499, %v1167
        %v1169 = vpop.f32.mrb[0].mxu0
        %1170 = vmatprep.mubr.f32.mxu0 0.0
        %1171 = vmatmul.mubr.f32.gmra.mrb[0].mxu0 %v683
        %v1172 = vpop.f32.mrb[0].mxu0
        %v1173 = vadd.f32 %v499, %v1172
        %v1174 = vpop.f32.mrb[0].mxu0
        %1175 = vmatprep.mubr.f32.mxu0 0.0
        %1176 = vmatmul.mubr.f32.gmra.mrb[0].mxu0 %v686
        %v1177 = vpop.f32.mrb[0].mxu0
        %v1178 = vadd.f32 %v499, %v1177
        %v1179 = vpop.f32.mrb[0].mxu0
        %1180 = vmatprep.mubr.f32.mxu0 0.0
        %1181 = vmatmul.mubr.f32.gmra.mrb[0].mxu0 %v689
        %v1182 = vpop.f32.mrb[0].mxu0
        %v1183 = vadd.f32 %v499, %v1182
        %v1184 = vpop.f32.mrb[0].mxu0
        %1185 = vmatprep.mubr.f32.mxu0 0.0
        %1186 = vmatmul.mubr.f32.gmra.mrb[0].mxu0 %v692
        %v1187 = vpop.f32.mrb[0].mxu0
        %v1188 = vadd.f32 %v499, %v1187
        %v1189 = vpop.f32.mrb[0].mxu0
        %1190 = vmatprep.mubr.f32.mxu0 0.0
        %1191 = vmatmul.mubr.f32.gmra.mrb[0].mxu0 %v695
        %v1192 = vpop.f32.mrb[0].mxu0
        %v1193 = vadd.f32 %v499, %v1192
        %v1194 = vpop.f32.mrb[0].mxu0
        %1195 = vmatprep.mubr.f32.mxu0 0.0
        %1196 = vmatmul.mubr.f32.gmra.mrb[0].mxu0 %v698
        %v1197 = vpop.f32.mrb[0].mxu0
        %v1198 = vadd.f32 %v499, %v1197
        %v1199 = vpop.f32.mrb[0].mxu0
        %1200 = vmatprep.mubr.f32.mxu0 0.0
        %1201 = vmatmul.mubr.f32.gmra.mrb[0].mxu0 %v701
        %v1202 = vpop.f32.mrb[0].mxu0
        %v1203 = vadd.f32 %v499, %v1202
        %v1204 = vpop.f32.mrb[0].mxu0
        %1205 = vmatprep.mubr.f32.mxu0 0.0
        %1206 = vmatmul.mubr.f32.gmra.mrb[0].mxu0 %v704
        %v1207 = vpop.f32.mrb[0].mxu0
        %v1208 = vadd.f32 %v499, %v1207
        %v1209 = vpop.f32.mrb[0].mxu0
        %1210 = vmatprep.mubr.f32.mxu0 0.0
        %1211 = vmatmul.mubr.f32.gmra.mrb[0].mxu0 %v707
        %v1212 = vpop.f32.mrb[0].mxu0
        %v1213 = vadd.f32 %v499, %v1212
        %v1214 = vpop.f32.mrb[0].mxu0
        %1215 = vmatprep.mubr.f32.mxu0 0.0
        %1216 = vmatmul.mubr.f32.gmra.mrb[0].mxu0 %v710
        %v1217 = vpop.f32.mrb[0].mxu0
        %v1218 = vadd.f32 %v499, %v1217
        %v1219 = vpop.f32.mrb[0].mxu0
        %1220 = vmatprep.mubr.f32.mxu0 0.0
        %1221 = vmatmul.mubr.f32.gmra.mrb[0].mxu0 %v713
        %v1222 = vpop.f32.mrb[0].mxu0
        %v1223 = vadd.f32 %v499, %v1222
        %v1224 = vpop.f32.mrb[0].mxu0
        %1225 = vmatprep.mubr.f32.mxu0 0.0
        %1226 = vmatmul.mubr.f32.gmra.mrb[0].mxu0 %v716
        %v1227 = vpop.f32.mrb[0].mxu0
        %v1228 = vadd.f32 %v499, %v1227
        %v1229 = vpop.f32.mrb[0].mxu0
        %1230 = vmatprep.mubr.f32.mxu0 0.0
        %1231 = vmatmul.mubr.f32.gmra.mrb[0].mxu0 %v719
        %v1232 = vpop.f32.mrb[0].mxu0
        %v1233 = vadd.f32 %v499, %v1232
        %v1234 = vpop.f32.mrb[0].mxu0
        %1235 = vmatprep.mubr.f32.mxu0 0.0
        %1236 = vmatmul.mubr.f32.gmra.mrb[0].mxu0 %v722
        %v1237 = vpop.f32.mrb[0].mxu0
        %v1238 = vadd.f32 %v499, %v1237
        %v1239 = vpop.f32.mrb[0].mxu0
        %1240 = vmatprep.mubr.f32.mxu0 0.0
        %1241 = vmatmul.mubr.f32.gmra.mrb[0].mxu0 %v725
        %v1242 = vpop.f32.mrb[0].mxu0
        %v1243 = vadd.f32 %v499, %v1242
        %v1244 = vpop.f32.mrb[0].mxu0
        %1245 = vmatprep.mubr.f32.mxu0 0.0
        %1246 = vmatmul.mubr.f32.gmra.mrb[0].mxu0 %v728
        %v1247 = vpop.f32.mrb[0].mxu0
        %v1248 = vadd.f32 %v499, %v1247
        %v1249 = vpop.f32.mrb[0].mxu0
        %1250 = vmatprep.mubr.f32.mxu0 0.0
        %1251 = vmatmul.mubr.f32.gmra.mrb[0].mxu0 %v731
        %v1252 = vpop.f32.mrb[0].mxu0
        %v1253 = vadd.f32 %v499, %v1252
        %v1254 = vpop.f32.mrb[0].mxu0
        %1255 = vmatprep.mubr.f32.mxu0 0.0
        %1256 = vmatmul.mubr.f32.gmra.mrb[0].mxu0 %v734
        %v1257 = vpop.f32.mrb[0].mxu0
        %v1258 = vadd.f32 %v499, %v1257
        %v1259 = vpop.f32.mrb[0].mxu0
        %1260 = vmatprep.mubr.f32.mxu0 0.0
        %1261 = vmatmul.mubr.f32.gmra.mrb[0].mxu0 %v737
        %v1262 = vpop.f32.mrb[0].mxu0
        %v1263 = vadd.f32 %v499, %v1262
        %v1264 = vpop.f32.mrb[0].mxu0
        %1265 = vmatprep.mubr.f32.mxu0 0.0
        %1266 = vmatmul.mubr.f32.gmra.mrb[0].mxu0 %v740
        %v1267 = vpop.f32.mrb[0].mxu0
        %v1268 = vadd.f32 %v499, %v1267
        %v1269 = vpop.f32.mrb[0].mxu0
        %1270 = vmatprep.mubr.f32.mxu0 0.0
        %1271 = vmatmul.mubr.f32.gmra.mrb[0].mxu0 %v743
        %v1272 = vpop.f32.mrb[0].mxu0
        %v1273 = vadd.f32 %v499, %v1272
        %v1274 = vpop.f32.mrb[0].mxu0
        %1275 = vmatprep.mubr.f32.mxu0 0.0
        %1276 = vmatmul.mubr.f32.gmra.mrb[0].mxu0 %v746
        %v1277 = vpop.f32.mrb[0].mxu0
        %v1278 = vadd.f32 %v499, %v1277
        %v1279 = vpop.f32.mrb[0].mxu0
        %1280 = vmatprep.mubr.f32.mxu0 0.0
        %1281 = vmatmul.mubr.f32.gmra.mrb[0].mxu0 %v749
        %v1282 = vpop.f32.mrb[0].mxu0
        %v1283 = vadd.f32 %v499, %v1282
        %v1284 = vpop.f32.mrb[0].mxu0
        %1285 = vmatprep.mubr.f32.mxu0 0.0
        %1286 = vmatmul.mubr.f32.gmra.mrb[0].mxu0 %v752
        %v1287 = vpop.f32.mrb[0].mxu0
        %v1288 = vadd.f32 %v499, %v1287
        %v1289 = vpop.f32.mrb[0].mxu0
        %1290 = vmatprep.mubr.f32.mxu0 0.0
        %1291 = vmatmul.mubr.f32.gmra.mrb[0].mxu0 %v755
        %v1292 = vpop.f32.mrb[0].mxu0
        %v1293 = vadd.f32 %v499, %v1292
        %v1294 = vpop.f32.mrb[0].mxu0
        %1295 = vmatprep.mubr.f32.mxu0 0.0
        %1296 = vmatmul.mubr.f32.gmra.mrb[0].mxu0 %v758
        %v1297 = vpop.f32.mrb[0].mxu0
        %v1298 = vadd.f32 %v499, %v1297
        %v1299 = vpop.f32.mrb[0].mxu0
        %1300 = vmatprep.mubr.f32.mxu0 0.0
        %1301 = vmatmul.mubr.f32.gmra.mrb[0].mxu0 %v761
        %v1302 = vpop.f32.mrb[0].mxu0
        %v1303 = vadd.f32 %v499, %v1302
        %v1304 = vpop.f32.mrb[0].mxu0
        %1305 = vmatprep.mubr.f32.mxu0 0.0
        %1306 = vmatmul.mubr.f32.gmra.mrb[0].mxu0 %v764
        %v1307 = vpop.f32.mrb[0].mxu0
        %v1308 = vadd.f32 %v499, %v1307
        %v1309 = vpop.f32.mrb[0].mxu0
        %1310 = vmatprep.mubr.f32.mxu0 0.0
        %1311 = vmatmul.mubr.f32.gmra.mrb[0].mxu0 %v767
        %v1312 = vpop.f32.mrb[0].mxu0
        %v1313 = vadd.f32 %v499, %v1312
        %v1314 = vpop.f32.mrb[0].mxu0
        %1315 = vmatprep.mubr.f32.mxu0 0.0
        %1316 = vmatmul.mubr.f32.gmra.mrb[0].mxu0 %v770
        %v1317 = vpop.f32.mrb[0].mxu0
        %v1318 = vadd.f32 %v499, %v1317
        %v1319 = vpop.f32.mrb[0].mxu0
        %1320 = vmatprep.mubr.f32.mxu0 0.0
        %1321 = vmatmul.mubr.f32.gmra.mrb[0].mxu0 %v773
        %v1322 = vpop.f32.mrb[0].mxu0
        %v1323 = vadd.f32 %v499, %v1322
        %v1324 = vpop.f32.mrb[0].mxu0
        %1325 = vmatprep.mubr.f32.mxu0 0.0
        %1326 = vmatmul.mubr.f32.gmra.mrb[0].mxu0 %v776
        %v1327 = vpop.f32.mrb[0].mxu0
        %v1328 = vadd.f32 %v499, %v1327
        %v1329 = vpop.f32.mrb[0].mxu0
        %1330 = vmatprep.mubr.f32.mxu0 0.0
        %1331 = vmatmul.mubr.f32.gmra.mrb[0].mxu0 %v779
        %v1332 = vpop.f32.mrb[0].mxu0
        %v1333 = vadd.f32 %v499, %v1332
        %v1334 = vpop.f32.mrb[0].mxu0
        %1335 = vmatprep.mubr.f32.mxu0 0.0
        %1336 = vmatmul.mubr.f32.gmra.mrb[0].mxu0 %v782
        %v1337 = vpop.f32.mrb[0].mxu0
        %v1338 = vadd.f32 %v499, %v1337
        %v1339 = vpop.f32.mrb[0].mxu0
        %1340 = vmatprep.mubr.f32.mxu0 0.0
        %1341 = vmatmul.mubr.f32.gmra.mrb[0].mxu0 %v785
        %v1342 = vpop.f32.mrb[0].mxu0
        %v1343 = vadd.f32 %v499, %v1342
        %v1344 = vpop.f32.mrb[0].mxu0
        %1345 = vmatprep.mubr.f32.mxu0 0.0
        %1346 = vmatmul.mubr.f32.gmra.mrb[0].mxu0 %v788
        %v1347 = vpop.f32.mrb[0].mxu0
        %v1348 = vadd.f32 %v499, %v1347
        %v1349 = vpop.f32.mrb[0].mxu0
        %1350 = vmatprep.mubr.f32.mxu0 0.0
        %1351 = vmatmul.mubr.f32.gmra.mrb[0].mxu0 %v791
        %v1352 = vpop.f32.mrb[0].mxu0
        %v1353 = vadd.f32 %v499, %v1352
        %v1354 = vpop.f32.mrb[0].mxu0
        %1355 = vmatprep.mubr.f32.mxu0 0.0
        %1356 = vmatmul.mubr.f32.gmra.mrb[0].mxu0 %v794
        %v1357 = vpop.f32.mrb[0].mxu0
        %v1358 = vadd.f32 %v499, %v1357
        %v1359 = vpop.f32.mrb[0].mxu0
        %1360 = vmatprep.mubr.f32.mxu0 0.0
        %1361 = vmatmul.mubr.f32.gmra.mrb[0].mxu0 %v797
        %v1362 = vpop.f32.mrb[0].mxu0
        %v1363 = vadd.f32 %v499, %v1362
        %v1364 = vpop.f32.mrb[0].mxu0
        %1365 = vmatprep.mubr.f32.mxu0 0.0
        %1366 = vmatmul.mubr.f32.gmra.mrb[0].mxu0 %v800
        %v1367 = vpop.f32.mrb[0].mxu0
        %v1368 = vadd.f32 %v499, %v1367
        %v1369 = vpop.f32.mrb[0].mxu0
        %1370 = vdwg.mxu0
        %v1371 = vmax.f32 %v873, 0.0
        %v1372 = vmax.f32 %v878, 0.0
        %v1373 = vmax.f32 %v883, 0.0
        %v1374 = vmax.f32 %v888, 0.0
        %v1375 = vmax.f32 %v893, 0.0
        %v1376 = vmax.f32 %v898, 0.0
        %v1377 = vmax.f32 %v903, 0.0
        %v1378 = vmax.f32 %v908, 0.0
        %v1379 = vmax.f32 %v913, 0.0
        %v1380 = vmax.f32 %v918, 0.0
        %v1381 = vmax.f32 %v923, 0.0
        %v1382 = vmax.f32 %v928, 0.0
        %v1383 = vmax.f32 %v933, 0.0
        %v1384 = vmax.f32 %v938, 0.0
        %v1385 = vmax.f32 %v943, 0.0
        %v1386 = vmax.f32 %v948, 0.0
        %v1387 = vmax.f32 %v953, 0.0
        %v1388 = vmax.f32 %v958, 0.0
        %v1389 = vmax.f32 %v963, 0.0
        %v1390 = vmax.f32 %v968, 0.0
        %v1391 = vmax.f32 %v973, 0.0
        %v1392 = vmax.f32 %v978, 0.0
        %v1393 = vmax.f32 %v983, 0.0
        %v1394 = vmax.f32 %v988, 0.0
        %v1395 = vmax.f32 %v993, 0.0
        %v1396 = vmax.f32 %v998, 0.0
        %v1397 = vmax.f32 %v1003, 0.0
        %v1398 = vmax.f32 %v1008, 0.0
        %v1399 = vmax.f32 %v1013, 0.0
        %v1400 = vmax.f32 %v1018, 0.0
        %v1401 = vmax.f32 %v1023, 0.0
        %v1402 = vmax.f32 %v1028, 0.0
        %v1403 = vmax.f32 %v1033, 0.0
        %v1404 = vmax.f32 %v1038, 0.0
        %v1405 = vmax.f32 %v1043, 0.0
        %v1406 = vmax.f32 %v1048, 0.0
        %v1407 = vmax.f32 %v1053, 0.0
        %v1408 = vmax.f32 %v1058, 0.0
        %v1409 = vmax.f32 %v1063, 0.0
        %v1410 = vmax.f32 %v1068, 0.0
        %v1411 = vmax.f32 %v1073, 0.0
        %v1412 = vmax.f32 %v1078, 0.0
        %v1413 = vmax.f32 %v1083, 0.0
        %v1414 = vmax.f32 %v1088, 0.0
        %v1415 = vmax.f32 %v1093, 0.0
        %v1416 = vmax.f32 %v1098, 0.0
        %v1417 = vmax.f32 %v1103, 0.0
        %v1418 = vmax.f32 %v1108, 0.0
        %v1419 = vmax.f32 %v1113, 0.0
        %v1420 = vmax.f32 %v1118, 0.0
        %v1421 = vmax.f32 %v1123, 0.0
        %v1422 = vmax.f32 %v1128, 0.0
        %v1423 = vmax.f32 %v1133, 0.0
        %v1424 = vmax.f32 %v1138, 0.0
        %v1425 = vmax.f32 %v1143, 0.0
        %v1426 = vmax.f32 %v1148, 0.0
        %v1427 = vmax.f32 %v1153, 0.0
        %v1428 = vmax.f32 %v1158, 0.0
        %v1429 = vmax.f32 %v1163, 0.0
        %v1430 = vmax.f32 %v1168, 0.0
        %v1431 = vmax.f32 %v1173, 0.0
        %v1432 = vmax.f32 %v1178, 0.0
        %v1433 = vmax.f32 %v1183, 0.0
        %v1434 = vmax.f32 %v1188, 0.0
        %v1435 = vmax.f32 %v1193, 0.0
        %v1436 = vmax.f32 %v1198, 0.0
        %v1437 = vmax.f32 %v1203, 0.0
        %v1438 = vmax.f32 %v1208, 0.0
        %v1439 = vmax.f32 %v1213, 0.0
        %v1440 = vmax.f32 %v1218, 0.0
        %v1441 = vmax.f32 %v1223, 0.0
        %v1442 = vmax.f32 %v1228, 0.0
        %v1443 = vmax.f32 %v1233, 0.0
        %v1444 = vmax.f32 %v1238, 0.0
        %v1445 = vmax.f32 %v1243, 0.0
        %v1446 = vmax.f32 %v1248, 0.0
        %v1447 = vmax.f32 %v1253, 0.0
        %v1448 = vmax.f32 %v1258, 0.0
        %v1449 = vmax.f32 %v1263, 0.0
        %v1450 = vmax.f32 %v1268, 0.0
        %v1451 = vmax.f32 %v1273, 0.0
        %v1452 = vmax.f32 %v1278, 0.0
        %v1453 = vmax.f32 %v1283, 0.0
        %v1454 = vmax.f32 %v1288, 0.0
        %v1455 = vmax.f32 %v1293, 0.0
        %v1456 = vmax.f32 %v1298, 0.0
        %v1457 = vmax.f32 %v1303, 0.0
        %v1458 = vmax.f32 %v1308, 0.0
        %v1459 = vmax.f32 %v1313, 0.0
        %v1460 = vmax.f32 %v1318, 0.0
        %v1461 = vmax.f32 %v1323, 0.0
        %v1462 = vmax.f32 %v1328, 0.0
        %v1463 = vmax.f32 %v1333, 0.0
        %v1464 = vmax.f32 %v1338, 0.0
        %v1465 = vmax.f32 %v1343, 0.0
        %v1466 = vmax.f32 %v1348, 0.0
        %v1467 = vmax.f32 %v1353, 0.0
        %v1468 = vmax.f32 %v1358, 0.0
        %v1469 = vmax.f32 %v1363, 0.0
        %v1470 = vmax.f32 %v1368, 0.0
        %v1471 = vmax.f32 %v1371, %v1396
        %v1472 = vmax.f32 %v1372, %v1397
        %v1473 = vmax.f32 %v1373, %v1398
        %v1474 = vmax.f32 %v1374, %v1399
        %v1475 = vmax.f32 %v1375, %v1400
        %v1476 = vmax.f32 %v1376, %v1401
        %v1477 = vmax.f32 %v1377, %v1402
        %v1478 = vmax.f32 %v1378, %v1403
        %v1479 = vmax.f32 %v1379, %v1404
        %v1480 = vmax.f32 %v1380, %v1405
        %v1481 = vmax.f32 %v1381, %v1406
        %v1482 = vmax.f32 %v1382, %v1407
        %v1483 = vmax.f32 %v1383, %v1408
        %v1484 = vmax.f32 %v1384, %v1409
        %v1485 = vmax.f32 %v1385, %v1410
        %v1486 = vmax.f32 %v1386, %v1411
        %v1487 = vmax.f32 %v1387, %v1412
        %v1488 = vmax.f32 %v1388, %v1413
        %v1489 = vmax.f32 %v1389, %v1414
        %v1490 = vmax.f32 %v1390, %v1415
        %v1491 = vmax.f32 %v1391, %v1416
        %v1492 = vmax.f32 %v1392, %v1417
        %v1493 = vmax.f32 %v1393, %v1418
        %v1494 = vmax.f32 %v1394, %v1419
        %v1495 = vmax.f32 %v1395, %v1420
        %v1496 = vmax.f32 %v1421, %v1446
        %v1497 = vmax.f32 %v1422, %v1447
        %v1498 = vmax.f32 %v1423, %v1448
        %v1499 = vmax.f32 %v1424, %v1449
        %v1500 = vmax.f32 %v1425, %v1450
        %v1501 = vmax.f32 %v1426, %v1451
        %v1502 = vmax.f32 %v1427, %v1452
        %v1503 = vmax.f32 %v1428, %v1453
        %v1504 = vmax.f32 %v1429, %v1454
        %v1505 = vmax.f32 %v1430, %v1455
        %v1506 = vmax.f32 %v1431, %v1456
        %v1507 = vmax.f32 %v1432, %v1457
        %v1508 = vmax.f32 %v1433, %v1458
        %v1509 = vmax.f32 %v1434, %v1459
        %v1510 = vmax.f32 %v1435, %v1460
        %v1511 = vmax.f32 %v1436, %v1461
        %v1512 = vmax.f32 %v1437, %v1462
        %v1513 = vmax.f32 %v1438, %v1463
        %v1514 = vmax.f32 %v1439, %v1464
        %v1515 = vmax.f32 %v1440, %v1465
        %v1516 = vmax.f32 %v1441, %v1466
        %v1517 = vmax.f32 %v1442, %v1467
        %v1518 = vmax.f32 %v1443, %v1468
        %v1519 = vmax.f32 %v1444, %v1469
        %v1520 = vmax.f32 %v1445, %v1470
        %v1521 = vmax.f32 %v1471, %v1496
        %v1522 = vmax.f32 %v1472, %v1497
        %v1523 = vmax.f32 %v1473, %v1498
        %v1524 = vmax.f32 %v1474, %v1499
        %v1525 = vmax.f32 %v1475, %v1500
        %v1526 = vmax.f32 %v1476, %v1501
        %v1527 = vmax.f32 %v1477, %v1502
        %v1528 = vmax.f32 %v1478, %v1503
        %v1529 = vmax.f32 %v1479, %v1504
        %v1530 = vmax.f32 %v1480, %v1505
        %v1531 = vmax.f32 %v1481, %v1506
        %v1532 = vmax.f32 %v1482, %v1507
        %v1533 = vmax.f32 %v1483, %v1508
        %v1534 = vmax.f32 %v1484, %v1509
        %v1535 = vmax.f32 %v1485, %v1510
        %v1536 = vmax.f32 %v1486, %v1511
        %v1537 = vmax.f32 %v1487, %v1512
        %v1538 = vmax.f32 %v1488, %v1513
        %v1539 = vmax.f32 %v1489, %v1514
        %v1540 = vmax.f32 %v1490, %v1515
        %v1541 = vmax.f32 %v1491, %v1516
        %v1542 = vmax.f32 %v1492, %v1517
        %v1543 = vmax.f32 %v1493, %v1518
        %v1544 = vmax.f32 %v1494, %v1519
        %v1545 = vmax.f32 %v1495, %v1520
        %v1546 = vld [vmem:[%s3] sm:$0x3f]
        %s1547 = scalar_lea.vmem %s3, 8
        %v1548 = vld [vmem:[%s1547] sm:$0x3f]
        %vm1567 = vcmask 1046528
        %v1568 = vrot.slane %v1521, 1
        %v1569 = vrot.slane %v1522, 1
        %v1570 = vsel %vm1567, %v1568, %v1569
        %v1571 = vrot.slane %v1523, 1
        %v1572 = vsel %vm1567, %v1569, %v1571
        %v1573 = vrot.slane %v1524, 1
        %v1574 = vsel %vm1567, %v1571, %v1573
        %v1575 = vrot.slane %v1525, 1
        %v1576 = vsel %vm1567, %v1573, %v1575
        %v1577 = vrot.slane %v1526, 1
        %v1578 = vsel %vm1567, %v1575, %v1577
        %v1579 = vrot.slane %v1527, 1
        %v1580 = vsel %vm1567, %v1577, %v1579
        %v1581 = vrot.slane %v1528, 1
        %v1582 = vsel %vm1567, %v1579, %v1581
        %v1583 = vrot.slane %v1529, 1
        %v1584 = vsel %vm1567, %v1581, %v1583
        %v1585 = vrot.slane %v1530, 1
        %v1586 = vsel %vm1567, %v1583, %v1585
        %v1587 = vrot.slane %v1531, 1
        %v1588 = vsel %vm1567, %v1585, %v1587
        %v1589 = vrot.slane %v1532, 1
        %v1590 = vsel %vm1567, %v1587, %v1589
        %v1591 = vrot.slane %v1533, 1
        %v1592 = vsel %vm1567, %v1589, %v1591
        %v1593 = vrot.slane %v1534, 1
        %v1594 = vsel %vm1567, %v1591, %v1593
        %v1595 = vrot.slane %v1535, 1
        %v1596 = vsel %vm1567, %v1593, %v1595
        %v1597 = vrot.slane %v1536, 1
        %v1598 = vsel %vm1567, %v1595, %v1597
        %v1599 = vrot.slane %v1537, 1
        %v1600 = vsel %vm1567, %v1597, %v1599
        %v1601 = vrot.slane %v1538, 1
        %v1602 = vsel %vm1567, %v1599, %v1601
        %vm1603 = vcmask 48128
        %v1604 = vsel %vm1603, %v1570, 0
        %v1606 = vsel %vm1603, %v1572, 0
        %v1608 = vsel %vm1603, %v1574, 0
        %v1610 = vsel %vm1603, %v1576, 0
        %v1612 = vsel %vm1603, %v1578, 0
        %v1614 = vsel %vm1603, %v1580, 0
        %v1616 = vsel %vm1603, %v1582, 0
        %v1618 = vsel %vm1603, %v1584, 0
        %v1620 = vsel %vm1603, %v1586, 0
        %v1622 = vsel %vm1603, %v1588, 0
        %v1624 = vsel %vm1603, %v1590, 0
        %v1626 = vsel %vm1603, %v1592, 0
        %v1628 = vsel %vm1603, %v1594, 0
        %v1630 = vsel %vm1603, %v1596, 0
        %v1632 = vsel %vm1603, %v1598, 0
        %v1634 = vsel %vm1603, %v1600, 0
        %v1636 = vsel %vm1603, %v1602, 0
        %vm1638 = vcmask 1045504
        %v1640 = vsel %vm1638, %v1548, 0
        %1642 = vmatprep.subr.mxu0 0.0
        %1643 = vmatpush1.msra.mxu0 %v1640
        %1644 = vmatprep.subr.mxu0 0.0
        %1645 = vmatpush1.msra.mxu0 0.0
        %1646 = vmatprep.subr.mxu0 0.0
        %1647 = vmatpush1.msra.mxu0 0.0
        %1648 = vmatprep.subr.mxu0 0.0
        %1649 = vmatpush1.msra.mxu0 0.0
        %1650 = vmatprep.subr.mxu0 0.0
        %1651 = vmatpush1.msra.mxu0 0.0
        %1652 = vmatprep.subr.mxu0 0.0
        %1653 = vmatpush1.msra.mxu0 0.0
        %1654 = vmatprep.subr.mxu0 0.0
        %1655 = vmatpush1.msra.mxu0 0.0
        %1656 = vmatprep.subr.mxu0 0.0
        %1657 = vmatpush1.msra.mxu0 0.0
        %1658 = vmatprep.subr.mxu0 0.0
        %1659 = vmatpush1.msra.mxu0 0.0
        %1660 = vmatprep.subr.mxu0 0.0
        %1661 = vmatpush1.msra.mxu0 0.0
        %1662 = vmatprep.subr.mxu0 0.0
        %1663 = vmatpush1.msra.mxu0 0.0
        %1664 = vmatprep.subr.mxu0 0.0
        %1665 = vmatpush1.msra.mxu0 0.0
        %1666 = vmatprep.subr.mxu0 0.0
        %1667 = vmatpush1.msra.mxu0 0.0
        %1668 = vmatprep.subr.mxu0 0.0
        %1669 = vmatpush1.msra.mxu0 0.0
        %1670 = vmatprep.subr.mxu0 0.0
        %1671 = vmatpush1.msra.mxu0 0.0
        %1672 = vmatprep.subr.mxu0 0.0
        %1673 = vmatpush1.msra.mxu0 0.0
        %1674 = vmatprep.subr.mxu0 0.0
        %1675 = vmatpush1.msra.mxu0 0.0
        %1676 = vmatprep.subr.mxu0 0.0
        %1677 = vmatpush1.msra.mxu0 0.0
        %1678 = vmatprep.subr.mxu0 0.0
        %1679 = vmatpush1.msra.mxu0 0.0
        %1680 = vmatprep.subr.mxu0 0.0
        %1681 = vmatpush1.msra.mxu0 0.0
        %1682 = vmatprep.subr.mxu0 0.0
        %1683 = vmatpush1.msra.mxu0 0.0
        %1684 = vmatprep.subr.mxu0 0.0
        %1685 = vmatpush1.msra.mxu0 0.0
        %1686 = vmatprep.subr.mxu0 0.0
        %1687 = vmatpush1.msra.mxu0 0.0
        %1688 = vmatprep.subr.mxu0 0.0
        %1689 = vmatpush1.msra.mxu0 0.0
        %1690 = vmatprep.subr.mxu0 0.0
        %1691 = vmatpush1.msra.mxu0 0.0
        %1692 = vmatprep.subr.mxu0 0.0
        %1693 = vmatpush1.msra.mxu0 0.0
        %1694 = vmatprep.subr.mxu0 0.0
        %1695 = vmatpush1.msra.mxu0 0.0
        %1696 = vmatprep.subr.mxu0 0.0
        %1697 = vmatpush1.msra.mxu0 0.0
        %1698 = vmatprep.subr.mxu0 0.0
        %1699 = vmatpush1.msra.mxu0 0.0
        %1700 = vmatprep.subr.mxu0 0.0
        %1701 = vmatpush1.msra.mxu0 0.0
        %1702 = vmatprep.subr.mxu0 0.0
        %1703 = vmatpush1.msra.mxu0 0.0
        %1704 = vmatprep.subr.mxu0 0.0
        %1705 = vmatpush1.msra.mxu0 0.0
        %1706 = vmatprep.mubr.f32.mxu0 0.0
        %1707 = vmatmul.mubr.f32.gmra.mrb[0].mxu0 %v1604
        %v1708 = vpop.f32.mrb[0].mxu0
        %v1709 = vadd.f32 0.0, %v1708
        %v1710 = vpop.f32.mrb[0].mxu0
        %1711 = vmatprep.mubr.f32.mxu0 0.0
        %1712 = vmatmul.mubr.f32.gmra.mrb[0].mxu0 %v1606
        %v1713 = vpop.f32.mrb[0].mxu0
        %v1714 = vadd.f32 0.0, %v1713
        %v1715 = vpop.f32.mrb[0].mxu0
        %1716 = vmatprep.mubr.f32.mxu0 0.0
        %1717 = vmatmul.mubr.f32.gmra.mrb[0].mxu0 %v1608
        %v1718 = vpop.f32.mrb[0].mxu0
        %v1719 = vadd.f32 0.0, %v1718
        %v1720 = vpop.f32.mrb[0].mxu0
        %1721 = vmatprep.mubr.f32.mxu0 0.0
        %1722 = vmatmul.mubr.f32.gmra.mrb[0].mxu0 %v1610
        %v1723 = vpop.f32.mrb[0].mxu0
        %v1724 = vadd.f32 0.0, %v1723
        %v1725 = vpop.f32.mrb[0].mxu0
        %1726 = vmatprep.mubr.f32.mxu0 0.0
        %1727 = vmatmul.mubr.f32.gmra.mrb[0].mxu0 %v1612
        %v1728 = vpop.f32.mrb[0].mxu0
        %v1729 = vadd.f32 0.0, %v1728
        %v1730 = vpop.f32.mrb[0].mxu0
        %1731 = vmatprep.mubr.f32.mxu0 0.0
        %1732 = vmatmul.mubr.f32.gmra.mrb[0].mxu0 %v1614
        %v1733 = vpop.f32.mrb[0].mxu0
        %v1734 = vadd.f32 0.0, %v1733
        %v1735 = vpop.f32.mrb[0].mxu0
        %1736 = vmatprep.mubr.f32.mxu0 0.0
        %1737 = vmatmul.mubr.f32.gmra.mrb[0].mxu0 %v1616
        %v1738 = vpop.f32.mrb[0].mxu0
        %v1739 = vadd.f32 0.0, %v1738
        %v1740 = vpop.f32.mrb[0].mxu0
        %1741 = vmatprep.mubr.f32.mxu0 0.0
        %1742 = vmatmul.mubr.f32.gmra.mrb[0].mxu0 %v1618
        %v1743 = vpop.f32.mrb[0].mxu0
        %v1744 = vadd.f32 0.0, %v1743
        %v1745 = vpop.f32.mrb[0].mxu0
        %1746 = vmatprep.mubr.f32.mxu0 0.0
        %1747 = vmatmul.mubr.f32.gmra.mrb[0].mxu0 %v1620
        %v1748 = vpop.f32.mrb[0].mxu0
        %v1749 = vadd.f32 0.0, %v1748
        %v1750 = vpop.f32.mrb[0].mxu0
        %1751 = vmatprep.mubr.f32.mxu0 0.0
        %1752 = vmatmul.mubr.f32.gmra.mrb[0].mxu0 %v1622
        %v1753 = vpop.f32.mrb[0].mxu0
        %v1754 = vadd.f32 0.0, %v1753
        %v1755 = vpop.f32.mrb[0].mxu0
        %1756 = vmatprep.mubr.f32.mxu0 0.0
        %1757 = vmatmul.mubr.f32.gmra.mrb[0].mxu0 %v1624
        %v1758 = vpop.f32.mrb[0].mxu0
        %v1759 = vadd.f32 0.0, %v1758
        %v1760 = vpop.f32.mrb[0].mxu0
        %1761 = vmatprep.mubr.f32.mxu0 0.0
        %1762 = vmatmul.mubr.f32.gmra.mrb[0].mxu0 %v1626
        %v1763 = vpop.f32.mrb[0].mxu0
        %v1764 = vadd.f32 0.0, %v1763
        %v1765 = vpop.f32.mrb[0].mxu0
        %1766 = vmatprep.mubr.f32.mxu0 0.0
        %1767 = vmatmul.mubr.f32.gmra.mrb[0].mxu0 %v1628
        %v1768 = vpop.f32.mrb[0].mxu0
        %v1769 = vadd.f32 0.0, %v1768
        %v1770 = vpop.f32.mrb[0].mxu0
        %1771 = vmatprep.mubr.f32.mxu0 0.0
        %1772 = vmatmul.mubr.f32.gmra.mrb[0].mxu0 %v1630
        %v1773 = vpop.f32.mrb[0].mxu0
        %v1774 = vadd.f32 0.0, %v1773
        %v1775 = vpop.f32.mrb[0].mxu0
        %1776 = vmatprep.mubr.f32.mxu0 0.0
        %1777 = vmatmul.mubr.f32.gmra.mrb[0].mxu0 %v1632
        %v1778 = vpop.f32.mrb[0].mxu0
        %v1779 = vadd.f32 0.0, %v1778
        %v1780 = vpop.f32.mrb[0].mxu0
        %1781 = vmatprep.mubr.f32.mxu0 0.0
        %1782 = vmatmul.mubr.f32.gmra.mrb[0].mxu0 %v1634
        %v1783 = vpop.f32.mrb[0].mxu0
        %v1784 = vadd.f32 0.0, %v1783
        %v1785 = vpop.f32.mrb[0].mxu0
        %1786 = vmatprep.mubr.f32.mxu0 0.0
        %1787 = vmatmul.mubr.f32.gmra.mrb[0].mxu0 %v1636
        %v1788 = vpop.f32.mrb[0].mxu0
        %v1789 = vadd.f32 0.0, %v1788
        %v1790 = vpop.f32.mrb[0].mxu0
        %1791 = vdwg.mxu0
        %v1792 = vsel %vm1603, %v1521, 0
        %v1794 = vsel %vm1603, %v1522, 0
        %v1796 = vsel %vm1603, %v1523, 0
        %v1798 = vsel %vm1603, %v1524, 0
        %v1800 = vsel %vm1603, %v1525, 0
        %v1802 = vsel %vm1603, %v1526, 0
        %v1804 = vsel %vm1603, %v1527, 0
        %v1806 = vsel %vm1603, %v1528, 0
        %v1808 = vsel %vm1603, %v1529, 0
        %v1810 = vsel %vm1603, %v1530, 0
        %v1812 = vsel %vm1603, %v1531, 0
        %v1814 = vsel %vm1603, %v1532, 0
        %v1816 = vsel %vm1603, %v1533, 0
        %v1818 = vsel %vm1603, %v1534, 0
        %v1820 = vsel %vm1603, %v1535, 0
        %v1822 = vsel %vm1603, %v1536, 0
        %v1824 = vsel %vm1603, %v1537, 0
        %v1827 = vsel %vm1638, %v1546, 0
        %1829 = vmatprep.subr.mxu0 0.0
        %1830 = vmatpush1.msra.mxu0 %v1827
        %1831 = vmatprep.subr.mxu0 0.0
        %1832 = vmatpush1.msra.mxu0 0.0
        %1833 = vmatprep.subr.mxu0 0.0
        %1834 = vmatpush1.msra.mxu0 0.0
        %1835 = vmatprep.subr.mxu0 0.0
        %1836 = vmatpush1.msra.mxu0 0.0
        %1837 = vmatprep.subr.mxu0 0.0
        %1838 = vmatpush1.msra.mxu0 0.0
        %1839 = vmatprep.subr.mxu0 0.0
        %1840 = vmatpush1.msra.mxu0 0.0
        %1841 = vmatprep.subr.mxu0 0.0
        %1842 = vmatpush1.msra.mxu0 0.0
        %1843 = vmatprep.subr.mxu0 0.0
        %1844 = vmatpush1.msra.mxu0 0.0
        %1845 = vmatprep.subr.mxu0 0.0
        %1846 = vmatpush1.msra.mxu0 0.0
        %1847 = vmatprep.subr.mxu0 0.0
        %1848 = vmatpush1.msra.mxu0 0.0
        %1849 = vmatprep.subr.mxu0 0.0
        %1850 = vmatpush1.msra.mxu0 0.0
        %1851 = vmatprep.subr.mxu0 0.0
        %1852 = vmatpush1.msra.mxu0 0.0
        %1853 = vmatprep.subr.mxu0 0.0
        %1854 = vmatpush1.msra.mxu0 0.0
        %1855 = vmatprep.subr.mxu0 0.0
        %1856 = vmatpush1.msra.mxu0 0.0
        %1857 = vmatprep.subr.mxu0 0.0
        %1858 = vmatpush1.msra.mxu0 0.0
        %1859 = vmatprep.subr.mxu0 0.0
        %1860 = vmatpush1.msra.mxu0 0.0
        %1861 = vmatprep.subr.mxu0 0.0
        %1862 = vmatpush1.msra.mxu0 0.0
        %1863 = vmatprep.subr.mxu0 0.0
        %1864 = vmatpush1.msra.mxu0 0.0
        %1865 = vmatprep.subr.mxu0 0.0
        %1866 = vmatpush1.msra.mxu0 0.0
        %1867 = vmatprep.subr.mxu0 0.0
        %1868 = vmatpush1.msra.mxu0 0.0
        %1869 = vmatprep.subr.mxu0 0.0
        %1870 = vmatpush1.msra.mxu0 0.0
        %1871 = vmatprep.subr.mxu0 0.0
        %1872 = vmatpush1.msra.mxu0 0.0
        %1873 = vmatprep.subr.mxu0 0.0
        %1874 = vmatpush1.msra.mxu0 0.0
        %1875 = vmatprep.subr.mxu0 0.0
        %1876 = vmatpush1.msra.mxu0 0.0
        %1877 = vmatprep.subr.mxu0 0.0
        %1878 = vmatpush1.msra.mxu0 0.0
        %1879 = vmatprep.subr.mxu0 0.0
        %1880 = vmatpush1.msra.mxu0 0.0
        %1881 = vmatprep.subr.mxu0 0.0
        %1882 = vmatpush1.msra.mxu0 0.0
        %1883 = vmatprep.subr.mxu0 0.0
        %1884 = vmatpush1.msra.mxu0 0.0
        %1885 = vmatprep.subr.mxu0 0.0
        %1886 = vmatpush1.msra.mxu0 0.0
        %1887 = vmatprep.subr.mxu0 0.0
        %1888 = vmatpush1.msra.mxu0 0.0
        %1889 = vmatprep.subr.mxu0 0.0
        %1890 = vmatpush1.msra.mxu0 0.0
        %1891 = vmatprep.subr.mxu0 0.0
        %1892 = vmatpush1.msra.mxu0 0.0
        %1893 = vmatprep.mubr.f32.mxu0 0.0
        %1894 = vmatmul.mubr.f32.gmra.mrb[0].mxu0 %v1792
        %v1895 = vpop.f32.mrb[0].mxu0
        %v1896 = vadd.f32 %v1709, %v1895
        %v1897 = vpop.f32.mrb[0].mxu0
        %1898 = vmatprep.mubr.f32.mxu0 0.0
        %1899 = vmatmul.mubr.f32.gmra.mrb[0].mxu0 %v1794
        %v1900 = vpop.f32.mrb[0].mxu0
        %v1901 = vadd.f32 %v1714, %v1900
        %v1902 = vpop.f32.mrb[0].mxu0
        %1903 = vmatprep.mubr.f32.mxu0 0.0
        %1904 = vmatmul.mubr.f32.gmra.mrb[0].mxu0 %v1796
        %v1905 = vpop.f32.mrb[0].mxu0
        %v1906 = vadd.f32 %v1719, %v1905
        %v1907 = vpop.f32.mrb[0].mxu0
        %1908 = vmatprep.mubr.f32.mxu0 0.0
        %1909 = vmatmul.mubr.f32.gmra.mrb[0].mxu0 %v1798
        %v1910 = vpop.f32.mrb[0].mxu0
        %v1911 = vadd.f32 %v1724, %v1910
        %v1912 = vpop.f32.mrb[0].mxu0
        %1913 = vmatprep.mubr.f32.mxu0 0.0
        %1914 = vmatmul.mubr.f32.gmra.mrb[0].mxu0 %v1800
        %v1915 = vpop.f32.mrb[0].mxu0
        %v1916 = vadd.f32 %v1729, %v1915
        %v1917 = vpop.f32.mrb[0].mxu0
        %1918 = vmatprep.mubr.f32.mxu0 0.0
        %1919 = vmatmul.mubr.f32.gmra.mrb[0].mxu0 %v1802
        %v1920 = vpop.f32.mrb[0].mxu0
        %v1921 = vadd.f32 %v1734, %v1920
        %v1922 = vpop.f32.mrb[0].mxu0
        %1923 = vmatprep.mubr.f32.mxu0 0.0
        %1924 = vmatmul.mubr.f32.gmra.mrb[0].mxu0 %v1804
        %v1925 = vpop.f32.mrb[0].mxu0
        %v1926 = vadd.f32 %v1739, %v1925
        %v1927 = vpop.f32.mrb[0].mxu0
        %1928 = vmatprep.mubr.f32.mxu0 0.0
        %1929 = vmatmul.mubr.f32.gmra.mrb[0].mxu0 %v1806
        %v1930 = vpop.f32.mrb[0].mxu0
        %v1931 = vadd.f32 %v1744, %v1930
        %v1932 = vpop.f32.mrb[0].mxu0
        %1933 = vmatprep.mubr.f32.mxu0 0.0
        %1934 = vmatmul.mubr.f32.gmra.mrb[0].mxu0 %v1808
        %v1935 = vpop.f32.mrb[0].mxu0
        %v1936 = vadd.f32 %v1749, %v1935
        %v1937 = vpop.f32.mrb[0].mxu0
        %1938 = vmatprep.mubr.f32.mxu0 0.0
        %1939 = vmatmul.mubr.f32.gmra.mrb[0].mxu0 %v1810
        %v1940 = vpop.f32.mrb[0].mxu0
        %v1941 = vadd.f32 %v1754, %v1940
        %v1942 = vpop.f32.mrb[0].mxu0
        %1943 = vmatprep.mubr.f32.mxu0 0.0
        %1944 = vmatmul.mubr.f32.gmra.mrb[0].mxu0 %v1812
        %v1945 = vpop.f32.mrb[0].mxu0
        %v1946 = vadd.f32 %v1759, %v1945
        %v1947 = vpop.f32.mrb[0].mxu0
        %1948 = vmatprep.mubr.f32.mxu0 0.0
        %1949 = vmatmul.mubr.f32.gmra.mrb[0].mxu0 %v1814
        %v1950 = vpop.f32.mrb[0].mxu0
        %v1951 = vadd.f32 %v1764, %v1950
        %v1952 = vpop.f32.mrb[0].mxu0
        %1953 = vmatprep.mubr.f32.mxu0 0.0
        %1954 = vmatmul.mubr.f32.gmra.mrb[0].mxu0 %v1816
        %v1955 = vpop.f32.mrb[0].mxu0
        %v1956 = vadd.f32 %v1769, %v1955
        %v1957 = vpop.f32.mrb[0].mxu0
        %1958 = vmatprep.mubr.f32.mxu0 0.0
        %1959 = vmatmul.mubr.f32.gmra.mrb[0].mxu0 %v1818
        %v1960 = vpop.f32.mrb[0].mxu0
        %v1961 = vadd.f32 %v1774, %v1960
        %v1962 = vpop.f32.mrb[0].mxu0
        %1963 = vmatprep.mubr.f32.mxu0 0.0
        %1964 = vmatmul.mubr.f32.gmra.mrb[0].mxu0 %v1820
        %v1965 = vpop.f32.mrb[0].mxu0
        %v1966 = vadd.f32 %v1779, %v1965
        %v1967 = vpop.f32.mrb[0].mxu0
        %1968 = vmatprep.mubr.f32.mxu0 0.0
        %1969 = vmatmul.mubr.f32.gmra.mrb[0].mxu0 %v1822
        %v1970 = vpop.f32.mrb[0].mxu0
        %v1971 = vadd.f32 %v1784, %v1970
        %v1972 = vpop.f32.mrb[0].mxu0
        %1973 = vmatprep.mubr.f32.mxu0 0.0
        %1974 = vmatmul.mubr.f32.gmra.mrb[0].mxu0 %v1824
        %v1975 = vpop.f32.mrb[0].mxu0
        %v1976 = vadd.f32 %v1789, %v1975
        %v1977 = vpop.f32.mrb[0].mxu0
        %1978 = vdwg.mxu0
        %s1979 = scalar_lea.vmem %s3, 16
        %v1980 = vld [vmem:[%s1979] sm:$0x3f]
        %v1981 = vrot.slane %v1521, 2
        %v1982 = vrot.slane %v1522, 2
        %v1983 = vsel %vm1638, %v1981, %v1982
        %v1984 = vrot.slane %v1523, 2
        %v1985 = vsel %vm1638, %v1982, %v1984
        %v1986 = vrot.slane %v1524, 2
        %v1987 = vsel %vm1638, %v1984, %v1986
        %v1988 = vrot.slane %v1525, 2
        %v1989 = vsel %vm1638, %v1986, %v1988
        %v1990 = vrot.slane %v1526, 2
        %v1991 = vsel %vm1638, %v1988, %v1990
        %v1992 = vrot.slane %v1527, 2
        %v1993 = vsel %vm1638, %v1990, %v1992
        %v1994 = vrot.slane %v1528, 2
        %v1995 = vsel %vm1638, %v1992, %v1994
        %v1996 = vrot.slane %v1529, 2
        %v1997 = vsel %vm1638, %v1994, %v1996
        %v1998 = vrot.slane %v1530, 2
        %v1999 = vsel %vm1638, %v1996, %v1998
        %v2000 = vrot.slane %v1531, 2
        %v2001 = vsel %vm1638, %v1998, %v2000
        %v2002 = vrot.slane %v1532, 2
        %v2003 = vsel %vm1638, %v2000, %v2002
        %v2004 = vrot.slane %v1533, 2
        %v2005 = vsel %vm1638, %v2002, %v2004
        %v2006 = vrot.slane %v1534, 2
        %v2007 = vsel %vm1638, %v2004, %v2006
        %v2008 = vrot.slane %v1535, 2
        %v2009 = vsel %vm1638, %v2006, %v2008
        %v2010 = vrot.slane %v1536, 2
        %v2011 = vsel %vm1638, %v2008, %v2010
        %v2012 = vrot.slane %v1537, 2
        %v2013 = vsel %vm1638, %v2010, %v2012
        %v2014 = vrot.slane %v1538, 2
        %v2015 = vsel %vm1638, %v2012, %v2014
        %v2016 = vsel %vm1603, %v1983, 0
        %v2018 = vsel %vm1603, %v1985, 0
        %v2020 = vsel %vm1603, %v1987, 0
        %v2022 = vsel %vm1603, %v1989, 0
        %v2024 = vsel %vm1603, %v1991, 0
        %v2026 = vsel %vm1603, %v1993, 0
        %v2028 = vsel %vm1603, %v1995, 0
        %v2030 = vsel %vm1603, %v1997, 0
        %v2032 = vsel %vm1603, %v1999, 0
        %v2034 = vsel %vm1603, %v2001, 0
        %v2036 = vsel %vm1603, %v2003, 0
        %v2038 = vsel %vm1603, %v2005, 0
        %v2040 = vsel %vm1603, %v2007, 0
        %v2042 = vsel %vm1603, %v2009, 0
        %v2044 = vsel %vm1603, %v2011, 0
        %v2046 = vsel %vm1603, %v2013, 0
        %v2048 = vsel %vm1603, %v2015, 0
        %v2051 = vsel %vm1638, %v1980, 0
        %2053 = vmatprep.subr.mxu0 0.0
        %2054 = vmatpush1.msra.mxu0 %v2051
        %2055 = vmatprep.subr.mxu0 0.0
        %2056 = vmatpush1.msra.mxu0 0.0
        %2057 = vmatprep.subr.mxu0 0.0
        %2058 = vmatpush1.msra.mxu0 0.0
        %2059 = vmatprep.subr.mxu0 0.0
        %2060 = vmatpush1.msra.mxu0 0.0
        %2061 = vmatprep.subr.mxu0 0.0
        %2062 = vmatpush1.msra.mxu0 0.0
        %2063 = vmatprep.subr.mxu0 0.0
        %2064 = vmatpush1.msra.mxu0 0.0
        %2065 = vmatprep.subr.mxu0 0.0
        %2066 = vmatpush1.msra.mxu0 0.0
        %2067 = vmatprep.subr.mxu0 0.0
        %2068 = vmatpush1.msra.mxu0 0.0
        %2069 = vmatprep.subr.mxu0 0.0
        %2070 = vmatpush1.msra.mxu0 0.0
        %2071 = vmatprep.subr.mxu0 0.0
        %2072 = vmatpush1.msra.mxu0 0.0
        %2073 = vmatprep.subr.mxu0 0.0
        %2074 = vmatpush1.msra.mxu0 0.0
        %2075 = vmatprep.subr.mxu0 0.0
        %2076 = vmatpush1.msra.mxu0 0.0
        %2077 = vmatprep.subr.mxu0 0.0
        %2078 = vmatpush1.msra.mxu0 0.0
        %2079 = vmatprep.subr.mxu0 0.0
        %2080 = vmatpush1.msra.mxu0 0.0
        %2081 = vmatprep.subr.mxu0 0.0
        %2082 = vmatpush1.msra.mxu0 0.0
        %2083 = vmatprep.subr.mxu0 0.0
        %2084 = vmatpush1.msra.mxu0 0.0
        %2085 = vmatprep.subr.mxu0 0.0
        %2086 = vmatpush1.msra.mxu0 0.0
        %2087 = vmatprep.subr.mxu0 0.0
        %2088 = vmatpush1.msra.mxu0 0.0
        %2089 = vmatprep.subr.mxu0 0.0
        %2090 = vmatpush1.msra.mxu0 0.0
        %2091 = vmatprep.subr.mxu0 0.0
        %2092 = vmatpush1.msra.mxu0 0.0
        %2093 = vmatprep.subr.mxu0 0.0
        %2094 = vmatpush1.msra.mxu0 0.0
        %2095 = vmatprep.subr.mxu0 0.0
        %2096 = vmatpush1.msra.mxu0 0.0
        %2097 = vmatprep.subr.mxu0 0.0
        %2098 = vmatpush1.msra.mxu0 0.0
        %2099 = vmatprep.subr.mxu0 0.0
        %2100 = vmatpush1.msra.mxu0 0.0
        %2101 = vmatprep.subr.mxu0 0.0
        %2102 = vmatpush1.msra.mxu0 0.0
        %2103 = vmatprep.subr.mxu0 0.0
        %2104 = vmatpush1.msra.mxu0 0.0
        %2105 = vmatprep.subr.mxu0 0.0
        %2106 = vmatpush1.msra.mxu0 0.0
        %2107 = vmatprep.subr.mxu0 0.0
        %2108 = vmatpush1.msra.mxu0 0.0
        %2109 = vmatprep.subr.mxu0 0.0
        %2110 = vmatpush1.msra.mxu0 0.0
        %2111 = vmatprep.subr.mxu0 0.0
        %2112 = vmatpush1.msra.mxu0 0.0
        %2113 = vmatprep.subr.mxu0 0.0
        %2114 = vmatpush1.msra.mxu0 0.0
        %2115 = vmatprep.subr.mxu0 0.0
        %2116 = vmatpush1.msra.mxu0 0.0
        %2117 = vmatprep.mubr.f32.mxu0 0.0
        %2118 = vmatmul.mubr.f32.gmra.mrb[0].mxu0 %v2016
        %v2119 = vpop.f32.mrb[0].mxu0
        %v2120 = vadd.f32 0.0, %v2119
        %v2121 = vpop.f32.mrb[0].mxu0
        %2122 = vmatprep.mubr.f32.mxu0 0.0
        %2123 = vmatmul.mubr.f32.gmra.mrb[0].mxu0 %v2018
        %v2124 = vpop.f32.mrb[0].mxu0
        %v2125 = vadd.f32 0.0, %v2124
        %v2126 = vpop.f32.mrb[0].mxu0
        %2127 = vmatprep.mubr.f32.mxu0 0.0
        %2128 = vmatmul.mubr.f32.gmra.mrb[0].mxu0 %v2020
        %v2129 = vpop.f32.mrb[0].mxu0
        %v2130 = vadd.f32 0.0, %v2129
        %v2131 = vpop.f32.mrb[0].mxu0
        %2132 = vmatprep.mubr.f32.mxu0 0.0
        %2133 = vmatmul.mubr.f32.gmra.mrb[0].mxu0 %v2022
        %v2134 = vpop.f32.mrb[0].mxu0
        %v2135 = vadd.f32 0.0, %v2134
        %v2136 = vpop.f32.mrb[0].mxu0
        %2137 = vmatprep.mubr.f32.mxu0 0.0
        %2138 = vmatmul.mubr.f32.gmra.mrb[0].mxu0 %v2024
        %v2139 = vpop.f32.mrb[0].mxu0
        %v2140 = vadd.f32 0.0, %v2139
        %v2141 = vpop.f32.mrb[0].mxu0
        %2142 = vmatprep.mubr.f32.mxu0 0.0
        %2143 = vmatmul.mubr.f32.gmra.mrb[0].mxu0 %v2026
        %v2144 = vpop.f32.mrb[0].mxu0
        %v2145 = vadd.f32 0.0, %v2144
        %v2146 = vpop.f32.mrb[0].mxu0
        %2147 = vmatprep.mubr.f32.mxu0 0.0
        %2148 = vmatmul.mubr.f32.gmra.mrb[0].mxu0 %v2028
        %v2149 = vpop.f32.mrb[0].mxu0
        %v2150 = vadd.f32 0.0, %v2149
        %v2151 = vpop.f32.mrb[0].mxu0
        %2152 = vmatprep.mubr.f32.mxu0 0.0
        %2153 = vmatmul.mubr.f32.gmra.mrb[0].mxu0 %v2030
        %v2154 = vpop.f32.mrb[0].mxu0
        %v2155 = vadd.f32 0.0, %v2154
        %v2156 = vpop.f32.mrb[0].mxu0
        %2157 = vmatprep.mubr.f32.mxu0 0.0
        %2158 = vmatmul.mubr.f32.gmra.mrb[0].mxu0 %v2032
        %v2159 = vpop.f32.mrb[0].mxu0
        %v2160 = vadd.f32 0.0, %v2159
        %v2161 = vpop.f32.mrb[0].mxu0
        %2162 = vmatprep.mubr.f32.mxu0 0.0
        %2163 = vmatmul.mubr.f32.gmra.mrb[0].mxu0 %v2034
        %v2164 = vpop.f32.mrb[0].mxu0
        %v2165 = vadd.f32 0.0, %v2164
        %v2166 = vpop.f32.mrb[0].mxu0
        %2167 = vmatprep.mubr.f32.mxu0 0.0
        %2168 = vmatmul.mubr.f32.gmra.mrb[0].mxu0 %v2036
        %v2169 = vpop.f32.mrb[0].mxu0
        %v2170 = vadd.f32 0.0, %v2169
        %v2171 = vpop.f32.mrb[0].mxu0
        %2172 = vmatprep.mubr.f32.mxu0 0.0
        %2173 = vmatmul.mubr.f32.gmra.mrb[0].mxu0 %v2038
        %v2174 = vpop.f32.mrb[0].mxu0
        %v2175 = vadd.f32 0.0, %v2174
        %v2176 = vpop.f32.mrb[0].mxu0
        %2177 = vmatprep.mubr.f32.mxu0 0.0
        %2178 = vmatmul.mubr.f32.gmra.mrb[0].mxu0 %v2040
        %v2179 = vpop.f32.mrb[0].mxu0
        %v2180 = vadd.f32 0.0, %v2179
        %v2181 = vpop.f32.mrb[0].mxu0
        %2182 = vmatprep.mubr.f32.mxu0 0.0
        %2183 = vmatmul.mubr.f32.gmra.mrb[0].mxu0 %v2042
        %v2184 = vpop.f32.mrb[0].mxu0
        %v2185 = vadd.f32 0.0, %v2184
        %v2186 = vpop.f32.mrb[0].mxu0
        %2187 = vmatprep.mubr.f32.mxu0 0.0
        %2188 = vmatmul.mubr.f32.gmra.mrb[0].mxu0 %v2044
        %v2189 = vpop.f32.mrb[0].mxu0
        %v2190 = vadd.f32 0.0, %v2189
        %v2191 = vpop.f32.mrb[0].mxu0
        %2192 = vmatprep.mubr.f32.mxu0 0.0
        %2193 = vmatmul.mubr.f32.gmra.mrb[0].mxu0 %v2046
        %v2194 = vpop.f32.mrb[0].mxu0
        %v2195 = vadd.f32 0.0, %v2194
        %v2196 = vpop.f32.mrb[0].mxu0
        %2197 = vmatprep.mubr.f32.mxu0 0.0
        %2198 = vmatmul.mubr.f32.gmra.mrb[0].mxu0 %v2048
        %v2199 = vpop.f32.mrb[0].mxu0
        %v2200 = vadd.f32 0.0, %v2199
        %v2201 = vpop.f32.mrb[0].mxu0
        %2202 = vdwg.mxu0
        %v2203 = vadd.f32 %v1896, %v2120
        %v2204 = vadd.f32 %v1901, %v2125
        %v2205 = vadd.f32 %v1906, %v2130
        %v2206 = vadd.f32 %v1911, %v2135
        %v2207 = vadd.f32 %v1916, %v2140
        %v2208 = vadd.f32 %v1921, %v2145
        %v2209 = vadd.f32 %v1926, %v2150
        %v2210 = vadd.f32 %v1931, %v2155
        %v2211 = vadd.f32 %v1936, %v2160
        %v2212 = vadd.f32 %v1941, %v2165
        %v2213 = vadd.f32 %v1946, %v2170
        %v2214 = vadd.f32 %v1951, %v2175
        %v2215 = vadd.f32 %v1956, %v2180
        %v2216 = vadd.f32 %v1961, %v2185
        %v2217 = vadd.f32 %v1966, %v2190
        %v2218 = vadd.f32 %v1971, %v2195
        %v2219 = vadd.f32 %v1976, %v2200
        %s2220 = scalar_lea.vmem %s3, 24
        %v2221 = vld [vmem:[%s2220] sm:$0x3f]
        %vm2222 = vcmask 1044480
        %v2223 = vrot.slane %v1521, 3
        %v2224 = vrot.slane %v1522, 3
        %v2225 = vsel %vm2222, %v2223, %v2224
        %v2226 = vrot.slane %v1523, 3
        %v2227 = vsel %vm2222, %v2224, %v2226
        %v2228 = vrot.slane %v1524, 3
        %v2229 = vsel %vm2222, %v2226, %v2228
        %v2230 = vrot.slane %v1525, 3
        %v2231 = vsel %vm2222, %v2228, %v2230
        %v2232 = vrot.slane %v1526, 3
        %v2233 = vsel %vm2222, %v2230, %v2232
        %v2234 = vrot.slane %v1527, 3
        %v2235 = vsel %vm2222, %v2232, %v2234
        %v2236 = vrot.slane %v1528, 3
        %v2237 = vsel %vm2222, %v2234, %v2236
        %v2238 = vrot.slane %v1529, 3
        %v2239 = vsel %vm2222, %v2236, %v2238
        %v2240 = vrot.slane %v1530, 3
        %v2241 = vsel %vm2222, %v2238, %v2240
        %v2242 = vrot.slane %v1531, 3
        %v2243 = vsel %vm2222, %v2240, %v2242
        %v2244 = vrot.slane %v1532, 3
        %v2245 = vsel %vm2222, %v2242, %v2244
        %v2246 = vrot.slane %v1533, 3
        %v2247 = vsel %vm2222, %v2244, %v2246
        %v2248 = vrot.slane %v1534, 3
        %v2249 = vsel %vm2222, %v2246, %v2248
        %v2250 = vrot.slane %v1535, 3
        %v2251 = vsel %vm2222, %v2248, %v2250
        %v2252 = vrot.slane %v1536, 3
        %v2253 = vsel %vm2222, %v2250, %v2252
        %v2254 = vrot.slane %v1537, 3
        %v2255 = vsel %vm2222, %v2252, %v2254
        %v2256 = vrot.slane %v1538, 3
        %v2257 = vsel %vm2222, %v2254, %v2256
        %v2258 = vsel %vm1603, %v2225, 0
        %v2260 = vsel %vm1603, %v2227, 0
        %v2262 = vsel %vm1603, %v2229, 0
        %v2264 = vsel %vm1603, %v2231, 0
        %v2266 = vsel %vm1603, %v2233, 0
        %v2268 = vsel %vm1603, %v2235, 0
        %v2270 = vsel %vm1603, %v2237, 0
        %v2272 = vsel %vm1603, %v2239, 0
        %v2274 = vsel %vm1603, %v2241, 0
        %v2276 = vsel %vm1603, %v2243, 0
        %v2278 = vsel %vm1603, %v2245, 0
        %v2280 = vsel %vm1603, %v2247, 0
        %v2282 = vsel %vm1603, %v2249, 0
        %v2284 = vsel %vm1603, %v2251, 0
        %v2286 = vsel %vm1603, %v2253, 0
        %v2288 = vsel %vm1603, %v2255, 0
        %v2290 = vsel %vm1603, %v2257, 0
        %v2293 = vsel %vm1638, %v2221, 0
        %2295 = vmatprep.subr.mxu0 0.0
        %2296 = vmatpush1.msra.mxu0 %v2293
        %2297 = vmatprep.subr.mxu0 0.0
        %2298 = vmatpush1.msra.mxu0 0.0
        %2299 = vmatprep.subr.mxu0 0.0
        %2300 = vmatpush1.msra.mxu0 0.0
        %2301 = vmatprep.subr.mxu0 0.0
        %2302 = vmatpush1.msra.mxu0 0.0
        %2303 = vmatprep.subr.mxu0 0.0
        %2304 = vmatpush1.msra.mxu0 0.0
        %2305 = vmatprep.subr.mxu0 0.0
        %2306 = vmatpush1.msra.mxu0 0.0
        %2307 = vmatprep.subr.mxu0 0.0
        %2308 = vmatpush1.msra.mxu0 0.0
        %2309 = vmatprep.subr.mxu0 0.0
        %2310 = vmatpush1.msra.mxu0 0.0
        %2311 = vmatprep.subr.mxu0 0.0
        %2312 = vmatpush1.msra.mxu0 0.0
        %2313 = vmatprep.subr.mxu0 0.0
        %2314 = vmatpush1.msra.mxu0 0.0
        %2315 = vmatprep.subr.mxu0 0.0
        %2316 = vmatpush1.msra.mxu0 0.0
        %2317 = vmatprep.subr.mxu0 0.0
        %2318 = vmatpush1.msra.mxu0 0.0
        %2319 = vmatprep.subr.mxu0 0.0
        %2320 = vmatpush1.msra.mxu0 0.0
        %2321 = vmatprep.subr.mxu0 0.0
        %2322 = vmatpush1.msra.mxu0 0.0
        %2323 = vmatprep.subr.mxu0 0.0
        %2324 = vmatpush1.msra.mxu0 0.0
        %2325 = vmatprep.subr.mxu0 0.0
        %2326 = vmatpush1.msra.mxu0 0.0
        %2327 = vmatprep.subr.mxu0 0.0
        %2328 = vmatpush1.msra.mxu0 0.0
        %2329 = vmatprep.subr.mxu0 0.0
        %2330 = vmatpush1.msra.mxu0 0.0
        %2331 = vmatprep.subr.mxu0 0.0
        %2332 = vmatpush1.msra.mxu0 0.0
        %2333 = vmatprep.subr.mxu0 0.0
        %2334 = vmatpush1.msra.mxu0 0.0
        %2335 = vmatprep.subr.mxu0 0.0
        %2336 = vmatpush1.msra.mxu0 0.0
        %2337 = vmatprep.subr.mxu0 0.0
        %2338 = vmatpush1.msra.mxu0 0.0
        %2339 = vmatprep.subr.mxu0 0.0
        %2340 = vmatpush1.msra.mxu0 0.0
        %2341 = vmatprep.subr.mxu0 0.0
        %2342 = vmatpush1.msra.mxu0 0.0
        %2343 = vmatprep.subr.mxu0 0.0
        %2344 = vmatpush1.msra.mxu0 0.0
        %2345 = vmatprep.subr.mxu0 0.0
        %2346 = vmatpush1.msra.mxu0 0.0
        %2347 = vmatprep.subr.mxu0 0.0
        %2348 = vmatpush1.msra.mxu0 0.0
        %2349 = vmatprep.subr.mxu0 0.0
        %2350 = vmatpush1.msra.mxu0 0.0
        %2351 = vmatprep.subr.mxu0 0.0
        %2352 = vmatpush1.msra.mxu0 0.0
        %2353 = vmatprep.subr.mxu0 0.0
        %2354 = vmatpush1.msra.mxu0 0.0
        %2355 = vmatprep.subr.mxu0 0.0
        %2356 = vmatpush1.msra.mxu0 0.0
        %2357 = vmatprep.subr.mxu0 0.0
        %2358 = vmatpush1.msra.mxu0 0.0
        %2359 = vmatprep.mubr.f32.mxu0 0.0
        %2360 = vmatmul.mubr.f32.gmra.mrb[0].mxu0 %v2258
        %v2361 = vpop.f32.mrb[0].mxu0
        %v2362 = vadd.f32 0.0, %v2361
        %v2363 = vpop.f32.mrb[0].mxu0
        %2364 = vmatprep.mubr.f32.mxu0 0.0
        %2365 = vmatmul.mubr.f32.gmra.mrb[0].mxu0 %v2260
        %v2366 = vpop.f32.mrb[0].mxu0
        %v2367 = vadd.f32 0.0, %v2366
        %v2368 = vpop.f32.mrb[0].mxu0
        %2369 = vmatprep.mubr.f32.mxu0 0.0
        %2370 = vmatmul.mubr.f32.gmra.mrb[0].mxu0 %v2262
        %v2371 = vpop.f32.mrb[0].mxu0
        %v2372 = vadd.f32 0.0, %v2371
        %v2373 = vpop.f32.mrb[0].mxu0
        %2374 = vmatprep.mubr.f32.mxu0 0.0
        %2375 = vmatmul.mubr.f32.gmra.mrb[0].mxu0 %v2264
        %v2376 = vpop.f32.mrb[0].mxu0
        %v2377 = vadd.f32 0.0, %v2376
        %v2378 = vpop.f32.mrb[0].mxu0
        %2379 = vmatprep.mubr.f32.mxu0 0.0
        %2380 = vmatmul.mubr.f32.gmra.mrb[0].mxu0 %v2266
        %v2381 = vpop.f32.mrb[0].mxu0
        %v2382 = vadd.f32 0.0, %v2381
        %v2383 = vpop.f32.mrb[0].mxu0
        %2384 = vmatprep.mubr.f32.mxu0 0.0
        %2385 = vmatmul.mubr.f32.gmra.mrb[0].mxu0 %v2268
        %v2386 = vpop.f32.mrb[0].mxu0
        %v2387 = vadd.f32 0.0, %v2386
        %v2388 = vpop.f32.mrb[0].mxu0
        %2389 = vmatprep.mubr.f32.mxu0 0.0
        %2390 = vmatmul.mubr.f32.gmra.mrb[0].mxu0 %v2270
        %v2391 = vpop.f32.mrb[0].mxu0
        %v2392 = vadd.f32 0.0, %v2391
        %v2393 = vpop.f32.mrb[0].mxu0
        %2394 = vmatprep.mubr.f32.mxu0 0.0
        %2395 = vmatmul.mubr.f32.gmra.mrb[0].mxu0 %v2272
        %v2396 = vpop.f32.mrb[0].mxu0
        %v2397 = vadd.f32 0.0, %v2396
        %v2398 = vpop.f32.mrb[0].mxu0
        %2399 = vmatprep.mubr.f32.mxu0 0.0
        %2400 = vmatmul.mubr.f32.gmra.mrb[0].mxu0 %v2274
        %v2401 = vpop.f32.mrb[0].mxu0
        %v2402 = vadd.f32 0.0, %v2401
        %v2403 = vpop.f32.mrb[0].mxu0
        %2404 = vmatprep.mubr.f32.mxu0 0.0
        %2405 = vmatmul.mubr.f32.gmra.mrb[0].mxu0 %v2276
        %v2406 = vpop.f32.mrb[0].mxu0
        %v2407 = vadd.f32 0.0, %v2406
        %v2408 = vpop.f32.mrb[0].mxu0
        %2409 = vmatprep.mubr.f32.mxu0 0.0
        %2410 = vmatmul.mubr.f32.gmra.mrb[0].mxu0 %v2278
        %v2411 = vpop.f32.mrb[0].mxu0
        %v2412 = vadd.f32 0.0, %v2411
        %v2413 = vpop.f32.mrb[0].mxu0
        %2414 = vmatprep.mubr.f32.mxu0 0.0
        %2415 = vmatmul.mubr.f32.gmra.mrb[0].mxu0 %v2280
        %v2416 = vpop.f32.mrb[0].mxu0
        %v2417 = vadd.f32 0.0, %v2416
        %v2418 = vpop.f32.mrb[0].mxu0
        %2419 = vmatprep.mubr.f32.mxu0 0.0
        %2420 = vmatmul.mubr.f32.gmra.mrb[0].mxu0 %v2282
        %v2421 = vpop.f32.mrb[0].mxu0
        %v2422 = vadd.f32 0.0, %v2421
        %v2423 = vpop.f32.mrb[0].mxu0
        %2424 = vmatprep.mubr.f32.mxu0 0.0
        %2425 = vmatmul.mubr.f32.gmra.mrb[0].mxu0 %v2284
        %v2426 = vpop.f32.mrb[0].mxu0
        %v2427 = vadd.f32 0.0, %v2426
        %v2428 = vpop.f32.mrb[0].mxu0
        %2429 = vmatprep.mubr.f32.mxu0 0.0
        %2430 = vmatmul.mubr.f32.gmra.mrb[0].mxu0 %v2286
        %v2431 = vpop.f32.mrb[0].mxu0
        %v2432 = vadd.f32 0.0, %v2431
        %v2433 = vpop.f32.mrb[0].mxu0
        %2434 = vmatprep.mubr.f32.mxu0 0.0
        %2435 = vmatmul.mubr.f32.gmra.mrb[0].mxu0 %v2288
        %v2436 = vpop.f32.mrb[0].mxu0
        %v2437 = vadd.f32 0.0, %v2436
        %v2438 = vpop.f32.mrb[0].mxu0
        %2439 = vmatprep.mubr.f32.mxu0 0.0
        %2440 = vmatmul.mubr.f32.gmra.mrb[0].mxu0 %v2290
        %v2441 = vpop.f32.mrb[0].mxu0
        %v2442 = vadd.f32 0.0, %v2441
        %v2443 = vpop.f32.mrb[0].mxu0
        %2444 = vdwg.mxu0
        %v2445 = vadd.f32 %v2203, %v2362
        %v2446 = vadd.f32 %v2204, %v2367
        %v2447 = vadd.f32 %v2205, %v2372
        %v2448 = vadd.f32 %v2206, %v2377
        %v2449 = vadd.f32 %v2207, %v2382
        %v2450 = vadd.f32 %v2208, %v2387
        %v2451 = vadd.f32 %v2209, %v2392
        %v2452 = vadd.f32 %v2210, %v2397
        %v2453 = vadd.f32 %v2211, %v2402
        %v2454 = vadd.f32 %v2212, %v2407
        %v2455 = vadd.f32 %v2213, %v2412
        %v2456 = vadd.f32 %v2214, %v2417
        %v2457 = vadd.f32 %v2215, %v2422
        %v2458 = vadd.f32 %v2216, %v2427
        %v2459 = vadd.f32 %v2217, %v2432
        %v2460 = vadd.f32 %v2218, %v2437
        %v2461 = vadd.f32 %v2219, %v2442
        %s2462 = scalar_lea.vmem %s3, 32
        %v2463 = vld [vmem:[%s2462] sm:$0x3f]
        %vm2464 = vcmask 1043456
        %v2465 = vrot.slane %v1521, 4
        %v2466 = vrot.slane %v1522, 4
        %v2467 = vsel %vm2464, %v2465, %v2466
        %v2468 = vrot.slane %v1523, 4
        %v2469 = vsel %vm2464, %v2466, %v2468
        %v2470 = vrot.slane %v1524, 4
        %v2471 = vsel %vm2464, %v2468, %v2470
        %v2472 = vrot.slane %v1525, 4
        %v2473 = vsel %vm2464, %v2470, %v2472
        %v2474 = vrot.slane %v1526, 4
        %v2475 = vsel %vm2464, %v2472, %v2474
        %v2476 = vrot.slane %v1527, 4
        %v2477 = vsel %vm2464, %v2474, %v2476
        %v2478 = vrot.slane %v1528, 4
        %v2479 = vsel %vm2464, %v2476, %v2478
        %v2480 = vrot.slane %v1529, 4
        %v2481 = vsel %vm2464, %v2478, %v2480
        %v2482 = vrot.slane %v1530, 4
        %v2483 = vsel %vm2464, %v2480, %v2482
        %v2484 = vrot.slane %v1531, 4
        %v2485 = vsel %vm2464, %v2482, %v2484
        %v2486 = vrot.slane %v1532, 4
        %v2487 = vsel %vm2464, %v2484, %v2486
        %v2488 = vrot.slane %v1533, 4
        %v2489 = vsel %vm2464, %v2486, %v2488
        %v2490 = vrot.slane %v1534, 4
        %v2491 = vsel %vm2464, %v2488, %v2490
        %v2492 = vrot.slane %v1535, 4
        %v2493 = vsel %vm2464, %v2490, %v2492
        %v2494 = vrot.slane %v1536, 4
        %v2495 = vsel %vm2464, %v2492, %v2494
        %v2496 = vrot.slane %v1537, 4
        %v2497 = vsel %vm2464, %v2494, %v2496
        %v2498 = vrot.slane %v1538, 4
        %v2499 = vsel %vm2464, %v2496, %v2498
        %v2500 = vsel %vm1603, %v2467, 0
        %v2502 = vsel %vm1603, %v2469, 0
        %v2504 = vsel %vm1603, %v2471, 0
        %v2506 = vsel %vm1603, %v2473, 0
        %v2508 = vsel %vm1603, %v2475, 0
        %v2510 = vsel %vm1603, %v2477, 0
        %v2512 = vsel %vm1603, %v2479, 0
        %v2514 = vsel %vm1603, %v2481, 0
        %v2516 = vsel %vm1603, %v2483, 0
        %v2518 = vsel %vm1603, %v2485, 0
        %v2520 = vsel %vm1603, %v2487, 0
        %v2522 = vsel %vm1603, %v2489, 0
        %v2524 = vsel %vm1603, %v2491, 0
        %v2526 = vsel %vm1603, %v2493, 0
        %v2528 = vsel %vm1603, %v2495, 0
        %v2530 = vsel %vm1603, %v2497, 0
        %v2532 = vsel %vm1603, %v2499, 0
        %v2535 = vsel %vm1638, %v2463, 0
        %2537 = vmatprep.subr.mxu0 0.0
        %2538 = vmatpush1.msra.mxu0 %v2535
        %2539 = vmatprep.subr.mxu0 0.0
        %2540 = vmatpush1.msra.mxu0 0.0
        %2541 = vmatprep.subr.mxu0 0.0
        %2542 = vmatpush1.msra.mxu0 0.0
        %2543 = vmatprep.subr.mxu0 0.0
        %2544 = vmatpush1.msra.mxu0 0.0
        %2545 = vmatprep.subr.mxu0 0.0
        %2546 = vmatpush1.msra.mxu0 0.0
        %2547 = vmatprep.subr.mxu0 0.0
        %2548 = vmatpush1.msra.mxu0 0.0
        %2549 = vmatprep.subr.mxu0 0.0
        %2550 = vmatpush1.msra.mxu0 0.0
        %2551 = vmatprep.subr.mxu0 0.0
        %2552 = vmatpush1.msra.mxu0 0.0
        %2553 = vmatprep.subr.mxu0 0.0
        %2554 = vmatpush1.msra.mxu0 0.0
        %2555 = vmatprep.subr.mxu0 0.0
        %2556 = vmatpush1.msra.mxu0 0.0
        %2557 = vmatprep.subr.mxu0 0.0
        %2558 = vmatpush1.msra.mxu0 0.0
        %2559 = vmatprep.subr.mxu0 0.0
        %2560 = vmatpush1.msra.mxu0 0.0
        %2561 = vmatprep.subr.mxu0 0.0
        %2562 = vmatpush1.msra.mxu0 0.0
        %2563 = vmatprep.subr.mxu0 0.0
        %2564 = vmatpush1.msra.mxu0 0.0
        %2565 = vmatprep.subr.mxu0 0.0
        %2566 = vmatpush1.msra.mxu0 0.0
        %2567 = vmatprep.subr.mxu0 0.0
        %2568 = vmatpush1.msra.mxu0 0.0
        %2569 = vmatprep.subr.mxu0 0.0
        %2570 = vmatpush1.msra.mxu0 0.0
        %2571 = vmatprep.subr.mxu0 0.0
        %2572 = vmatpush1.msra.mxu0 0.0
        %2573 = vmatprep.subr.mxu0 0.0
        %2574 = vmatpush1.msra.mxu0 0.0
        %2575 = vmatprep.subr.mxu0 0.0
        %2576 = vmatpush1.msra.mxu0 0.0
        %2577 = vmatprep.subr.mxu0 0.0
        %2578 = vmatpush1.msra.mxu0 0.0
        %2579 = vmatprep.subr.mxu0 0.0
        %2580 = vmatpush1.msra.mxu0 0.0
        %2581 = vmatprep.subr.mxu0 0.0
        %2582 = vmatpush1.msra.mxu0 0.0
        %2583 = vmatprep.subr.mxu0 0.0
        %2584 = vmatpush1.msra.mxu0 0.0
        %2585 = vmatprep.subr.mxu0 0.0
        %2586 = vmatpush1.msra.mxu0 0.0
        %2587 = vmatprep.subr.mxu0 0.0
        %2588 = vmatpush1.msra.mxu0 0.0
        %2589 = vmatprep.subr.mxu0 0.0
        %2590 = vmatpush1.msra.mxu0 0.0
        %2591 = vmatprep.subr.mxu0 0.0
        %2592 = vmatpush1.msra.mxu0 0.0
        %2593 = vmatprep.subr.mxu0 0.0
        %2594 = vmatpush1.msra.mxu0 0.0
        %2595 = vmatprep.subr.mxu0 0.0
        %2596 = vmatpush1.msra.mxu0 0.0
        %2597 = vmatprep.subr.mxu0 0.0
        %2598 = vmatpush1.msra.mxu0 0.0
        %2599 = vmatprep.subr.mxu0 0.0
        %2600 = vmatpush1.msra.mxu0 0.0
        %2601 = vmatprep.mubr.f32.mxu0 0.0
        %2602 = vmatmul.mubr.f32.gmra.mrb[0].mxu0 %v2500
        %v2603 = vpop.f32.mrb[0].mxu0
        %v2604 = vadd.f32 0.0, %v2603
        %v2605 = vpop.f32.mrb[0].mxu0
        %2606 = vmatprep.mubr.f32.mxu0 0.0
        %2607 = vmatmul.mubr.f32.gmra.mrb[0].mxu0 %v2502
        %v2608 = vpop.f32.mrb[0].mxu0
        %v2609 = vadd.f32 0.0, %v2608
        %v2610 = vpop.f32.mrb[0].mxu0
        %2611 = vmatprep.mubr.f32.mxu0 0.0
        %2612 = vmatmul.mubr.f32.gmra.mrb[0].mxu0 %v2504
        %v2613 = vpop.f32.mrb[0].mxu0
        %v2614 = vadd.f32 0.0, %v2613
        %v2615 = vpop.f32.mrb[0].mxu0
        %2616 = vmatprep.mubr.f32.mxu0 0.0
        %2617 = vmatmul.mubr.f32.gmra.mrb[0].mxu0 %v2506
        %v2618 = vpop.f32.mrb[0].mxu0
        %v2619 = vadd.f32 0.0, %v2618
        %v2620 = vpop.f32.mrb[0].mxu0
        %2621 = vmatprep.mubr.f32.mxu0 0.0
        %2622 = vmatmul.mubr.f32.gmra.mrb[0].mxu0 %v2508
        %v2623 = vpop.f32.mrb[0].mxu0
        %v2624 = vadd.f32 0.0, %v2623
        %v2625 = vpop.f32.mrb[0].mxu0
        %2626 = vmatprep.mubr.f32.mxu0 0.0
        %2627 = vmatmul.mubr.f32.gmra.mrb[0].mxu0 %v2510
        %v2628 = vpop.f32.mrb[0].mxu0
        %v2629 = vadd.f32 0.0, %v2628
        %v2630 = vpop.f32.mrb[0].mxu0
        %2631 = vmatprep.mubr.f32.mxu0 0.0
        %2632 = vmatmul.mubr.f32.gmra.mrb[0].mxu0 %v2512
        %v2633 = vpop.f32.mrb[0].mxu0
        %v2634 = vadd.f32 0.0, %v2633
        %v2635 = vpop.f32.mrb[0].mxu0
        %2636 = vmatprep.mubr.f32.mxu0 0.0
        %2637 = vmatmul.mubr.f32.gmra.mrb[0].mxu0 %v2514
        %v2638 = vpop.f32.mrb[0].mxu0
        %v2639 = vadd.f32 0.0, %v2638
        %v2640 = vpop.f32.mrb[0].mxu0
        %2641 = vmatprep.mubr.f32.mxu0 0.0
        %2642 = vmatmul.mubr.f32.gmra.mrb[0].mxu0 %v2516
        %v2643 = vpop.f32.mrb[0].mxu0
        %v2644 = vadd.f32 0.0, %v2643
        %v2645 = vpop.f32.mrb[0].mxu0
        %2646 = vmatprep.mubr.f32.mxu0 0.0
        %2647 = vmatmul.mubr.f32.gmra.mrb[0].mxu0 %v2518
        %v2648 = vpop.f32.mrb[0].mxu0
        %v2649 = vadd.f32 0.0, %v2648
        %v2650 = vpop.f32.mrb[0].mxu0
        %2651 = vmatprep.mubr.f32.mxu0 0.0
        %2652 = vmatmul.mubr.f32.gmra.mrb[0].mxu0 %v2520
        %v2653 = vpop.f32.mrb[0].mxu0
        %v2654 = vadd.f32 0.0, %v2653
        %v2655 = vpop.f32.mrb[0].mxu0
        %2656 = vmatprep.mubr.f32.mxu0 0.0
        %2657 = vmatmul.mubr.f32.gmra.mrb[0].mxu0 %v2522
        %v2658 = vpop.f32.mrb[0].mxu0
        %v2659 = vadd.f32 0.0, %v2658
        %v2660 = vpop.f32.mrb[0].mxu0
        %2661 = vmatprep.mubr.f32.mxu0 0.0
        %2662 = vmatmul.mubr.f32.gmra.mrb[0].mxu0 %v2524
        %v2663 = vpop.f32.mrb[0].mxu0
        %v2664 = vadd.f32 0.0, %v2663
        %v2665 = vpop.f32.mrb[0].mxu0
        %2666 = vmatprep.mubr.f32.mxu0 0.0
        %2667 = vmatmul.mubr.f32.gmra.mrb[0].mxu0 %v2526
        %v2668 = vpop.f32.mrb[0].mxu0
        %v2669 = vadd.f32 0.0, %v2668
        %v2670 = vpop.f32.mrb[0].mxu0
        %2671 = vmatprep.mubr.f32.mxu0 0.0
        %2672 = vmatmul.mubr.f32.gmra.mrb[0].mxu0 %v2528
        %v2673 = vpop.f32.mrb[0].mxu0
        %v2674 = vadd.f32 0.0, %v2673
        %v2675 = vpop.f32.mrb[0].mxu0
        %2676 = vmatprep.mubr.f32.mxu0 0.0
        %2677 = vmatmul.mubr.f32.gmra.mrb[0].mxu0 %v2530
        %v2678 = vpop.f32.mrb[0].mxu0
        %v2679 = vadd.f32 0.0, %v2678
        %v2680 = vpop.f32.mrb[0].mxu0
        %2681 = vmatprep.mubr.f32.mxu0 0.0
        %2682 = vmatmul.mubr.f32.gmra.mrb[0].mxu0 %v2532
        %v2683 = vpop.f32.mrb[0].mxu0
        %v2684 = vadd.f32 0.0, %v2683
        %v2685 = vpop.f32.mrb[0].mxu0
        %2686 = vdwg.mxu0
        %v2687 = vadd.f32 %v2445, %v2604
        %v2688 = vadd.f32 %v2446, %v2609
        %v2689 = vadd.f32 %v2447, %v2614
        %v2690 = vadd.f32 %v2448, %v2619
        %v2691 = vadd.f32 %v2449, %v2624
        %v2692 = vadd.f32 %v2450, %v2629
        %v2693 = vadd.f32 %v2451, %v2634
        %v2694 = vadd.f32 %v2452, %v2639
        %v2695 = vadd.f32 %v2453, %v2644
        %v2696 = vadd.f32 %v2454, %v2649
        %v2697 = vadd.f32 %v2455, %v2654
        %v2698 = vadd.f32 %v2456, %v2659
        %v2699 = vadd.f32 %v2457, %v2664
        %v2700 = vadd.f32 %v2458, %v2669
        %v2701 = vadd.f32 %v2459, %v2674
        %v2702 = vadd.f32 %v2460, %v2679
        %v2703 = vadd.f32 %v2461, %v2684
        %s2704 = scalar_lea.vmem %s3, 40
        %v2705 = vld [vmem:[%s2704] sm:$0x3f]
        %vm2707 = vcmask 1041408
        %v2708 = vrot.slane %v1522, 6
        %v2709 = vrot.slane %v1523, 6
        %v2710 = vsel %vm2707, %v2708, %v2709
        %v2711 = vrot.slane %v1524, 6
        %v2712 = vsel %vm2707, %v2709, %v2711
        %v2713 = vrot.slane %v1525, 6
        %v2714 = vsel %vm2707, %v2711, %v2713
        %v2715 = vrot.slane %v1526, 6
        %v2716 = vsel %vm2707, %v2713, %v2715
        %v2717 = vrot.slane %v1527, 6
        %v2718 = vsel %vm2707, %v2715, %v2717
        %v2719 = vrot.slane %v1528, 6
        %v2720 = vsel %vm2707, %v2717, %v2719
        %v2721 = vrot.slane %v1529, 6
        %v2722 = vsel %vm2707, %v2719, %v2721
        %v2723 = vrot.slane %v1530, 6
        %v2724 = vsel %vm2707, %v2721, %v2723
        %v2725 = vrot.slane %v1531, 6
        %v2726 = vsel %vm2707, %v2723, %v2725
        %v2727 = vrot.slane %v1532, 6
        %v2728 = vsel %vm2707, %v2725, %v2727
        %v2729 = vrot.slane %v1533, 6
        %v2730 = vsel %vm2707, %v2727, %v2729
        %v2731 = vrot.slane %v1534, 6
        %v2732 = vsel %vm2707, %v2729, %v2731
        %v2733 = vrot.slane %v1535, 6
        %v2734 = vsel %vm2707, %v2731, %v2733
        %v2735 = vrot.slane %v1536, 6
        %v2736 = vsel %vm2707, %v2733, %v2735
        %v2737 = vrot.slane %v1537, 6
        %v2738 = vsel %vm2707, %v2735, %v2737
        %v2739 = vrot.slane %v1538, 6
        %v2740 = vsel %vm2707, %v2737, %v2739
        %v2741 = vrot.slane %v1539, 6
        %v2742 = vsel %vm2707, %v2739, %v2741
        %v2743 = vsel %vm1603, %v2710, 0
        %v2745 = vsel %vm1603, %v2712, 0
        %v2747 = vsel %vm1603, %v2714, 0
        %v2749 = vsel %vm1603, %v2716, 0
        %v2751 = vsel %vm1603, %v2718, 0
        %v2753 = vsel %vm1603, %v2720, 0
        %v2755 = vsel %vm1603, %v2722, 0
        %v2757 = vsel %vm1603, %v2724, 0
        %v2759 = vsel %vm1603, %v2726, 0
        %v2761 = vsel %vm1603, %v2728, 0
        %v2763 = vsel %vm1603, %v2730, 0
        %v2765 = vsel %vm1603, %v2732, 0
        %v2767 = vsel %vm1603, %v2734, 0
        %v2769 = vsel %vm1603, %v2736, 0
        %v2771 = vsel %vm1603, %v2738, 0
        %v2773 = vsel %vm1603, %v2740, 0
        %v2775 = vsel %vm1603, %v2742, 0
        %v2778 = vsel %vm1638, %v2705, 0
        %2780 = vmatprep.subr.mxu0 0.0
        %2781 = vmatpush1.msra.mxu0 %v2778
        %2782 = vmatprep.subr.mxu0 0.0
        %2783 = vmatpush1.msra.mxu0 0.0
        %2784 = vmatprep.subr.mxu0 0.0
        %2785 = vmatpush1.msra.mxu0 0.0
        %2786 = vmatprep.subr.mxu0 0.0
        %2787 = vmatpush1.msra.mxu0 0.0
        %2788 = vmatprep.subr.mxu0 0.0
        %2789 = vmatpush1.msra.mxu0 0.0
        %2790 = vmatprep.subr.mxu0 0.0
        %2791 = vmatpush1.msra.mxu0 0.0
        %2792 = vmatprep.subr.mxu0 0.0
        %2793 = vmatpush1.msra.mxu0 0.0
        %2794 = vmatprep.subr.mxu0 0.0
        %2795 = vmatpush1.msra.mxu0 0.0
        %2796 = vmatprep.subr.mxu0 0.0
        %2797 = vmatpush1.msra.mxu0 0.0
        %2798 = vmatprep.subr.mxu0 0.0
        %2799 = vmatpush1.msra.mxu0 0.0
        %2800 = vmatprep.subr.mxu0 0.0
        %2801 = vmatpush1.msra.mxu0 0.0
        %2802 = vmatprep.subr.mxu0 0.0
        %2803 = vmatpush1.msra.mxu0 0.0
        %2804 = vmatprep.subr.mxu0 0.0
        %2805 = vmatpush1.msra.mxu0 0.0
        %2806 = vmatprep.subr.mxu0 0.0
        %2807 = vmatpush1.msra.mxu0 0.0
        %2808 = vmatprep.subr.mxu0 0.0
        %2809 = vmatpush1.msra.mxu0 0.0
        %2810 = vmatprep.subr.mxu0 0.0
        %2811 = vmatpush1.msra.mxu0 0.0
        %2812 = vmatprep.subr.mxu0 0.0
        %2813 = vmatpush1.msra.mxu0 0.0
        %2814 = vmatprep.subr.mxu0 0.0
        %2815 = vmatpush1.msra.mxu0 0.0
        %2816 = vmatprep.subr.mxu0 0.0
        %2817 = vmatpush1.msra.mxu0 0.0
        %2818 = vmatprep.subr.mxu0 0.0
        %2819 = vmatpush1.msra.mxu0 0.0
        %2820 = vmatprep.subr.mxu0 0.0
        %2821 = vmatpush1.msra.mxu0 0.0
        %2822 = vmatprep.subr.mxu0 0.0
        %2823 = vmatpush1.msra.mxu0 0.0
        %2824 = vmatprep.subr.mxu0 0.0
        %2825 = vmatpush1.msra.mxu0 0.0
        %2826 = vmatprep.subr.mxu0 0.0
        %2827 = vmatpush1.msra.mxu0 0.0
        %2828 = vmatprep.subr.mxu0 0.0
        %2829 = vmatpush1.msra.mxu0 0.0
        %2830 = vmatprep.subr.mxu0 0.0
        %2831 = vmatpush1.msra.mxu0 0.0
        %2832 = vmatprep.subr.mxu0 0.0
        %2833 = vmatpush1.msra.mxu0 0.0
        %2834 = vmatprep.subr.mxu0 0.0
        %2835 = vmatpush1.msra.mxu0 0.0
        %2836 = vmatprep.subr.mxu0 0.0
        %2837 = vmatpush1.msra.mxu0 0.0
        %2838 = vmatprep.subr.mxu0 0.0
        %2839 = vmatpush1.msra.mxu0 0.0
        %2840 = vmatprep.subr.mxu0 0.0
        %2841 = vmatpush1.msra.mxu0 0.0
        %2842 = vmatprep.subr.mxu0 0.0
        %2843 = vmatpush1.msra.mxu0 0.0
        %2844 = vmatprep.mubr.f32.mxu0 0.0
        %2845 = vmatmul.mubr.f32.gmra.mrb[0].mxu0 %v2743
        %v2846 = vpop.f32.mrb[0].mxu0
        %v2847 = vadd.f32 0.0, %v2846
        %v2848 = vpop.f32.mrb[0].mxu0
        %2849 = vmatprep.mubr.f32.mxu0 0.0
        %2850 = vmatmul.mubr.f32.gmra.mrb[0].mxu0 %v2745
        %v2851 = vpop.f32.mrb[0].mxu0
        %v2852 = vadd.f32 0.0, %v2851
        %v2853 = vpop.f32.mrb[0].mxu0
        %2854 = vmatprep.mubr.f32.mxu0 0.0
        %2855 = vmatmul.mubr.f32.gmra.mrb[0].mxu0 %v2747
        %v2856 = vpop.f32.mrb[0].mxu0
        %v2857 = vadd.f32 0.0, %v2856
        %v2858 = vpop.f32.mrb[0].mxu0
        %2859 = vmatprep.mubr.f32.mxu0 0.0
        %2860 = vmatmul.mubr.f32.gmra.mrb[0].mxu0 %v2749
        %v2861 = vpop.f32.mrb[0].mxu0
        %v2862 = vadd.f32 0.0, %v2861
        %v2863 = vpop.f32.mrb[0].mxu0
        %2864 = vmatprep.mubr.f32.mxu0 0.0
        %2865 = vmatmul.mubr.f32.gmra.mrb[0].mxu0 %v2751
        %v2866 = vpop.f32.mrb[0].mxu0
        %v2867 = vadd.f32 0.0, %v2866
        %v2868 = vpop.f32.mrb[0].mxu0
        %2869 = vmatprep.mubr.f32.mxu0 0.0
        %2870 = vmatmul.mubr.f32.gmra.mrb[0].mxu0 %v2753
        %v2871 = vpop.f32.mrb[0].mxu0
        %v2872 = vadd.f32 0.0, %v2871
        %v2873 = vpop.f32.mrb[0].mxu0
        %2874 = vmatprep.mubr.f32.mxu0 0.0
        %2875 = vmatmul.mubr.f32.gmra.mrb[0].mxu0 %v2755
        %v2876 = vpop.f32.mrb[0].mxu0
        %v2877 = vadd.f32 0.0, %v2876
        %v2878 = vpop.f32.mrb[0].mxu0
        %2879 = vmatprep.mubr.f32.mxu0 0.0
        %2880 = vmatmul.mubr.f32.gmra.mrb[0].mxu0 %v2757
        %v2881 = vpop.f32.mrb[0].mxu0
        %v2882 = vadd.f32 0.0, %v2881
        %v2883 = vpop.f32.mrb[0].mxu0
        %2884 = vmatprep.mubr.f32.mxu0 0.0
        %2885 = vmatmul.mubr.f32.gmra.mrb[0].mxu0 %v2759
        %v2886 = vpop.f32.mrb[0].mxu0
        %v2887 = vadd.f32 0.0, %v2886
        %v2888 = vpop.f32.mrb[0].mxu0
        %2889 = vmatprep.mubr.f32.mxu0 0.0
        %2890 = vmatmul.mubr.f32.gmra.mrb[0].mxu0 %v2761
        %v2891 = vpop.f32.mrb[0].mxu0
        %v2892 = vadd.f32 0.0, %v2891
        %v2893 = vpop.f32.mrb[0].mxu0
        %2894 = vmatprep.mubr.f32.mxu0 0.0
        %2895 = vmatmul.mubr.f32.gmra.mrb[0].mxu0 %v2763
        %v2896 = vpop.f32.mrb[0].mxu0
        %v2897 = vadd.f32 0.0, %v2896
        %v2898 = vpop.f32.mrb[0].mxu0
        %2899 = vmatprep.mubr.f32.mxu0 0.0
        %2900 = vmatmul.mubr.f32.gmra.mrb[0].mxu0 %v2765
        %v2901 = vpop.f32.mrb[0].mxu0
        %v2902 = vadd.f32 0.0, %v2901
        %v2903 = vpop.f32.mrb[0].mxu0
        %2904 = vmatprep.mubr.f32.mxu0 0.0
        %2905 = vmatmul.mubr.f32.gmra.mrb[0].mxu0 %v2767
        %v2906 = vpop.f32.mrb[0].mxu0
        %v2907 = vadd.f32 0.0, %v2906
        %v2908 = vpop.f32.mrb[0].mxu0
        %2909 = vmatprep.mubr.f32.mxu0 0.0
        %2910 = vmatmul.mubr.f32.gmra.mrb[0].mxu0 %v2769
        %v2911 = vpop.f32.mrb[0].mxu0
        %v2912 = vadd.f32 0.0, %v2911
        %v2913 = vpop.f32.mrb[0].mxu0
        %2914 = vmatprep.mubr.f32.mxu0 0.0
        %2915 = vmatmul.mubr.f32.gmra.mrb[0].mxu0 %v2771
        %v2916 = vpop.f32.mrb[0].mxu0
        %v2917 = vadd.f32 0.0, %v2916
        %v2918 = vpop.f32.mrb[0].mxu0
        %2919 = vmatprep.mubr.f32.mxu0 0.0
        %2920 = vmatmul.mubr.f32.gmra.mrb[0].mxu0 %v2773
        %v2921 = vpop.f32.mrb[0].mxu0
        %v2922 = vadd.f32 0.0, %v2921
        %v2923 = vpop.f32.mrb[0].mxu0
        %2924 = vmatprep.mubr.f32.mxu0 0.0
        %2925 = vmatmul.mubr.f32.gmra.mrb[0].mxu0 %v2775
        %v2926 = vpop.f32.mrb[0].mxu0
        %v2927 = vadd.f32 0.0, %v2926
        %v2928 = vpop.f32.mrb[0].mxu0
        %2929 = vdwg.mxu0
        %v2930 = vadd.f32 %v2687, %v2847
        %v2931 = vadd.f32 %v2688, %v2852
        %v2932 = vadd.f32 %v2689, %v2857
        %v2933 = vadd.f32 %v2690, %v2862
        %v2934 = vadd.f32 %v2691, %v2867
        %v2935 = vadd.f32 %v2692, %v2872
        %v2936 = vadd.f32 %v2693, %v2877
        %v2937 = vadd.f32 %v2694, %v2882
        %v2938 = vadd.f32 %v2695, %v2887
        %v2939 = vadd.f32 %v2696, %v2892
        %v2940 = vadd.f32 %v2697, %v2897
        %v2941 = vadd.f32 %v2698, %v2902
        %v2942 = vadd.f32 %v2699, %v2907
        %v2943 = vadd.f32 %v2700, %v2912
        %v2944 = vadd.f32 %v2701, %v2917
        %v2945 = vadd.f32 %v2702, %v2922
        %v2946 = vadd.f32 %v2703, %v2927
        %s2947 = scalar_lea.vmem %s3, 48
        %v2948 = vld [vmem:[%s2947] sm:$0x3f]
        %vm2949 = vcmask 1040384
        %v2950 = vrot.slane %v1522, 7
        %v2951 = vrot.slane %v1523, 7
        %v2952 = vsel %vm2949, %v2950, %v2951
        %v2953 = vrot.slane %v1524, 7
        %v2954 = vsel %vm2949, %v2951, %v2953
        %v2955 = vrot.slane %v1525, 7
        %v2956 = vsel %vm2949, %v2953, %v2955
        %v2957 = vrot.slane %v1526, 7
        %v2958 = vsel %vm2949, %v2955, %v2957
        %v2959 = vrot.slane %v1527, 7
        %v2960 = vsel %vm2949, %v2957, %v2959
        %v2961 = vrot.slane %v1528, 7
        %v2962 = vsel %vm2949, %v2959, %v2961
        %v2963 = vrot.slane %v1529, 7
        %v2964 = vsel %vm2949, %v2961, %v2963
        %v2965 = vrot.slane %v1530, 7
        %v2966 = vsel %vm2949, %v2963, %v2965
        %v2967 = vrot.slane %v1531, 7
        %v2968 = vsel %vm2949, %v2965, %v2967
        %v2969 = vrot.slane %v1532, 7
        %v2970 = vsel %vm2949, %v2967, %v2969
        %v2971 = vrot.slane %v1533, 7
        %v2972 = vsel %vm2949, %v2969, %v2971
        %v2973 = vrot.slane %v1534, 7
        %v2974 = vsel %vm2949, %v2971, %v2973
        %v2975 = vrot.slane %v1535, 7
        %v2976 = vsel %vm2949, %v2973, %v2975
        %v2977 = vrot.slane %v1536, 7
        %v2978 = vsel %vm2949, %v2975, %v2977
        %v2979 = vrot.slane %v1537, 7
        %v2980 = vsel %vm2949, %v2977, %v2979
        %v2981 = vrot.slane %v1538, 7
        %v2982 = vsel %vm2949, %v2979, %v2981
        %v2983 = vrot.slane %v1539, 7
        %v2984 = vsel %vm2949, %v2981, %v2983
        %v2985 = vsel %vm1603, %v2952, 0
        %v2987 = vsel %vm1603, %v2954, 0
        %v2989 = vsel %vm1603, %v2956, 0
        %v2991 = vsel %vm1603, %v2958, 0
        %v2993 = vsel %vm1603, %v2960, 0
        %v2995 = vsel %vm1603, %v2962, 0
        %v2997 = vsel %vm1603, %v2964, 0
        %v2999 = vsel %vm1603, %v2966, 0
        %v3001 = vsel %vm1603, %v2968, 0
        %v3003 = vsel %vm1603, %v2970, 0
        %v3005 = vsel %vm1603, %v2972, 0
        %v3007 = vsel %vm1603, %v2974, 0
        %v3009 = vsel %vm1603, %v2976, 0
        %v3011 = vsel %vm1603, %v2978, 0
        %v3013 = vsel %vm1603, %v2980, 0
        %v3015 = vsel %vm1603, %v2982, 0
        %v3017 = vsel %vm1603, %v2984, 0
        %v3020 = vsel %vm1638, %v2948, 0
        %3022 = vmatprep.subr.mxu0 0.0
        %3023 = vmatpush1.msra.mxu0 %v3020
        %3024 = vmatprep.subr.mxu0 0.0
        %3025 = vmatpush1.msra.mxu0 0.0
        %3026 = vmatprep.subr.mxu0 0.0
        %3027 = vmatpush1.msra.mxu0 0.0
        %3028 = vmatprep.subr.mxu0 0.0
        %3029 = vmatpush1.msra.mxu0 0.0
        %3030 = vmatprep.subr.mxu0 0.0
        %3031 = vmatpush1.msra.mxu0 0.0
        %3032 = vmatprep.subr.mxu0 0.0
        %3033 = vmatpush1.msra.mxu0 0.0
        %3034 = vmatprep.subr.mxu0 0.0
        %3035 = vmatpush1.msra.mxu0 0.0
        %3036 = vmatprep.subr.mxu0 0.0
        %3037 = vmatpush1.msra.mxu0 0.0
        %3038 = vmatprep.subr.mxu0 0.0
        %3039 = vmatpush1.msra.mxu0 0.0
        %3040 = vmatprep.subr.mxu0 0.0
        %3041 = vmatpush1.msra.mxu0 0.0
        %3042 = vmatprep.subr.mxu0 0.0
        %3043 = vmatpush1.msra.mxu0 0.0
        %3044 = vmatprep.subr.mxu0 0.0
        %3045 = vmatpush1.msra.mxu0 0.0
        %3046 = vmatprep.subr.mxu0 0.0
        %3047 = vmatpush1.msra.mxu0 0.0
        %3048 = vmatprep.subr.mxu0 0.0
        %3049 = vmatpush1.msra.mxu0 0.0
        %3050 = vmatprep.subr.mxu0 0.0
        %3051 = vmatpush1.msra.mxu0 0.0
        %3052 = vmatprep.subr.mxu0 0.0
        %3053 = vmatpush1.msra.mxu0 0.0
        %3054 = vmatprep.subr.mxu0 0.0
        %3055 = vmatpush1.msra.mxu0 0.0
        %3056 = vmatprep.subr.mxu0 0.0
        %3057 = vmatpush1.msra.mxu0 0.0
        %3058 = vmatprep.subr.mxu0 0.0
        %3059 = vmatpush1.msra.mxu0 0.0
        %3060 = vmatprep.subr.mxu0 0.0
        %3061 = vmatpush1.msra.mxu0 0.0
        %3062 = vmatprep.subr.mxu0 0.0
        %3063 = vmatpush1.msra.mxu0 0.0
        %3064 = vmatprep.subr.mxu0 0.0
        %3065 = vmatpush1.msra.mxu0 0.0
        %3066 = vmatprep.subr.mxu0 0.0
        %3067 = vmatpush1.msra.mxu0 0.0
        %3068 = vmatprep.subr.mxu0 0.0
        %3069 = vmatpush1.msra.mxu0 0.0
        %3070 = vmatprep.subr.mxu0 0.0
        %3071 = vmatpush1.msra.mxu0 0.0
        %3072 = vmatprep.subr.mxu0 0.0
        %3073 = vmatpush1.msra.mxu0 0.0
        %3074 = vmatprep.subr.mxu0 0.0
        %3075 = vmatpush1.msra.mxu0 0.0
        %3076 = vmatprep.subr.mxu0 0.0
        %3077 = vmatpush1.msra.mxu0 0.0
        %3078 = vmatprep.subr.mxu0 0.0
        %3079 = vmatpush1.msra.mxu0 0.0
        %3080 = vmatprep.subr.mxu0 0.0
        %3081 = vmatpush1.msra.mxu0 0.0
        %3082 = vmatprep.subr.mxu0 0.0
        %3083 = vmatpush1.msra.mxu0 0.0
        %3084 = vmatprep.subr.mxu0 0.0
        %3085 = vmatpush1.msra.mxu0 0.0
        %3086 = vmatprep.mubr.f32.mxu0 0.0
        %3087 = vmatmul.mubr.f32.gmra.mrb[0].mxu0 %v2985
        %v3088 = vpop.f32.mrb[0].mxu0
        %v3089 = vadd.f32 0.0, %v3088
        %v3090 = vpop.f32.mrb[0].mxu0
        %3091 = vmatprep.mubr.f32.mxu0 0.0
        %3092 = vmatmul.mubr.f32.gmra.mrb[0].mxu0 %v2987
        %v3093 = vpop.f32.mrb[0].mxu0
        %v3094 = vadd.f32 0.0, %v3093
        %v3095 = vpop.f32.mrb[0].mxu0
        %3096 = vmatprep.mubr.f32.mxu0 0.0
        %3097 = vmatmul.mubr.f32.gmra.mrb[0].mxu0 %v2989
        %v3098 = vpop.f32.mrb[0].mxu0
        %v3099 = vadd.f32 0.0, %v3098
        %v3100 = vpop.f32.mrb[0].mxu0
        %3101 = vmatprep.mubr.f32.mxu0 0.0
        %3102 = vmatmul.mubr.f32.gmra.mrb[0].mxu0 %v2991
        %v3103 = vpop.f32.mrb[0].mxu0
        %v3104 = vadd.f32 0.0, %v3103
        %v3105 = vpop.f32.mrb[0].mxu0
        %3106 = vmatprep.mubr.f32.mxu0 0.0
        %3107 = vmatmul.mubr.f32.gmra.mrb[0].mxu0 %v2993
        %v3108 = vpop.f32.mrb[0].mxu0
        %v3109 = vadd.f32 0.0, %v3108
        %v3110 = vpop.f32.mrb[0].mxu0
        %3111 = vmatprep.mubr.f32.mxu0 0.0
        %3112 = vmatmul.mubr.f32.gmra.mrb[0].mxu0 %v2995
        %v3113 = vpop.f32.mrb[0].mxu0
        %v3114 = vadd.f32 0.0, %v3113
        %v3115 = vpop.f32.mrb[0].mxu0
        %3116 = vmatprep.mubr.f32.mxu0 0.0
        %3117 = vmatmul.mubr.f32.gmra.mrb[0].mxu0 %v2997
        %v3118 = vpop.f32.mrb[0].mxu0
        %v3119 = vadd.f32 0.0, %v3118
        %v3120 = vpop.f32.mrb[0].mxu0
        %3121 = vmatprep.mubr.f32.mxu0 0.0
        %3122 = vmatmul.mubr.f32.gmra.mrb[0].mxu0 %v2999
        %v3123 = vpop.f32.mrb[0].mxu0
        %v3124 = vadd.f32 0.0, %v3123
        %v3125 = vpop.f32.mrb[0].mxu0
        %3126 = vmatprep.mubr.f32.mxu0 0.0
        %3127 = vmatmul.mubr.f32.gmra.mrb[0].mxu0 %v3001
        %v3128 = vpop.f32.mrb[0].mxu0
        %v3129 = vadd.f32 0.0, %v3128
        %v3130 = vpop.f32.mrb[0].mxu0
        %3131 = vmatprep.mubr.f32.mxu0 0.0
        %3132 = vmatmul.mubr.f32.gmra.mrb[0].mxu0 %v3003
        %v3133 = vpop.f32.mrb[0].mxu0
        %v3134 = vadd.f32 0.0, %v3133
        %v3135 = vpop.f32.mrb[0].mxu0
        %3136 = vmatprep.mubr.f32.mxu0 0.0
        %3137 = vmatmul.mubr.f32.gmra.mrb[0].mxu0 %v3005
        %v3138 = vpop.f32.mrb[0].mxu0
        %v3139 = vadd.f32 0.0, %v3138
        %v3140 = vpop.f32.mrb[0].mxu0
        %3141 = vmatprep.mubr.f32.mxu0 0.0
        %3142 = vmatmul.mubr.f32.gmra.mrb[0].mxu0 %v3007
        %v3143 = vpop.f32.mrb[0].mxu0
        %v3144 = vadd.f32 0.0, %v3143
        %v3145 = vpop.f32.mrb[0].mxu0
        %3146 = vmatprep.mubr.f32.mxu0 0.0
        %3147 = vmatmul.mubr.f32.gmra.mrb[0].mxu0 %v3009
        %v3148 = vpop.f32.mrb[0].mxu0
        %v3149 = vadd.f32 0.0, %v3148
        %v3150 = vpop.f32.mrb[0].mxu0
        %3151 = vmatprep.mubr.f32.mxu0 0.0
        %3152 = vmatmul.mubr.f32.gmra.mrb[0].mxu0 %v3011
        %v3153 = vpop.f32.mrb[0].mxu0
        %v3154 = vadd.f32 0.0, %v3153
        %v3155 = vpop.f32.mrb[0].mxu0
        %3156 = vmatprep.mubr.f32.mxu0 0.0
        %3157 = vmatmul.mubr.f32.gmra.mrb[0].mxu0 %v3013
        %v3158 = vpop.f32.mrb[0].mxu0
        %v3159 = vadd.f32 0.0, %v3158
        %v3160 = vpop.f32.mrb[0].mxu0
        %3161 = vmatprep.mubr.f32.mxu0 0.0
        %3162 = vmatmul.mubr.f32.gmra.mrb[0].mxu0 %v3015
        %v3163 = vpop.f32.mrb[0].mxu0
        %v3164 = vadd.f32 0.0, %v3163
        %v3165 = vpop.f32.mrb[0].mxu0
        %3166 = vmatprep.mubr.f32.mxu0 0.0
        %3167 = vmatmul.mubr.f32.gmra.mrb[0].mxu0 %v3017
        %v3168 = vpop.f32.mrb[0].mxu0
        %v3169 = vadd.f32 0.0, %v3168
        %v3170 = vpop.f32.mrb[0].mxu0
        %3171 = vdwg.mxu0
        %v3172 = vadd.f32 %v2930, %v3089
        %v3173 = vadd.f32 %v2931, %v3094
        %v3174 = vadd.f32 %v2932, %v3099
        %v3175 = vadd.f32 %v2933, %v3104
        %v3176 = vadd.f32 %v2934, %v3109
        %v3177 = vadd.f32 %v2935, %v3114
        %v3178 = vadd.f32 %v2936, %v3119
        %v3179 = vadd.f32 %v2937, %v3124
        %v3180 = vadd.f32 %v2938, %v3129
        %v3181 = vadd.f32 %v2939, %v3134
        %v3182 = vadd.f32 %v2940, %v3139
        %v3183 = vadd.f32 %v2941, %v3144
        %v3184 = vadd.f32 %v2942, %v3149
        %v3185 = vadd.f32 %v2943, %v3154
        %v3186 = vadd.f32 %v2944, %v3159
        %v3187 = vadd.f32 %v2945, %v3164
        %v3188 = vadd.f32 %v2946, %v3169
        %s3189 = scalar_lea.vmem %s3, 56
        %v3190 = vld [vmem:[%s3189] sm:$0x3f]
        %v3191 = vsel %vm1603, %v1538, 0
        %v3193 = vsel %vm1603, %v1539, 0
        %v3196 = vsel %vm1638, %v3190, 0
        %3198 = vmatprep.subr.mxu0 0.0
        %3199 = vmatpush1.msra.mxu0 %v3196
        %3200 = vmatprep.subr.mxu0 0.0
        %3201 = vmatpush1.msra.mxu0 0.0
        %3202 = vmatprep.subr.mxu0 0.0
        %3203 = vmatpush1.msra.mxu0 0.0
        %3204 = vmatprep.subr.mxu0 0.0
        %3205 = vmatpush1.msra.mxu0 0.0
        %3206 = vmatprep.subr.mxu0 0.0
        %3207 = vmatpush1.msra.mxu0 0.0
        %3208 = vmatprep.subr.mxu0 0.0
        %3209 = vmatpush1.msra.mxu0 0.0
        %3210 = vmatprep.subr.mxu0 0.0
        %3211 = vmatpush1.msra.mxu0 0.0
        %3212 = vmatprep.subr.mxu0 0.0
        %3213 = vmatpush1.msra.mxu0 0.0
        %3214 = vmatprep.subr.mxu0 0.0
        %3215 = vmatpush1.msra.mxu0 0.0
        %3216 = vmatprep.subr.mxu0 0.0
        %3217 = vmatpush1.msra.mxu0 0.0
        %3218 = vmatprep.subr.mxu0 0.0
        %3219 = vmatpush1.msra.mxu0 0.0
        %3220 = vmatprep.subr.mxu0 0.0
        %3221 = vmatpush1.msra.mxu0 0.0
        %3222 = vmatprep.subr.mxu0 0.0
        %3223 = vmatpush1.msra.mxu0 0.0
        %3224 = vmatprep.subr.mxu0 0.0
        %3225 = vmatpush1.msra.mxu0 0.0
        %3226 = vmatprep.subr.mxu0 0.0
        %3227 = vmatpush1.msra.mxu0 0.0
        %3228 = vmatprep.subr.mxu0 0.0
        %3229 = vmatpush1.msra.mxu0 0.0
        %3230 = vmatprep.subr.mxu0 0.0
        %3231 = vmatpush1.msra.mxu0 0.0
        %3232 = vmatprep.subr.mxu0 0.0
        %3233 = vmatpush1.msra.mxu0 0.0
        %3234 = vmatprep.subr.mxu0 0.0
        %3235 = vmatpush1.msra.mxu0 0.0
        %3236 = vmatprep.subr.mxu0 0.0
        %3237 = vmatpush1.msra.mxu0 0.0
        %3238 = vmatprep.subr.mxu0 0.0
        %3239 = vmatpush1.msra.mxu0 0.0
        %3240 = vmatprep.subr.mxu0 0.0
        %3241 = vmatpush1.msra.mxu0 0.0
        %3242 = vmatprep.subr.mxu0 0.0
        %3243 = vmatpush1.msra.mxu0 0.0
        %3244 = vmatprep.subr.mxu0 0.0
        %3245 = vmatpush1.msra.mxu0 0.0
        %3246 = vmatprep.subr.mxu0 0.0
        %3247 = vmatpush1.msra.mxu0 0.0
        %3248 = vmatprep.subr.mxu0 0.0
        %3249 = vmatpush1.msra.mxu0 0.0
        %3250 = vmatprep.subr.mxu0 0.0
        %3251 = vmatpush1.msra.mxu0 0.0
        %3252 = vmatprep.subr.mxu0 0.0
        %3253 = vmatpush1.msra.mxu0 0.0
        %3254 = vmatprep.subr.mxu0 0.0
        %3255 = vmatpush1.msra.mxu0 0.0
        %3256 = vmatprep.subr.mxu0 0.0
        %3257 = vmatpush1.msra.mxu0 0.0
        %3258 = vmatprep.subr.mxu0 0.0
        %3259 = vmatpush1.msra.mxu0 0.0
        %3260 = vmatprep.subr.mxu0 0.0
        %3261 = vmatpush1.msra.mxu0 0.0
        %3262 = vmatprep.mubr.f32.mxu0 0.0
        %3263 = vmatmul.mubr.f32.gmra.mrb[0].mxu0 %v1796
        %v3264 = vpop.f32.mrb[0].mxu0
        %v3265 = vadd.f32 0.0, %v3264
        %v3266 = vpop.f32.mrb[0].mxu0
        %3267 = vmatprep.mubr.f32.mxu0 0.0
        %3268 = vmatmul.mubr.f32.gmra.mrb[0].mxu0 %v1798
        %v3269 = vpop.f32.mrb[0].mxu0
        %v3270 = vadd.f32 0.0, %v3269
        %v3271 = vpop.f32.mrb[0].mxu0
        %3272 = vmatprep.mubr.f32.mxu0 0.0
        %3273 = vmatmul.mubr.f32.gmra.mrb[0].mxu0 %v1800
        %v3274 = vpop.f32.mrb[0].mxu0
        %v3275 = vadd.f32 0.0, %v3274
        %v3276 = vpop.f32.mrb[0].mxu0
        %3277 = vmatprep.mubr.f32.mxu0 0.0
        %3278 = vmatmul.mubr.f32.gmra.mrb[0].mxu0 %v1802
        %v3279 = vpop.f32.mrb[0].mxu0
        %v3280 = vadd.f32 0.0, %v3279
        %v3281 = vpop.f32.mrb[0].mxu0
        %3282 = vmatprep.mubr.f32.mxu0 0.0
        %3283 = vmatmul.mubr.f32.gmra.mrb[0].mxu0 %v1804
        %v3284 = vpop.f32.mrb[0].mxu0
        %v3285 = vadd.f32 0.0, %v3284
        %v3286 = vpop.f32.mrb[0].mxu0
        %3287 = vmatprep.mubr.f32.mxu0 0.0
        %3288 = vmatmul.mubr.f32.gmra.mrb[0].mxu0 %v1806
        %v3289 = vpop.f32.mrb[0].mxu0
        %v3290 = vadd.f32 0.0, %v3289
        %v3291 = vpop.f32.mrb[0].mxu0
        %3292 = vmatprep.mubr.f32.mxu0 0.0
        %3293 = vmatmul.mubr.f32.gmra.mrb[0].mxu0 %v1808
        %v3294 = vpop.f32.mrb[0].mxu0
        %v3295 = vadd.f32 0.0, %v3294
        %v3296 = vpop.f32.mrb[0].mxu0
        %3297 = vmatprep.mubr.f32.mxu0 0.0
        %3298 = vmatmul.mubr.f32.gmra.mrb[0].mxu0 %v1810
        %v3299 = vpop.f32.mrb[0].mxu0
        %v3300 = vadd.f32 0.0, %v3299
        %v3301 = vpop.f32.mrb[0].mxu0
        %3302 = vmatprep.mubr.f32.mxu0 0.0
        %3303 = vmatmul.mubr.f32.gmra.mrb[0].mxu0 %v1812
        %v3304 = vpop.f32.mrb[0].mxu0
        %v3305 = vadd.f32 0.0, %v3304
        %v3306 = vpop.f32.mrb[0].mxu0
        %3307 = vmatprep.mubr.f32.mxu0 0.0
        %3308 = vmatmul.mubr.f32.gmra.mrb[0].mxu0 %v1814
        %v3309 = vpop.f32.mrb[0].mxu0
        %v3310 = vadd.f32 0.0, %v3309
        %v3311 = vpop.f32.mrb[0].mxu0
        %3312 = vmatprep.mubr.f32.mxu0 0.0
        %3313 = vmatmul.mubr.f32.gmra.mrb[0].mxu0 %v1816
        %v3314 = vpop.f32.mrb[0].mxu0
        %v3315 = vadd.f32 0.0, %v3314
        %v3316 = vpop.f32.mrb[0].mxu0
        %3317 = vmatprep.mubr.f32.mxu0 0.0
        %3318 = vmatmul.mubr.f32.gmra.mrb[0].mxu0 %v1818
        %v3319 = vpop.f32.mrb[0].mxu0
        %v3320 = vadd.f32 0.0, %v3319
        %v3321 = vpop.f32.mrb[0].mxu0
        %3322 = vmatprep.mubr.f32.mxu0 0.0
        %3323 = vmatmul.mubr.f32.gmra.mrb[0].mxu0 %v1820
        %v3324 = vpop.f32.mrb[0].mxu0
        %v3325 = vadd.f32 0.0, %v3324
        %v3326 = vpop.f32.mrb[0].mxu0
        %3327 = vmatprep.mubr.f32.mxu0 0.0
        %3328 = vmatmul.mubr.f32.gmra.mrb[0].mxu0 %v1822
        %v3329 = vpop.f32.mrb[0].mxu0
        %v3330 = vadd.f32 0.0, %v3329
        %v3331 = vpop.f32.mrb[0].mxu0
        %3332 = vmatprep.mubr.f32.mxu0 0.0
        %3333 = vmatmul.mubr.f32.gmra.mrb[0].mxu0 %v1824
        %v3334 = vpop.f32.mrb[0].mxu0
        %v3335 = vadd.f32 0.0, %v3334
        %v3336 = vpop.f32.mrb[0].mxu0
        %3337 = vmatprep.mubr.f32.mxu0 0.0
        %3338 = vmatmul.mubr.f32.gmra.mrb[0].mxu0 %v3191
        %v3339 = vpop.f32.mrb[0].mxu0
        %v3340 = vadd.f32 0.0, %v3339
        %v3341 = vpop.f32.mrb[0].mxu0
        %3342 = vmatprep.mubr.f32.mxu0 0.0
        %3343 = vmatmul.mubr.f32.gmra.mrb[0].mxu0 %v3193
        %v3344 = vpop.f32.mrb[0].mxu0
        %v3345 = vadd.f32 0.0, %v3344
        %v3346 = vpop.f32.mrb[0].mxu0
        %3347 = vdwg.mxu0
        %v3348 = vadd.f32 %v3172, %v3265
        %v3349 = vadd.f32 %v3173, %v3270
        %v3350 = vadd.f32 %v3174, %v3275
        %v3351 = vadd.f32 %v3175, %v3280
        %v3352 = vadd.f32 %v3176, %v3285
        %v3353 = vadd.f32 %v3177, %v3290
        %v3354 = vadd.f32 %v3178, %v3295
        %v3355 = vadd.f32 %v3179, %v3300
        %v3356 = vadd.f32 %v3180, %v3305
        %v3357 = vadd.f32 %v3181, %v3310
        %v3358 = vadd.f32 %v3182, %v3315
        %v3359 = vadd.f32 %v3183, %v3320
        %v3360 = vadd.f32 %v3184, %v3325
        %v3361 = vadd.f32 %v3185, %v3330
        %v3362 = vadd.f32 %v3186, %v3335
        %v3363 = vadd.f32 %v3187, %v3340
        %v3364 = vadd.f32 %v3188, %v3345
        %s3365 = scalar_lea.vmem %s3, 64
        %v3366 = vld [vmem:[%s3365] sm:$0x3f]
        %v3368 = vrot.slane %v1539, 1
        %v3369 = vsel %vm1567, %v1601, %v3368
        %v3370 = vrot.slane %v1540, 1
        %v3371 = vsel %vm1567, %v3368, %v3370
        %v3372 = vsel %vm1603, %v3369, 0
        %v3374 = vsel %vm1603, %v3371, 0
        %v3377 = vsel %vm1638, %v3366, 0
        %3379 = vmatprep.subr.mxu0 0.0
        %3380 = vmatpush1.msra.mxu0 %v3377
        %3381 = vmatprep.subr.mxu0 0.0
        %3382 = vmatpush1.msra.mxu0 0.0
        %3383 = vmatprep.subr.mxu0 0.0
        %3384 = vmatpush1.msra.mxu0 0.0
        %3385 = vmatprep.subr.mxu0 0.0
        %3386 = vmatpush1.msra.mxu0 0.0
        %3387 = vmatprep.subr.mxu0 0.0
        %3388 = vmatpush1.msra.mxu0 0.0
        %3389 = vmatprep.subr.mxu0 0.0
        %3390 = vmatpush1.msra.mxu0 0.0
        %3391 = vmatprep.subr.mxu0 0.0
        %3392 = vmatpush1.msra.mxu0 0.0
        %3393 = vmatprep.subr.mxu0 0.0
        %3394 = vmatpush1.msra.mxu0 0.0
        %3395 = vmatprep.subr.mxu0 0.0
        %3396 = vmatpush1.msra.mxu0 0.0
        %3397 = vmatprep.subr.mxu0 0.0
        %3398 = vmatpush1.msra.mxu0 0.0
        %3399 = vmatprep.subr.mxu0 0.0
        %3400 = vmatpush1.msra.mxu0 0.0
        %3401 = vmatprep.subr.mxu0 0.0
        %3402 = vmatpush1.msra.mxu0 0.0
        %3403 = vmatprep.subr.mxu0 0.0
        %3404 = vmatpush1.msra.mxu0 0.0
        %3405 = vmatprep.subr.mxu0 0.0
        %3406 = vmatpush1.msra.mxu0 0.0
        %3407 = vmatprep.subr.mxu0 0.0
        %3408 = vmatpush1.msra.mxu0 0.0
        %3409 = vmatprep.subr.mxu0 0.0
        %3410 = vmatpush1.msra.mxu0 0.0
        %3411 = vmatprep.subr.mxu0 0.0
        %3412 = vmatpush1.msra.mxu0 0.0
        %3413 = vmatprep.subr.mxu0 0.0
        %3414 = vmatpush1.msra.mxu0 0.0
        %3415 = vmatprep.subr.mxu0 0.0
        %3416 = vmatpush1.msra.mxu0 0.0
        %3417 = vmatprep.subr.mxu0 0.0
        %3418 = vmatpush1.msra.mxu0 0.0
        %3419 = vmatprep.subr.mxu0 0.0
        %3420 = vmatpush1.msra.mxu0 0.0
        %3421 = vmatprep.subr.mxu0 0.0
        %3422 = vmatpush1.msra.mxu0 0.0
        %3423 = vmatprep.subr.mxu0 0.0
        %3424 = vmatpush1.msra.mxu0 0.0
        %3425 = vmatprep.subr.mxu0 0.0
        %3426 = vmatpush1.msra.mxu0 0.0
        %3427 = vmatprep.subr.mxu0 0.0
        %3428 = vmatpush1.msra.mxu0 0.0
        %3429 = vmatprep.subr.mxu0 0.0
        %3430 = vmatpush1.msra.mxu0 0.0
        %3431 = vmatprep.subr.mxu0 0.0
        %3432 = vmatpush1.msra.mxu0 0.0
        %3433 = vmatprep.subr.mxu0 0.0
        %3434 = vmatpush1.msra.mxu0 0.0
        %3435 = vmatprep.subr.mxu0 0.0
        %3436 = vmatpush1.msra.mxu0 0.0
        %3437 = vmatprep.subr.mxu0 0.0
        %3438 = vmatpush1.msra.mxu0 0.0
        %3439 = vmatprep.subr.mxu0 0.0
        %3440 = vmatpush1.msra.mxu0 0.0
        %3441 = vmatprep.subr.mxu0 0.0
        %3442 = vmatpush1.msra.mxu0 0.0
        %3443 = vmatprep.mubr.f32.mxu0 0.0
        %3444 = vmatmul.mubr.f32.gmra.mrb[0].mxu0 %v1608
        %v3445 = vpop.f32.mrb[0].mxu0
        %v3446 = vadd.f32 0.0, %v3445
        %v3447 = vpop.f32.mrb[0].mxu0
        %3448 = vmatprep.mubr.f32.mxu0 0.0
        %3449 = vmatmul.mubr.f32.gmra.mrb[0].mxu0 %v1610
        %v3450 = vpop.f32.mrb[0].mxu0
        %v3451 = vadd.f32 0.0, %v3450
        %v3452 = vpop.f32.mrb[0].mxu0
        %3453 = vmatprep.mubr.f32.mxu0 0.0
        %3454 = vmatmul.mubr.f32.gmra.mrb[0].mxu0 %v1612
        %v3455 = vpop.f32.mrb[0].mxu0
        %v3456 = vadd.f32 0.0, %v3455
        %v3457 = vpop.f32.mrb[0].mxu0
        %3458 = vmatprep.mubr.f32.mxu0 0.0
        %3459 = vmatmul.mubr.f32.gmra.mrb[0].mxu0 %v1614
        %v3460 = vpop.f32.mrb[0].mxu0
        %v3461 = vadd.f32 0.0, %v3460
        %v3462 = vpop.f32.mrb[0].mxu0
        %3463 = vmatprep.mubr.f32.mxu0 0.0
        %3464 = vmatmul.mubr.f32.gmra.mrb[0].mxu0 %v1616
        %v3465 = vpop.f32.mrb[0].mxu0
        %v3466 = vadd.f32 0.0, %v3465
        %v3467 = vpop.f32.mrb[0].mxu0
        %3468 = vmatprep.mubr.f32.mxu0 0.0
        %3469 = vmatmul.mubr.f32.gmra.mrb[0].mxu0 %v1618
        %v3470 = vpop.f32.mrb[0].mxu0
        %v3471 = vadd.f32 0.0, %v3470
        %v3472 = vpop.f32.mrb[0].mxu0
        %3473 = vmatprep.mubr.f32.mxu0 0.0
        %3474 = vmatmul.mubr.f32.gmra.mrb[0].mxu0 %v1620
        %v3475 = vpop.f32.mrb[0].mxu0
        %v3476 = vadd.f32 0.0, %v3475
        %v3477 = vpop.f32.mrb[0].mxu0
        %3478 = vmatprep.mubr.f32.mxu0 0.0
        %3479 = vmatmul.mubr.f32.gmra.mrb[0].mxu0 %v1622
        %v3480 = vpop.f32.mrb[0].mxu0
        %v3481 = vadd.f32 0.0, %v3480
        %v3482 = vpop.f32.mrb[0].mxu0
        %3483 = vmatprep.mubr.f32.mxu0 0.0
        %3484 = vmatmul.mubr.f32.gmra.mrb[0].mxu0 %v1624
        %v3485 = vpop.f32.mrb[0].mxu0
        %v3486 = vadd.f32 0.0, %v3485
        %v3487 = vpop.f32.mrb[0].mxu0
        %3488 = vmatprep.mubr.f32.mxu0 0.0
        %3489 = vmatmul.mubr.f32.gmra.mrb[0].mxu0 %v1626
        %v3490 = vpop.f32.mrb[0].mxu0
        %v3491 = vadd.f32 0.0, %v3490
        %v3492 = vpop.f32.mrb[0].mxu0
        %3493 = vmatprep.mubr.f32.mxu0 0.0
        %3494 = vmatmul.mubr.f32.gmra.mrb[0].mxu0 %v1628
        %v3495 = vpop.f32.mrb[0].mxu0
        %v3496 = vadd.f32 0.0, %v3495
        %v3497 = vpop.f32.mrb[0].mxu0
        %3498 = vmatprep.mubr.f32.mxu0 0.0
        %3499 = vmatmul.mubr.f32.gmra.mrb[0].mxu0 %v1630
        %v3500 = vpop.f32.mrb[0].mxu0
        %v3501 = vadd.f32 0.0, %v3500
        %v3502 = vpop.f32.mrb[0].mxu0
        %3503 = vmatprep.mubr.f32.mxu0 0.0
        %3504 = vmatmul.mubr.f32.gmra.mrb[0].mxu0 %v1632
        %v3505 = vpop.f32.mrb[0].mxu0
        %v3506 = vadd.f32 0.0, %v3505
        %v3507 = vpop.f32.mrb[0].mxu0
        %3508 = vmatprep.mubr.f32.mxu0 0.0
        %3509 = vmatmul.mubr.f32.gmra.mrb[0].mxu0 %v1634
        %v3510 = vpop.f32.mrb[0].mxu0
        %v3511 = vadd.f32 0.0, %v3510
        %v3512 = vpop.f32.mrb[0].mxu0
        %3513 = vmatprep.mubr.f32.mxu0 0.0
        %3514 = vmatmul.mubr.f32.gmra.mrb[0].mxu0 %v1636
        %v3515 = vpop.f32.mrb[0].mxu0
        %v3516 = vadd.f32 0.0, %v3515
        %v3517 = vpop.f32.mrb[0].mxu0
        %3518 = vmatprep.mubr.f32.mxu0 0.0
        %3519 = vmatmul.mubr.f32.gmra.mrb[0].mxu0 %v3372
        %v3520 = vpop.f32.mrb[0].mxu0
        %v3521 = vadd.f32 0.0, %v3520
        %v3522 = vpop.f32.mrb[0].mxu0
        %3523 = vmatprep.mubr.f32.mxu0 0.0
        %3524 = vmatmul.mubr.f32.gmra.mrb[0].mxu0 %v3374
        %v3525 = vpop.f32.mrb[0].mxu0
        %v3526 = vadd.f32 0.0, %v3525
        %v3527 = vpop.f32.mrb[0].mxu0
        %3528 = vdwg.mxu0
        %v3529 = vadd.f32 %v3348, %v3446
        %v3530 = vadd.f32 %v3349, %v3451
        %v3531 = vadd.f32 %v3350, %v3456
        %v3532 = vadd.f32 %v3351, %v3461
        %v3533 = vadd.f32 %v3352, %v3466
        %v3534 = vadd.f32 %v3353, %v3471
        %v3535 = vadd.f32 %v3354, %v3476
        %v3536 = vadd.f32 %v3355, %v3481
        %v3537 = vadd.f32 %v3356, %v3486
        %v3538 = vadd.f32 %v3357, %v3491
        %v3539 = vadd.f32 %v3358, %v3496
        %v3540 = vadd.f32 %v3359, %v3501
        %v3541 = vadd.f32 %v3360, %v3506
        %v3542 = vadd.f32 %v3361, %v3511
        %v3543 = vadd.f32 %v3362, %v3516
        %v3544 = vadd.f32 %v3363, %v3521
        %v3545 = vadd.f32 %v3364, %v3526
        %s3546 = scalar_lea.vmem %s3, 72
        %v3547 = vld [vmem:[%s3546] sm:$0x3f]
        %v3548 = vrot.slane %v1539, 2
        %v3549 = vsel %vm1638, %v2014, %v3548
        %v3550 = vrot.slane %v1540, 2
        %v3551 = vsel %vm1638, %v3548, %v3550
        %v3552 = vsel %vm1603, %v3549, 0
        %v3554 = vsel %vm1603, %v3551, 0
        %v3557 = vsel %vm1638, %v3547, 0
        %3559 = vmatprep.subr.mxu0 0.0
        %3560 = vmatpush1.msra.mxu0 %v3557
        %3561 = vmatprep.subr.mxu0 0.0
        %3562 = vmatpush1.msra.mxu0 0.0
        %3563 = vmatprep.subr.mxu0 0.0
        %3564 = vmatpush1.msra.mxu0 0.0
        %3565 = vmatprep.subr.mxu0 0.0
        %3566 = vmatpush1.msra.mxu0 0.0
        %3567 = vmatprep.subr.mxu0 0.0
        %3568 = vmatpush1.msra.mxu0 0.0
        %3569 = vmatprep.subr.mxu0 0.0
        %3570 = vmatpush1.msra.mxu0 0.0
        %3571 = vmatprep.subr.mxu0 0.0
        %3572 = vmatpush1.msra.mxu0 0.0
        %3573 = vmatprep.subr.mxu0 0.0
        %3574 = vmatpush1.msra.mxu0 0.0
        %3575 = vmatprep.subr.mxu0 0.0
        %3576 = vmatpush1.msra.mxu0 0.0
        %3577 = vmatprep.subr.mxu0 0.0
        %3578 = vmatpush1.msra.mxu0 0.0
        %3579 = vmatprep.subr.mxu0 0.0
        %3580 = vmatpush1.msra.mxu0 0.0
        %3581 = vmatprep.subr.mxu0 0.0
        %3582 = vmatpush1.msra.mxu0 0.0
        %3583 = vmatprep.subr.mxu0 0.0
        %3584 = vmatpush1.msra.mxu0 0.0
        %3585 = vmatprep.subr.mxu0 0.0
        %3586 = vmatpush1.msra.mxu0 0.0
        %3587 = vmatprep.subr.mxu0 0.0
        %3588 = vmatpush1.msra.mxu0 0.0
        %3589 = vmatprep.subr.mxu0 0.0
        %3590 = vmatpush1.msra.mxu0 0.0
        %3591 = vmatprep.subr.mxu0 0.0
        %3592 = vmatpush1.msra.mxu0 0.0
        %3593 = vmatprep.subr.mxu0 0.0
        %3594 = vmatpush1.msra.mxu0 0.0
        %3595 = vmatprep.subr.mxu0 0.0
        %3596 = vmatpush1.msra.mxu0 0.0
        %3597 = vmatprep.subr.mxu0 0.0
        %3598 = vmatpush1.msra.mxu0 0.0
        %3599 = vmatprep.subr.mxu0 0.0
        %3600 = vmatpush1.msra.mxu0 0.0
        %3601 = vmatprep.subr.mxu0 0.0
        %3602 = vmatpush1.msra.mxu0 0.0
        %3603 = vmatprep.subr.mxu0 0.0
        %3604 = vmatpush1.msra.mxu0 0.0
        %3605 = vmatprep.subr.mxu0 0.0
        %3606 = vmatpush1.msra.mxu0 0.0
        %3607 = vmatprep.subr.mxu0 0.0
        %3608 = vmatpush1.msra.mxu0 0.0
        %3609 = vmatprep.subr.mxu0 0.0
        %3610 = vmatpush1.msra.mxu0 0.0
        %3611 = vmatprep.subr.mxu0 0.0
        %3612 = vmatpush1.msra.mxu0 0.0
        %3613 = vmatprep.subr.mxu0 0.0
        %3614 = vmatpush1.msra.mxu0 0.0
        %3615 = vmatprep.subr.mxu0 0.0
        %3616 = vmatpush1.msra.mxu0 0.0
        %3617 = vmatprep.subr.mxu0 0.0
        %3618 = vmatpush1.msra.mxu0 0.0
        %3619 = vmatprep.subr.mxu0 0.0
        %3620 = vmatpush1.msra.mxu0 0.0
        %3621 = vmatprep.subr.mxu0 0.0
        %3622 = vmatpush1.msra.mxu0 0.0
        %3623 = vmatprep.mubr.f32.mxu0 0.0
        %3624 = vmatmul.mubr.f32.gmra.mrb[0].mxu0 %v2020
        %v3625 = vpop.f32.mrb[0].mxu0
        %v3626 = vadd.f32 0.0, %v3625
        %v3627 = vpop.f32.mrb[0].mxu0
        %3628 = vmatprep.mubr.f32.mxu0 0.0
        %3629 = vmatmul.mubr.f32.gmra.mrb[0].mxu0 %v2022
        %v3630 = vpop.f32.mrb[0].mxu0
        %v3631 = vadd.f32 0.0, %v3630
        %v3632 = vpop.f32.mrb[0].mxu0
        %3633 = vmatprep.mubr.f32.mxu0 0.0
        %3634 = vmatmul.mubr.f32.gmra.mrb[0].mxu0 %v2024
        %v3635 = vpop.f32.mrb[0].mxu0
        %v3636 = vadd.f32 0.0, %v3635
        %v3637 = vpop.f32.mrb[0].mxu0
        %3638 = vmatprep.mubr.f32.mxu0 0.0
        %3639 = vmatmul.mubr.f32.gmra.mrb[0].mxu0 %v2026
        %v3640 = vpop.f32.mrb[0].mxu0
        %v3641 = vadd.f32 0.0, %v3640
        %v3642 = vpop.f32.mrb[0].mxu0
        %3643 = vmatprep.mubr.f32.mxu0 0.0
        %3644 = vmatmul.mubr.f32.gmra.mrb[0].mxu0 %v2028
        %v3645 = vpop.f32.mrb[0].mxu0
        %v3646 = vadd.f32 0.0, %v3645
        %v3647 = vpop.f32.mrb[0].mxu0
        %3648 = vmatprep.mubr.f32.mxu0 0.0
        %3649 = vmatmul.mubr.f32.gmra.mrb[0].mxu0 %v2030
        %v3650 = vpop.f32.mrb[0].mxu0
        %v3651 = vadd.f32 0.0, %v3650
        %v3652 = vpop.f32.mrb[0].mxu0
        %3653 = vmatprep.mubr.f32.mxu0 0.0
        %3654 = vmatmul.mubr.f32.gmra.mrb[0].mxu0 %v2032
        %v3655 = vpop.f32.mrb[0].mxu0
        %v3656 = vadd.f32 0.0, %v3655
        %v3657 = vpop.f32.mrb[0].mxu0
        %3658 = vmatprep.mubr.f32.mxu0 0.0
        %3659 = vmatmul.mubr.f32.gmra.mrb[0].mxu0 %v2034
        %v3660 = vpop.f32.mrb[0].mxu0
        %v3661 = vadd.f32 0.0, %v3660
        %v3662 = vpop.f32.mrb[0].mxu0
        %3663 = vmatprep.mubr.f32.mxu0 0.0
        %3664 = vmatmul.mubr.f32.gmra.mrb[0].mxu0 %v2036
        %v3665 = vpop.f32.mrb[0].mxu0
        %v3666 = vadd.f32 0.0, %v3665
        %v3667 = vpop.f32.mrb[0].mxu0
        %3668 = vmatprep.mubr.f32.mxu0 0.0
        %3669 = vmatmul.mubr.f32.gmra.mrb[0].mxu0 %v2038
        %v3670 = vpop.f32.mrb[0].mxu0
        %v3671 = vadd.f32 0.0, %v3670
        %v3672 = vpop.f32.mrb[0].mxu0
        %3673 = vmatprep.mubr.f32.mxu0 0.0
        %3674 = vmatmul.mubr.f32.gmra.mrb[0].mxu0 %v2040
        %v3675 = vpop.f32.mrb[0].mxu0
        %v3676 = vadd.f32 0.0, %v3675
        %v3677 = vpop.f32.mrb[0].mxu0
        %3678 = vmatprep.mubr.f32.mxu0 0.0
        %3679 = vmatmul.mubr.f32.gmra.mrb[0].mxu0 %v2042
        %v3680 = vpop.f32.mrb[0].mxu0
        %v3681 = vadd.f32 0.0, %v3680
        %v3682 = vpop.f32.mrb[0].mxu0
        %3683 = vmatprep.mubr.f32.mxu0 0.0
        %3684 = vmatmul.mubr.f32.gmra.mrb[0].mxu0 %v2044
        %v3685 = vpop.f32.mrb[0].mxu0
        %v3686 = vadd.f32 0.0, %v3685
        %v3687 = vpop.f32.mrb[0].mxu0
        %3688 = vmatprep.mubr.f32.mxu0 0.0
        %3689 = vmatmul.mubr.f32.gmra.mrb[0].mxu0 %v2046
        %v3690 = vpop.f32.mrb[0].mxu0
        %v3691 = vadd.f32 0.0, %v3690
        %v3692 = vpop.f32.mrb[0].mxu0
        %3693 = vmatprep.mubr.f32.mxu0 0.0
        %3694 = vmatmul.mubr.f32.gmra.mrb[0].mxu0 %v2048
        %v3695 = vpop.f32.mrb[0].mxu0
        %v3696 = vadd.f32 0.0, %v3695
        %v3697 = vpop.f32.mrb[0].mxu0
        %3698 = vmatprep.mubr.f32.mxu0 0.0
        %3699 = vmatmul.mubr.f32.gmra.mrb[0].mxu0 %v3552
        %v3700 = vpop.f32.mrb[0].mxu0
        %v3701 = vadd.f32 0.0, %v3700
        %v3702 = vpop.f32.mrb[0].mxu0
        %3703 = vmatprep.mubr.f32.mxu0 0.0
        %3704 = vmatmul.mubr.f32.gmra.mrb[0].mxu0 %v3554
        %v3705 = vpop.f32.mrb[0].mxu0
        %v3706 = vadd.f32 0.0, %v3705
        %v3707 = vpop.f32.mrb[0].mxu0
        %3708 = vdwg.mxu0
        %v3709 = vadd.f32 %v3529, %v3626
        %v3710 = vadd.f32 %v3530, %v3631
        %v3711 = vadd.f32 %v3531, %v3636
        %v3712 = vadd.f32 %v3532, %v3641
        %v3713 = vadd.f32 %v3533, %v3646
        %v3714 = vadd.f32 %v3534, %v3651
        %v3715 = vadd.f32 %v3535, %v3656
        %v3716 = vadd.f32 %v3536, %v3661
        %v3717 = vadd.f32 %v3537, %v3666
        %v3718 = vadd.f32 %v3538, %v3671
        %v3719 = vadd.f32 %v3539, %v3676
        %v3720 = vadd.f32 %v3540, %v3681
        %v3721 = vadd.f32 %v3541, %v3686
        %v3722 = vadd.f32 %v3542, %v3691
        %v3723 = vadd.f32 %v3543, %v3696
        %v3724 = vadd.f32 %v3544, %v3701
        %v3725 = vadd.f32 %v3545, %v3706
        %s3726 = scalar_lea.vmem %s3, 80
        %v3727 = vld [vmem:[%s3726] sm:$0x3f]
        %v3729 = vrot.slane %v1539, 4
        %v3730 = vsel %vm2464, %v2498, %v3729
        %v3731 = vrot.slane %v1540, 4
        %v3732 = vsel %vm2464, %v3729, %v3731
        %v3733 = vrot.slane %v1541, 4
        %v3734 = vsel %vm2464, %v3731, %v3733
        %v3735 = vsel %vm1603, %v3730, 0
        %v3737 = vsel %vm1603, %v3732, 0
        %v3739 = vsel %vm1603, %v3734, 0
        %v3742 = vsel %vm1638, %v3727, 0
        %3744 = vmatprep.subr.mxu0 0.0
        %3745 = vmatpush1.msra.mxu0 %v3742
        %3746 = vmatprep.subr.mxu0 0.0
        %3747 = vmatpush1.msra.mxu0 0.0
        %3748 = vmatprep.subr.mxu0 0.0
        %3749 = vmatpush1.msra.mxu0 0.0
        %3750 = vmatprep.subr.mxu0 0.0
        %3751 = vmatpush1.msra.mxu0 0.0
        %3752 = vmatprep.subr.mxu0 0.0
        %3753 = vmatpush1.msra.mxu0 0.0
        %3754 = vmatprep.subr.mxu0 0.0
        %3755 = vmatpush1.msra.mxu0 0.0
        %3756 = vmatprep.subr.mxu0 0.0
        %3757 = vmatpush1.msra.mxu0 0.0
        %3758 = vmatprep.subr.mxu0 0.0
        %3759 = vmatpush1.msra.mxu0 0.0
        %3760 = vmatprep.subr.mxu0 0.0
        %3761 = vmatpush1.msra.mxu0 0.0
        %3762 = vmatprep.subr.mxu0 0.0
        %3763 = vmatpush1.msra.mxu0 0.0
        %3764 = vmatprep.subr.mxu0 0.0
        %3765 = vmatpush1.msra.mxu0 0.0
        %3766 = vmatprep.subr.mxu0 0.0
        %3767 = vmatpush1.msra.mxu0 0.0
        %3768 = vmatprep.subr.mxu0 0.0
        %3769 = vmatpush1.msra.mxu0 0.0
        %3770 = vmatprep.subr.mxu0 0.0
        %3771 = vmatpush1.msra.mxu0 0.0
        %3772 = vmatprep.subr.mxu0 0.0
        %3773 = vmatpush1.msra.mxu0 0.0
        %3774 = vmatprep.subr.mxu0 0.0
        %3775 = vmatpush1.msra.mxu0 0.0
        %3776 = vmatprep.subr.mxu0 0.0
        %3777 = vmatpush1.msra.mxu0 0.0
        %3778 = vmatprep.subr.mxu0 0.0
        %3779 = vmatpush1.msra.mxu0 0.0
        %3780 = vmatprep.subr.mxu0 0.0
        %3781 = vmatpush1.msra.mxu0 0.0
        %3782 = vmatprep.subr.mxu0 0.0
        %3783 = vmatpush1.msra.mxu0 0.0
        %3784 = vmatprep.subr.mxu0 0.0
        %3785 = vmatpush1.msra.mxu0 0.0
        %3786 = vmatprep.subr.mxu0 0.0
        %3787 = vmatpush1.msra.mxu0 0.0
        %3788 = vmatprep.subr.mxu0 0.0
        %3789 = vmatpush1.msra.mxu0 0.0
        %3790 = vmatprep.subr.mxu0 0.0
        %3791 = vmatpush1.msra.mxu0 0.0
        %3792 = vmatprep.subr.mxu0 0.0
        %3793 = vmatpush1.msra.mxu0 0.0
        %3794 = vmatprep.subr.mxu0 0.0
        %3795 = vmatpush1.msra.mxu0 0.0
        %3796 = vmatprep.subr.mxu0 0.0
        %3797 = vmatpush1.msra.mxu0 0.0
        %3798 = vmatprep.subr.mxu0 0.0
        %3799 = vmatpush1.msra.mxu0 0.0
        %3800 = vmatprep.subr.mxu0 0.0
        %3801 = vmatpush1.msra.mxu0 0.0
        %3802 = vmatprep.subr.mxu0 0.0
        %3803 = vmatpush1.msra.mxu0 0.0
        %3804 = vmatprep.subr.mxu0 0.0
        %3805 = vmatpush1.msra.mxu0 0.0
        %3806 = vmatprep.subr.mxu0 0.0
        %3807 = vmatpush1.msra.mxu0 0.0
        %3808 = vmatprep.mubr.f32.mxu0 0.0
        %3809 = vmatmul.mubr.f32.gmra.mrb[0].mxu0 %v2506
        %v3810 = vpop.f32.mrb[0].mxu0
        %v3811 = vadd.f32 0.0, %v3810
        %v3812 = vpop.f32.mrb[0].mxu0
        %3813 = vmatprep.mubr.f32.mxu0 0.0
        %3814 = vmatmul.mubr.f32.gmra.mrb[0].mxu0 %v2508
        %v3815 = vpop.f32.mrb[0].mxu0
        %v3816 = vadd.f32 0.0, %v3815
        %v3817 = vpop.f32.mrb[0].mxu0
        %3818 = vmatprep.mubr.f32.mxu0 0.0
        %3819 = vmatmul.mubr.f32.gmra.mrb[0].mxu0 %v2510
        %v3820 = vpop.f32.mrb[0].mxu0
        %v3821 = vadd.f32 0.0, %v3820
        %v3822 = vpop.f32.mrb[0].mxu0
        %3823 = vmatprep.mubr.f32.mxu0 0.0
        %3824 = vmatmul.mubr.f32.gmra.mrb[0].mxu0 %v2512
        %v3825 = vpop.f32.mrb[0].mxu0
        %v3826 = vadd.f32 0.0, %v3825
        %v3827 = vpop.f32.mrb[0].mxu0
        %3828 = vmatprep.mubr.f32.mxu0 0.0
        %3829 = vmatmul.mubr.f32.gmra.mrb[0].mxu0 %v2514
        %v3830 = vpop.f32.mrb[0].mxu0
        %v3831 = vadd.f32 0.0, %v3830
        %v3832 = vpop.f32.mrb[0].mxu0
        %3833 = vmatprep.mubr.f32.mxu0 0.0
        %3834 = vmatmul.mubr.f32.gmra.mrb[0].mxu0 %v2516
        %v3835 = vpop.f32.mrb[0].mxu0
        %v3836 = vadd.f32 0.0, %v3835
        %v3837 = vpop.f32.mrb[0].mxu0
        %3838 = vmatprep.mubr.f32.mxu0 0.0
        %3839 = vmatmul.mubr.f32.gmra.mrb[0].mxu0 %v2518
        %v3840 = vpop.f32.mrb[0].mxu0
        %v3841 = vadd.f32 0.0, %v3840
        %v3842 = vpop.f32.mrb[0].mxu0
        %3843 = vmatprep.mubr.f32.mxu0 0.0
        %3844 = vmatmul.mubr.f32.gmra.mrb[0].mxu0 %v2520
        %v3845 = vpop.f32.mrb[0].mxu0
        %v3846 = vadd.f32 0.0, %v3845
        %v3847 = vpop.f32.mrb[0].mxu0
        %3848 = vmatprep.mubr.f32.mxu0 0.0
        %3849 = vmatmul.mubr.f32.gmra.mrb[0].mxu0 %v2522
        %v3850 = vpop.f32.mrb[0].mxu0
        %v3851 = vadd.f32 0.0, %v3850
        %v3852 = vpop.f32.mrb[0].mxu0
        %3853 = vmatprep.mubr.f32.mxu0 0.0
        %3854 = vmatmul.mubr.f32.gmra.mrb[0].mxu0 %v2524
        %v3855 = vpop.f32.mrb[0].mxu0
        %v3856 = vadd.f32 0.0, %v3855
        %v3857 = vpop.f32.mrb[0].mxu0
        %3858 = vmatprep.mubr.f32.mxu0 0.0
        %3859 = vmatmul.mubr.f32.gmra.mrb[0].mxu0 %v2526
        %v3860 = vpop.f32.mrb[0].mxu0
        %v3861 = vadd.f32 0.0, %v3860
        %v3862 = vpop.f32.mrb[0].mxu0
        %3863 = vmatprep.mubr.f32.mxu0 0.0
        %3864 = vmatmul.mubr.f32.gmra.mrb[0].mxu0 %v2528
        %v3865 = vpop.f32.mrb[0].mxu0
        %v3866 = vadd.f32 0.0, %v3865
        %v3867 = vpop.f32.mrb[0].mxu0
        %3868 = vmatprep.mubr.f32.mxu0 0.0
        %3869 = vmatmul.mubr.f32.gmra.mrb[0].mxu0 %v2530
        %v3870 = vpop.f32.mrb[0].mxu0
        %v3871 = vadd.f32 0.0, %v3870
        %v3872 = vpop.f32.mrb[0].mxu0
        %3873 = vmatprep.mubr.f32.mxu0 0.0
        %3874 = vmatmul.mubr.f32.gmra.mrb[0].mxu0 %v2532
        %v3875 = vpop.f32.mrb[0].mxu0
        %v3876 = vadd.f32 0.0, %v3875
        %v3877 = vpop.f32.mrb[0].mxu0
        %3878 = vmatprep.mubr.f32.mxu0 0.0
        %3879 = vmatmul.mubr.f32.gmra.mrb[0].mxu0 %v3735
        %v3880 = vpop.f32.mrb[0].mxu0
        %v3881 = vadd.f32 0.0, %v3880
        %v3882 = vpop.f32.mrb[0].mxu0
        %3883 = vmatprep.mubr.f32.mxu0 0.0
        %3884 = vmatmul.mubr.f32.gmra.mrb[0].mxu0 %v3737
        %v3885 = vpop.f32.mrb[0].mxu0
        %v3886 = vadd.f32 0.0, %v3885
        %v3887 = vpop.f32.mrb[0].mxu0
        %3888 = vmatprep.mubr.f32.mxu0 0.0
        %3889 = vmatmul.mubr.f32.gmra.mrb[0].mxu0 %v3739
        %v3890 = vpop.f32.mrb[0].mxu0
        %v3891 = vadd.f32 0.0, %v3890
        %v3892 = vpop.f32.mrb[0].mxu0
        %3893 = vdwg.mxu0
        %v3894 = vadd.f32 %v3709, %v3811
        %v3895 = vadd.f32 %v3710, %v3816
        %v3896 = vadd.f32 %v3711, %v3821
        %v3897 = vadd.f32 %v3712, %v3826
        %v3898 = vadd.f32 %v3713, %v3831
        %v3899 = vadd.f32 %v3714, %v3836
        %v3900 = vadd.f32 %v3715, %v3841
        %v3901 = vadd.f32 %v3716, %v3846
        %v3902 = vadd.f32 %v3717, %v3851
        %v3903 = vadd.f32 %v3718, %v3856
        %v3904 = vadd.f32 %v3719, %v3861
        %v3905 = vadd.f32 %v3720, %v3866
        %v3906 = vadd.f32 %v3721, %v3871
        %v3907 = vadd.f32 %v3722, %v3876
        %v3908 = vadd.f32 %v3723, %v3881
        %v3909 = vadd.f32 %v3724, %v3886
        %v3910 = vadd.f32 %v3725, %v3891
        %s3911 = scalar_lea.vmem %s3, 88
        %v3912 = vld [vmem:[%s3911] sm:$0x3f]
        %v3913 = vrot.slane %v1524, 5
        %v3914 = vrot.slane %v1525, 5
        %v3915 = vsel %vm802, %v3913, %v3914
        %v3916 = vrot.slane %v1526, 5
        %v3917 = vsel %vm802, %v3914, %v3916
        %v3918 = vrot.slane %v1527, 5
        %v3919 = vsel %vm802, %v3916, %v3918
        %v3920 = vrot.slane %v1528, 5
        %v3921 = vsel %vm802, %v3918, %v3920
        %v3922 = vrot.slane %v1529, 5
        %v3923 = vsel %vm802, %v3920, %v3922
        %v3924 = vrot.slane %v1530, 5
        %v3925 = vsel %vm802, %v3922, %v3924
        %v3926 = vrot.slane %v1531, 5
        %v3927 = vsel %vm802, %v3924, %v3926
        %v3928 = vrot.slane %v1532, 5
        %v3929 = vsel %vm802, %v3926, %v3928
        %v3930 = vrot.slane %v1533, 5
        %v3931 = vsel %vm802, %v3928, %v3930
        %v3932 = vrot.slane %v1534, 5
        %v3933 = vsel %vm802, %v3930, %v3932
        %v3934 = vrot.slane %v1535, 5
        %v3935 = vsel %vm802, %v3932, %v3934
        %v3936 = vrot.slane %v1536, 5
        %v3937 = vsel %vm802, %v3934, %v3936
        %v3938 = vrot.slane %v1537, 5
        %v3939 = vsel %vm802, %v3936, %v3938
        %v3940 = vrot.slane %v1538, 5
        %v3941 = vsel %vm802, %v3938, %v3940
        %v3942 = vrot.slane %v1539, 5
        %v3943 = vsel %vm802, %v3940, %v3942
        %v3944 = vrot.slane %v1540, 5
        %v3945 = vsel %vm802, %v3942, %v3944
        %v3946 = vrot.slane %v1541, 5
        %v3947 = vsel %vm802, %v3944, %v3946
        %v3948 = vsel %vm1603, %v3915, 0
        %v3950 = vsel %vm1603, %v3917, 0
        %v3952 = vsel %vm1603, %v3919, 0
        %v3954 = vsel %vm1603, %v3921, 0
        %v3956 = vsel %vm1603, %v3923, 0
        %v3958 = vsel %vm1603, %v3925, 0
        %v3960 = vsel %vm1603, %v3927, 0
        %v3962 = vsel %vm1603, %v3929, 0
        %v3964 = vsel %vm1603, %v3931, 0
        %v3966 = vsel %vm1603, %v3933, 0
        %v3968 = vsel %vm1603, %v3935, 0
        %v3970 = vsel %vm1603, %v3937, 0
        %v3972 = vsel %vm1603, %v3939, 0
        %v3974 = vsel %vm1603, %v3941, 0
        %v3976 = vsel %vm1603, %v3943, 0
        %v3978 = vsel %vm1603, %v3945, 0
        %v3980 = vsel %vm1603, %v3947, 0
        %v3983 = vsel %vm1638, %v3912, 0
        %3985 = vmatprep.subr.mxu0 0.0
        %3986 = vmatpush1.msra.mxu0 %v3983
        %3987 = vmatprep.subr.mxu0 0.0
        %3988 = vmatpush1.msra.mxu0 0.0
        %3989 = vmatprep.subr.mxu0 0.0
        %3990 = vmatpush1.msra.mxu0 0.0
        %3991 = vmatprep.subr.mxu0 0.0
        %3992 = vmatpush1.msra.mxu0 0.0
        %3993 = vmatprep.subr.mxu0 0.0
        %3994 = vmatpush1.msra.mxu0 0.0
        %3995 = vmatprep.subr.mxu0 0.0
        %3996 = vmatpush1.msra.mxu0 0.0
        %3997 = vmatprep.subr.mxu0 0.0
        %3998 = vmatpush1.msra.mxu0 0.0
        %3999 = vmatprep.subr.mxu0 0.0
        %4000 = vmatpush1.msra.mxu0 0.0
        %4001 = vmatprep.subr.mxu0 0.0
        %4002 = vmatpush1.msra.mxu0 0.0
        %4003 = vmatprep.subr.mxu0 0.0
        %4004 = vmatpush1.msra.mxu0 0.0
        %4005 = vmatprep.subr.mxu0 0.0
        %4006 = vmatpush1.msra.mxu0 0.0
        %4007 = vmatprep.subr.mxu0 0.0
        %4008 = vmatpush1.msra.mxu0 0.0
        %4009 = vmatprep.subr.mxu0 0.0
        %4010 = vmatpush1.msra.mxu0 0.0
        %4011 = vmatprep.subr.mxu0 0.0
        %4012 = vmatpush1.msra.mxu0 0.0
        %4013 = vmatprep.subr.mxu0 0.0
        %4014 = vmatpush1.msra.mxu0 0.0
        %4015 = vmatprep.subr.mxu0 0.0
        %4016 = vmatpush1.msra.mxu0 0.0
        %4017 = vmatprep.subr.mxu0 0.0
        %4018 = vmatpush1.msra.mxu0 0.0
        %4019 = vmatprep.subr.mxu0 0.0
        %4020 = vmatpush1.msra.mxu0 0.0
        %4021 = vmatprep.subr.mxu0 0.0
        %4022 = vmatpush1.msra.mxu0 0.0
        %4023 = vmatprep.subr.mxu0 0.0
        %4024 = vmatpush1.msra.mxu0 0.0
        %4025 = vmatprep.subr.mxu0 0.0
        %4026 = vmatpush1.msra.mxu0 0.0
        %4027 = vmatprep.subr.mxu0 0.0
        %4028 = vmatpush1.msra.mxu0 0.0
        %4029 = vmatprep.subr.mxu0 0.0
        %4030 = vmatpush1.msra.mxu0 0.0
        %4031 = vmatprep.subr.mxu0 0.0
        %4032 = vmatpush1.msra.mxu0 0.0
        %4033 = vmatprep.subr.mxu0 0.0
        %4034 = vmatpush1.msra.mxu0 0.0
        %4035 = vmatprep.subr.mxu0 0.0
        %4036 = vmatpush1.msra.mxu0 0.0
        %4037 = vmatprep.subr.mxu0 0.0
        %4038 = vmatpush1.msra.mxu0 0.0
        %4039 = vmatprep.subr.mxu0 0.0
        %4040 = vmatpush1.msra.mxu0 0.0
        %4041 = vmatprep.subr.mxu0 0.0
        %4042 = vmatpush1.msra.mxu0 0.0
        %4043 = vmatprep.subr.mxu0 0.0
        %4044 = vmatpush1.msra.mxu0 0.0
        %4045 = vmatprep.subr.mxu0 0.0
        %4046 = vmatpush1.msra.mxu0 0.0
        %4047 = vmatprep.subr.mxu0 0.0
        %4048 = vmatpush1.msra.mxu0 0.0
        %4049 = vmatprep.mubr.f32.mxu0 0.0
        %4050 = vmatmul.mubr.f32.gmra.mrb[0].mxu0 %v3948
        %v4051 = vpop.f32.mrb[0].mxu0
        %v4052 = vadd.f32 0.0, %v4051
        %v4053 = vpop.f32.mrb[0].mxu0
        %4054 = vmatprep.mubr.f32.mxu0 0.0
        %4055 = vmatmul.mubr.f32.gmra.mrb[0].mxu0 %v3950
        %v4056 = vpop.f32.mrb[0].mxu0
        %v4057 = vadd.f32 0.0, %v4056
        %v4058 = vpop.f32.mrb[0].mxu0
        %4059 = vmatprep.mubr.f32.mxu0 0.0
        %4060 = vmatmul.mubr.f32.gmra.mrb[0].mxu0 %v3952
        %v4061 = vpop.f32.mrb[0].mxu0
        %v4062 = vadd.f32 0.0, %v4061
        %v4063 = vpop.f32.mrb[0].mxu0
        %4064 = vmatprep.mubr.f32.mxu0 0.0
        %4065 = vmatmul.mubr.f32.gmra.mrb[0].mxu0 %v3954
        %v4066 = vpop.f32.mrb[0].mxu0
        %v4067 = vadd.f32 0.0, %v4066
        %v4068 = vpop.f32.mrb[0].mxu0
        %4069 = vmatprep.mubr.f32.mxu0 0.0
        %4070 = vmatmul.mubr.f32.gmra.mrb[0].mxu0 %v3956
        %v4071 = vpop.f32.mrb[0].mxu0
        %v4072 = vadd.f32 0.0, %v4071
        %v4073 = vpop.f32.mrb[0].mxu0
        %4074 = vmatprep.mubr.f32.mxu0 0.0
        %4075 = vmatmul.mubr.f32.gmra.mrb[0].mxu0 %v3958
        %v4076 = vpop.f32.mrb[0].mxu0
        %v4077 = vadd.f32 0.0, %v4076
        %v4078 = vpop.f32.mrb[0].mxu0
        %4079 = vmatprep.mubr.f32.mxu0 0.0
        %4080 = vmatmul.mubr.f32.gmra.mrb[0].mxu0 %v3960
        %v4081 = vpop.f32.mrb[0].mxu0
        %v4082 = vadd.f32 0.0, %v4081
        %v4083 = vpop.f32.mrb[0].mxu0
        %4084 = vmatprep.mubr.f32.mxu0 0.0
        %4085 = vmatmul.mubr.f32.gmra.mrb[0].mxu0 %v3962
        %v4086 = vpop.f32.mrb[0].mxu0
        %v4087 = vadd.f32 0.0, %v4086
        %v4088 = vpop.f32.mrb[0].mxu0
        %4089 = vmatprep.mubr.f32.mxu0 0.0
        %4090 = vmatmul.mubr.f32.gmra.mrb[0].mxu0 %v3964
        %v4091 = vpop.f32.mrb[0].mxu0
        %v4092 = vadd.f32 0.0, %v4091
        %v4093 = vpop.f32.mrb[0].mxu0
        %4094 = vmatprep.mubr.f32.mxu0 0.0
        %4095 = vmatmul.mubr.f32.gmra.mrb[0].mxu0 %v3966
        %v4096 = vpop.f32.mrb[0].mxu0
        %v4097 = vadd.f32 0.0, %v4096
        %v4098 = vpop.f32.mrb[0].mxu0
        %4099 = vmatprep.mubr.f32.mxu0 0.0
        %4100 = vmatmul.mubr.f32.gmra.mrb[0].mxu0 %v3968
        %v4101 = vpop.f32.mrb[0].mxu0
        %v4102 = vadd.f32 0.0, %v4101
        %v4103 = vpop.f32.mrb[0].mxu0
        %4104 = vmatprep.mubr.f32.mxu0 0.0
        %4105 = vmatmul.mubr.f32.gmra.mrb[0].mxu0 %v3970
        %v4106 = vpop.f32.mrb[0].mxu0
        %v4107 = vadd.f32 0.0, %v4106
        %v4108 = vpop.f32.mrb[0].mxu0
        %4109 = vmatprep.mubr.f32.mxu0 0.0
        %4110 = vmatmul.mubr.f32.gmra.mrb[0].mxu0 %v3972
        %v4111 = vpop.f32.mrb[0].mxu0
        %v4112 = vadd.f32 0.0, %v4111
        %v4113 = vpop.f32.mrb[0].mxu0
        %4114 = vmatprep.mubr.f32.mxu0 0.0
        %4115 = vmatmul.mubr.f32.gmra.mrb[0].mxu0 %v3974
        %v4116 = vpop.f32.mrb[0].mxu0
        %v4117 = vadd.f32 0.0, %v4116
        %v4118 = vpop.f32.mrb[0].mxu0
        %4119 = vmatprep.mubr.f32.mxu0 0.0
        %4120 = vmatmul.mubr.f32.gmra.mrb[0].mxu0 %v3976
        %v4121 = vpop.f32.mrb[0].mxu0
        %v4122 = vadd.f32 0.0, %v4121
        %v4123 = vpop.f32.mrb[0].mxu0
        %4124 = vmatprep.mubr.f32.mxu0 0.0
        %4125 = vmatmul.mubr.f32.gmra.mrb[0].mxu0 %v3978
        %v4126 = vpop.f32.mrb[0].mxu0
        %v4127 = vadd.f32 0.0, %v4126
        %v4128 = vpop.f32.mrb[0].mxu0
        %4129 = vmatprep.mubr.f32.mxu0 0.0
        %4130 = vmatmul.mubr.f32.gmra.mrb[0].mxu0 %v3980
        %v4131 = vpop.f32.mrb[0].mxu0
        %v4132 = vadd.f32 0.0, %v4131
        %v4133 = vpop.f32.mrb[0].mxu0
        %4134 = vdwg.mxu0
        %v4135 = vadd.f32 %v3894, %v4052
        %v4136 = vadd.f32 %v3895, %v4057
        %v4137 = vadd.f32 %v3896, %v4062
        %v4138 = vadd.f32 %v3897, %v4067
        %v4139 = vadd.f32 %v3898, %v4072
        %v4140 = vadd.f32 %v3899, %v4077
        %v4141 = vadd.f32 %v3900, %v4082
        %v4142 = vadd.f32 %v3901, %v4087
        %v4143 = vadd.f32 %v3902, %v4092
        %v4144 = vadd.f32 %v3903, %v4097
        %v4145 = vadd.f32 %v3904, %v4102
        %v4146 = vadd.f32 %v3905, %v4107
        %v4147 = vadd.f32 %v3906, %v4112
        %v4148 = vadd.f32 %v3907, %v4117
        %v4149 = vadd.f32 %v3908, %v4122
        %v4150 = vadd.f32 %v3909, %v4127
        %v4151 = vadd.f32 %v3910, %v4132
        %s4152 = scalar_lea.vmem %s3, 96
        %v4153 = vld [vmem:[%s4152] sm:$0x3f]
        %v4154 = vrot.slane %v1540, 6
        %v4155 = vsel %vm2707, %v2741, %v4154
        %v4156 = vrot.slane %v1541, 6
        %v4157 = vsel %vm2707, %v4154, %v4156
        %v4158 = vsel %vm1603, %v4155, 0
        %v4160 = vsel %vm1603, %v4157, 0
        %v4163 = vsel %vm1638, %v4153, 0
        %4165 = vmatprep.subr.mxu0 0.0
        %4166 = vmatpush1.msra.mxu0 %v4163
        %4167 = vmatprep.subr.mxu0 0.0
        %4168 = vmatpush1.msra.mxu0 0.0
        %4169 = vmatprep.subr.mxu0 0.0
        %4170 = vmatpush1.msra.mxu0 0.0
        %4171 = vmatprep.subr.mxu0 0.0
        %4172 = vmatpush1.msra.mxu0 0.0
        %4173 = vmatprep.subr.mxu0 0.0
        %4174 = vmatpush1.msra.mxu0 0.0
        %4175 = vmatprep.subr.mxu0 0.0
        %4176 = vmatpush1.msra.mxu0 0.0
        %4177 = vmatprep.subr.mxu0 0.0
        %4178 = vmatpush1.msra.mxu0 0.0
        %4179 = vmatprep.subr.mxu0 0.0
        %4180 = vmatpush1.msra.mxu0 0.0
        %4181 = vmatprep.subr.mxu0 0.0
        %4182 = vmatpush1.msra.mxu0 0.0
        %4183 = vmatprep.subr.mxu0 0.0
        %4184 = vmatpush1.msra.mxu0 0.0
        %4185 = vmatprep.subr.mxu0 0.0
        %4186 = vmatpush1.msra.mxu0 0.0
        %4187 = vmatprep.subr.mxu0 0.0
        %4188 = vmatpush1.msra.mxu0 0.0
        %4189 = vmatprep.subr.mxu0 0.0
        %4190 = vmatpush1.msra.mxu0 0.0
        %4191 = vmatprep.subr.mxu0 0.0
        %4192 = vmatpush1.msra.mxu0 0.0
        %4193 = vmatprep.subr.mxu0 0.0
        %4194 = vmatpush1.msra.mxu0 0.0
        %4195 = vmatprep.subr.mxu0 0.0
        %4196 = vmatpush1.msra.mxu0 0.0
        %4197 = vmatprep.subr.mxu0 0.0
        %4198 = vmatpush1.msra.mxu0 0.0
        %4199 = vmatprep.subr.mxu0 0.0
        %4200 = vmatpush1.msra.mxu0 0.0
        %4201 = vmatprep.subr.mxu0 0.0
        %4202 = vmatpush1.msra.mxu0 0.0
        %4203 = vmatprep.subr.mxu0 0.0
        %4204 = vmatpush1.msra.mxu0 0.0
        %4205 = vmatprep.subr.mxu0 0.0
        %4206 = vmatpush1.msra.mxu0 0.0
        %4207 = vmatprep.subr.mxu0 0.0
        %4208 = vmatpush1.msra.mxu0 0.0
        %4209 = vmatprep.subr.mxu0 0.0
        %4210 = vmatpush1.msra.mxu0 0.0
        %4211 = vmatprep.subr.mxu0 0.0
        %4212 = vmatpush1.msra.mxu0 0.0
        %4213 = vmatprep.subr.mxu0 0.0
        %4214 = vmatpush1.msra.mxu0 0.0
        %4215 = vmatprep.subr.mxu0 0.0
        %4216 = vmatpush1.msra.mxu0 0.0
        %4217 = vmatprep.subr.mxu0 0.0
        %4218 = vmatpush1.msra.mxu0 0.0
        %4219 = vmatprep.subr.mxu0 0.0
        %4220 = vmatpush1.msra.mxu0 0.0
        %4221 = vmatprep.subr.mxu0 0.0
        %4222 = vmatpush1.msra.mxu0 0.0
        %4223 = vmatprep.subr.mxu0 0.0
        %4224 = vmatpush1.msra.mxu0 0.0
        %4225 = vmatprep.subr.mxu0 0.0
        %4226 = vmatpush1.msra.mxu0 0.0
        %4227 = vmatprep.subr.mxu0 0.0
        %4228 = vmatpush1.msra.mxu0 0.0
        %4229 = vmatprep.mubr.f32.mxu0 0.0
        %4230 = vmatmul.mubr.f32.gmra.mrb[0].mxu0 %v2747
        %v4231 = vpop.f32.mrb[0].mxu0
        %v4232 = vadd.f32 0.0, %v4231
        %v4233 = vpop.f32.mrb[0].mxu0
        %4234 = vmatprep.mubr.f32.mxu0 0.0
        %4235 = vmatmul.mubr.f32.gmra.mrb[0].mxu0 %v2749
        %v4236 = vpop.f32.mrb[0].mxu0
        %v4237 = vadd.f32 0.0, %v4236
        %v4238 = vpop.f32.mrb[0].mxu0
        %4239 = vmatprep.mubr.f32.mxu0 0.0
        %4240 = vmatmul.mubr.f32.gmra.mrb[0].mxu0 %v2751
        %v4241 = vpop.f32.mrb[0].mxu0
        %v4242 = vadd.f32 0.0, %v4241
        %v4243 = vpop.f32.mrb[0].mxu0
        %4244 = vmatprep.mubr.f32.mxu0 0.0
        %4245 = vmatmul.mubr.f32.gmra.mrb[0].mxu0 %v2753
        %v4246 = vpop.f32.mrb[0].mxu0
        %v4247 = vadd.f32 0.0, %v4246
        %v4248 = vpop.f32.mrb[0].mxu0
        %4249 = vmatprep.mubr.f32.mxu0 0.0
        %4250 = vmatmul.mubr.f32.gmra.mrb[0].mxu0 %v2755
        %v4251 = vpop.f32.mrb[0].mxu0
        %v4252 = vadd.f32 0.0, %v4251
        %v4253 = vpop.f32.mrb[0].mxu0
        %4254 = vmatprep.mubr.f32.mxu0 0.0
        %4255 = vmatmul.mubr.f32.gmra.mrb[0].mxu0 %v2757
        %v4256 = vpop.f32.mrb[0].mxu0
        %v4257 = vadd.f32 0.0, %v4256
        %v4258 = vpop.f32.mrb[0].mxu0
        %4259 = vmatprep.mubr.f32.mxu0 0.0
        %4260 = vmatmul.mubr.f32.gmra.mrb[0].mxu0 %v2759
        %v4261 = vpop.f32.mrb[0].mxu0
        %v4262 = vadd.f32 0.0, %v4261
        %v4263 = vpop.f32.mrb[0].mxu0
        %4264 = vmatprep.mubr.f32.mxu0 0.0
        %4265 = vmatmul.mubr.f32.gmra.mrb[0].mxu0 %v2761
        %v4266 = vpop.f32.mrb[0].mxu0
        %v4267 = vadd.f32 0.0, %v4266
        %v4268 = vpop.f32.mrb[0].mxu0
        %4269 = vmatprep.mubr.f32.mxu0 0.0
        %4270 = vmatmul.mubr.f32.gmra.mrb[0].mxu0 %v2763
        %v4271 = vpop.f32.mrb[0].mxu0
        %v4272 = vadd.f32 0.0, %v4271
        %v4273 = vpop.f32.mrb[0].mxu0
        %4274 = vmatprep.mubr.f32.mxu0 0.0
        %4275 = vmatmul.mubr.f32.gmra.mrb[0].mxu0 %v2765
        %v4276 = vpop.f32.mrb[0].mxu0
        %v4277 = vadd.f32 0.0, %v4276
        %v4278 = vpop.f32.mrb[0].mxu0
        %4279 = vmatprep.mubr.f32.mxu0 0.0
        %4280 = vmatmul.mubr.f32.gmra.mrb[0].mxu0 %v2767
        %v4281 = vpop.f32.mrb[0].mxu0
        %v4282 = vadd.f32 0.0, %v4281
        %v4283 = vpop.f32.mrb[0].mxu0
        %4284 = vmatprep.mubr.f32.mxu0 0.0
        %4285 = vmatmul.mubr.f32.gmra.mrb[0].mxu0 %v2769
        %v4286 = vpop.f32.mrb[0].mxu0
        %v4287 = vadd.f32 0.0, %v4286
        %v4288 = vpop.f32.mrb[0].mxu0
        %4289 = vmatprep.mubr.f32.mxu0 0.0
        %4290 = vmatmul.mubr.f32.gmra.mrb[0].mxu0 %v2771
        %v4291 = vpop.f32.mrb[0].mxu0
        %v4292 = vadd.f32 0.0, %v4291
        %v4293 = vpop.f32.mrb[0].mxu0
        %4294 = vmatprep.mubr.f32.mxu0 0.0
        %4295 = vmatmul.mubr.f32.gmra.mrb[0].mxu0 %v2773
        %v4296 = vpop.f32.mrb[0].mxu0
        %v4297 = vadd.f32 0.0, %v4296
        %v4298 = vpop.f32.mrb[0].mxu0
        %4299 = vmatprep.mubr.f32.mxu0 0.0
        %4300 = vmatmul.mubr.f32.gmra.mrb[0].mxu0 %v2775
        %v4301 = vpop.f32.mrb[0].mxu0
        %v4302 = vadd.f32 0.0, %v4301
        %v4303 = vpop.f32.mrb[0].mxu0
        %4304 = vmatprep.mubr.f32.mxu0 0.0
        %4305 = vmatmul.mubr.f32.gmra.mrb[0].mxu0 %v4158
        %v4306 = vpop.f32.mrb[0].mxu0
        %v4307 = vadd.f32 0.0, %v4306
        %v4308 = vpop.f32.mrb[0].mxu0
        %4309 = vmatprep.mubr.f32.mxu0 0.0
        %4310 = vmatmul.mubr.f32.gmra.mrb[0].mxu0 %v4160
        %v4311 = vpop.f32.mrb[0].mxu0
        %v4312 = vadd.f32 0.0, %v4311
        %v4313 = vpop.f32.mrb[0].mxu0
        %4314 = vdwg.mxu0
        %v4315 = vadd.f32 %v4135, %v4232
        %v4316 = vadd.f32 %v4136, %v4237
        %v4317 = vadd.f32 %v4137, %v4242
        %v4318 = vadd.f32 %v4138, %v4247
        %v4319 = vadd.f32 %v4139, %v4252
        %v4320 = vadd.f32 %v4140, %v4257
        %v4321 = vadd.f32 %v4141, %v4262
        %v4322 = vadd.f32 %v4142, %v4267
        %v4323 = vadd.f32 %v4143, %v4272
        %v4324 = vadd.f32 %v4144, %v4277
        %v4325 = vadd.f32 %v4145, %v4282
        %v4326 = vadd.f32 %v4146, %v4287
        %v4327 = vadd.f32 %v4147, %v4292
        %v4328 = vadd.f32 %v4148, %v4297
        %v4329 = vadd.f32 %v4149, %v4302
        %v4330 = vadd.f32 %v4150, %v4307
        %v4331 = vadd.f32 %v4151, %v4312
        %s4332 = scalar_lea.vmem %s3, 104
        %v4333 = vld [vmem:[%s4332] sm:$0x3f]
        %v4334 = vrot.slane %v1540, 7
        %v4335 = vsel %vm2949, %v2983, %v4334
        %v4336 = vrot.slane %v1541, 7
        %v4337 = vsel %vm2949, %v4334, %v4336
        %v4338 = vsel %vm1603, %v4335, 0
        %v4340 = vsel %vm1603, %v4337, 0
        %v4343 = vsel %vm1638, %v4333, 0
        %4345 = vmatprep.subr.mxu0 0.0
        %4346 = vmatpush1.msra.mxu0 %v4343
        %4347 = vmatprep.subr.mxu0 0.0
        %4348 = vmatpush1.msra.mxu0 0.0
        %4349 = vmatprep.subr.mxu0 0.0
        %4350 = vmatpush1.msra.mxu0 0.0
        %4351 = vmatprep.subr.mxu0 0.0
        %4352 = vmatpush1.msra.mxu0 0.0
        %4353 = vmatprep.subr.mxu0 0.0
        %4354 = vmatpush1.msra.mxu0 0.0
        %4355 = vmatprep.subr.mxu0 0.0
        %4356 = vmatpush1.msra.mxu0 0.0
        %4357 = vmatprep.subr.mxu0 0.0
        %4358 = vmatpush1.msra.mxu0 0.0
        %4359 = vmatprep.subr.mxu0 0.0
        %4360 = vmatpush1.msra.mxu0 0.0
        %4361 = vmatprep.subr.mxu0 0.0
        %4362 = vmatpush1.msra.mxu0 0.0
        %4363 = vmatprep.subr.mxu0 0.0
        %4364 = vmatpush1.msra.mxu0 0.0
        %4365 = vmatprep.subr.mxu0 0.0
        %4366 = vmatpush1.msra.mxu0 0.0
        %4367 = vmatprep.subr.mxu0 0.0
        %4368 = vmatpush1.msra.mxu0 0.0
        %4369 = vmatprep.subr.mxu0 0.0
        %4370 = vmatpush1.msra.mxu0 0.0
        %4371 = vmatprep.subr.mxu0 0.0
        %4372 = vmatpush1.msra.mxu0 0.0
        %4373 = vmatprep.subr.mxu0 0.0
        %4374 = vmatpush1.msra.mxu0 0.0
        %4375 = vmatprep.subr.mxu0 0.0
        %4376 = vmatpush1.msra.mxu0 0.0
        %4377 = vmatprep.subr.mxu0 0.0
        %4378 = vmatpush1.msra.mxu0 0.0
        %4379 = vmatprep.subr.mxu0 0.0
        %4380 = vmatpush1.msra.mxu0 0.0
        %4381 = vmatprep.subr.mxu0 0.0
        %4382 = vmatpush1.msra.mxu0 0.0
        %4383 = vmatprep.subr.mxu0 0.0
        %4384 = vmatpush1.msra.mxu0 0.0
        %4385 = vmatprep.subr.mxu0 0.0
        %4386 = vmatpush1.msra.mxu0 0.0
        %4387 = vmatprep.subr.mxu0 0.0
        %4388 = vmatpush1.msra.mxu0 0.0
        %4389 = vmatprep.subr.mxu0 0.0
        %4390 = vmatpush1.msra.mxu0 0.0
        %4391 = vmatprep.subr.mxu0 0.0
        %4392 = vmatpush1.msra.mxu0 0.0
        %4393 = vmatprep.subr.mxu0 0.0
        %4394 = vmatpush1.msra.mxu0 0.0
        %4395 = vmatprep.subr.mxu0 0.0
        %4396 = vmatpush1.msra.mxu0 0.0
        %4397 = vmatprep.subr.mxu0 0.0
        %4398 = vmatpush1.msra.mxu0 0.0
        %4399 = vmatprep.subr.mxu0 0.0
        %4400 = vmatpush1.msra.mxu0 0.0
        %4401 = vmatprep.subr.mxu0 0.0
        %4402 = vmatpush1.msra.mxu0 0.0
        %4403 = vmatprep.subr.mxu0 0.0
        %4404 = vmatpush1.msra.mxu0 0.0
        %4405 = vmatprep.subr.mxu0 0.0
        %4406 = vmatpush1.msra.mxu0 0.0
        %4407 = vmatprep.subr.mxu0 0.0
        %4408 = vmatpush1.msra.mxu0 0.0
        %4409 = vmatprep.mubr.f32.mxu0 0.0
        %4410 = vmatmul.mubr.f32.gmra.mrb[0].mxu0 %v2989
        %v4411 = vpop.f32.mrb[0].mxu0
        %v4412 = vadd.f32 0.0, %v4411
        %v4413 = vpop.f32.mrb[0].mxu0
        %4414 = vmatprep.mubr.f32.mxu0 0.0
        %4415 = vmatmul.mubr.f32.gmra.mrb[0].mxu0 %v2991
        %v4416 = vpop.f32.mrb[0].mxu0
        %v4417 = vadd.f32 0.0, %v4416
        %v4418 = vpop.f32.mrb[0].mxu0
        %4419 = vmatprep.mubr.f32.mxu0 0.0
        %4420 = vmatmul.mubr.f32.gmra.mrb[0].mxu0 %v2993
        %v4421 = vpop.f32.mrb[0].mxu0
        %v4422 = vadd.f32 0.0, %v4421
        %v4423 = vpop.f32.mrb[0].mxu0
        %4424 = vmatprep.mubr.f32.mxu0 0.0
        %4425 = vmatmul.mubr.f32.gmra.mrb[0].mxu0 %v2995
        %v4426 = vpop.f32.mrb[0].mxu0
        %v4427 = vadd.f32 0.0, %v4426
        %v4428 = vpop.f32.mrb[0].mxu0
        %4429 = vmatprep.mubr.f32.mxu0 0.0
        %4430 = vmatmul.mubr.f32.gmra.mrb[0].mxu0 %v2997
        %v4431 = vpop.f32.mrb[0].mxu0
        %v4432 = vadd.f32 0.0, %v4431
        %v4433 = vpop.f32.mrb[0].mxu0
        %4434 = vmatprep.mubr.f32.mxu0 0.0
        %4435 = vmatmul.mubr.f32.gmra.mrb[0].mxu0 %v2999
        %v4436 = vpop.f32.mrb[0].mxu0
        %v4437 = vadd.f32 0.0, %v4436
        %v4438 = vpop.f32.mrb[0].mxu0
        %4439 = vmatprep.mubr.f32.mxu0 0.0
        %4440 = vmatmul.mubr.f32.gmra.mrb[0].mxu0 %v3001
        %v4441 = vpop.f32.mrb[0].mxu0
        %v4442 = vadd.f32 0.0, %v4441
        %v4443 = vpop.f32.mrb[0].mxu0
        %4444 = vmatprep.mubr.f32.mxu0 0.0
        %4445 = vmatmul.mubr.f32.gmra.mrb[0].mxu0 %v3003
        %v4446 = vpop.f32.mrb[0].mxu0
        %v4447 = vadd.f32 0.0, %v4446
        %v4448 = vpop.f32.mrb[0].mxu0
        %4449 = vmatprep.mubr.f32.mxu0 0.0
        %4450 = vmatmul.mubr.f32.gmra.mrb[0].mxu0 %v3005
        %v4451 = vpop.f32.mrb[0].mxu0
        %v4452 = vadd.f32 0.0, %v4451
        %v4453 = vpop.f32.mrb[0].mxu0
        %4454 = vmatprep.mubr.f32.mxu0 0.0
        %4455 = vmatmul.mubr.f32.gmra.mrb[0].mxu0 %v3007
        %v4456 = vpop.f32.mrb[0].mxu0
        %v4457 = vadd.f32 0.0, %v4456
        %v4458 = vpop.f32.mrb[0].mxu0
        %4459 = vmatprep.mubr.f32.mxu0 0.0
        %4460 = vmatmul.mubr.f32.gmra.mrb[0].mxu0 %v3009
        %v4461 = vpop.f32.mrb[0].mxu0
        %v4462 = vadd.f32 0.0, %v4461
        %v4463 = vpop.f32.mrb[0].mxu0
        %4464 = vmatprep.mubr.f32.mxu0 0.0
        %4465 = vmatmul.mubr.f32.gmra.mrb[0].mxu0 %v3011
        %v4466 = vpop.f32.mrb[0].mxu0
        %v4467 = vadd.f32 0.0, %v4466
        %v4468 = vpop.f32.mrb[0].mxu0
        %4469 = vmatprep.mubr.f32.mxu0 0.0
        %4470 = vmatmul.mubr.f32.gmra.mrb[0].mxu0 %v3013
        %v4471 = vpop.f32.mrb[0].mxu0
        %v4472 = vadd.f32 0.0, %v4471
        %v4473 = vpop.f32.mrb[0].mxu0
        %4474 = vmatprep.mubr.f32.mxu0 0.0
        %4475 = vmatmul.mubr.f32.gmra.mrb[0].mxu0 %v3015
        %v4476 = vpop.f32.mrb[0].mxu0
        %v4477 = vadd.f32 0.0, %v4476
        %v4478 = vpop.f32.mrb[0].mxu0
        %4479 = vmatprep.mubr.f32.mxu0 0.0
        %4480 = vmatmul.mubr.f32.gmra.mrb[0].mxu0 %v3017
        %v4481 = vpop.f32.mrb[0].mxu0
        %v4482 = vadd.f32 0.0, %v4481
        %v4483 = vpop.f32.mrb[0].mxu0
        %4484 = vmatprep.mubr.f32.mxu0 0.0
        %4485 = vmatmul.mubr.f32.gmra.mrb[0].mxu0 %v4338
        %v4486 = vpop.f32.mrb[0].mxu0
        %v4487 = vadd.f32 0.0, %v4486
        %v4488 = vpop.f32.mrb[0].mxu0
        %4489 = vmatprep.mubr.f32.mxu0 0.0
        %4490 = vmatmul.mubr.f32.gmra.mrb[0].mxu0 %v4340
        %v4491 = vpop.f32.mrb[0].mxu0
        %v4492 = vadd.f32 0.0, %v4491
        %v4493 = vpop.f32.mrb[0].mxu0
        %4494 = vdwg.mxu0
        %v4495 = vadd.f32 %v4315, %v4412
        %v4496 = vadd.f32 %v4316, %v4417
        %v4497 = vadd.f32 %v4317, %v4422
        %v4498 = vadd.f32 %v4318, %v4427
        %v4499 = vadd.f32 %v4319, %v4432
        %v4500 = vadd.f32 %v4320, %v4437
        %v4501 = vadd.f32 %v4321, %v4442
        %v4502 = vadd.f32 %v4322, %v4447
        %v4503 = vadd.f32 %v4323, %v4452
        %v4504 = vadd.f32 %v4324, %v4457
        %v4505 = vadd.f32 %v4325, %v4462
        %v4506 = vadd.f32 %v4326, %v4467
        %v4507 = vadd.f32 %v4327, %v4472
        %v4508 = vadd.f32 %v4328, %v4477
        %v4509 = vadd.f32 %v4329, %v4482
        %v4510 = vadd.f32 %v4330, %v4487
        %v4511 = vadd.f32 %v4331, %v4492
        %s4512 = scalar_lea.vmem %s3, 112
        %v4513 = vld [vmem:[%s4512] sm:$0x3f]
        %v4514 = vsel %vm1603, %v1540, 0
        %v4516 = vsel %vm1603, %v1541, 0
        %v4519 = vsel %vm1638, %v4513, 0
        %4521 = vmatprep.subr.mxu0 0.0
        %4522 = vmatpush1.msra.mxu0 %v4519
        %4523 = vmatprep.subr.mxu0 0.0
        %4524 = vmatpush1.msra.mxu0 0.0
        %4525 = vmatprep.subr.mxu0 0.0
        %4526 = vmatpush1.msra.mxu0 0.0
        %4527 = vmatprep.subr.mxu0 0.0
        %4528 = vmatpush1.msra.mxu0 0.0
        %4529 = vmatprep.subr.mxu0 0.0
        %4530 = vmatpush1.msra.mxu0 0.0
        %4531 = vmatprep.subr.mxu0 0.0
        %4532 = vmatpush1.msra.mxu0 0.0
        %4533 = vmatprep.subr.mxu0 0.0
        %4534 = vmatpush1.msra.mxu0 0.0
        %4535 = vmatprep.subr.mxu0 0.0
        %4536 = vmatpush1.msra.mxu0 0.0
        %4537 = vmatprep.subr.mxu0 0.0
        %4538 = vmatpush1.msra.mxu0 0.0
        %4539 = vmatprep.subr.mxu0 0.0
        %4540 = vmatpush1.msra.mxu0 0.0
        %4541 = vmatprep.subr.mxu0 0.0
        %4542 = vmatpush1.msra.mxu0 0.0
        %4543 = vmatprep.subr.mxu0 0.0
        %4544 = vmatpush1.msra.mxu0 0.0
        %4545 = vmatprep.subr.mxu0 0.0
        %4546 = vmatpush1.msra.mxu0 0.0
        %4547 = vmatprep.subr.mxu0 0.0
        %4548 = vmatpush1.msra.mxu0 0.0
        %4549 = vmatprep.subr.mxu0 0.0
        %4550 = vmatpush1.msra.mxu0 0.0
        %4551 = vmatprep.subr.mxu0 0.0
        %4552 = vmatpush1.msra.mxu0 0.0
        %4553 = vmatprep.subr.mxu0 0.0
        %4554 = vmatpush1.msra.mxu0 0.0
        %4555 = vmatprep.subr.mxu0 0.0
        %4556 = vmatpush1.msra.mxu0 0.0
        %4557 = vmatprep.subr.mxu0 0.0
        %4558 = vmatpush1.msra.mxu0 0.0
        %4559 = vmatprep.subr.mxu0 0.0
        %4560 = vmatpush1.msra.mxu0 0.0
        %4561 = vmatprep.subr.mxu0 0.0
        %4562 = vmatpush1.msra.mxu0 0.0
        %4563 = vmatprep.subr.mxu0 0.0
        %4564 = vmatpush1.msra.mxu0 0.0
        %4565 = vmatprep.subr.mxu0 0.0
        %4566 = vmatpush1.msra.mxu0 0.0
        %4567 = vmatprep.subr.mxu0 0.0
        %4568 = vmatpush1.msra.mxu0 0.0
        %4569 = vmatprep.subr.mxu0 0.0
        %4570 = vmatpush1.msra.mxu0 0.0
        %4571 = vmatprep.subr.mxu0 0.0
        %4572 = vmatpush1.msra.mxu0 0.0
        %4573 = vmatprep.subr.mxu0 0.0
        %4574 = vmatpush1.msra.mxu0 0.0
        %4575 = vmatprep.subr.mxu0 0.0
        %4576 = vmatpush1.msra.mxu0 0.0
        %4577 = vmatprep.subr.mxu0 0.0
        %4578 = vmatpush1.msra.mxu0 0.0
        %4579 = vmatprep.subr.mxu0 0.0
        %4580 = vmatpush1.msra.mxu0 0.0
        %4581 = vmatprep.subr.mxu0 0.0
        %4582 = vmatpush1.msra.mxu0 0.0
        %4583 = vmatprep.subr.mxu0 0.0
        %4584 = vmatpush1.msra.mxu0 0.0
        %4585 = vmatprep.mubr.f32.mxu0 0.0
        %4586 = vmatmul.mubr.f32.gmra.mrb[0].mxu0 %v1800
        %v4587 = vpop.f32.mrb[0].mxu0
        %v4588 = vadd.f32 0.0, %v4587
        %v4589 = vpop.f32.mrb[0].mxu0
        %4590 = vmatprep.mubr.f32.mxu0 0.0
        %4591 = vmatmul.mubr.f32.gmra.mrb[0].mxu0 %v1802
        %v4592 = vpop.f32.mrb[0].mxu0
        %v4593 = vadd.f32 0.0, %v4592
        %v4594 = vpop.f32.mrb[0].mxu0
        %4595 = vmatprep.mubr.f32.mxu0 0.0
        %4596 = vmatmul.mubr.f32.gmra.mrb[0].mxu0 %v1804
        %v4597 = vpop.f32.mrb[0].mxu0
        %v4598 = vadd.f32 0.0, %v4597
        %v4599 = vpop.f32.mrb[0].mxu0
        %4600 = vmatprep.mubr.f32.mxu0 0.0
        %4601 = vmatmul.mubr.f32.gmra.mrb[0].mxu0 %v1806
        %v4602 = vpop.f32.mrb[0].mxu0
        %v4603 = vadd.f32 0.0, %v4602
        %v4604 = vpop.f32.mrb[0].mxu0
        %4605 = vmatprep.mubr.f32.mxu0 0.0
        %4606 = vmatmul.mubr.f32.gmra.mrb[0].mxu0 %v1808
        %v4607 = vpop.f32.mrb[0].mxu0
        %v4608 = vadd.f32 0.0, %v4607
        %v4609 = vpop.f32.mrb[0].mxu0
        %4610 = vmatprep.mubr.f32.mxu0 0.0
        %4611 = vmatmul.mubr.f32.gmra.mrb[0].mxu0 %v1810
        %v4612 = vpop.f32.mrb[0].mxu0
        %v4613 = vadd.f32 0.0, %v4612
        %v4614 = vpop.f32.mrb[0].mxu0
        %4615 = vmatprep.mubr.f32.mxu0 0.0
        %4616 = vmatmul.mubr.f32.gmra.mrb[0].mxu0 %v1812
        %v4617 = vpop.f32.mrb[0].mxu0
        %v4618 = vadd.f32 0.0, %v4617
        %v4619 = vpop.f32.mrb[0].mxu0
        %4620 = vmatprep.mubr.f32.mxu0 0.0
        %4621 = vmatmul.mubr.f32.gmra.mrb[0].mxu0 %v1814
        %v4622 = vpop.f32.mrb[0].mxu0
        %v4623 = vadd.f32 0.0, %v4622
        %v4624 = vpop.f32.mrb[0].mxu0
        %4625 = vmatprep.mubr.f32.mxu0 0.0
        %4626 = vmatmul.mubr.f32.gmra.mrb[0].mxu0 %v1816
        %v4627 = vpop.f32.mrb[0].mxu0
        %v4628 = vadd.f32 0.0, %v4627
        %v4629 = vpop.f32.mrb[0].mxu0
        %4630 = vmatprep.mubr.f32.mxu0 0.0
        %4631 = vmatmul.mubr.f32.gmra.mrb[0].mxu0 %v1818
        %v4632 = vpop.f32.mrb[0].mxu0
        %v4633 = vadd.f32 0.0, %v4632
        %v4634 = vpop.f32.mrb[0].mxu0
        %4635 = vmatprep.mubr.f32.mxu0 0.0
        %4636 = vmatmul.mubr.f32.gmra.mrb[0].mxu0 %v1820
        %v4637 = vpop.f32.mrb[0].mxu0
        %v4638 = vadd.f32 0.0, %v4637
        %v4639 = vpop.f32.mrb[0].mxu0
        %4640 = vmatprep.mubr.f32.mxu0 0.0
        %4641 = vmatmul.mubr.f32.gmra.mrb[0].mxu0 %v1822
        %v4642 = vpop.f32.mrb[0].mxu0
        %v4643 = vadd.f32 0.0, %v4642
        %v4644 = vpop.f32.mrb[0].mxu0
        %4645 = vmatprep.mubr.f32.mxu0 0.0
        %4646 = vmatmul.mubr.f32.gmra.mrb[0].mxu0 %v1824
        %v4647 = vpop.f32.mrb[0].mxu0
        %v4648 = vadd.f32 0.0, %v4647
        %v4649 = vpop.f32.mrb[0].mxu0
        %4650 = vmatprep.mubr.f32.mxu0 0.0
        %4651 = vmatmul.mubr.f32.gmra.mrb[0].mxu0 %v3191
        %v4652 = vpop.f32.mrb[0].mxu0
        %v4653 = vadd.f32 0.0, %v4652
        %v4654 = vpop.f32.mrb[0].mxu0
        %4655 = vmatprep.mubr.f32.mxu0 0.0
        %4656 = vmatmul.mubr.f32.gmra.mrb[0].mxu0 %v3193
        %v4657 = vpop.f32.mrb[0].mxu0
        %v4658 = vadd.f32 0.0, %v4657
        %v4659 = vpop.f32.mrb[0].mxu0
        %4660 = vmatprep.mubr.f32.mxu0 0.0
        %4661 = vmatmul.mubr.f32.gmra.mrb[0].mxu0 %v4514
        %v4662 = vpop.f32.mrb[0].mxu0
        %v4663 = vadd.f32 0.0, %v4662
        %v4664 = vpop.f32.mrb[0].mxu0
        %4665 = vmatprep.mubr.f32.mxu0 0.0
        %4666 = vmatmul.mubr.f32.gmra.mrb[0].mxu0 %v4516
        %v4667 = vpop.f32.mrb[0].mxu0
        %v4668 = vadd.f32 0.0, %v4667
        %v4669 = vpop.f32.mrb[0].mxu0
        %4670 = vdwg.mxu0
        %v4671 = vadd.f32 %v4495, %v4588
        %v4672 = vadd.f32 %v4496, %v4593
        %v4673 = vadd.f32 %v4497, %v4598
        %v4674 = vadd.f32 %v4498, %v4603
        %v4675 = vadd.f32 %v4499, %v4608
        %v4676 = vadd.f32 %v4500, %v4613
        %v4677 = vadd.f32 %v4501, %v4618
        %v4678 = vadd.f32 %v4502, %v4623
        %v4679 = vadd.f32 %v4503, %v4628
        %v4680 = vadd.f32 %v4504, %v4633
        %v4681 = vadd.f32 %v4505, %v4638
        %v4682 = vadd.f32 %v4506, %v4643
        %v4683 = vadd.f32 %v4507, %v4648
        %v4684 = vadd.f32 %v4508, %v4653
        %v4685 = vadd.f32 %v4509, %v4658
        %v4686 = vadd.f32 %v4510, %v4663
        %v4687 = vadd.f32 %v4511, %v4668
        %s4688 = scalar_lea.vmem %s3, 120
        %v4689 = vld [vmem:[%s4688] sm:$0x3f]
        %v4692 = vrot.slane %v1541, 2
        %v4693 = vsel %vm1638, %v3550, %v4692
        %v4694 = vrot.slane %v1542, 2
        %v4695 = vsel %vm1638, %v4692, %v4694
        %v4696 = vrot.slane %v1543, 2
        %v4697 = vsel %vm1638, %v4694, %v4696
        %v4698 = vsel %vm1603, %v4693, 0
        %v4700 = vsel %vm1603, %v4695, 0
        %v4702 = vsel %vm1603, %v4697, 0
        %v4705 = vsel %vm1638, %v4689, 0
        %4707 = vmatprep.subr.mxu0 0.0
        %4708 = vmatpush1.msra.mxu0 %v4705
        %4709 = vmatprep.subr.mxu0 0.0
        %4710 = vmatpush1.msra.mxu0 0.0
        %4711 = vmatprep.subr.mxu0 0.0
        %4712 = vmatpush1.msra.mxu0 0.0
        %4713 = vmatprep.subr.mxu0 0.0
        %4714 = vmatpush1.msra.mxu0 0.0
        %4715 = vmatprep.subr.mxu0 0.0
        %4716 = vmatpush1.msra.mxu0 0.0
        %4717 = vmatprep.subr.mxu0 0.0
        %4718 = vmatpush1.msra.mxu0 0.0
        %4719 = vmatprep.subr.mxu0 0.0
        %4720 = vmatpush1.msra.mxu0 0.0
        %4721 = vmatprep.subr.mxu0 0.0
        %4722 = vmatpush1.msra.mxu0 0.0
        %4723 = vmatprep.subr.mxu0 0.0
        %4724 = vmatpush1.msra.mxu0 0.0
        %4725 = vmatprep.subr.mxu0 0.0
        %4726 = vmatpush1.msra.mxu0 0.0
        %4727 = vmatprep.subr.mxu0 0.0
        %4728 = vmatpush1.msra.mxu0 0.0
        %4729 = vmatprep.subr.mxu0 0.0
        %4730 = vmatpush1.msra.mxu0 0.0
        %4731 = vmatprep.subr.mxu0 0.0
        %4732 = vmatpush1.msra.mxu0 0.0
        %4733 = vmatprep.subr.mxu0 0.0
        %4734 = vmatpush1.msra.mxu0 0.0
        %4735 = vmatprep.subr.mxu0 0.0
        %4736 = vmatpush1.msra.mxu0 0.0
        %4737 = vmatprep.subr.mxu0 0.0
        %4738 = vmatpush1.msra.mxu0 0.0
        %4739 = vmatprep.subr.mxu0 0.0
        %4740 = vmatpush1.msra.mxu0 0.0
        %4741 = vmatprep.subr.mxu0 0.0
        %4742 = vmatpush1.msra.mxu0 0.0
        %4743 = vmatprep.subr.mxu0 0.0
        %4744 = vmatpush1.msra.mxu0 0.0
        %4745 = vmatprep.subr.mxu0 0.0
        %4746 = vmatpush1.msra.mxu0 0.0
        %4747 = vmatprep.subr.mxu0 0.0
        %4748 = vmatpush1.msra.mxu0 0.0
        %4749 = vmatprep.subr.mxu0 0.0
        %4750 = vmatpush1.msra.mxu0 0.0
        %4751 = vmatprep.subr.mxu0 0.0
        %4752 = vmatpush1.msra.mxu0 0.0
        %4753 = vmatprep.subr.mxu0 0.0
        %4754 = vmatpush1.msra.mxu0 0.0
        %4755 = vmatprep.subr.mxu0 0.0
        %4756 = vmatpush1.msra.mxu0 0.0
        %4757 = vmatprep.subr.mxu0 0.0
        %4758 = vmatpush1.msra.mxu0 0.0
        %4759 = vmatprep.subr.mxu0 0.0
        %4760 = vmatpush1.msra.mxu0 0.0
        %4761 = vmatprep.subr.mxu0 0.0
        %4762 = vmatpush1.msra.mxu0 0.0
        %4763 = vmatprep.subr.mxu0 0.0
        %4764 = vmatpush1.msra.mxu0 0.0
        %4765 = vmatprep.subr.mxu0 0.0
        %4766 = vmatpush1.msra.mxu0 0.0
        %4767 = vmatprep.subr.mxu0 0.0
        %4768 = vmatpush1.msra.mxu0 0.0
        %4769 = vmatprep.subr.mxu0 0.0
        %4770 = vmatpush1.msra.mxu0 0.0
        %4771 = vmatprep.mubr.f32.mxu0 0.0
        %4772 = vmatmul.mubr.f32.gmra.mrb[0].mxu0 %v2026
        %v4773 = vpop.f32.mrb[0].mxu0
        %v4774 = vadd.f32 0.0, %v4773
        %v4775 = vpop.f32.mrb[0].mxu0
        %4776 = vmatprep.mubr.f32.mxu0 0.0
        %4777 = vmatmul.mubr.f32.gmra.mrb[0].mxu0 %v2028
        %v4778 = vpop.f32.mrb[0].mxu0
        %v4779 = vadd.f32 0.0, %v4778
        %v4780 = vpop.f32.mrb[0].mxu0
        %4781 = vmatprep.mubr.f32.mxu0 0.0
        %4782 = vmatmul.mubr.f32.gmra.mrb[0].mxu0 %v2030
        %v4783 = vpop.f32.mrb[0].mxu0
        %v4784 = vadd.f32 0.0, %v4783
        %v4785 = vpop.f32.mrb[0].mxu0
        %4786 = vmatprep.mubr.f32.mxu0 0.0
        %4787 = vmatmul.mubr.f32.gmra.mrb[0].mxu0 %v2032
        %v4788 = vpop.f32.mrb[0].mxu0
        %v4789 = vadd.f32 0.0, %v4788
        %v4790 = vpop.f32.mrb[0].mxu0
        %4791 = vmatprep.mubr.f32.mxu0 0.0
        %4792 = vmatmul.mubr.f32.gmra.mrb[0].mxu0 %v2034
        %v4793 = vpop.f32.mrb[0].mxu0
        %v4794 = vadd.f32 0.0, %v4793
        %v4795 = vpop.f32.mrb[0].mxu0
        %4796 = vmatprep.mubr.f32.mxu0 0.0
        %4797 = vmatmul.mubr.f32.gmra.mrb[0].mxu0 %v2036
        %v4798 = vpop.f32.mrb[0].mxu0
        %v4799 = vadd.f32 0.0, %v4798
        %v4800 = vpop.f32.mrb[0].mxu0
        %4801 = vmatprep.mubr.f32.mxu0 0.0
        %4802 = vmatmul.mubr.f32.gmra.mrb[0].mxu0 %v2038
        %v4803 = vpop.f32.mrb[0].mxu0
        %v4804 = vadd.f32 0.0, %v4803
        %v4805 = vpop.f32.mrb[0].mxu0
        %4806 = vmatprep.mubr.f32.mxu0 0.0
        %4807 = vmatmul.mubr.f32.gmra.mrb[0].mxu0 %v2040
        %v4808 = vpop.f32.mrb[0].mxu0
        %v4809 = vadd.f32 0.0, %v4808
        %v4810 = vpop.f32.mrb[0].mxu0
        %4811 = vmatprep.mubr.f32.mxu0 0.0
        %4812 = vmatmul.mubr.f32.gmra.mrb[0].mxu0 %v2042
        %v4813 = vpop.f32.mrb[0].mxu0
        %v4814 = vadd.f32 0.0, %v4813
        %v4815 = vpop.f32.mrb[0].mxu0
        %4816 = vmatprep.mubr.f32.mxu0 0.0
        %4817 = vmatmul.mubr.f32.gmra.mrb[0].mxu0 %v2044
        %v4818 = vpop.f32.mrb[0].mxu0
        %v4819 = vadd.f32 0.0, %v4818
        %v4820 = vpop.f32.mrb[0].mxu0
        %4821 = vmatprep.mubr.f32.mxu0 0.0
        %4822 = vmatmul.mubr.f32.gmra.mrb[0].mxu0 %v2046
        %v4823 = vpop.f32.mrb[0].mxu0
        %v4824 = vadd.f32 0.0, %v4823
        %v4825 = vpop.f32.mrb[0].mxu0
        %4826 = vmatprep.mubr.f32.mxu0 0.0
        %4827 = vmatmul.mubr.f32.gmra.mrb[0].mxu0 %v2048
        %v4828 = vpop.f32.mrb[0].mxu0
        %v4829 = vadd.f32 0.0, %v4828
        %v4830 = vpop.f32.mrb[0].mxu0
        %4831 = vmatprep.mubr.f32.mxu0 0.0
        %4832 = vmatmul.mubr.f32.gmra.mrb[0].mxu0 %v3552
        %v4833 = vpop.f32.mrb[0].mxu0
        %v4834 = vadd.f32 0.0, %v4833
        %v4835 = vpop.f32.mrb[0].mxu0
        %4836 = vmatprep.mubr.f32.mxu0 0.0
        %4837 = vmatmul.mubr.f32.gmra.mrb[0].mxu0 %v3554
        %v4838 = vpop.f32.mrb[0].mxu0
        %v4839 = vadd.f32 0.0, %v4838
        %v4840 = vpop.f32.mrb[0].mxu0
        %4841 = vmatprep.mubr.f32.mxu0 0.0
        %4842 = vmatmul.mubr.f32.gmra.mrb[0].mxu0 %v4698
        %v4843 = vpop.f32.mrb[0].mxu0
        %v4844 = vadd.f32 0.0, %v4843
        %v4845 = vpop.f32.mrb[0].mxu0
        %4846 = vmatprep.mubr.f32.mxu0 0.0
        %4847 = vmatmul.mubr.f32.gmra.mrb[0].mxu0 %v4700
        %v4848 = vpop.f32.mrb[0].mxu0
        %v4849 = vadd.f32 0.0, %v4848
        %v4850 = vpop.f32.mrb[0].mxu0
        %4851 = vmatprep.mubr.f32.mxu0 0.0
        %4852 = vmatmul.mubr.f32.gmra.mrb[0].mxu0 %v4702
        %v4853 = vpop.f32.mrb[0].mxu0
        %v4854 = vadd.f32 0.0, %v4853
        %v4855 = vpop.f32.mrb[0].mxu0
        %4856 = vdwg.mxu0
        %v4857 = vadd.f32 %v4671, %v4774
        %v4858 = vadd.f32 %v4672, %v4779
        %v4859 = vadd.f32 %v4673, %v4784
        %v4860 = vadd.f32 %v4674, %v4789
        %v4861 = vadd.f32 %v4675, %v4794
        %v4862 = vadd.f32 %v4676, %v4799
        %v4863 = vadd.f32 %v4677, %v4804
        %v4864 = vadd.f32 %v4678, %v4809
        %v4865 = vadd.f32 %v4679, %v4814
        %v4866 = vadd.f32 %v4680, %v4819
        %v4867 = vadd.f32 %v4681, %v4824
        %v4868 = vadd.f32 %v4682, %v4829
        %v4869 = vadd.f32 %v4683, %v4834
        %v4870 = vadd.f32 %v4684, %v4839
        %v4871 = vadd.f32 %v4685, %v4844
        %v4872 = vadd.f32 %v4686, %v4849
        %v4873 = vadd.f32 %v4687, %v4854
        %s4874 = scalar_lea.vmem %s3, 128
        %v4875 = vld [vmem:[%s4874] sm:$0x3f]
        %v4876 = vrot.slane %v1539, 3
        %v4877 = vsel %vm2222, %v2256, %v4876
        %v4878 = vrot.slane %v1540, 3
        %v4879 = vsel %vm2222, %v4876, %v4878
        %v4880 = vrot.slane %v1541, 3
        %v4881 = vsel %vm2222, %v4878, %v4880
        %v4882 = vrot.slane %v1542, 3
        %v4883 = vsel %vm2222, %v4880, %v4882
        %v4884 = vrot.slane %v1543, 3
        %v4885 = vsel %vm2222, %v4882, %v4884
        %v4886 = vsel %vm1603, %v4877, 0
        %v4888 = vsel %vm1603, %v4879, 0
        %v4890 = vsel %vm1603, %v4881, 0
        %v4892 = vsel %vm1603, %v4883, 0
        %v4894 = vsel %vm1603, %v4885, 0
        %v4897 = vsel %vm1638, %v4875, 0
        %4899 = vmatprep.subr.mxu0 0.0
        %4900 = vmatpush1.msra.mxu0 %v4897
        %4901 = vmatprep.subr.mxu0 0.0
        %4902 = vmatpush1.msra.mxu0 0.0
        %4903 = vmatprep.subr.mxu0 0.0
        %4904 = vmatpush1.msra.mxu0 0.0
        %4905 = vmatprep.subr.mxu0 0.0
        %4906 = vmatpush1.msra.mxu0 0.0
        %4907 = vmatprep.subr.mxu0 0.0
        %4908 = vmatpush1.msra.mxu0 0.0
        %4909 = vmatprep.subr.mxu0 0.0
        %4910 = vmatpush1.msra.mxu0 0.0
        %4911 = vmatprep.subr.mxu0 0.0
        %4912 = vmatpush1.msra.mxu0 0.0
        %4913 = vmatprep.subr.mxu0 0.0
        %4914 = vmatpush1.msra.mxu0 0.0
        %4915 = vmatprep.subr.mxu0 0.0
        %4916 = vmatpush1.msra.mxu0 0.0
        %4917 = vmatprep.subr.mxu0 0.0
        %4918 = vmatpush1.msra.mxu0 0.0
        %4919 = vmatprep.subr.mxu0 0.0
        %4920 = vmatpush1.msra.mxu0 0.0
        %4921 = vmatprep.subr.mxu0 0.0
        %4922 = vmatpush1.msra.mxu0 0.0
        %4923 = vmatprep.subr.mxu0 0.0
        %4924 = vmatpush1.msra.mxu0 0.0
        %4925 = vmatprep.subr.mxu0 0.0
        %4926 = vmatpush1.msra.mxu0 0.0
        %4927 = vmatprep.subr.mxu0 0.0
        %4928 = vmatpush1.msra.mxu0 0.0
        %4929 = vmatprep.subr.mxu0 0.0
        %4930 = vmatpush1.msra.mxu0 0.0
        %4931 = vmatprep.subr.mxu0 0.0
        %4932 = vmatpush1.msra.mxu0 0.0
        %4933 = vmatprep.subr.mxu0 0.0
        %4934 = vmatpush1.msra.mxu0 0.0
        %4935 = vmatprep.subr.mxu0 0.0
        %4936 = vmatpush1.msra.mxu0 0.0
        %4937 = vmatprep.subr.mxu0 0.0
        %4938 = vmatpush1.msra.mxu0 0.0
        %4939 = vmatprep.subr.mxu0 0.0
        %4940 = vmatpush1.msra.mxu0 0.0
        %4941 = vmatprep.subr.mxu0 0.0
        %4942 = vmatpush1.msra.mxu0 0.0
        %4943 = vmatprep.subr.mxu0 0.0
        %4944 = vmatpush1.msra.mxu0 0.0
        %4945 = vmatprep.subr.mxu0 0.0
        %4946 = vmatpush1.msra.mxu0 0.0
        %4947 = vmatprep.subr.mxu0 0.0
        %4948 = vmatpush1.msra.mxu0 0.0
        %4949 = vmatprep.subr.mxu0 0.0
        %4950 = vmatpush1.msra.mxu0 0.0
        %4951 = vmatprep.subr.mxu0 0.0
        %4952 = vmatpush1.msra.mxu0 0.0
        %4953 = vmatprep.subr.mxu0 0.0
        %4954 = vmatpush1.msra.mxu0 0.0
        %4955 = vmatprep.subr.mxu0 0.0
        %4956 = vmatpush1.msra.mxu0 0.0
        %4957 = vmatprep.subr.mxu0 0.0
        %4958 = vmatpush1.msra.mxu0 0.0
        %4959 = vmatprep.subr.mxu0 0.0
        %4960 = vmatpush1.msra.mxu0 0.0
        %4961 = vmatprep.subr.mxu0 0.0
        %4962 = vmatpush1.msra.mxu0 0.0
        %4963 = vmatprep.mubr.f32.mxu0 0.0
        %4964 = vmatmul.mubr.f32.gmra.mrb[0].mxu0 %v2268
        %v4965 = vpop.f32.mrb[0].mxu0
        %v4966 = vadd.f32 0.0, %v4965
        %v4967 = vpop.f32.mrb[0].mxu0
        %4968 = vmatprep.mubr.f32.mxu0 0.0
        %4969 = vmatmul.mubr.f32.gmra.mrb[0].mxu0 %v2270
        %v4970 = vpop.f32.mrb[0].mxu0
        %v4971 = vadd.f32 0.0, %v4970
        %v4972 = vpop.f32.mrb[0].mxu0
        %4973 = vmatprep.mubr.f32.mxu0 0.0
        %4974 = vmatmul.mubr.f32.gmra.mrb[0].mxu0 %v2272
        %v4975 = vpop.f32.mrb[0].mxu0
        %v4976 = vadd.f32 0.0, %v4975
        %v4977 = vpop.f32.mrb[0].mxu0
        %4978 = vmatprep.mubr.f32.mxu0 0.0
        %4979 = vmatmul.mubr.f32.gmra.mrb[0].mxu0 %v2274
        %v4980 = vpop.f32.mrb[0].mxu0
        %v4981 = vadd.f32 0.0, %v4980
        %v4982 = vpop.f32.mrb[0].mxu0
        %4983 = vmatprep.mubr.f32.mxu0 0.0
        %4984 = vmatmul.mubr.f32.gmra.mrb[0].mxu0 %v2276
        %v4985 = vpop.f32.mrb[0].mxu0
        %v4986 = vadd.f32 0.0, %v4985
        %v4987 = vpop.f32.mrb[0].mxu0
        %4988 = vmatprep.mubr.f32.mxu0 0.0
        %4989 = vmatmul.mubr.f32.gmra.mrb[0].mxu0 %v2278
        %v4990 = vpop.f32.mrb[0].mxu0
        %v4991 = vadd.f32 0.0, %v4990
        %v4992 = vpop.f32.mrb[0].mxu0
        %4993 = vmatprep.mubr.f32.mxu0 0.0
        %4994 = vmatmul.mubr.f32.gmra.mrb[0].mxu0 %v2280
        %v4995 = vpop.f32.mrb[0].mxu0
        %v4996 = vadd.f32 0.0, %v4995
        %v4997 = vpop.f32.mrb[0].mxu0
        %4998 = vmatprep.mubr.f32.mxu0 0.0
        %4999 = vmatmul.mubr.f32.gmra.mrb[0].mxu0 %v2282
        %v5000 = vpop.f32.mrb[0].mxu0
        %v5001 = vadd.f32 0.0, %v5000
        %v5002 = vpop.f32.mrb[0].mxu0
        %5003 = vmatprep.mubr.f32.mxu0 0.0
        %5004 = vmatmul.mubr.f32.gmra.mrb[0].mxu0 %v2284
        %v5005 = vpop.f32.mrb[0].mxu0
        %v5006 = vadd.f32 0.0, %v5005
        %v5007 = vpop.f32.mrb[0].mxu0
        %5008 = vmatprep.mubr.f32.mxu0 0.0
        %5009 = vmatmul.mubr.f32.gmra.mrb[0].mxu0 %v2286
        %v5010 = vpop.f32.mrb[0].mxu0
        %v5011 = vadd.f32 0.0, %v5010
        %v5012 = vpop.f32.mrb[0].mxu0
        %5013 = vmatprep.mubr.f32.mxu0 0.0
        %5014 = vmatmul.mubr.f32.gmra.mrb[0].mxu0 %v2288
        %v5015 = vpop.f32.mrb[0].mxu0
        %v5016 = vadd.f32 0.0, %v5015
        %v5017 = vpop.f32.mrb[0].mxu0
        %5018 = vmatprep.mubr.f32.mxu0 0.0
        %5019 = vmatmul.mubr.f32.gmra.mrb[0].mxu0 %v2290
        %v5020 = vpop.f32.mrb[0].mxu0
        %v5021 = vadd.f32 0.0, %v5020
        %v5022 = vpop.f32.mrb[0].mxu0
        %5023 = vmatprep.mubr.f32.mxu0 0.0
        %5024 = vmatmul.mubr.f32.gmra.mrb[0].mxu0 %v4886
        %v5025 = vpop.f32.mrb[0].mxu0
        %v5026 = vadd.f32 0.0, %v5025
        %v5027 = vpop.f32.mrb[0].mxu0
        %5028 = vmatprep.mubr.f32.mxu0 0.0
        %5029 = vmatmul.mubr.f32.gmra.mrb[0].mxu0 %v4888
        %v5030 = vpop.f32.mrb[0].mxu0
        %v5031 = vadd.f32 0.0, %v5030
        %v5032 = vpop.f32.mrb[0].mxu0
        %5033 = vmatprep.mubr.f32.mxu0 0.0
        %5034 = vmatmul.mubr.f32.gmra.mrb[0].mxu0 %v4890
        %v5035 = vpop.f32.mrb[0].mxu0
        %v5036 = vadd.f32 0.0, %v5035
        %v5037 = vpop.f32.mrb[0].mxu0
        %5038 = vmatprep.mubr.f32.mxu0 0.0
        %5039 = vmatmul.mubr.f32.gmra.mrb[0].mxu0 %v4892
        %v5040 = vpop.f32.mrb[0].mxu0
        %v5041 = vadd.f32 0.0, %v5040
        %v5042 = vpop.f32.mrb[0].mxu0
        %5043 = vmatprep.mubr.f32.mxu0 0.0
        %5044 = vmatmul.mubr.f32.gmra.mrb[0].mxu0 %v4894
        %v5045 = vpop.f32.mrb[0].mxu0
        %v5046 = vadd.f32 0.0, %v5045
        %v5047 = vpop.f32.mrb[0].mxu0
        %5048 = vdwg.mxu0
        %v5049 = vadd.f32 %v4857, %v4966
        %v5050 = vadd.f32 %v4858, %v4971
        %v5051 = vadd.f32 %v4859, %v4976
        %v5052 = vadd.f32 %v4860, %v4981
        %v5053 = vadd.f32 %v4861, %v4986
        %v5054 = vadd.f32 %v4862, %v4991
        %v5055 = vadd.f32 %v4863, %v4996
        %v5056 = vadd.f32 %v4864, %v5001
        %v5057 = vadd.f32 %v4865, %v5006
        %v5058 = vadd.f32 %v4866, %v5011
        %v5059 = vadd.f32 %v4867, %v5016
        %v5060 = vadd.f32 %v4868, %v5021
        %v5061 = vadd.f32 %v4869, %v5026
        %v5062 = vadd.f32 %v4870, %v5031
        %v5063 = vadd.f32 %v4871, %v5036
        %v5064 = vadd.f32 %v4872, %v5041
        %v5065 = vadd.f32 %v4873, %v5046
        %s5066 = scalar_lea.vmem %s3, 136
        %v5067 = vld [vmem:[%s5066] sm:$0x3f]
        %v5068 = vrot.slane %v1542, 4
        %v5069 = vsel %vm2464, %v3733, %v5068
        %v5070 = vrot.slane %v1543, 4
        %v5071 = vsel %vm2464, %v5068, %v5070
        %v5072 = vsel %vm1603, %v5069, 0
        %v5074 = vsel %vm1603, %v5071, 0
        %v5077 = vsel %vm1638, %v5067, 0
        %5079 = vmatprep.subr.mxu0 0.0
        %5080 = vmatpush1.msra.mxu0 %v5077
        %5081 = vmatprep.subr.mxu0 0.0
        %5082 = vmatpush1.msra.mxu0 0.0
        %5083 = vmatprep.subr.mxu0 0.0
        %5084 = vmatpush1.msra.mxu0 0.0
        %5085 = vmatprep.subr.mxu0 0.0
        %5086 = vmatpush1.msra.mxu0 0.0
        %5087 = vmatprep.subr.mxu0 0.0
        %5088 = vmatpush1.msra.mxu0 0.0
        %5089 = vmatprep.subr.mxu0 0.0
        %5090 = vmatpush1.msra.mxu0 0.0
        %5091 = vmatprep.subr.mxu0 0.0
        %5092 = vmatpush1.msra.mxu0 0.0
        %5093 = vmatprep.subr.mxu0 0.0
        %5094 = vmatpush1.msra.mxu0 0.0
        %5095 = vmatprep.subr.mxu0 0.0
        %5096 = vmatpush1.msra.mxu0 0.0
        %5097 = vmatprep.subr.mxu0 0.0
        %5098 = vmatpush1.msra.mxu0 0.0
        %5099 = vmatprep.subr.mxu0 0.0
        %5100 = vmatpush1.msra.mxu0 0.0
        %5101 = vmatprep.subr.mxu0 0.0
        %5102 = vmatpush1.msra.mxu0 0.0
        %5103 = vmatprep.subr.mxu0 0.0
        %5104 = vmatpush1.msra.mxu0 0.0
        %5105 = vmatprep.subr.mxu0 0.0
        %5106 = vmatpush1.msra.mxu0 0.0
        %5107 = vmatprep.subr.mxu0 0.0
        %5108 = vmatpush1.msra.mxu0 0.0
        %5109 = vmatprep.subr.mxu0 0.0
        %5110 = vmatpush1.msra.mxu0 0.0
        %5111 = vmatprep.subr.mxu0 0.0
        %5112 = vmatpush1.msra.mxu0 0.0
        %5113 = vmatprep.subr.mxu0 0.0
        %5114 = vmatpush1.msra.mxu0 0.0
        %5115 = vmatprep.subr.mxu0 0.0
        %5116 = vmatpush1.msra.mxu0 0.0
        %5117 = vmatprep.subr.mxu0 0.0
        %5118 = vmatpush1.msra.mxu0 0.0
        %5119 = vmatprep.subr.mxu0 0.0
        %5120 = vmatpush1.msra.mxu0 0.0
        %5121 = vmatprep.subr.mxu0 0.0
        %5122 = vmatpush1.msra.mxu0 0.0
        %5123 = vmatprep.subr.mxu0 0.0
        %5124 = vmatpush1.msra.mxu0 0.0
        %5125 = vmatprep.subr.mxu0 0.0
        %5126 = vmatpush1.msra.mxu0 0.0
        %5127 = vmatprep.subr.mxu0 0.0
        %5128 = vmatpush1.msra.mxu0 0.0
        %5129 = vmatprep.subr.mxu0 0.0
        %5130 = vmatpush1.msra.mxu0 0.0
        %5131 = vmatprep.subr.mxu0 0.0
        %5132 = vmatpush1.msra.mxu0 0.0
        %5133 = vmatprep.subr.mxu0 0.0
        %5134 = vmatpush1.msra.mxu0 0.0
        %5135 = vmatprep.subr.mxu0 0.0
        %5136 = vmatpush1.msra.mxu0 0.0
        %5137 = vmatprep.subr.mxu0 0.0
        %5138 = vmatpush1.msra.mxu0 0.0
        %5139 = vmatprep.subr.mxu0 0.0
        %5140 = vmatpush1.msra.mxu0 0.0
        %5141 = vmatprep.subr.mxu0 0.0
        %5142 = vmatpush1.msra.mxu0 0.0
        %5143 = vmatprep.mubr.f32.mxu0 0.0
        %5144 = vmatmul.mubr.f32.gmra.mrb[0].mxu0 %v2510
        %v5145 = vpop.f32.mrb[0].mxu0
        %v5146 = vadd.f32 0.0, %v5145
        %v5147 = vpop.f32.mrb[0].mxu0
        %5148 = vmatprep.mubr.f32.mxu0 0.0
        %5149 = vmatmul.mubr.f32.gmra.mrb[0].mxu0 %v2512
        %v5150 = vpop.f32.mrb[0].mxu0
        %v5151 = vadd.f32 0.0, %v5150
        %v5152 = vpop.f32.mrb[0].mxu0
        %5153 = vmatprep.mubr.f32.mxu0 0.0
        %5154 = vmatmul.mubr.f32.gmra.mrb[0].mxu0 %v2514
        %v5155 = vpop.f32.mrb[0].mxu0
        %v5156 = vadd.f32 0.0, %v5155
        %v5157 = vpop.f32.mrb[0].mxu0
        %5158 = vmatprep.mubr.f32.mxu0 0.0
        %5159 = vmatmul.mubr.f32.gmra.mrb[0].mxu0 %v2516
        %v5160 = vpop.f32.mrb[0].mxu0
        %v5161 = vadd.f32 0.0, %v5160
        %v5162 = vpop.f32.mrb[0].mxu0
        %5163 = vmatprep.mubr.f32.mxu0 0.0
        %5164 = vmatmul.mubr.f32.gmra.mrb[0].mxu0 %v2518
        %v5165 = vpop.f32.mrb[0].mxu0
        %v5166 = vadd.f32 0.0, %v5165
        %v5167 = vpop.f32.mrb[0].mxu0
        %5168 = vmatprep.mubr.f32.mxu0 0.0
        %5169 = vmatmul.mubr.f32.gmra.mrb[0].mxu0 %v2520
        %v5170 = vpop.f32.mrb[0].mxu0
        %v5171 = vadd.f32 0.0, %v5170
        %v5172 = vpop.f32.mrb[0].mxu0
        %5173 = vmatprep.mubr.f32.mxu0 0.0
        %5174 = vmatmul.mubr.f32.gmra.mrb[0].mxu0 %v2522
        %v5175 = vpop.f32.mrb[0].mxu0
        %v5176 = vadd.f32 0.0, %v5175
        %v5177 = vpop.f32.mrb[0].mxu0
        %5178 = vmatprep.mubr.f32.mxu0 0.0
        %5179 = vmatmul.mubr.f32.gmra.mrb[0].mxu0 %v2524
        %v5180 = vpop.f32.mrb[0].mxu0
        %v5181 = vadd.f32 0.0, %v5180
        %v5182 = vpop.f32.mrb[0].mxu0
        %5183 = vmatprep.mubr.f32.mxu0 0.0
        %5184 = vmatmul.mubr.f32.gmra.mrb[0].mxu0 %v2526
        %v5185 = vpop.f32.mrb[0].mxu0
        %v5186 = vadd.f32 0.0, %v5185
        %v5187 = vpop.f32.mrb[0].mxu0
        %5188 = vmatprep.mubr.f32.mxu0 0.0
        %5189 = vmatmul.mubr.f32.gmra.mrb[0].mxu0 %v2528
        %v5190 = vpop.f32.mrb[0].mxu0
        %v5191 = vadd.f32 0.0, %v5190
        %v5192 = vpop.f32.mrb[0].mxu0
        %5193 = vmatprep.mubr.f32.mxu0 0.0
        %5194 = vmatmul.mubr.f32.gmra.mrb[0].mxu0 %v2530
        %v5195 = vpop.f32.mrb[0].mxu0
        %v5196 = vadd.f32 0.0, %v5195
        %v5197 = vpop.f32.mrb[0].mxu0
        %5198 = vmatprep.mubr.f32.mxu0 0.0
        %5199 = vmatmul.mubr.f32.gmra.mrb[0].mxu0 %v2532
        %v5200 = vpop.f32.mrb[0].mxu0
        %v5201 = vadd.f32 0.0, %v5200
        %v5202 = vpop.f32.mrb[0].mxu0
        %5203 = vmatprep.mubr.f32.mxu0 0.0
        %5204 = vmatmul.mubr.f32.gmra.mrb[0].mxu0 %v3735
        %v5205 = vpop.f32.mrb[0].mxu0
        %v5206 = vadd.f32 0.0, %v5205
        %v5207 = vpop.f32.mrb[0].mxu0
        %5208 = vmatprep.mubr.f32.mxu0 0.0
        %5209 = vmatmul.mubr.f32.gmra.mrb[0].mxu0 %v3737
        %v5210 = vpop.f32.mrb[0].mxu0
        %v5211 = vadd.f32 0.0, %v5210
        %v5212 = vpop.f32.mrb[0].mxu0
        %5213 = vmatprep.mubr.f32.mxu0 0.0
        %5214 = vmatmul.mubr.f32.gmra.mrb[0].mxu0 %v3739
        %v5215 = vpop.f32.mrb[0].mxu0
        %v5216 = vadd.f32 0.0, %v5215
        %v5217 = vpop.f32.mrb[0].mxu0
        %5218 = vmatprep.mubr.f32.mxu0 0.0
        %5219 = vmatmul.mubr.f32.gmra.mrb[0].mxu0 %v5072
        %v5220 = vpop.f32.mrb[0].mxu0
        %v5221 = vadd.f32 0.0, %v5220
        %v5222 = vpop.f32.mrb[0].mxu0
        %5223 = vmatprep.mubr.f32.mxu0 0.0
        %5224 = vmatmul.mubr.f32.gmra.mrb[0].mxu0 %v5074
        %v5225 = vpop.f32.mrb[0].mxu0
        %v5226 = vadd.f32 0.0, %v5225
        %v5227 = vpop.f32.mrb[0].mxu0
        %5228 = vdwg.mxu0
        %v5229 = vadd.f32 %v5049, %v5146
        %v5230 = vadd.f32 %v5050, %v5151
        %v5231 = vadd.f32 %v5051, %v5156
        %v5232 = vadd.f32 %v5052, %v5161
        %v5233 = vadd.f32 %v5053, %v5166
        %v5234 = vadd.f32 %v5054, %v5171
        %v5235 = vadd.f32 %v5055, %v5176
        %v5236 = vadd.f32 %v5056, %v5181
        %v5237 = vadd.f32 %v5057, %v5186
        %v5238 = vadd.f32 %v5058, %v5191
        %v5239 = vadd.f32 %v5059, %v5196
        %v5240 = vadd.f32 %v5060, %v5201
        %v5241 = vadd.f32 %v5061, %v5206
        %v5242 = vadd.f32 %v5062, %v5211
        %v5243 = vadd.f32 %v5063, %v5216
        %v5244 = vadd.f32 %v5064, %v5221
        %v5245 = vadd.f32 %v5065, %v5226
        %s5246 = scalar_lea.vmem %s3, 144
        %v5247 = vld [vmem:[%s5246] sm:$0x3f]
        %v5248 = vrot.slane %v1542, 5
        %v5249 = vsel %vm802, %v3946, %v5248
        %v5250 = vrot.slane %v1543, 5
        %v5251 = vsel %vm802, %v5248, %v5250
        %v5252 = vsel %vm1603, %v5249, 0
        %v5254 = vsel %vm1603, %v5251, 0
        %v5257 = vsel %vm1638, %v5247, 0
        %5259 = vmatprep.subr.mxu0 0.0
        %5260 = vmatpush1.msra.mxu0 %v5257
        %5261 = vmatprep.subr.mxu0 0.0
        %5262 = vmatpush1.msra.mxu0 0.0
        %5263 = vmatprep.subr.mxu0 0.0
        %5264 = vmatpush1.msra.mxu0 0.0
        %5265 = vmatprep.subr.mxu0 0.0
        %5266 = vmatpush1.msra.mxu0 0.0
        %5267 = vmatprep.subr.mxu0 0.0
        %5268 = vmatpush1.msra.mxu0 0.0
        %5269 = vmatprep.subr.mxu0 0.0
        %5270 = vmatpush1.msra.mxu0 0.0
        %5271 = vmatprep.subr.mxu0 0.0
        %5272 = vmatpush1.msra.mxu0 0.0
        %5273 = vmatprep.subr.mxu0 0.0
        %5274 = vmatpush1.msra.mxu0 0.0
        %5275 = vmatprep.subr.mxu0 0.0
        %5276 = vmatpush1.msra.mxu0 0.0
        %5277 = vmatprep.subr.mxu0 0.0
        %5278 = vmatpush1.msra.mxu0 0.0
        %5279 = vmatprep.subr.mxu0 0.0
        %5280 = vmatpush1.msra.mxu0 0.0
        %5281 = vmatprep.subr.mxu0 0.0
        %5282 = vmatpush1.msra.mxu0 0.0
        %5283 = vmatprep.subr.mxu0 0.0
        %5284 = vmatpush1.msra.mxu0 0.0
        %5285 = vmatprep.subr.mxu0 0.0
        %5286 = vmatpush1.msra.mxu0 0.0
        %5287 = vmatprep.subr.mxu0 0.0
        %5288 = vmatpush1.msra.mxu0 0.0
        %5289 = vmatprep.subr.mxu0 0.0
        %5290 = vmatpush1.msra.mxu0 0.0
        %5291 = vmatprep.subr.mxu0 0.0
        %5292 = vmatpush1.msra.mxu0 0.0
        %5293 = vmatprep.subr.mxu0 0.0
        %5294 = vmatpush1.msra.mxu0 0.0
        %5295 = vmatprep.subr.mxu0 0.0
        %5296 = vmatpush1.msra.mxu0 0.0
        %5297 = vmatprep.subr.mxu0 0.0
        %5298 = vmatpush1.msra.mxu0 0.0
        %5299 = vmatprep.subr.mxu0 0.0
        %5300 = vmatpush1.msra.mxu0 0.0
        %5301 = vmatprep.subr.mxu0 0.0
        %5302 = vmatpush1.msra.mxu0 0.0
        %5303 = vmatprep.subr.mxu0 0.0
        %5304 = vmatpush1.msra.mxu0 0.0
        %5305 = vmatprep.subr.mxu0 0.0
        %5306 = vmatpush1.msra.mxu0 0.0
        %5307 = vmatprep.subr.mxu0 0.0
        %5308 = vmatpush1.msra.mxu0 0.0
        %5309 = vmatprep.subr.mxu0 0.0
        %5310 = vmatpush1.msra.mxu0 0.0
        %5311 = vmatprep.subr.mxu0 0.0
        %5312 = vmatpush1.msra.mxu0 0.0
        %5313 = vmatprep.subr.mxu0 0.0
        %5314 = vmatpush1.msra.mxu0 0.0
        %5315 = vmatprep.subr.mxu0 0.0
        %5316 = vmatpush1.msra.mxu0 0.0
        %5317 = vmatprep.subr.mxu0 0.0
        %5318 = vmatpush1.msra.mxu0 0.0
        %5319 = vmatprep.subr.mxu0 0.0
        %5320 = vmatpush1.msra.mxu0 0.0
        %5321 = vmatprep.subr.mxu0 0.0
        %5322 = vmatpush1.msra.mxu0 0.0
        %5323 = vmatprep.mubr.f32.mxu0 0.0
        %5324 = vmatmul.mubr.f32.gmra.mrb[0].mxu0 %v3952
        %v5325 = vpop.f32.mrb[0].mxu0
        %v5326 = vadd.f32 0.0, %v5325
        %v5327 = vpop.f32.mrb[0].mxu0
        %5328 = vmatprep.mubr.f32.mxu0 0.0
        %5329 = vmatmul.mubr.f32.gmra.mrb[0].mxu0 %v3954
        %v5330 = vpop.f32.mrb[0].mxu0
        %v5331 = vadd.f32 0.0, %v5330
        %v5332 = vpop.f32.mrb[0].mxu0
        %5333 = vmatprep.mubr.f32.mxu0 0.0
        %5334 = vmatmul.mubr.f32.gmra.mrb[0].mxu0 %v3956
        %v5335 = vpop.f32.mrb[0].mxu0
        %v5336 = vadd.f32 0.0, %v5335
        %v5337 = vpop.f32.mrb[0].mxu0
        %5338 = vmatprep.mubr.f32.mxu0 0.0
        %5339 = vmatmul.mubr.f32.gmra.mrb[0].mxu0 %v3958
        %v5340 = vpop.f32.mrb[0].mxu0
        %v5341 = vadd.f32 0.0, %v5340
        %v5342 = vpop.f32.mrb[0].mxu0
        %5343 = vmatprep.mubr.f32.mxu0 0.0
        %5344 = vmatmul.mubr.f32.gmra.mrb[0].mxu0 %v3960
        %v5345 = vpop.f32.mrb[0].mxu0
        %v5346 = vadd.f32 0.0, %v5345
        %v5347 = vpop.f32.mrb[0].mxu0
        %5348 = vmatprep.mubr.f32.mxu0 0.0
        %5349 = vmatmul.mubr.f32.gmra.mrb[0].mxu0 %v3962
        %v5350 = vpop.f32.mrb[0].mxu0
        %v5351 = vadd.f32 0.0, %v5350
        %v5352 = vpop.f32.mrb[0].mxu0
        %5353 = vmatprep.mubr.f32.mxu0 0.0
        %5354 = vmatmul.mubr.f32.gmra.mrb[0].mxu0 %v3964
        %v5355 = vpop.f32.mrb[0].mxu0
        %v5356 = vadd.f32 0.0, %v5355
        %v5357 = vpop.f32.mrb[0].mxu0
        %5358 = vmatprep.mubr.f32.mxu0 0.0
        %5359 = vmatmul.mubr.f32.gmra.mrb[0].mxu0 %v3966
        %v5360 = vpop.f32.mrb[0].mxu0
        %v5361 = vadd.f32 0.0, %v5360
        %v5362 = vpop.f32.mrb[0].mxu0
        %5363 = vmatprep.mubr.f32.mxu0 0.0
        %5364 = vmatmul.mubr.f32.gmra.mrb[0].mxu0 %v3968
        %v5365 = vpop.f32.mrb[0].mxu0
        %v5366 = vadd.f32 0.0, %v5365
        %v5367 = vpop.f32.mrb[0].mxu0
        %5368 = vmatprep.mubr.f32.mxu0 0.0
        %5369 = vmatmul.mubr.f32.gmra.mrb[0].mxu0 %v3970
        %v5370 = vpop.f32.mrb[0].mxu0
        %v5371 = vadd.f32 0.0, %v5370
        %v5372 = vpop.f32.mrb[0].mxu0
        %5373 = vmatprep.mubr.f32.mxu0 0.0
        %5374 = vmatmul.mubr.f32.gmra.mrb[0].mxu0 %v3972
        %v5375 = vpop.f32.mrb[0].mxu0
        %v5376 = vadd.f32 0.0, %v5375
        %v5377 = vpop.f32.mrb[0].mxu0
        %5378 = vmatprep.mubr.f32.mxu0 0.0
        %5379 = vmatmul.mubr.f32.gmra.mrb[0].mxu0 %v3974
        %v5380 = vpop.f32.mrb[0].mxu0
        %v5381 = vadd.f32 0.0, %v5380
        %v5382 = vpop.f32.mrb[0].mxu0
        %5383 = vmatprep.mubr.f32.mxu0 0.0
        %5384 = vmatmul.mubr.f32.gmra.mrb[0].mxu0 %v3976
        %v5385 = vpop.f32.mrb[0].mxu0
        %v5386 = vadd.f32 0.0, %v5385
        %v5387 = vpop.f32.mrb[0].mxu0
        %5388 = vmatprep.mubr.f32.mxu0 0.0
        %5389 = vmatmul.mubr.f32.gmra.mrb[0].mxu0 %v3978
        %v5390 = vpop.f32.mrb[0].mxu0
        %v5391 = vadd.f32 0.0, %v5390
        %v5392 = vpop.f32.mrb[0].mxu0
        %5393 = vmatprep.mubr.f32.mxu0 0.0
        %5394 = vmatmul.mubr.f32.gmra.mrb[0].mxu0 %v3980
        %v5395 = vpop.f32.mrb[0].mxu0
        %v5396 = vadd.f32 0.0, %v5395
        %v5397 = vpop.f32.mrb[0].mxu0
        %5398 = vmatprep.mubr.f32.mxu0 0.0
        %5399 = vmatmul.mubr.f32.gmra.mrb[0].mxu0 %v5252
        %v5400 = vpop.f32.mrb[0].mxu0
        %v5401 = vadd.f32 0.0, %v5400
        %v5402 = vpop.f32.mrb[0].mxu0
        %5403 = vmatprep.mubr.f32.mxu0 0.0
        %5404 = vmatmul.mubr.f32.gmra.mrb[0].mxu0 %v5254
        %v5405 = vpop.f32.mrb[0].mxu0
        %v5406 = vadd.f32 0.0, %v5405
        %v5407 = vpop.f32.mrb[0].mxu0
        %5408 = vdwg.mxu0
        %v5409 = vadd.f32 %v5229, %v5326
        %v5410 = vadd.f32 %v5230, %v5331
        %v5411 = vadd.f32 %v5231, %v5336
        %v5412 = vadd.f32 %v5232, %v5341
        %v5413 = vadd.f32 %v5233, %v5346
        %v5414 = vadd.f32 %v5234, %v5351
        %v5415 = vadd.f32 %v5235, %v5356
        %v5416 = vadd.f32 %v5236, %v5361
        %v5417 = vadd.f32 %v5237, %v5366
        %v5418 = vadd.f32 %v5238, %v5371
        %v5419 = vadd.f32 %v5239, %v5376
        %v5420 = vadd.f32 %v5240, %v5381
        %v5421 = vadd.f32 %v5241, %v5386
        %v5422 = vadd.f32 %v5242, %v5391
        %v5423 = vadd.f32 %v5243, %v5396
        %v5424 = vadd.f32 %v5244, %v5401
        %v5425 = vadd.f32 %v5245, %v5406
        %s5426 = scalar_lea.vmem %s3, 152
        %v5427 = vld [vmem:[%s5426] sm:$0x3f]
        %v5428 = vrot.slane %v1542, 6
        %v5429 = vsel %vm2707, %v4156, %v5428
        %v5430 = vrot.slane %v1543, 6
        %v5431 = vsel %vm2707, %v5428, %v5430
        %v5432 = vsel %vm1603, %v5429, 0
        %v5434 = vsel %vm1603, %v5431, 0
        %v5437 = vsel %vm1638, %v5427, 0
        %5439 = vmatprep.subr.mxu0 0.0
        %5440 = vmatpush1.msra.mxu0 %v5437
        %5441 = vmatprep.subr.mxu0 0.0
        %5442 = vmatpush1.msra.mxu0 0.0
        %5443 = vmatprep.subr.mxu0 0.0
        %5444 = vmatpush1.msra.mxu0 0.0
        %5445 = vmatprep.subr.mxu0 0.0
        %5446 = vmatpush1.msra.mxu0 0.0
        %5447 = vmatprep.subr.mxu0 0.0
        %5448 = vmatpush1.msra.mxu0 0.0
        %5449 = vmatprep.subr.mxu0 0.0
        %5450 = vmatpush1.msra.mxu0 0.0
        %5451 = vmatprep.subr.mxu0 0.0
        %5452 = vmatpush1.msra.mxu0 0.0
        %5453 = vmatprep.subr.mxu0 0.0
        %5454 = vmatpush1.msra.mxu0 0.0
        %5455 = vmatprep.subr.mxu0 0.0
        %5456 = vmatpush1.msra.mxu0 0.0
        %5457 = vmatprep.subr.mxu0 0.0
        %5458 = vmatpush1.msra.mxu0 0.0
        %5459 = vmatprep.subr.mxu0 0.0
        %5460 = vmatpush1.msra.mxu0 0.0
        %5461 = vmatprep.subr.mxu0 0.0
        %5462 = vmatpush1.msra.mxu0 0.0
        %5463 = vmatprep.subr.mxu0 0.0
        %5464 = vmatpush1.msra.mxu0 0.0
        %5465 = vmatprep.subr.mxu0 0.0
        %5466 = vmatpush1.msra.mxu0 0.0
        %5467 = vmatprep.subr.mxu0 0.0
        %5468 = vmatpush1.msra.mxu0 0.0
        %5469 = vmatprep.subr.mxu0 0.0
        %5470 = vmatpush1.msra.mxu0 0.0
        %5471 = vmatprep.subr.mxu0 0.0
        %5472 = vmatpush1.msra.mxu0 0.0
        %5473 = vmatprep.subr.mxu0 0.0
        %5474 = vmatpush1.msra.mxu0 0.0
        %5475 = vmatprep.subr.mxu0 0.0
        %5476 = vmatpush1.msra.mxu0 0.0
        %5477 = vmatprep.subr.mxu0 0.0
        %5478 = vmatpush1.msra.mxu0 0.0
        %5479 = vmatprep.subr.mxu0 0.0
        %5480 = vmatpush1.msra.mxu0 0.0
        %5481 = vmatprep.subr.mxu0 0.0
        %5482 = vmatpush1.msra.mxu0 0.0
        %5483 = vmatprep.subr.mxu0 0.0
        %5484 = vmatpush1.msra.mxu0 0.0
        %5485 = vmatprep.subr.mxu0 0.0
        %5486 = vmatpush1.msra.mxu0 0.0
        %5487 = vmatprep.subr.mxu0 0.0
        %5488 = vmatpush1.msra.mxu0 0.0
        %5489 = vmatprep.subr.mxu0 0.0
        %5490 = vmatpush1.msra.mxu0 0.0
        %5491 = vmatprep.subr.mxu0 0.0
        %5492 = vmatpush1.msra.mxu0 0.0
        %5493 = vmatprep.subr.mxu0 0.0
        %5494 = vmatpush1.msra.mxu0 0.0
        %5495 = vmatprep.subr.mxu0 0.0
        %5496 = vmatpush1.msra.mxu0 0.0
        %5497 = vmatprep.subr.mxu0 0.0
        %5498 = vmatpush1.msra.mxu0 0.0
        %5499 = vmatprep.subr.mxu0 0.0
        %5500 = vmatpush1.msra.mxu0 0.0
        %5501 = vmatprep.subr.mxu0 0.0
        %5502 = vmatpush1.msra.mxu0 0.0
        %5503 = vmatprep.mubr.f32.mxu0 0.0
        %5504 = vmatmul.mubr.f32.gmra.mrb[0].mxu0 %v2751
        %v5505 = vpop.f32.mrb[0].mxu0
        %v5506 = vadd.f32 0.0, %v5505
        %v5507 = vpop.f32.mrb[0].mxu0
        %5508 = vmatprep.mubr.f32.mxu0 0.0
        %5509 = vmatmul.mubr.f32.gmra.mrb[0].mxu0 %v2753
        %v5510 = vpop.f32.mrb[0].mxu0
        %v5511 = vadd.f32 0.0, %v5510
        %v5512 = vpop.f32.mrb[0].mxu0
        %5513 = vmatprep.mubr.f32.mxu0 0.0
        %5514 = vmatmul.mubr.f32.gmra.mrb[0].mxu0 %v2755
        %v5515 = vpop.f32.mrb[0].mxu0
        %v5516 = vadd.f32 0.0, %v5515
        %v5517 = vpop.f32.mrb[0].mxu0
        %5518 = vmatprep.mubr.f32.mxu0 0.0
        %5519 = vmatmul.mubr.f32.gmra.mrb[0].mxu0 %v2757
        %v5520 = vpop.f32.mrb[0].mxu0
        %v5521 = vadd.f32 0.0, %v5520
        %v5522 = vpop.f32.mrb[0].mxu0
        %5523 = vmatprep.mubr.f32.mxu0 0.0
        %5524 = vmatmul.mubr.f32.gmra.mrb[0].mxu0 %v2759
        %v5525 = vpop.f32.mrb[0].mxu0
        %v5526 = vadd.f32 0.0, %v5525
        %v5527 = vpop.f32.mrb[0].mxu0
        %5528 = vmatprep.mubr.f32.mxu0 0.0
        %5529 = vmatmul.mubr.f32.gmra.mrb[0].mxu0 %v2761
        %v5530 = vpop.f32.mrb[0].mxu0
        %v5531 = vadd.f32 0.0, %v5530
        %v5532 = vpop.f32.mrb[0].mxu0
        %5533 = vmatprep.mubr.f32.mxu0 0.0
        %5534 = vmatmul.mubr.f32.gmra.mrb[0].mxu0 %v2763
        %v5535 = vpop.f32.mrb[0].mxu0
        %v5536 = vadd.f32 0.0, %v5535
        %v5537 = vpop.f32.mrb[0].mxu0
        %5538 = vmatprep.mubr.f32.mxu0 0.0
        %5539 = vmatmul.mubr.f32.gmra.mrb[0].mxu0 %v2765
        %v5540 = vpop.f32.mrb[0].mxu0
        %v5541 = vadd.f32 0.0, %v5540
        %v5542 = vpop.f32.mrb[0].mxu0
        %5543 = vmatprep.mubr.f32.mxu0 0.0
        %5544 = vmatmul.mubr.f32.gmra.mrb[0].mxu0 %v2767
        %v5545 = vpop.f32.mrb[0].mxu0
        %v5546 = vadd.f32 0.0, %v5545
        %v5547 = vpop.f32.mrb[0].mxu0
        %5548 = vmatprep.mubr.f32.mxu0 0.0
        %5549 = vmatmul.mubr.f32.gmra.mrb[0].mxu0 %v2769
        %v5550 = vpop.f32.mrb[0].mxu0
        %v5551 = vadd.f32 0.0, %v5550
        %v5552 = vpop.f32.mrb[0].mxu0
        %5553 = vmatprep.mubr.f32.mxu0 0.0
        %5554 = vmatmul.mubr.f32.gmra.mrb[0].mxu0 %v2771
        %v5555 = vpop.f32.mrb[0].mxu0
        %v5556 = vadd.f32 0.0, %v5555
        %v5557 = vpop.f32.mrb[0].mxu0
        %5558 = vmatprep.mubr.f32.mxu0 0.0
        %5559 = vmatmul.mubr.f32.gmra.mrb[0].mxu0 %v2773
        %v5560 = vpop.f32.mrb[0].mxu0
        %v5561 = vadd.f32 0.0, %v5560
        %v5562 = vpop.f32.mrb[0].mxu0
        %5563 = vmatprep.mubr.f32.mxu0 0.0
        %5564 = vmatmul.mubr.f32.gmra.mrb[0].mxu0 %v2775
        %v5565 = vpop.f32.mrb[0].mxu0
        %v5566 = vadd.f32 0.0, %v5565
        %v5567 = vpop.f32.mrb[0].mxu0
        %5568 = vmatprep.mubr.f32.mxu0 0.0
        %5569 = vmatmul.mubr.f32.gmra.mrb[0].mxu0 %v4158
        %v5570 = vpop.f32.mrb[0].mxu0
        %v5571 = vadd.f32 0.0, %v5570
        %v5572 = vpop.f32.mrb[0].mxu0
        %5573 = vmatprep.mubr.f32.mxu0 0.0
        %5574 = vmatmul.mubr.f32.gmra.mrb[0].mxu0 %v4160
        %v5575 = vpop.f32.mrb[0].mxu0
        %v5576 = vadd.f32 0.0, %v5575
        %v5577 = vpop.f32.mrb[0].mxu0
        %5578 = vmatprep.mubr.f32.mxu0 0.0
        %5579 = vmatmul.mubr.f32.gmra.mrb[0].mxu0 %v5432
        %v5580 = vpop.f32.mrb[0].mxu0
        %v5581 = vadd.f32 0.0, %v5580
        %v5582 = vpop.f32.mrb[0].mxu0
        %5583 = vmatprep.mubr.f32.mxu0 0.0
        %5584 = vmatmul.mubr.f32.gmra.mrb[0].mxu0 %v5434
        %v5585 = vpop.f32.mrb[0].mxu0
        %v5586 = vadd.f32 0.0, %v5585
        %v5587 = vpop.f32.mrb[0].mxu0
        %5588 = vdwg.mxu0
        %v5589 = vadd.f32 %v5409, %v5506
        %v5590 = vadd.f32 %v5410, %v5511
        %v5591 = vadd.f32 %v5411, %v5516
        %v5592 = vadd.f32 %v5412, %v5521
        %v5593 = vadd.f32 %v5413, %v5526
        %v5594 = vadd.f32 %v5414, %v5531
        %v5595 = vadd.f32 %v5415, %v5536
        %v5596 = vadd.f32 %v5416, %v5541
        %v5597 = vadd.f32 %v5417, %v5546
        %v5598 = vadd.f32 %v5418, %v5551
        %v5599 = vadd.f32 %v5419, %v5556
        %v5600 = vadd.f32 %v5420, %v5561
        %v5601 = vadd.f32 %v5421, %v5566
        %v5602 = vadd.f32 %v5422, %v5571
        %v5603 = vadd.f32 %v5423, %v5576
        %v5604 = vadd.f32 %v5424, %v5581
        %v5605 = vadd.f32 %v5425, %v5586
        %s5606 = scalar_lea.vmem %s3, 160
        %v5607 = vld [vmem:[%s5606] sm:$0x3f]
        %v5608 = vsel %vm1603, %v1542, 0
        %v5610 = vsel %vm1603, %v1543, 0
        %v5613 = vsel %vm1603, %v1544, 0
        %v5616 = vsel %vm1638, %v5607, 0
        %5618 = vmatprep.subr.mxu0 0.0
        %5619 = vmatpush1.msra.mxu0 %v5616
        %5620 = vmatprep.subr.mxu0 0.0
        %5621 = vmatpush1.msra.mxu0 0.0
        %5622 = vmatprep.subr.mxu0 0.0
        %5623 = vmatpush1.msra.mxu0 0.0
        %5624 = vmatprep.subr.mxu0 0.0
        %5625 = vmatpush1.msra.mxu0 0.0
        %5626 = vmatprep.subr.mxu0 0.0
        %5627 = vmatpush1.msra.mxu0 0.0
        %5628 = vmatprep.subr.mxu0 0.0
        %5629 = vmatpush1.msra.mxu0 0.0
        %5630 = vmatprep.subr.mxu0 0.0
        %5631 = vmatpush1.msra.mxu0 0.0
        %5632 = vmatprep.subr.mxu0 0.0
        %5633 = vmatpush1.msra.mxu0 0.0
        %5634 = vmatprep.subr.mxu0 0.0
        %5635 = vmatpush1.msra.mxu0 0.0
        %5636 = vmatprep.subr.mxu0 0.0
        %5637 = vmatpush1.msra.mxu0 0.0
        %5638 = vmatprep.subr.mxu0 0.0
        %5639 = vmatpush1.msra.mxu0 0.0
        %5640 = vmatprep.subr.mxu0 0.0
        %5641 = vmatpush1.msra.mxu0 0.0
        %5642 = vmatprep.subr.mxu0 0.0
        %5643 = vmatpush1.msra.mxu0 0.0
        %5644 = vmatprep.subr.mxu0 0.0
        %5645 = vmatpush1.msra.mxu0 0.0
        %5646 = vmatprep.subr.mxu0 0.0
        %5647 = vmatpush1.msra.mxu0 0.0
        %5648 = vmatprep.subr.mxu0 0.0
        %5649 = vmatpush1.msra.mxu0 0.0
        %5650 = vmatprep.subr.mxu0 0.0
        %5651 = vmatpush1.msra.mxu0 0.0
        %5652 = vmatprep.subr.mxu0 0.0
        %5653 = vmatpush1.msra.mxu0 0.0
        %5654 = vmatprep.subr.mxu0 0.0
        %5655 = vmatpush1.msra.mxu0 0.0
        %5656 = vmatprep.subr.mxu0 0.0
        %5657 = vmatpush1.msra.mxu0 0.0
        %5658 = vmatprep.subr.mxu0 0.0
        %5659 = vmatpush1.msra.mxu0 0.0
        %5660 = vmatprep.subr.mxu0 0.0
        %5661 = vmatpush1.msra.mxu0 0.0
        %5662 = vmatprep.subr.mxu0 0.0
        %5663 = vmatpush1.msra.mxu0 0.0
        %5664 = vmatprep.subr.mxu0 0.0
        %5665 = vmatpush1.msra.mxu0 0.0
        %5666 = vmatprep.subr.mxu0 0.0
        %5667 = vmatpush1.msra.mxu0 0.0
        %5668 = vmatprep.subr.mxu0 0.0
        %5669 = vmatpush1.msra.mxu0 0.0
        %5670 = vmatprep.subr.mxu0 0.0
        %5671 = vmatpush1.msra.mxu0 0.0
        %5672 = vmatprep.subr.mxu0 0.0
        %5673 = vmatpush1.msra.mxu0 0.0
        %5674 = vmatprep.subr.mxu0 0.0
        %5675 = vmatpush1.msra.mxu0 0.0
        %5676 = vmatprep.subr.mxu0 0.0
        %5677 = vmatpush1.msra.mxu0 0.0
        %5678 = vmatprep.subr.mxu0 0.0
        %5679 = vmatpush1.msra.mxu0 0.0
        %5680 = vmatprep.subr.mxu0 0.0
        %5681 = vmatpush1.msra.mxu0 0.0
        %5682 = vmatprep.mubr.f32.mxu0 0.0
        %5683 = vmatmul.mubr.f32.gmra.mrb[0].mxu0 %v1806
        %v5684 = vpop.f32.mrb[0].mxu0
        %v5685 = vadd.f32 0.0, %v5684
        %v5686 = vpop.f32.mrb[0].mxu0
        %5687 = vmatprep.mubr.f32.mxu0 0.0
        %5688 = vmatmul.mubr.f32.gmra.mrb[0].mxu0 %v1808
        %v5689 = vpop.f32.mrb[0].mxu0
        %v5690 = vadd.f32 0.0, %v5689
        %v5691 = vpop.f32.mrb[0].mxu0
        %5692 = vmatprep.mubr.f32.mxu0 0.0
        %5693 = vmatmul.mubr.f32.gmra.mrb[0].mxu0 %v1810
        %v5694 = vpop.f32.mrb[0].mxu0
        %v5695 = vadd.f32 0.0, %v5694
        %v5696 = vpop.f32.mrb[0].mxu0
        %5697 = vmatprep.mubr.f32.mxu0 0.0
        %5698 = vmatmul.mubr.f32.gmra.mrb[0].mxu0 %v1812
        %v5699 = vpop.f32.mrb[0].mxu0
        %v5700 = vadd.f32 0.0, %v5699
        %v5701 = vpop.f32.mrb[0].mxu0
        %5702 = vmatprep.mubr.f32.mxu0 0.0
        %5703 = vmatmul.mubr.f32.gmra.mrb[0].mxu0 %v1814
        %v5704 = vpop.f32.mrb[0].mxu0
        %v5705 = vadd.f32 0.0, %v5704
        %v5706 = vpop.f32.mrb[0].mxu0
        %5707 = vmatprep.mubr.f32.mxu0 0.0
        %5708 = vmatmul.mubr.f32.gmra.mrb[0].mxu0 %v1816
        %v5709 = vpop.f32.mrb[0].mxu0
        %v5710 = vadd.f32 0.0, %v5709
        %v5711 = vpop.f32.mrb[0].mxu0
        %5712 = vmatprep.mubr.f32.mxu0 0.0
        %5713 = vmatmul.mubr.f32.gmra.mrb[0].mxu0 %v1818
        %v5714 = vpop.f32.mrb[0].mxu0
        %v5715 = vadd.f32 0.0, %v5714
        %v5716 = vpop.f32.mrb[0].mxu0
        %5717 = vmatprep.mubr.f32.mxu0 0.0
        %5718 = vmatmul.mubr.f32.gmra.mrb[0].mxu0 %v1820
        %v5719 = vpop.f32.mrb[0].mxu0
        %v5720 = vadd.f32 0.0, %v5719
        %v5721 = vpop.f32.mrb[0].mxu0
        %5722 = vmatprep.mubr.f32.mxu0 0.0
        %5723 = vmatmul.mubr.f32.gmra.mrb[0].mxu0 %v1822
        %v5724 = vpop.f32.mrb[0].mxu0
        %v5725 = vadd.f32 0.0, %v5724
        %v5726 = vpop.f32.mrb[0].mxu0
        %5727 = vmatprep.mubr.f32.mxu0 0.0
        %5728 = vmatmul.mubr.f32.gmra.mrb[0].mxu0 %v1824
        %v5729 = vpop.f32.mrb[0].mxu0
        %v5730 = vadd.f32 0.0, %v5729
        %v5731 = vpop.f32.mrb[0].mxu0
        %5732 = vmatprep.mubr.f32.mxu0 0.0
        %5733 = vmatmul.mubr.f32.gmra.mrb[0].mxu0 %v3191
        %v5734 = vpop.f32.mrb[0].mxu0
        %v5735 = vadd.f32 0.0, %v5734
        %v5736 = vpop.f32.mrb[0].mxu0
        %5737 = vmatprep.mubr.f32.mxu0 0.0
        %5738 = vmatmul.mubr.f32.gmra.mrb[0].mxu0 %v3193
        %v5739 = vpop.f32.mrb[0].mxu0
        %v5740 = vadd.f32 0.0, %v5739
        %v5741 = vpop.f32.mrb[0].mxu0
        %5742 = vmatprep.mubr.f32.mxu0 0.0
        %5743 = vmatmul.mubr.f32.gmra.mrb[0].mxu0 %v4514
        %v5744 = vpop.f32.mrb[0].mxu0
        %v5745 = vadd.f32 0.0, %v5744
        %v5746 = vpop.f32.mrb[0].mxu0
        %5747 = vmatprep.mubr.f32.mxu0 0.0
        %5748 = vmatmul.mubr.f32.gmra.mrb[0].mxu0 %v4516
        %v5749 = vpop.f32.mrb[0].mxu0
        %v5750 = vadd.f32 0.0, %v5749
        %v5751 = vpop.f32.mrb[0].mxu0
        %5752 = vmatprep.mubr.f32.mxu0 0.0
        %5753 = vmatmul.mubr.f32.gmra.mrb[0].mxu0 %v5608
        %v5754 = vpop.f32.mrb[0].mxu0
        %v5755 = vadd.f32 0.0, %v5754
        %v5756 = vpop.f32.mrb[0].mxu0
        %5757 = vmatprep.mubr.f32.mxu0 0.0
        %5758 = vmatmul.mubr.f32.gmra.mrb[0].mxu0 %v5610
        %v5759 = vpop.f32.mrb[0].mxu0
        %v5760 = vadd.f32 0.0, %v5759
        %v5761 = vpop.f32.mrb[0].mxu0
        %5762 = vmatprep.mubr.f32.mxu0 0.0
        %5763 = vmatmul.mubr.f32.gmra.mrb[0].mxu0 %v5613
        %v5764 = vpop.f32.mrb[0].mxu0
        %v5765 = vadd.f32 0.0, %v5764
        %v5766 = vpop.f32.mrb[0].mxu0
        %5767 = vdwg.mxu0
        %v5768 = vadd.f32 %v5589, %v5685
        %v5769 = vadd.f32 %v5590, %v5690
        %v5770 = vadd.f32 %v5591, %v5695
        %v5771 = vadd.f32 %v5592, %v5700
        %v5772 = vadd.f32 %v5593, %v5705
        %v5773 = vadd.f32 %v5594, %v5710
        %v5774 = vadd.f32 %v5595, %v5715
        %v5775 = vadd.f32 %v5596, %v5720
        %v5776 = vadd.f32 %v5597, %v5725
        %v5777 = vadd.f32 %v5598, %v5730
        %v5778 = vadd.f32 %v5599, %v5735
        %v5779 = vadd.f32 %v5600, %v5740
        %v5780 = vadd.f32 %v5601, %v5745
        %v5781 = vadd.f32 %v5602, %v5750
        %v5782 = vadd.f32 %v5603, %v5755
        %v5783 = vadd.f32 %v5604, %v5760
        %v5784 = vadd.f32 %v5605, %v5765
        %s5785 = scalar_lea.vmem %s3, 168
        %v5786 = vld [vmem:[%s5785] sm:$0x3f]
        %v5788 = vrot.slane %v1541, 1
        %v5789 = vsel %vm1567, %v3370, %v5788
        %v5790 = vrot.slane %v1542, 1
        %v5791 = vsel %vm1567, %v5788, %v5790
        %v5792 = vrot.slane %v1543, 1
        %v5793 = vsel %vm1567, %v5790, %v5792
        %v5794 = vrot.slane %v1544, 1
        %v5795 = vsel %vm1567, %v5792, %v5794
        %v5796 = vrot.slane %v1545, 1
        %v5797 = vsel %vm1567, %v5794, %v5796
        %v5798 = vsel %vm1603, %v5789, 0
        %v5800 = vsel %vm1603, %v5791, 0
        %v5802 = vsel %vm1603, %v5793, 0
        %v5804 = vsel %vm1603, %v5795, 0
        %v5806 = vsel %vm1603, %v5797, 0
        %v5809 = vsel %vm1638, %v5786, 0
        %5811 = vmatprep.subr.mxu0 0.0
        %5812 = vmatpush1.msra.mxu0 %v5809
        %5813 = vmatprep.subr.mxu0 0.0
        %5814 = vmatpush1.msra.mxu0 0.0
        %5815 = vmatprep.subr.mxu0 0.0
        %5816 = vmatpush1.msra.mxu0 0.0
        %5817 = vmatprep.subr.mxu0 0.0
        %5818 = vmatpush1.msra.mxu0 0.0
        %5819 = vmatprep.subr.mxu0 0.0
        %5820 = vmatpush1.msra.mxu0 0.0
        %5821 = vmatprep.subr.mxu0 0.0
        %5822 = vmatpush1.msra.mxu0 0.0
        %5823 = vmatprep.subr.mxu0 0.0
        %5824 = vmatpush1.msra.mxu0 0.0
        %5825 = vmatprep.subr.mxu0 0.0
        %5826 = vmatpush1.msra.mxu0 0.0
        %5827 = vmatprep.subr.mxu0 0.0
        %5828 = vmatpush1.msra.mxu0 0.0
        %5829 = vmatprep.subr.mxu0 0.0
        %5830 = vmatpush1.msra.mxu0 0.0
        %5831 = vmatprep.subr.mxu0 0.0
        %5832 = vmatpush1.msra.mxu0 0.0
        %5833 = vmatprep.subr.mxu0 0.0
        %5834 = vmatpush1.msra.mxu0 0.0
        %5835 = vmatprep.subr.mxu0 0.0
        %5836 = vmatpush1.msra.mxu0 0.0
        %5837 = vmatprep.subr.mxu0 0.0
        %5838 = vmatpush1.msra.mxu0 0.0
        %5839 = vmatprep.subr.mxu0 0.0
        %5840 = vmatpush1.msra.mxu0 0.0
        %5841 = vmatprep.subr.mxu0 0.0
        %5842 = vmatpush1.msra.mxu0 0.0
        %5843 = vmatprep.subr.mxu0 0.0
        %5844 = vmatpush1.msra.mxu0 0.0
        %5845 = vmatprep.subr.mxu0 0.0
        %5846 = vmatpush1.msra.mxu0 0.0
        %5847 = vmatprep.subr.mxu0 0.0
        %5848 = vmatpush1.msra.mxu0 0.0
        %5849 = vmatprep.subr.mxu0 0.0
        %5850 = vmatpush1.msra.mxu0 0.0
        %5851 = vmatprep.subr.mxu0 0.0
        %5852 = vmatpush1.msra.mxu0 0.0
        %5853 = vmatprep.subr.mxu0 0.0
        %5854 = vmatpush1.msra.mxu0 0.0
        %5855 = vmatprep.subr.mxu0 0.0
        %5856 = vmatpush1.msra.mxu0 0.0
        %5857 = vmatprep.subr.mxu0 0.0
        %5858 = vmatpush1.msra.mxu0 0.0
        %5859 = vmatprep.subr.mxu0 0.0
        %5860 = vmatpush1.msra.mxu0 0.0
        %5861 = vmatprep.subr.mxu0 0.0
        %5862 = vmatpush1.msra.mxu0 0.0
        %5863 = vmatprep.subr.mxu0 0.0
        %5864 = vmatpush1.msra.mxu0 0.0
        %5865 = vmatprep.subr.mxu0 0.0
        %5866 = vmatpush1.msra.mxu0 0.0
        %5867 = vmatprep.subr.mxu0 0.0
        %5868 = vmatpush1.msra.mxu0 0.0
        %5869 = vmatprep.subr.mxu0 0.0
        %5870 = vmatpush1.msra.mxu0 0.0
        %5871 = vmatprep.subr.mxu0 0.0
        %5872 = vmatpush1.msra.mxu0 0.0
        %5873 = vmatprep.subr.mxu0 0.0
        %5874 = vmatpush1.msra.mxu0 0.0
        %5875 = vmatprep.mubr.f32.mxu0 0.0
        %5876 = vmatmul.mubr.f32.gmra.mrb[0].mxu0 %v1618
        %v5877 = vpop.f32.mrb[0].mxu0
        %v5878 = vadd.f32 0.0, %v5877
        %v5879 = vpop.f32.mrb[0].mxu0
        %5880 = vmatprep.mubr.f32.mxu0 0.0
        %5881 = vmatmul.mubr.f32.gmra.mrb[0].mxu0 %v1620
        %v5882 = vpop.f32.mrb[0].mxu0
        %v5883 = vadd.f32 0.0, %v5882
        %v5884 = vpop.f32.mrb[0].mxu0
        %5885 = vmatprep.mubr.f32.mxu0 0.0
        %5886 = vmatmul.mubr.f32.gmra.mrb[0].mxu0 %v1622
        %v5887 = vpop.f32.mrb[0].mxu0
        %v5888 = vadd.f32 0.0, %v5887
        %v5889 = vpop.f32.mrb[0].mxu0
        %5890 = vmatprep.mubr.f32.mxu0 0.0
        %5891 = vmatmul.mubr.f32.gmra.mrb[0].mxu0 %v1624
        %v5892 = vpop.f32.mrb[0].mxu0
        %v5893 = vadd.f32 0.0, %v5892
        %v5894 = vpop.f32.mrb[0].mxu0
        %5895 = vmatprep.mubr.f32.mxu0 0.0
        %5896 = vmatmul.mubr.f32.gmra.mrb[0].mxu0 %v1626
        %v5897 = vpop.f32.mrb[0].mxu0
        %v5898 = vadd.f32 0.0, %v5897
        %v5899 = vpop.f32.mrb[0].mxu0
        %5900 = vmatprep.mubr.f32.mxu0 0.0
        %5901 = vmatmul.mubr.f32.gmra.mrb[0].mxu0 %v1628
        %v5902 = vpop.f32.mrb[0].mxu0
        %v5903 = vadd.f32 0.0, %v5902
        %v5904 = vpop.f32.mrb[0].mxu0
        %5905 = vmatprep.mubr.f32.mxu0 0.0
        %5906 = vmatmul.mubr.f32.gmra.mrb[0].mxu0 %v1630
        %v5907 = vpop.f32.mrb[0].mxu0
        %v5908 = vadd.f32 0.0, %v5907
        %v5909 = vpop.f32.mrb[0].mxu0
        %5910 = vmatprep.mubr.f32.mxu0 0.0
        %5911 = vmatmul.mubr.f32.gmra.mrb[0].mxu0 %v1632
        %v5912 = vpop.f32.mrb[0].mxu0
        %v5913 = vadd.f32 0.0, %v5912
        %v5914 = vpop.f32.mrb[0].mxu0
        %5915 = vmatprep.mubr.f32.mxu0 0.0
        %5916 = vmatmul.mubr.f32.gmra.mrb[0].mxu0 %v1634
        %v5917 = vpop.f32.mrb[0].mxu0
        %v5918 = vadd.f32 0.0, %v5917
        %v5919 = vpop.f32.mrb[0].mxu0
        %5920 = vmatprep.mubr.f32.mxu0 0.0
        %5921 = vmatmul.mubr.f32.gmra.mrb[0].mxu0 %v1636
        %v5922 = vpop.f32.mrb[0].mxu0
        %v5923 = vadd.f32 0.0, %v5922
        %v5924 = vpop.f32.mrb[0].mxu0
        %5925 = vmatprep.mubr.f32.mxu0 0.0
        %5926 = vmatmul.mubr.f32.gmra.mrb[0].mxu0 %v3372
        %v5927 = vpop.f32.mrb[0].mxu0
        %v5928 = vadd.f32 0.0, %v5927
        %v5929 = vpop.f32.mrb[0].mxu0
        %5930 = vmatprep.mubr.f32.mxu0 0.0
        %5931 = vmatmul.mubr.f32.gmra.mrb[0].mxu0 %v3374
        %v5932 = vpop.f32.mrb[0].mxu0
        %v5933 = vadd.f32 0.0, %v5932
        %v5934 = vpop.f32.mrb[0].mxu0
        %5935 = vmatprep.mubr.f32.mxu0 0.0
        %5936 = vmatmul.mubr.f32.gmra.mrb[0].mxu0 %v5798
        %v5937 = vpop.f32.mrb[0].mxu0
        %v5938 = vadd.f32 0.0, %v5937
        %v5939 = vpop.f32.mrb[0].mxu0
        %5940 = vmatprep.mubr.f32.mxu0 0.0
        %5941 = vmatmul.mubr.f32.gmra.mrb[0].mxu0 %v5800
        %v5942 = vpop.f32.mrb[0].mxu0
        %v5943 = vadd.f32 0.0, %v5942
        %v5944 = vpop.f32.mrb[0].mxu0
        %5945 = vmatprep.mubr.f32.mxu0 0.0
        %5946 = vmatmul.mubr.f32.gmra.mrb[0].mxu0 %v5802
        %v5947 = vpop.f32.mrb[0].mxu0
        %v5948 = vadd.f32 0.0, %v5947
        %v5949 = vpop.f32.mrb[0].mxu0
        %5950 = vmatprep.mubr.f32.mxu0 0.0
        %5951 = vmatmul.mubr.f32.gmra.mrb[0].mxu0 %v5804
        %v5952 = vpop.f32.mrb[0].mxu0
        %v5953 = vadd.f32 0.0, %v5952
        %v5954 = vpop.f32.mrb[0].mxu0
        %5955 = vmatprep.mubr.f32.mxu0 0.0
        %5956 = vmatmul.mubr.f32.gmra.mrb[0].mxu0 %v5806
        %v5957 = vpop.f32.mrb[0].mxu0
        %v5958 = vadd.f32 0.0, %v5957
        %v5959 = vpop.f32.mrb[0].mxu0
        %5960 = vdwg.mxu0
        %v5961 = vadd.f32 %v5768, %v5878
        %v5962 = vadd.f32 %v5769, %v5883
        %v5963 = vadd.f32 %v5770, %v5888
        %v5964 = vadd.f32 %v5771, %v5893
        %v5965 = vadd.f32 %v5772, %v5898
        %v5966 = vadd.f32 %v5773, %v5903
        %v5967 = vadd.f32 %v5774, %v5908
        %v5968 = vadd.f32 %v5775, %v5913
        %v5969 = vadd.f32 %v5776, %v5918
        %v5970 = vadd.f32 %v5777, %v5923
        %v5971 = vadd.f32 %v5778, %v5928
        %v5972 = vadd.f32 %v5779, %v5933
        %v5973 = vadd.f32 %v5780, %v5938
        %v5974 = vadd.f32 %v5781, %v5943
        %v5975 = vadd.f32 %v5782, %v5948
        %v5976 = vadd.f32 %v5783, %v5953
        %v5977 = vadd.f32 %v5784, %v5958
        %s5978 = scalar_lea.vmem %s3, 176
        %v5979 = vld [vmem:[%s5978] sm:$0x3f]
        %v5980 = vrot.slane %v1544, 2
        %v5981 = vsel %vm1638, %v4696, %v5980
        %v5982 = vrot.slane %v1545, 2
        %v5983 = vsel %vm1638, %v5980, %v5982
        %v5984 = vsel %vm1603, %v5981, 0
        %v5986 = vsel %vm1603, %v5983, 0
        %v5989 = vsel %vm1638, %v5979, 0
        %5991 = vmatprep.subr.mxu0 0.0
        %5992 = vmatpush1.msra.mxu0 %v5989
        %5993 = vmatprep.subr.mxu0 0.0
        %5994 = vmatpush1.msra.mxu0 0.0
        %5995 = vmatprep.subr.mxu0 0.0
        %5996 = vmatpush1.msra.mxu0 0.0
        %5997 = vmatprep.subr.mxu0 0.0
        %5998 = vmatpush1.msra.mxu0 0.0
        %5999 = vmatprep.subr.mxu0 0.0
        %6000 = vmatpush1.msra.mxu0 0.0
        %6001 = vmatprep.subr.mxu0 0.0
        %6002 = vmatpush1.msra.mxu0 0.0
        %6003 = vmatprep.subr.mxu0 0.0
        %6004 = vmatpush1.msra.mxu0 0.0
        %6005 = vmatprep.subr.mxu0 0.0
        %6006 = vmatpush1.msra.mxu0 0.0
        %6007 = vmatprep.subr.mxu0 0.0
        %6008 = vmatpush1.msra.mxu0 0.0
        %6009 = vmatprep.subr.mxu0 0.0
        %6010 = vmatpush1.msra.mxu0 0.0
        %6011 = vmatprep.subr.mxu0 0.0
        %6012 = vmatpush1.msra.mxu0 0.0
        %6013 = vmatprep.subr.mxu0 0.0
        %6014 = vmatpush1.msra.mxu0 0.0
        %6015 = vmatprep.subr.mxu0 0.0
        %6016 = vmatpush1.msra.mxu0 0.0
        %6017 = vmatprep.subr.mxu0 0.0
        %6018 = vmatpush1.msra.mxu0 0.0
        %6019 = vmatprep.subr.mxu0 0.0
        %6020 = vmatpush1.msra.mxu0 0.0
        %6021 = vmatprep.subr.mxu0 0.0
        %6022 = vmatpush1.msra.mxu0 0.0
        %6023 = vmatprep.subr.mxu0 0.0
        %6024 = vmatpush1.msra.mxu0 0.0
        %6025 = vmatprep.subr.mxu0 0.0
        %6026 = vmatpush1.msra.mxu0 0.0
        %6027 = vmatprep.subr.mxu0 0.0
        %6028 = vmatpush1.msra.mxu0 0.0
        %6029 = vmatprep.subr.mxu0 0.0
        %6030 = vmatpush1.msra.mxu0 0.0
        %6031 = vmatprep.subr.mxu0 0.0
        %6032 = vmatpush1.msra.mxu0 0.0
        %6033 = vmatprep.subr.mxu0 0.0
        %6034 = vmatpush1.msra.mxu0 0.0
        %6035 = vmatprep.subr.mxu0 0.0
        %6036 = vmatpush1.msra.mxu0 0.0
        %6037 = vmatprep.subr.mxu0 0.0
        %6038 = vmatpush1.msra.mxu0 0.0
        %6039 = vmatprep.subr.mxu0 0.0
        %6040 = vmatpush1.msra.mxu0 0.0
        %6041 = vmatprep.subr.mxu0 0.0
        %6042 = vmatpush1.msra.mxu0 0.0
        %6043 = vmatprep.subr.mxu0 0.0
        %6044 = vmatpush1.msra.mxu0 0.0
        %6045 = vmatprep.subr.mxu0 0.0
        %6046 = vmatpush1.msra.mxu0 0.0
        %6047 = vmatprep.subr.mxu0 0.0
        %6048 = vmatpush1.msra.mxu0 0.0
        %6049 = vmatprep.subr.mxu0 0.0
        %6050 = vmatpush1.msra.mxu0 0.0
        %6051 = vmatprep.subr.mxu0 0.0
        %6052 = vmatpush1.msra.mxu0 0.0
        %6053 = vmatprep.subr.mxu0 0.0
        %6054 = vmatpush1.msra.mxu0 0.0
        %6055 = vmatprep.mubr.f32.mxu0 0.0
        %6056 = vmatmul.mubr.f32.gmra.mrb[0].mxu0 %v2030
        %v6057 = vpop.f32.mrb[0].mxu0
        %v6058 = vadd.f32 0.0, %v6057
        %v6059 = vpop.f32.mrb[0].mxu0
        %6060 = vmatprep.mubr.f32.mxu0 0.0
        %6061 = vmatmul.mubr.f32.gmra.mrb[0].mxu0 %v2032
        %v6062 = vpop.f32.mrb[0].mxu0
        %v6063 = vadd.f32 0.0, %v6062
        %v6064 = vpop.f32.mrb[0].mxu0
        %6065 = vmatprep.mubr.f32.mxu0 0.0
        %6066 = vmatmul.mubr.f32.gmra.mrb[0].mxu0 %v2034
        %v6067 = vpop.f32.mrb[0].mxu0
        %v6068 = vadd.f32 0.0, %v6067
        %v6069 = vpop.f32.mrb[0].mxu0
        %6070 = vmatprep.mubr.f32.mxu0 0.0
        %6071 = vmatmul.mubr.f32.gmra.mrb[0].mxu0 %v2036
        %v6072 = vpop.f32.mrb[0].mxu0
        %v6073 = vadd.f32 0.0, %v6072
        %v6074 = vpop.f32.mrb[0].mxu0
        %6075 = vmatprep.mubr.f32.mxu0 0.0
        %6076 = vmatmul.mubr.f32.gmra.mrb[0].mxu0 %v2038
        %v6077 = vpop.f32.mrb[0].mxu0
        %v6078 = vadd.f32 0.0, %v6077
        %v6079 = vpop.f32.mrb[0].mxu0
        %6080 = vmatprep.mubr.f32.mxu0 0.0
        %6081 = vmatmul.mubr.f32.gmra.mrb[0].mxu0 %v2040
        %v6082 = vpop.f32.mrb[0].mxu0
        %v6083 = vadd.f32 0.0, %v6082
        %v6084 = vpop.f32.mrb[0].mxu0
        %6085 = vmatprep.mubr.f32.mxu0 0.0
        %6086 = vmatmul.mubr.f32.gmra.mrb[0].mxu0 %v2042
        %v6087 = vpop.f32.mrb[0].mxu0
        %v6088 = vadd.f32 0.0, %v6087
        %v6089 = vpop.f32.mrb[0].mxu0
        %6090 = vmatprep.mubr.f32.mxu0 0.0
        %6091 = vmatmul.mubr.f32.gmra.mrb[0].mxu0 %v2044
        %v6092 = vpop.f32.mrb[0].mxu0
        %v6093 = vadd.f32 0.0, %v6092
        %v6094 = vpop.f32.mrb[0].mxu0
        %6095 = vmatprep.mubr.f32.mxu0 0.0
        %6096 = vmatmul.mubr.f32.gmra.mrb[0].mxu0 %v2046
        %v6097 = vpop.f32.mrb[0].mxu0
        %v6098 = vadd.f32 0.0, %v6097
        %v6099 = vpop.f32.mrb[0].mxu0
        %6100 = vmatprep.mubr.f32.mxu0 0.0
        %6101 = vmatmul.mubr.f32.gmra.mrb[0].mxu0 %v2048
        %v6102 = vpop.f32.mrb[0].mxu0
        %v6103 = vadd.f32 0.0, %v6102
        %v6104 = vpop.f32.mrb[0].mxu0
        %6105 = vmatprep.mubr.f32.mxu0 0.0
        %6106 = vmatmul.mubr.f32.gmra.mrb[0].mxu0 %v3552
        %v6107 = vpop.f32.mrb[0].mxu0
        %v6108 = vadd.f32 0.0, %v6107
        %v6109 = vpop.f32.mrb[0].mxu0
        %6110 = vmatprep.mubr.f32.mxu0 0.0
        %6111 = vmatmul.mubr.f32.gmra.mrb[0].mxu0 %v3554
        %v6112 = vpop.f32.mrb[0].mxu0
        %v6113 = vadd.f32 0.0, %v6112
        %v6114 = vpop.f32.mrb[0].mxu0
        %6115 = vmatprep.mubr.f32.mxu0 0.0
        %6116 = vmatmul.mubr.f32.gmra.mrb[0].mxu0 %v4698
        %v6117 = vpop.f32.mrb[0].mxu0
        %v6118 = vadd.f32 0.0, %v6117
        %v6119 = vpop.f32.mrb[0].mxu0
        %6120 = vmatprep.mubr.f32.mxu0 0.0
        %6121 = vmatmul.mubr.f32.gmra.mrb[0].mxu0 %v4700
        %v6122 = vpop.f32.mrb[0].mxu0
        %v6123 = vadd.f32 0.0, %v6122
        %v6124 = vpop.f32.mrb[0].mxu0
        %6125 = vmatprep.mubr.f32.mxu0 0.0
        %6126 = vmatmul.mubr.f32.gmra.mrb[0].mxu0 %v4702
        %v6127 = vpop.f32.mrb[0].mxu0
        %v6128 = vadd.f32 0.0, %v6127
        %v6129 = vpop.f32.mrb[0].mxu0
        %6130 = vmatprep.mubr.f32.mxu0 0.0
        %6131 = vmatmul.mubr.f32.gmra.mrb[0].mxu0 %v5984
        %v6132 = vpop.f32.mrb[0].mxu0
        %v6133 = vadd.f32 0.0, %v6132
        %v6134 = vpop.f32.mrb[0].mxu0
        %6135 = vmatprep.mubr.f32.mxu0 0.0
        %6136 = vmatmul.mubr.f32.gmra.mrb[0].mxu0 %v5986
        %v6137 = vpop.f32.mrb[0].mxu0
        %v6138 = vadd.f32 0.0, %v6137
        %v6139 = vpop.f32.mrb[0].mxu0
        %6140 = vdwg.mxu0
        %v6141 = vadd.f32 %v5961, %v6058
        %v6142 = vadd.f32 %v5962, %v6063
        %v6143 = vadd.f32 %v5963, %v6068
        %v6144 = vadd.f32 %v5964, %v6073
        %v6145 = vadd.f32 %v5965, %v6078
        %v6146 = vadd.f32 %v5966, %v6083
        %v6147 = vadd.f32 %v5967, %v6088
        %v6148 = vadd.f32 %v5968, %v6093
        %v6149 = vadd.f32 %v5969, %v6098
        %v6150 = vadd.f32 %v5970, %v6103
        %v6151 = vadd.f32 %v5971, %v6108
        %v6152 = vadd.f32 %v5972, %v6113
        %v6153 = vadd.f32 %v5973, %v6118
        %v6154 = vadd.f32 %v5974, %v6123
        %v6155 = vadd.f32 %v5975, %v6128
        %v6156 = vadd.f32 %v5976, %v6133
        %v6157 = vadd.f32 %v5977, %v6138
        %s6158 = scalar_lea.vmem %s3, 184
        %v6159 = vld [vmem:[%s6158] sm:$0x3f]
        %v6160 = vrot.slane %v1544, 3
        %v6161 = vsel %vm2222, %v4884, %v6160
        %v6162 = vrot.slane %v1545, 3
        %v6163 = vsel %vm2222, %v6160, %v6162
        %v6164 = vsel %vm1603, %v6161, 0
        %v6166 = vsel %vm1603, %v6163, 0
        %v6169 = vsel %vm1638, %v6159, 0
        %6171 = vmatprep.subr.mxu0 0.0
        %6172 = vmatpush1.msra.mxu0 %v6169
        %6173 = vmatprep.subr.mxu0 0.0
        %6174 = vmatpush1.msra.mxu0 0.0
        %6175 = vmatprep.subr.mxu0 0.0
        %6176 = vmatpush1.msra.mxu0 0.0
        %6177 = vmatprep.subr.mxu0 0.0
        %6178 = vmatpush1.msra.mxu0 0.0
        %6179 = vmatprep.subr.mxu0 0.0
        %6180 = vmatpush1.msra.mxu0 0.0
        %6181 = vmatprep.subr.mxu0 0.0
        %6182 = vmatpush1.msra.mxu0 0.0
        %6183 = vmatprep.subr.mxu0 0.0
        %6184 = vmatpush1.msra.mxu0 0.0
        %6185 = vmatprep.subr.mxu0 0.0
        %6186 = vmatpush1.msra.mxu0 0.0
        %6187 = vmatprep.subr.mxu0 0.0
        %6188 = vmatpush1.msra.mxu0 0.0
        %6189 = vmatprep.subr.mxu0 0.0
        %6190 = vmatpush1.msra.mxu0 0.0
        %6191 = vmatprep.subr.mxu0 0.0
        %6192 = vmatpush1.msra.mxu0 0.0
        %6193 = vmatprep.subr.mxu0 0.0
        %6194 = vmatpush1.msra.mxu0 0.0
        %6195 = vmatprep.subr.mxu0 0.0
        %6196 = vmatpush1.msra.mxu0 0.0
        %6197 = vmatprep.subr.mxu0 0.0
        %6198 = vmatpush1.msra.mxu0 0.0
        %6199 = vmatprep.subr.mxu0 0.0
        %6200 = vmatpush1.msra.mxu0 0.0
        %6201 = vmatprep.subr.mxu0 0.0
        %6202 = vmatpush1.msra.mxu0 0.0
        %6203 = vmatprep.subr.mxu0 0.0
        %6204 = vmatpush1.msra.mxu0 0.0
        %6205 = vmatprep.subr.mxu0 0.0
        %6206 = vmatpush1.msra.mxu0 0.0
        %6207 = vmatprep.subr.mxu0 0.0
        %6208 = vmatpush1.msra.mxu0 0.0
        %6209 = vmatprep.subr.mxu0 0.0
        %6210 = vmatpush1.msra.mxu0 0.0
        %6211 = vmatprep.subr.mxu0 0.0
        %6212 = vmatpush1.msra.mxu0 0.0
        %6213 = vmatprep.subr.mxu0 0.0
        %6214 = vmatpush1.msra.mxu0 0.0
        %6215 = vmatprep.subr.mxu0 0.0
        %6216 = vmatpush1.msra.mxu0 0.0
        %6217 = vmatprep.subr.mxu0 0.0
        %6218 = vmatpush1.msra.mxu0 0.0
        %6219 = vmatprep.subr.mxu0 0.0
        %6220 = vmatpush1.msra.mxu0 0.0
        %6221 = vmatprep.subr.mxu0 0.0
        %6222 = vmatpush1.msra.mxu0 0.0
        %6223 = vmatprep.subr.mxu0 0.0
        %6224 = vmatpush1.msra.mxu0 0.0
        %6225 = vmatprep.subr.mxu0 0.0
        %6226 = vmatpush1.msra.mxu0 0.0
        %6227 = vmatprep.subr.mxu0 0.0
        %6228 = vmatpush1.msra.mxu0 0.0
        %6229 = vmatprep.subr.mxu0 0.0
        %6230 = vmatpush1.msra.mxu0 0.0
        %6231 = vmatprep.subr.mxu0 0.0
        %6232 = vmatpush1.msra.mxu0 0.0
        %6233 = vmatprep.subr.mxu0 0.0
        %6234 = vmatpush1.msra.mxu0 0.0
        %6235 = vmatprep.mubr.f32.mxu0 0.0
        %6236 = vmatmul.mubr.f32.gmra.mrb[0].mxu0 %v2272
        %v6237 = vpop.f32.mrb[0].mxu0
        %v6238 = vadd.f32 0.0, %v6237
        %v6239 = vpop.f32.mrb[0].mxu0
        %6240 = vmatprep.mubr.f32.mxu0 0.0
        %6241 = vmatmul.mubr.f32.gmra.mrb[0].mxu0 %v2274
        %v6242 = vpop.f32.mrb[0].mxu0
        %v6243 = vadd.f32 0.0, %v6242
        %v6244 = vpop.f32.mrb[0].mxu0
        %6245 = vmatprep.mubr.f32.mxu0 0.0
        %6246 = vmatmul.mubr.f32.gmra.mrb[0].mxu0 %v2276
        %v6247 = vpop.f32.mrb[0].mxu0
        %v6248 = vadd.f32 0.0, %v6247
        %v6249 = vpop.f32.mrb[0].mxu0
        %6250 = vmatprep.mubr.f32.mxu0 0.0
        %6251 = vmatmul.mubr.f32.gmra.mrb[0].mxu0 %v2278
        %v6252 = vpop.f32.mrb[0].mxu0
        %v6253 = vadd.f32 0.0, %v6252
        %v6254 = vpop.f32.mrb[0].mxu0
        %6255 = vmatprep.mubr.f32.mxu0 0.0
        %6256 = vmatmul.mubr.f32.gmra.mrb[0].mxu0 %v2280
        %v6257 = vpop.f32.mrb[0].mxu0
        %v6258 = vadd.f32 0.0, %v6257
        %v6259 = vpop.f32.mrb[0].mxu0
        %6260 = vmatprep.mubr.f32.mxu0 0.0
        %6261 = vmatmul.mubr.f32.gmra.mrb[0].mxu0 %v2282
        %v6262 = vpop.f32.mrb[0].mxu0
        %v6263 = vadd.f32 0.0, %v6262
        %v6264 = vpop.f32.mrb[0].mxu0
        %6265 = vmatprep.mubr.f32.mxu0 0.0
        %6266 = vmatmul.mubr.f32.gmra.mrb[0].mxu0 %v2284
        %v6267 = vpop.f32.mrb[0].mxu0
        %v6268 = vadd.f32 0.0, %v6267
        %v6269 = vpop.f32.mrb[0].mxu0
        %6270 = vmatprep.mubr.f32.mxu0 0.0
        %6271 = vmatmul.mubr.f32.gmra.mrb[0].mxu0 %v2286
        %v6272 = vpop.f32.mrb[0].mxu0
        %v6273 = vadd.f32 0.0, %v6272
        %v6274 = vpop.f32.mrb[0].mxu0
        %6275 = vmatprep.mubr.f32.mxu0 0.0
        %6276 = vmatmul.mubr.f32.gmra.mrb[0].mxu0 %v2288
        %v6277 = vpop.f32.mrb[0].mxu0
        %v6278 = vadd.f32 0.0, %v6277
        %v6279 = vpop.f32.mrb[0].mxu0
        %6280 = vmatprep.mubr.f32.mxu0 0.0
        %6281 = vmatmul.mubr.f32.gmra.mrb[0].mxu0 %v2290
        %v6282 = vpop.f32.mrb[0].mxu0
        %v6283 = vadd.f32 0.0, %v6282
        %v6284 = vpop.f32.mrb[0].mxu0
        %6285 = vmatprep.mubr.f32.mxu0 0.0
        %6286 = vmatmul.mubr.f32.gmra.mrb[0].mxu0 %v4886
        %v6287 = vpop.f32.mrb[0].mxu0
        %v6288 = vadd.f32 0.0, %v6287
        %v6289 = vpop.f32.mrb[0].mxu0
        %6290 = vmatprep.mubr.f32.mxu0 0.0
        %6291 = vmatmul.mubr.f32.gmra.mrb[0].mxu0 %v4888
        %v6292 = vpop.f32.mrb[0].mxu0
        %v6293 = vadd.f32 0.0, %v6292
        %v6294 = vpop.f32.mrb[0].mxu0
        %6295 = vmatprep.mubr.f32.mxu0 0.0
        %6296 = vmatmul.mubr.f32.gmra.mrb[0].mxu0 %v4890
        %v6297 = vpop.f32.mrb[0].mxu0
        %v6298 = vadd.f32 0.0, %v6297
        %v6299 = vpop.f32.mrb[0].mxu0
        %6300 = vmatprep.mubr.f32.mxu0 0.0
        %6301 = vmatmul.mubr.f32.gmra.mrb[0].mxu0 %v4892
        %v6302 = vpop.f32.mrb[0].mxu0
        %v6303 = vadd.f32 0.0, %v6302
        %v6304 = vpop.f32.mrb[0].mxu0
        %6305 = vmatprep.mubr.f32.mxu0 0.0
        %6306 = vmatmul.mubr.f32.gmra.mrb[0].mxu0 %v4894
        %v6307 = vpop.f32.mrb[0].mxu0
        %v6308 = vadd.f32 0.0, %v6307
        %v6309 = vpop.f32.mrb[0].mxu0
        %6310 = vmatprep.mubr.f32.mxu0 0.0
        %6311 = vmatmul.mubr.f32.gmra.mrb[0].mxu0 %v6164
        %v6312 = vpop.f32.mrb[0].mxu0
        %v6313 = vadd.f32 0.0, %v6312
        %v6314 = vpop.f32.mrb[0].mxu0
        %6315 = vmatprep.mubr.f32.mxu0 0.0
        %6316 = vmatmul.mubr.f32.gmra.mrb[0].mxu0 %v6166
        %v6317 = vpop.f32.mrb[0].mxu0
        %v6318 = vadd.f32 0.0, %v6317
        %v6319 = vpop.f32.mrb[0].mxu0
        %6320 = vdwg.mxu0
        %v6321 = vadd.f32 %v6141, %v6238
        %v6322 = vadd.f32 %v6142, %v6243
        %v6323 = vadd.f32 %v6143, %v6248
        %v6324 = vadd.f32 %v6144, %v6253
        %v6325 = vadd.f32 %v6145, %v6258
        %v6326 = vadd.f32 %v6146, %v6263
        %v6327 = vadd.f32 %v6147, %v6268
        %v6328 = vadd.f32 %v6148, %v6273
        %v6329 = vadd.f32 %v6149, %v6278
        %v6330 = vadd.f32 %v6150, %v6283
        %v6331 = vadd.f32 %v6151, %v6288
        %v6332 = vadd.f32 %v6152, %v6293
        %v6333 = vadd.f32 %v6153, %v6298
        %v6334 = vadd.f32 %v6154, %v6303
        %v6335 = vadd.f32 %v6155, %v6308
        %v6336 = vadd.f32 %v6156, %v6313
        %v6337 = vadd.f32 %v6157, %v6318
        %s6338 = scalar_lea.vmem %s3, 192
        %v6339 = vld [vmem:[%s6338] sm:$0x3f]
        %v6340 = vrot.slane %v1544, 4
        %v6341 = vsel %vm2464, %v5070, %v6340
        %v6342 = vrot.slane %v1545, 4
        %v6343 = vsel %vm2464, %v6340, %v6342
        %v6344 = vsel %vm1603, %v6341, 0
        %v6346 = vsel %vm1603, %v6343, 0
        %v6349 = vsel %vm1638, %v6339, 0
        %6351 = vmatprep.subr.mxu0 0.0
        %6352 = vmatpush1.msra.mxu0 %v6349
        %6353 = vmatprep.subr.mxu0 0.0
        %6354 = vmatpush1.msra.mxu0 0.0
        %6355 = vmatprep.subr.mxu0 0.0
        %6356 = vmatpush1.msra.mxu0 0.0
        %6357 = vmatprep.subr.mxu0 0.0
        %6358 = vmatpush1.msra.mxu0 0.0
        %6359 = vmatprep.subr.mxu0 0.0
        %6360 = vmatpush1.msra.mxu0 0.0
        %6361 = vmatprep.subr.mxu0 0.0
        %6362 = vmatpush1.msra.mxu0 0.0
        %6363 = vmatprep.subr.mxu0 0.0
        %6364 = vmatpush1.msra.mxu0 0.0
        %6365 = vmatprep.subr.mxu0 0.0
        %6366 = vmatpush1.msra.mxu0 0.0
        %6367 = vmatprep.subr.mxu0 0.0
        %6368 = vmatpush1.msra.mxu0 0.0
        %6369 = vmatprep.subr.mxu0 0.0
        %6370 = vmatpush1.msra.mxu0 0.0
        %6371 = vmatprep.subr.mxu0 0.0
        %6372 = vmatpush1.msra.mxu0 0.0
        %6373 = vmatprep.subr.mxu0 0.0
        %6374 = vmatpush1.msra.mxu0 0.0
        %6375 = vmatprep.subr.mxu0 0.0
        %6376 = vmatpush1.msra.mxu0 0.0
        %6377 = vmatprep.subr.mxu0 0.0
        %6378 = vmatpush1.msra.mxu0 0.0
        %6379 = vmatprep.subr.mxu0 0.0
        %6380 = vmatpush1.msra.mxu0 0.0
        %6381 = vmatprep.subr.mxu0 0.0
        %6382 = vmatpush1.msra.mxu0 0.0
        %6383 = vmatprep.subr.mxu0 0.0
        %6384 = vmatpush1.msra.mxu0 0.0
        %6385 = vmatprep.subr.mxu0 0.0
        %6386 = vmatpush1.msra.mxu0 0.0
        %6387 = vmatprep.subr.mxu0 0.0
        %6388 = vmatpush1.msra.mxu0 0.0
        %6389 = vmatprep.subr.mxu0 0.0
        %6390 = vmatpush1.msra.mxu0 0.0
        %6391 = vmatprep.subr.mxu0 0.0
        %6392 = vmatpush1.msra.mxu0 0.0
        %6393 = vmatprep.subr.mxu0 0.0
        %6394 = vmatpush1.msra.mxu0 0.0
        %6395 = vmatprep.subr.mxu0 0.0
        %6396 = vmatpush1.msra.mxu0 0.0
        %6397 = vmatprep.subr.mxu0 0.0
        %6398 = vmatpush1.msra.mxu0 0.0
        %6399 = vmatprep.subr.mxu0 0.0
        %6400 = vmatpush1.msra.mxu0 0.0
        %6401 = vmatprep.subr.mxu0 0.0
        %6402 = vmatpush1.msra.mxu0 0.0
        %6403 = vmatprep.subr.mxu0 0.0
        %6404 = vmatpush1.msra.mxu0 0.0
        %6405 = vmatprep.subr.mxu0 0.0
        %6406 = vmatpush1.msra.mxu0 0.0
        %6407 = vmatprep.subr.mxu0 0.0
        %6408 = vmatpush1.msra.mxu0 0.0
        %6409 = vmatprep.subr.mxu0 0.0
        %6410 = vmatpush1.msra.mxu0 0.0
        %6411 = vmatprep.subr.mxu0 0.0
        %6412 = vmatpush1.msra.mxu0 0.0
        %6413 = vmatprep.subr.mxu0 0.0
        %6414 = vmatpush1.msra.mxu0 0.0
        %6415 = vmatprep.mubr.f32.mxu0 0.0
        %6416 = vmatmul.mubr.f32.gmra.mrb[0].mxu0 %v2514
        %v6417 = vpop.f32.mrb[0].mxu0
        %v6418 = vadd.f32 0.0, %v6417
        %v6419 = vpop.f32.mrb[0].mxu0
        %6420 = vmatprep.mubr.f32.mxu0 0.0
        %6421 = vmatmul.mubr.f32.gmra.mrb[0].mxu0 %v2516
        %v6422 = vpop.f32.mrb[0].mxu0
        %v6423 = vadd.f32 0.0, %v6422
        %v6424 = vpop.f32.mrb[0].mxu0
        %6425 = vmatprep.mubr.f32.mxu0 0.0
        %6426 = vmatmul.mubr.f32.gmra.mrb[0].mxu0 %v2518
        %v6427 = vpop.f32.mrb[0].mxu0
        %v6428 = vadd.f32 0.0, %v6427
        %v6429 = vpop.f32.mrb[0].mxu0
        %6430 = vmatprep.mubr.f32.mxu0 0.0
        %6431 = vmatmul.mubr.f32.gmra.mrb[0].mxu0 %v2520
        %v6432 = vpop.f32.mrb[0].mxu0
        %v6433 = vadd.f32 0.0, %v6432
        %v6434 = vpop.f32.mrb[0].mxu0
        %6435 = vmatprep.mubr.f32.mxu0 0.0
        %6436 = vmatmul.mubr.f32.gmra.mrb[0].mxu0 %v2522
        %v6437 = vpop.f32.mrb[0].mxu0
        %v6438 = vadd.f32 0.0, %v6437
        %v6439 = vpop.f32.mrb[0].mxu0
        %6440 = vmatprep.mubr.f32.mxu0 0.0
        %6441 = vmatmul.mubr.f32.gmra.mrb[0].mxu0 %v2524
        %v6442 = vpop.f32.mrb[0].mxu0
        %v6443 = vadd.f32 0.0, %v6442
        %v6444 = vpop.f32.mrb[0].mxu0
        %6445 = vmatprep.mubr.f32.mxu0 0.0
        %6446 = vmatmul.mubr.f32.gmra.mrb[0].mxu0 %v2526
        %v6447 = vpop.f32.mrb[0].mxu0
        %v6448 = vadd.f32 0.0, %v6447
        %v6449 = vpop.f32.mrb[0].mxu0
        %6450 = vmatprep.mubr.f32.mxu0 0.0
        %6451 = vmatmul.mubr.f32.gmra.mrb[0].mxu0 %v2528
        %v6452 = vpop.f32.mrb[0].mxu0
        %v6453 = vadd.f32 0.0, %v6452
        %v6454 = vpop.f32.mrb[0].mxu0
        %6455 = vmatprep.mubr.f32.mxu0 0.0
        %6456 = vmatmul.mubr.f32.gmra.mrb[0].mxu0 %v2530
        %v6457 = vpop.f32.mrb[0].mxu0
        %v6458 = vadd.f32 0.0, %v6457
        %v6459 = vpop.f32.mrb[0].mxu0
        %6460 = vmatprep.mubr.f32.mxu0 0.0
        %6461 = vmatmul.mubr.f32.gmra.mrb[0].mxu0 %v2532
        %v6462 = vpop.f32.mrb[0].mxu0
        %v6463 = vadd.f32 0.0, %v6462
        %v6464 = vpop.f32.mrb[0].mxu0
        %6465 = vmatprep.mubr.f32.mxu0 0.0
        %6466 = vmatmul.mubr.f32.gmra.mrb[0].mxu0 %v3735
        %v6467 = vpop.f32.mrb[0].mxu0
        %v6468 = vadd.f32 0.0, %v6467
        %v6469 = vpop.f32.mrb[0].mxu0
        %6470 = vmatprep.mubr.f32.mxu0 0.0
        %6471 = vmatmul.mubr.f32.gmra.mrb[0].mxu0 %v3737
        %v6472 = vpop.f32.mrb[0].mxu0
        %v6473 = vadd.f32 0.0, %v6472
        %v6474 = vpop.f32.mrb[0].mxu0
        %6475 = vmatprep.mubr.f32.mxu0 0.0
        %6476 = vmatmul.mubr.f32.gmra.mrb[0].mxu0 %v3739
        %v6477 = vpop.f32.mrb[0].mxu0
        %v6478 = vadd.f32 0.0, %v6477
        %v6479 = vpop.f32.mrb[0].mxu0
        %6480 = vmatprep.mubr.f32.mxu0 0.0
        %6481 = vmatmul.mubr.f32.gmra.mrb[0].mxu0 %v5072
        %v6482 = vpop.f32.mrb[0].mxu0
        %v6483 = vadd.f32 0.0, %v6482
        %v6484 = vpop.f32.mrb[0].mxu0
        %6485 = vmatprep.mubr.f32.mxu0 0.0
        %6486 = vmatmul.mubr.f32.gmra.mrb[0].mxu0 %v5074
        %v6487 = vpop.f32.mrb[0].mxu0
        %v6488 = vadd.f32 0.0, %v6487
        %v6489 = vpop.f32.mrb[0].mxu0
        %6490 = vmatprep.mubr.f32.mxu0 0.0
        %6491 = vmatmul.mubr.f32.gmra.mrb[0].mxu0 %v6344
        %v6492 = vpop.f32.mrb[0].mxu0
        %v6493 = vadd.f32 0.0, %v6492
        %v6494 = vpop.f32.mrb[0].mxu0
        %6495 = vmatprep.mubr.f32.mxu0 0.0
        %6496 = vmatmul.mubr.f32.gmra.mrb[0].mxu0 %v6346
        %v6497 = vpop.f32.mrb[0].mxu0
        %v6498 = vadd.f32 0.0, %v6497
        %v6499 = vpop.f32.mrb[0].mxu0
        %6500 = vdwg.mxu0
        %v6501 = vadd.f32 %v6321, %v6418
        %v6502 = vadd.f32 %v6322, %v6423
        %v6503 = vadd.f32 %v6323, %v6428
        %v6504 = vadd.f32 %v6324, %v6433
        %v6505 = vadd.f32 %v6325, %v6438
        %v6506 = vadd.f32 %v6326, %v6443
        %v6507 = vadd.f32 %v6327, %v6448
        %v6508 = vadd.f32 %v6328, %v6453
        %v6509 = vadd.f32 %v6329, %v6458
        %v6510 = vadd.f32 %v6330, %v6463
        %v6511 = vadd.f32 %v6331, %v6468
        %v6512 = vadd.f32 %v6332, %v6473
        %v6513 = vadd.f32 %v6333, %v6478
        %v6514 = vadd.f32 %v6334, %v6483
        %v6515 = vadd.f32 %v6335, %v6488
        %v6516 = vadd.f32 %v6336, %v6493
        %v6517 = vadd.f32 %v6337, %v6498
        %v6518 = vld [vmem:[%s4] sm:$0x1]
        %v6520 = vlaneseq
        %v6521 = vshrl.u32 %v6520, 7
        %v6522 = vsub.s32 0, %v6521
        %v6523 = vrot.slane %v6518, %v6522
        %v6525 = vadd.f32 %v6501, %v6523
        %v6526 = vadd.f32 %v6502, %v6523
        %v6527 = vadd.f32 %v6503, %v6523
        %v6528 = vadd.f32 %v6504, %v6523
        %v6529 = vadd.f32 %v6505, %v6523
        %v6530 = vadd.f32 %v6506, %v6523
        %v6531 = vadd.f32 %v6507, %v6523
        %v6532 = vadd.f32 %v6508, %v6523
        %v6533 = vadd.f32 %v6509, %v6523
        %v6534 = vadd.f32 %v6510, %v6523
        %v6535 = vadd.f32 %v6511, %v6523
        %v6536 = vadd.f32 %v6512, %v6523
        %v6537 = vadd.f32 %v6513, %v6523
        %v6538 = vadd.f32 %v6514, %v6523
        %v6539 = vadd.f32 %v6515, %v6523
        %v6540 = vadd.f32 %v6516, %v6523
        %v6541 = vadd.f32 %v6517, %v6523
        %v6542 = vmax.f32 %v6525, 0.0
        %v6543 = vmax.f32 %v6526, 0.0
        %v6544 = vmax.f32 %v6527, 0.0
        %v6545 = vmax.f32 %v6528, 0.0
        %v6546 = vmax.f32 %v6529, 0.0
        %v6547 = vmax.f32 %v6530, 0.0
        %v6548 = vmax.f32 %v6531, 0.0
        %v6549 = vmax.f32 %v6532, 0.0
        %v6550 = vmax.f32 %v6533, 0.0
        %v6551 = vmax.f32 %v6534, 0.0
        %v6552 = vmax.f32 %v6535, 0.0
        %v6553 = vmax.f32 %v6536, 0.0
        %v6554 = vmax.f32 %v6537, 0.0
        %v6555 = vmax.f32 %v6538, 0.0
        %v6556 = vmax.f32 %v6539, 0.0
        %v6557 = vmax.f32 %v6540, 0.0
        %v6558 = vmax.f32 %v6541, 0.0
        %v6573 = vrot.slane %v6542, 1
        %v6574 = vrot.slane %v6543, 1
        %v6575 = vsel %vm1567, %v6573, %v6574
        %v6576 = vrot.slane %v6544, 1
        %v6577 = vsel %vm1567, %v6574, %v6576
        %v6578 = vrot.slane %v6545, 1
        %v6579 = vrot.slane %v6546, 1
        %v6580 = vsel %vm1567, %v6578, %v6579
        %v6581 = vrot.slane %v6547, 1
        %v6582 = vsel %vm1567, %v6579, %v6581
        %v6583 = vrot.slane %v6549, 1
        %v6584 = vrot.slane %v6550, 1
        %v6585 = vsel %vm1567, %v6583, %v6584
        %v6586 = vrot.slane %v6551, 1
        %v6587 = vsel %vm1567, %v6584, %v6586
        %v6588 = vrot.slane %v6552, 1
        %v6589 = vrot.slane %v6553, 1
        %v6590 = vsel %vm1567, %v6588, %v6589
        %v6591 = vrot.slane %v6554, 1
        %v6592 = vsel %vm1567, %v6589, %v6591
        %v6593 = vrot.slane %v6556, 1
        %v6594 = vrot.slane %v6557, 1
        %v6595 = vsel %vm1567, %v6593, %v6594
        %v6606 = vmax.f32 %v6542, %v6575
        %v6607 = vmax.f32 %v6543, %v6577
        %v6608 = vmax.f32 %v6545, %v6580
        %v6609 = vmax.f32 %v6546, %v6582
        %v6610 = vmax.f32 %v6549, %v6585
        %v6611 = vmax.f32 %v6550, %v6587
        %v6612 = vmax.f32 %v6552, %v6590
        %v6613 = vmax.f32 %v6553, %v6592
        %v6614 = vmax.f32 %v6556, %v6595
        %v6615 = vmax.f32 %v6557, %v6594
        %v6619 = vsel %vm1567, %v6576, %v6578
        %v6620 = vrot.slane %v6548, 1
        %v6621 = vsel %vm1567, %v6581, %v6620
        %v6622 = vsel %vm1567, %v6620, %v6583
        %v6623 = vsel %vm1567, %v6586, %v6588
        %v6624 = vrot.slane %v6555, 1
        %v6625 = vsel %vm1567, %v6591, %v6624
        %v6626 = vsel %vm1567, %v6624, %v6593
        %v6627 = vrot.slane %v6558, 1
        %v6628 = vsel %vm1567, %v6594, %v6627
        %v6637 = vmax.f32 %v6544, %v6619
        %v6638 = vmax.f32 %v6547, %v6621
        %v6639 = vmax.f32 %v6548, %v6622
        %v6640 = vmax.f32 %v6551, %v6623
        %v6641 = vmax.f32 %v6554, %v6625
        %v6642 = vmax.f32 %v6555, %v6626
        %v6643 = vmax.f32 %v6557, %v6628
        %v6644 = vmax.f32 %v6558, %v6627
        %v6659 = vrot.slane %v6607, 6
        %v6660 = vrot.slane %v6637, 6
        %v6661 = vsel %vm2707, %v6659, %v6660
        %v6662 = vrot.slane %v6608, 6
        %v6663 = vsel %vm2707, %v6660, %v6662
        %v6664 = vrot.slane %v6609, 6
        %v6665 = vrot.slane %v6638, 6
        %v6666 = vsel %vm2707, %v6664, %v6665
        %v6667 = vrot.slane %v6639, 6
        %v6668 = vsel %vm2707, %v6665, %v6667
        %v6669 = vrot.slane %v6611, 6
        %v6670 = vrot.slane %v6640, 6
        %v6671 = vsel %vm2707, %v6669, %v6670
        %v6672 = vrot.slane %v6612, 6
        %v6673 = vsel %vm2707, %v6670, %v6672
        %v6674 = vrot.slane %v6613, 6
        %v6675 = vrot.slane %v6641, 6
        %v6676 = vsel %vm2707, %v6674, %v6675
        %v6677 = vrot.slane %v6642, 6
        %v6678 = vsel %vm2707, %v6675, %v6677
        %v6679 = vrot.slane %v6643, 6
        %v6680 = vrot.slane %v6644, 6
        %v6681 = vsel %vm2707, %v6679, %v6680
        %v6692 = vmax.f32 %v6606, %v6661
        %v6693 = vmax.f32 %v6607, %v6663
        %v6694 = vmax.f32 %v6608, %v6666
        %v6695 = vmax.f32 %v6609, %v6668
        %v6696 = vmax.f32 %v6610, %v6671
        %v6697 = vmax.f32 %v6611, %v6673
        %v6698 = vmax.f32 %v6612, %v6676
        %v6699 = vmax.f32 %v6613, %v6678
        %v6700 = vmax.f32 %v6614, %v6681
        %v6701 = vmax.f32 %v6615, %v6680
        %v6702 = vld [vmem:[%s5] sm:$0xff]
        %v6703 = vld [vmem:[%s5 + $0x8] sm:$0xff]
        %s6704 = scalar_lea.vmem %s5, 16
        %v6705 = vld [vmem:[%s6704] sm:$0xff]
        %v6706 = vld [vmem:[%s6704 + $0x8] sm:$0xff]
        %v6708 = vrot.slane %v6692, 2
        %vm6709 = vcmask 130048
        %v6710 = vsel %vm6709, %v6708, 0
        %6712 = vmatprep.subr.mxu0 0.0
        %6713 = vmatpush1.msra.mxu0 %v6705
        %6714 = vmatprep.subr.mxu0 0.0
        %6715 = vmatpush1.msra.mxu0 %v6706
        %6716 = vmatprep.subr.mxu0 0.0
        %6717 = vmatpush1.msra.mxu0 0.0
        %6718 = vmatprep.subr.mxu0 0.0
        %6719 = vmatpush1.msra.mxu0 0.0
        %6720 = vmatprep.subr.mxu0 0.0
        %6721 = vmatpush1.msra.mxu0 0.0
        %6722 = vmatprep.subr.mxu0 0.0
        %6723 = vmatpush1.msra.mxu0 0.0
        %6724 = vmatprep.subr.mxu0 0.0
        %6725 = vmatpush1.msra.mxu0 0.0
        %6726 = vmatprep.subr.mxu0 0.0
        %6727 = vmatpush1.msra.mxu0 0.0
        %6728 = vmatprep.subr.mxu0 0.0
        %6729 = vmatpush1.msra.mxu0 0.0
        %6730 = vmatprep.subr.mxu0 0.0
        %6731 = vmatpush1.msra.mxu0 0.0
        %6732 = vmatprep.subr.mxu0 0.0
        %6733 = vmatpush1.msra.mxu0 0.0
        %6734 = vmatprep.subr.mxu0 0.0
        %6735 = vmatpush1.msra.mxu0 0.0
        %6736 = vmatprep.subr.mxu0 0.0
        %6737 = vmatpush1.msra.mxu0 0.0
        %6738 = vmatprep.subr.mxu0 0.0
        %6739 = vmatpush1.msra.mxu0 0.0
        %6740 = vmatprep.subr.mxu0 0.0
        %6741 = vmatpush1.msra.mxu0 0.0
        %6742 = vmatprep.subr.mxu0 0.0
        %6743 = vmatpush1.msra.mxu0 0.0
        %6744 = vmatprep.subr.mxu0 0.0
        %6745 = vmatpush1.msra.mxu0 0.0
        %6746 = vmatprep.subr.mxu0 0.0
        %6747 = vmatpush1.msra.mxu0 0.0
        %6748 = vmatprep.subr.mxu0 0.0
        %6749 = vmatpush1.msra.mxu0 0.0
        %6750 = vmatprep.subr.mxu0 0.0
        %6751 = vmatpush1.msra.mxu0 0.0
        %6752 = vmatprep.subr.mxu0 0.0
        %6753 = vmatpush1.msra.mxu0 0.0
        %6754 = vmatprep.subr.mxu0 0.0
        %6755 = vmatpush1.msra.mxu0 0.0
        %6756 = vmatprep.subr.mxu0 0.0
        %6757 = vmatpush1.msra.mxu0 0.0
        %6758 = vmatprep.subr.mxu0 0.0
        %6759 = vmatpush1.msra.mxu0 0.0
        %6760 = vmatprep.subr.mxu0 0.0
        %6761 = vmatpush1.msra.mxu0 0.0
        %6762 = vmatprep.subr.mxu0 0.0
        %6763 = vmatpush1.msra.mxu0 0.0
        %6764 = vmatprep.subr.mxu0 0.0
        %6765 = vmatpush1.msra.mxu0 0.0
        %6766 = vmatprep.subr.mxu0 0.0
        %6767 = vmatpush1.msra.mxu0 0.0
        %6768 = vmatprep.subr.mxu0 0.0
        %6769 = vmatpush1.msra.mxu0 0.0
        %6770 = vmatprep.subr.mxu0 0.0
        %6771 = vmatpush1.msra.mxu0 0.0
        %6772 = vmatprep.subr.mxu0 0.0
        %6773 = vmatpush1.msra.mxu0 0.0
        %6774 = vmatprep.subr.mxu0 0.0
        %6775 = vmatpush1.msra.mxu0 0.0
        %6776 = vmatprep.mubr.f32.mxu0 0.0
        %6777 = vmatmul.mubr.f32.gmra.mrb[0].mxu0 %v6710
        %v6778 = vpop.f32.mrb[0].mxu0
        %v6779 = vadd.f32 0.0, %v6778
        %v6780 = vpop.f32.mrb[0].mxu0
        %6781 = vdwg.mxu0
        %v6782 = vsel %vm6709, %v6692, 0
        %6784 = vmatprep.subr.mxu0 0.0
        %6785 = vmatpush1.msra.mxu0 %v6702
        %6786 = vmatprep.subr.mxu0 0.0
        %6787 = vmatpush1.msra.mxu0 %v6703
        %6788 = vmatprep.subr.mxu0 0.0
        %6789 = vmatpush1.msra.mxu0 0.0
        %6790 = vmatprep.subr.mxu0 0.0
        %6791 = vmatpush1.msra.mxu0 0.0
        %6792 = vmatprep.subr.mxu0 0.0
        %6793 = vmatpush1.msra.mxu0 0.0
        %6794 = vmatprep.subr.mxu0 0.0
        %6795 = vmatpush1.msra.mxu0 0.0
        %6796 = vmatprep.subr.mxu0 0.0
        %6797 = vmatpush1.msra.mxu0 0.0
        %6798 = vmatprep.subr.mxu0 0.0
        %6799 = vmatpush1.msra.mxu0 0.0
        %6800 = vmatprep.subr.mxu0 0.0
        %6801 = vmatpush1.msra.mxu0 0.0
        %6802 = vmatprep.subr.mxu0 0.0
        %6803 = vmatpush1.msra.mxu0 0.0
        %6804 = vmatprep.subr.mxu0 0.0
        %6805 = vmatpush1.msra.mxu0 0.0
        %6806 = vmatprep.subr.mxu0 0.0
        %6807 = vmatpush1.msra.mxu0 0.0
        %6808 = vmatprep.subr.mxu0 0.0
        %6809 = vmatpush1.msra.mxu0 0.0
        %6810 = vmatprep.subr.mxu0 0.0
        %6811 = vmatpush1.msra.mxu0 0.0
        %6812 = vmatprep.subr.mxu0 0.0
        %6813 = vmatpush1.msra.mxu0 0.0
        %6814 = vmatprep.subr.mxu0 0.0
        %6815 = vmatpush1.msra.mxu0 0.0
        %6816 = vmatprep.subr.mxu0 0.0
        %6817 = vmatpush1.msra.mxu0 0.0
        %6818 = vmatprep.subr.mxu0 0.0
        %6819 = vmatpush1.msra.mxu0 0.0
        %6820 = vmatprep.subr.mxu0 0.0
        %6821 = vmatpush1.msra.mxu0 0.0
        %6822 = vmatprep.subr.mxu0 0.0
        %6823 = vmatpush1.msra.mxu0 0.0
        %6824 = vmatprep.subr.mxu0 0.0
        %6825 = vmatpush1.msra.mxu0 0.0
        %6826 = vmatprep.subr.mxu0 0.0
        %6827 = vmatpush1.msra.mxu0 0.0
        %6828 = vmatprep.subr.mxu0 0.0
        %6829 = vmatpush1.msra.mxu0 0.0
        %6830 = vmatprep.subr.mxu0 0.0
        %6831 = vmatpush1.msra.mxu0 0.0
        %6832 = vmatprep.subr.mxu0 0.0
        %6833 = vmatpush1.msra.mxu0 0.0
        %6834 = vmatprep.subr.mxu0 0.0
        %6835 = vmatpush1.msra.mxu0 0.0
        %6836 = vmatprep.subr.mxu0 0.0
        %6837 = vmatpush1.msra.mxu0 0.0
        %6838 = vmatprep.subr.mxu0 0.0
        %6839 = vmatpush1.msra.mxu0 0.0
        %6840 = vmatprep.subr.mxu0 0.0
        %6841 = vmatpush1.msra.mxu0 0.0
        %6842 = vmatprep.subr.mxu0 0.0
        %6843 = vmatpush1.msra.mxu0 0.0
        %6844 = vmatprep.subr.mxu0 0.0
        %6845 = vmatpush1.msra.mxu0 0.0
        %6846 = vmatprep.subr.mxu0 0.0
        %6847 = vmatpush1.msra.mxu0 0.0
        %6848 = vmatprep.mubr.f32.mxu0 0.0
        %6849 = vmatmul.mubr.f32.gmra.mrb[0].mxu0 %v6782
        %v6850 = vpop.f32.mrb[0].mxu0
        %v6851 = vadd.f32 %v6779, %v6850
        %v6852 = vpop.f32.mrb[0].mxu0
        %6853 = vdwg.mxu0
        %s6854 = scalar_lea.vmem %s5, 32
        %v6855 = vld [vmem:[%s6854] sm:$0xff]
        %v6856 = vld [vmem:[%s6854 + $0x8] sm:$0xff]
        %v6857 = vrot.slane %v6692, 4
        %v6858 = vsel %vm6709, %v6857, 0
        %6860 = vmatprep.subr.mxu0 0.0
        %6861 = vmatpush1.msra.mxu0 %v6855
        %6862 = vmatprep.subr.mxu0 0.0
        %6863 = vmatpush1.msra.mxu0 %v6856
        %6864 = vmatprep.subr.mxu0 0.0
        %6865 = vmatpush1.msra.mxu0 0.0
        %6866 = vmatprep.subr.mxu0 0.0
        %6867 = vmatpush1.msra.mxu0 0.0
        %6868 = vmatprep.subr.mxu0 0.0
        %6869 = vmatpush1.msra.mxu0 0.0
        %6870 = vmatprep.subr.mxu0 0.0
        %6871 = vmatpush1.msra.mxu0 0.0
        %6872 = vmatprep.subr.mxu0 0.0
        %6873 = vmatpush1.msra.mxu0 0.0
        %6874 = vmatprep.subr.mxu0 0.0
        %6875 = vmatpush1.msra.mxu0 0.0
        %6876 = vmatprep.subr.mxu0 0.0
        %6877 = vmatpush1.msra.mxu0 0.0
        %6878 = vmatprep.subr.mxu0 0.0
        %6879 = vmatpush1.msra.mxu0 0.0
        %6880 = vmatprep.subr.mxu0 0.0
        %6881 = vmatpush1.msra.mxu0 0.0
        %6882 = vmatprep.subr.mxu0 0.0
        %6883 = vmatpush1.msra.mxu0 0.0
        %6884 = vmatprep.subr.mxu0 0.0
        %6885 = vmatpush1.msra.mxu0 0.0
        %6886 = vmatprep.subr.mxu0 0.0
        %6887 = vmatpush1.msra.mxu0 0.0
        %6888 = vmatprep.subr.mxu0 0.0
        %6889 = vmatpush1.msra.mxu0 0.0
        %6890 = vmatprep.subr.mxu0 0.0
        %6891 = vmatpush1.msra.mxu0 0.0
        %6892 = vmatprep.subr.mxu0 0.0
        %6893 = vmatpush1.msra.mxu0 0.0
        %6894 = vmatprep.subr.mxu0 0.0
        %6895 = vmatpush1.msra.mxu0 0.0
        %6896 = vmatprep.subr.mxu0 0.0
        %6897 = vmatpush1.msra.mxu0 0.0
        %6898 = vmatprep.subr.mxu0 0.0
        %6899 = vmatpush1.msra.mxu0 0.0
        %6900 = vmatprep.subr.mxu0 0.0
        %6901 = vmatpush1.msra.mxu0 0.0
        %6902 = vmatprep.subr.mxu0 0.0
        %6903 = vmatpush1.msra.mxu0 0.0
        %6904 = vmatprep.subr.mxu0 0.0
        %6905 = vmatpush1.msra.mxu0 0.0
        %6906 = vmatprep.subr.mxu0 0.0
        %6907 = vmatpush1.msra.mxu0 0.0
        %6908 = vmatprep.subr.mxu0 0.0
        %6909 = vmatpush1.msra.mxu0 0.0
        %6910 = vmatprep.subr.mxu0 0.0
        %6911 = vmatpush1.msra.mxu0 0.0
        %6912 = vmatprep.subr.mxu0 0.0
        %6913 = vmatpush1.msra.mxu0 0.0
        %6914 = vmatprep.subr.mxu0 0.0
        %6915 = vmatpush1.msra.mxu0 0.0
        %6916 = vmatprep.subr.mxu0 0.0
        %6917 = vmatpush1.msra.mxu0 0.0
        %6918 = vmatprep.subr.mxu0 0.0
        %6919 = vmatpush1.msra.mxu0 0.0
        %6920 = vmatprep.subr.mxu0 0.0
        %6921 = vmatpush1.msra.mxu0 0.0
        %6922 = vmatprep.subr.mxu0 0.0
        %6923 = vmatpush1.msra.mxu0 0.0
        %6924 = vmatprep.mubr.f32.mxu0 0.0
        %6925 = vmatmul.mubr.f32.gmra.mrb[0].mxu0 %v6858
        %v6926 = vpop.f32.mrb[0].mxu0
        %v6927 = vadd.f32 0.0, %v6926
        %v6928 = vpop.f32.mrb[0].mxu0
        %6929 = vdwg.mxu0
        %v6930 = vadd.f32 %v6851, %v6927
        %s6931 = scalar_lea.vmem %s5, 48
        %v6932 = vld [vmem:[%s6931] sm:$0xff]
        %v6933 = vld [vmem:[%s6931 + $0x8] sm:$0xff]
        %v6934 = vrot.slane %v6692, 6
        %v6935 = vsel %vm6709, %v6934, 0
        %6937 = vmatprep.subr.mxu0 0.0
        %6938 = vmatpush1.msra.mxu0 %v6932
        %6939 = vmatprep.subr.mxu0 0.0
        %6940 = vmatpush1.msra.mxu0 %v6933
        %6941 = vmatprep.subr.mxu0 0.0
        %6942 = vmatpush1.msra.mxu0 0.0
        %6943 = vmatprep.subr.mxu0 0.0
        %6944 = vmatpush1.msra.mxu0 0.0
        %6945 = vmatprep.subr.mxu0 0.0
        %6946 = vmatpush1.msra.mxu0 0.0
        %6947 = vmatprep.subr.mxu0 0.0
        %6948 = vmatpush1.msra.mxu0 0.0
        %6949 = vmatprep.subr.mxu0 0.0
        %6950 = vmatpush1.msra.mxu0 0.0
        %6951 = vmatprep.subr.mxu0 0.0
        %6952 = vmatpush1.msra.mxu0 0.0
        %6953 = vmatprep.subr.mxu0 0.0
        %6954 = vmatpush1.msra.mxu0 0.0
        %6955 = vmatprep.subr.mxu0 0.0
        %6956 = vmatpush1.msra.mxu0 0.0
        %6957 = vmatprep.subr.mxu0 0.0
        %6958 = vmatpush1.msra.mxu0 0.0
        %6959 = vmatprep.subr.mxu0 0.0
        %6960 = vmatpush1.msra.mxu0 0.0
        %6961 = vmatprep.subr.mxu0 0.0
        %6962 = vmatpush1.msra.mxu0 0.0
        %6963 = vmatprep.subr.mxu0 0.0
        %6964 = vmatpush1.msra.mxu0 0.0
        %6965 = vmatprep.subr.mxu0 0.0
        %6966 = vmatpush1.msra.mxu0 0.0
        %6967 = vmatprep.subr.mxu0 0.0
        %6968 = vmatpush1.msra.mxu0 0.0
        %6969 = vmatprep.subr.mxu0 0.0
        %6970 = vmatpush1.msra.mxu0 0.0
        %6971 = vmatprep.subr.mxu0 0.0
        %6972 = vmatpush1.msra.mxu0 0.0
        %6973 = vmatprep.subr.mxu0 0.0
        %6974 = vmatpush1.msra.mxu0 0.0
        %6975 = vmatprep.subr.mxu0 0.0
        %6976 = vmatpush1.msra.mxu0 0.0
        %6977 = vmatprep.subr.mxu0 0.0
        %6978 = vmatpush1.msra.mxu0 0.0
        %6979 = vmatprep.subr.mxu0 0.0
        %6980 = vmatpush1.msra.mxu0 0.0
        %6981 = vmatprep.subr.mxu0 0.0
        %6982 = vmatpush1.msra.mxu0 0.0
        %6983 = vmatprep.subr.mxu0 0.0
        %6984 = vmatpush1.msra.mxu0 0.0
        %6985 = vmatprep.subr.mxu0 0.0
        %6986 = vmatpush1.msra.mxu0 0.0
        %6987 = vmatprep.subr.mxu0 0.0
        %6988 = vmatpush1.msra.mxu0 0.0
        %6989 = vmatprep.subr.mxu0 0.0
        %6990 = vmatpush1.msra.mxu0 0.0
        %6991 = vmatprep.subr.mxu0 0.0
        %6992 = vmatpush1.msra.mxu0 0.0
        %6993 = vmatprep.subr.mxu0 0.0
        %6994 = vmatpush1.msra.mxu0 0.0
        %6995 = vmatprep.subr.mxu0 0.0
        %6996 = vmatpush1.msra.mxu0 0.0
        %6997 = vmatprep.subr.mxu0 0.0
        %6998 = vmatpush1.msra.mxu0 0.0
        %6999 = vmatprep.subr.mxu0 0.0
        %7000 = vmatpush1.msra.mxu0 0.0
        %7001 = vmatprep.mubr.f32.mxu0 0.0
        %7002 = vmatmul.mubr.f32.gmra.mrb[0].mxu0 %v6935
        %v7003 = vpop.f32.mrb[0].mxu0
        %v7004 = vadd.f32 0.0, %v7003
        %v7005 = vpop.f32.mrb[0].mxu0
        %7006 = vdwg.mxu0
        %v7007 = vadd.f32 %v6930, %v7004
        %s7008 = scalar_lea.vmem %s5, 64
        %v7009 = vld [vmem:[%s7008] sm:$0xff]
        %v7010 = vld [vmem:[%s7008 + $0x8] sm:$0xff]
        %v7012 = vsel %vm6709, %v6693, 0
        %7014 = vmatprep.subr.mxu0 0.0
        %7015 = vmatpush1.msra.mxu0 %v7009
        %7016 = vmatprep.subr.mxu0 0.0
        %7017 = vmatpush1.msra.mxu0 %v7010
        %7018 = vmatprep.subr.mxu0 0.0
        %7019 = vmatpush1.msra.mxu0 0.0
        %7020 = vmatprep.subr.mxu0 0.0
        %7021 = vmatpush1.msra.mxu0 0.0
        %7022 = vmatprep.subr.mxu0 0.0
        %7023 = vmatpush1.msra.mxu0 0.0
        %7024 = vmatprep.subr.mxu0 0.0
        %7025 = vmatpush1.msra.mxu0 0.0
        %7026 = vmatprep.subr.mxu0 0.0
        %7027 = vmatpush1.msra.mxu0 0.0
        %7028 = vmatprep.subr.mxu0 0.0
        %7029 = vmatpush1.msra.mxu0 0.0
        %7030 = vmatprep.subr.mxu0 0.0
        %7031 = vmatpush1.msra.mxu0 0.0
        %7032 = vmatprep.subr.mxu0 0.0
        %7033 = vmatpush1.msra.mxu0 0.0
        %7034 = vmatprep.subr.mxu0 0.0
        %7035 = vmatpush1.msra.mxu0 0.0
        %7036 = vmatprep.subr.mxu0 0.0
        %7037 = vmatpush1.msra.mxu0 0.0
        %7038 = vmatprep.subr.mxu0 0.0
        %7039 = vmatpush1.msra.mxu0 0.0
        %7040 = vmatprep.subr.mxu0 0.0
        %7041 = vmatpush1.msra.mxu0 0.0
        %7042 = vmatprep.subr.mxu0 0.0
        %7043 = vmatpush1.msra.mxu0 0.0
        %7044 = vmatprep.subr.mxu0 0.0
        %7045 = vmatpush1.msra.mxu0 0.0
        %7046 = vmatprep.subr.mxu0 0.0
        %7047 = vmatpush1.msra.mxu0 0.0
        %7048 = vmatprep.subr.mxu0 0.0
        %7049 = vmatpush1.msra.mxu0 0.0
        %7050 = vmatprep.subr.mxu0 0.0
        %7051 = vmatpush1.msra.mxu0 0.0
        %7052 = vmatprep.subr.mxu0 0.0
        %7053 = vmatpush1.msra.mxu0 0.0
        %7054 = vmatprep.subr.mxu0 0.0
        %7055 = vmatpush1.msra.mxu0 0.0
        %7056 = vmatprep.subr.mxu0 0.0
        %7057 = vmatpush1.msra.mxu0 0.0
        %7058 = vmatprep.subr.mxu0 0.0
        %7059 = vmatpush1.msra.mxu0 0.0
        %7060 = vmatprep.subr.mxu0 0.0
        %7061 = vmatpush1.msra.mxu0 0.0
        %7062 = vmatprep.subr.mxu0 0.0
        %7063 = vmatpush1.msra.mxu0 0.0
        %7064 = vmatprep.subr.mxu0 0.0
        %7065 = vmatpush1.msra.mxu0 0.0
        %7066 = vmatprep.subr.mxu0 0.0
        %7067 = vmatpush1.msra.mxu0 0.0
        %7068 = vmatprep.subr.mxu0 0.0
        %7069 = vmatpush1.msra.mxu0 0.0
        %7070 = vmatprep.subr.mxu0 0.0
        %7071 = vmatpush1.msra.mxu0 0.0
        %7072 = vmatprep.subr.mxu0 0.0
        %7073 = vmatpush1.msra.mxu0 0.0
        %7074 = vmatprep.subr.mxu0 0.0
        %7075 = vmatpush1.msra.mxu0 0.0
        %7076 = vmatprep.subr.mxu0 0.0
        %7077 = vmatpush1.msra.mxu0 0.0
        %7078 = vmatprep.mubr.f32.mxu0 0.0
        %7079 = vmatmul.mubr.f32.gmra.mrb[0].mxu0 %v7012
        %v7080 = vpop.f32.mrb[0].mxu0
        %v7081 = vadd.f32 0.0, %v7080
        %v7082 = vpop.f32.mrb[0].mxu0
        %7083 = vdwg.mxu0
        %v7084 = vadd.f32 %v7007, %v7081
        %s7085 = scalar_lea.vmem %s5, 80
        %v7086 = vld [vmem:[%s7085] sm:$0xff]
        %v7087 = vld [vmem:[%s7085 + $0x8] sm:$0xff]
        %v7089 = vrot.slane %v6694, 4
        %v7090 = vsel %vm6709, %v7089, 0
        %7092 = vmatprep.subr.mxu0 0.0
        %7093 = vmatpush1.msra.mxu0 %v7086
        %7094 = vmatprep.subr.mxu0 0.0
        %7095 = vmatpush1.msra.mxu0 %v7087
        %7096 = vmatprep.subr.mxu0 0.0
        %7097 = vmatpush1.msra.mxu0 0.0
        %7098 = vmatprep.subr.mxu0 0.0
        %7099 = vmatpush1.msra.mxu0 0.0
        %7100 = vmatprep.subr.mxu0 0.0
        %7101 = vmatpush1.msra.mxu0 0.0
        %7102 = vmatprep.subr.mxu0 0.0
        %7103 = vmatpush1.msra.mxu0 0.0
        %7104 = vmatprep.subr.mxu0 0.0
        %7105 = vmatpush1.msra.mxu0 0.0
        %7106 = vmatprep.subr.mxu0 0.0
        %7107 = vmatpush1.msra.mxu0 0.0
        %7108 = vmatprep.subr.mxu0 0.0
        %7109 = vmatpush1.msra.mxu0 0.0
        %7110 = vmatprep.subr.mxu0 0.0
        %7111 = vmatpush1.msra.mxu0 0.0
        %7112 = vmatprep.subr.mxu0 0.0
        %7113 = vmatpush1.msra.mxu0 0.0
        %7114 = vmatprep.subr.mxu0 0.0
        %7115 = vmatpush1.msra.mxu0 0.0
        %7116 = vmatprep.subr.mxu0 0.0
        %7117 = vmatpush1.msra.mxu0 0.0
        %7118 = vmatprep.subr.mxu0 0.0
        %7119 = vmatpush1.msra.mxu0 0.0
        %7120 = vmatprep.subr.mxu0 0.0
        %7121 = vmatpush1.msra.mxu0 0.0
        %7122 = vmatprep.subr.mxu0 0.0
        %7123 = vmatpush1.msra.mxu0 0.0
        %7124 = vmatprep.subr.mxu0 0.0
        %7125 = vmatpush1.msra.mxu0 0.0
        %7126 = vmatprep.subr.mxu0 0.0
        %7127 = vmatpush1.msra.mxu0 0.0
        %7128 = vmatprep.subr.mxu0 0.0
        %7129 = vmatpush1.msra.mxu0 0.0
        %7130 = vmatprep.subr.mxu0 0.0
        %7131 = vmatpush1.msra.mxu0 0.0
        %7132 = vmatprep.subr.mxu0 0.0
        %7133 = vmatpush1.msra.mxu0 0.0
        %7134 = vmatprep.subr.mxu0 0.0
        %7135 = vmatpush1.msra.mxu0 0.0
        %7136 = vmatprep.subr.mxu0 0.0
        %7137 = vmatpush1.msra.mxu0 0.0
        %7138 = vmatprep.subr.mxu0 0.0
        %7139 = vmatpush1.msra.mxu0 0.0
        %7140 = vmatprep.subr.mxu0 0.0
        %7141 = vmatpush1.msra.mxu0 0.0
        %7142 = vmatprep.subr.mxu0 0.0
        %7143 = vmatpush1.msra.mxu0 0.0
        %7144 = vmatprep.subr.mxu0 0.0
        %7145 = vmatpush1.msra.mxu0 0.0
        %7146 = vmatprep.subr.mxu0 0.0
        %7147 = vmatpush1.msra.mxu0 0.0
        %7148 = vmatprep.subr.mxu0 0.0
        %7149 = vmatpush1.msra.mxu0 0.0
        %7150 = vmatprep.subr.mxu0 0.0
        %7151 = vmatpush1.msra.mxu0 0.0
        %7152 = vmatprep.subr.mxu0 0.0
        %7153 = vmatpush1.msra.mxu0 0.0
        %7154 = vmatprep.subr.mxu0 0.0
        %7155 = vmatpush1.msra.mxu0 0.0
        %7156 = vmatprep.mubr.f32.mxu0 0.0
        %7157 = vmatmul.mubr.f32.gmra.mrb[0].mxu0 %v7090
        %v7158 = vpop.f32.mrb[0].mxu0
        %v7159 = vadd.f32 0.0, %v7158
        %v7160 = vpop.f32.mrb[0].mxu0
        %7161 = vdwg.mxu0
        %v7162 = vadd.f32 %v7084, %v7159
        %s7163 = scalar_lea.vmem %s5, 96
        %v7164 = vld [vmem:[%s7163] sm:$0xff]
        %v7165 = vld [vmem:[%s7163 + $0x8] sm:$0xff]
        %v7166 = vrot.slane %v6694, 6
        %v7167 = vsel %vm6709, %v7166, 0
        %7169 = vmatprep.subr.mxu0 0.0
        %7170 = vmatpush1.msra.mxu0 %v7164
        %7171 = vmatprep.subr.mxu0 0.0
        %7172 = vmatpush1.msra.mxu0 %v7165
        %7173 = vmatprep.subr.mxu0 0.0
        %7174 = vmatpush1.msra.mxu0 0.0
        %7175 = vmatprep.subr.mxu0 0.0
        %7176 = vmatpush1.msra.mxu0 0.0
        %7177 = vmatprep.subr.mxu0 0.0
        %7178 = vmatpush1.msra.mxu0 0.0
        %7179 = vmatprep.subr.mxu0 0.0
        %7180 = vmatpush1.msra.mxu0 0.0
        %7181 = vmatprep.subr.mxu0 0.0
        %7182 = vmatpush1.msra.mxu0 0.0
        %7183 = vmatprep.subr.mxu0 0.0
        %7184 = vmatpush1.msra.mxu0 0.0
        %7185 = vmatprep.subr.mxu0 0.0
        %7186 = vmatpush1.msra.mxu0 0.0
        %7187 = vmatprep.subr.mxu0 0.0
        %7188 = vmatpush1.msra.mxu0 0.0
        %7189 = vmatprep.subr.mxu0 0.0
        %7190 = vmatpush1.msra.mxu0 0.0
        %7191 = vmatprep.subr.mxu0 0.0
        %7192 = vmatpush1.msra.mxu0 0.0
        %7193 = vmatprep.subr.mxu0 0.0
        %7194 = vmatpush1.msra.mxu0 0.0
        %7195 = vmatprep.subr.mxu0 0.0
        %7196 = vmatpush1.msra.mxu0 0.0
        %7197 = vmatprep.subr.mxu0 0.0
        %7198 = vmatpush1.msra.mxu0 0.0
        %7199 = vmatprep.subr.mxu0 0.0
        %7200 = vmatpush1.msra.mxu0 0.0
        %7201 = vmatprep.subr.mxu0 0.0
        %7202 = vmatpush1.msra.mxu0 0.0
        %7203 = vmatprep.subr.mxu0 0.0
        %7204 = vmatpush1.msra.mxu0 0.0
        %7205 = vmatprep.subr.mxu0 0.0
        %7206 = vmatpush1.msra.mxu0 0.0
        %7207 = vmatprep.subr.mxu0 0.0
        %7208 = vmatpush1.msra.mxu0 0.0
        %7209 = vmatprep.subr.mxu0 0.0
        %7210 = vmatpush1.msra.mxu0 0.0
        %7211 = vmatprep.subr.mxu0 0.0
        %7212 = vmatpush1.msra.mxu0 0.0
        %7213 = vmatprep.subr.mxu0 0.0
        %7214 = vmatpush1.msra.mxu0 0.0
        %7215 = vmatprep.subr.mxu0 0.0
        %7216 = vmatpush1.msra.mxu0 0.0
        %7217 = vmatprep.subr.mxu0 0.0
        %7218 = vmatpush1.msra.mxu0 0.0
        %7219 = vmatprep.subr.mxu0 0.0
        %7220 = vmatpush1.msra.mxu0 0.0
        %7221 = vmatprep.subr.mxu0 0.0
        %7222 = vmatpush1.msra.mxu0 0.0
        %7223 = vmatprep.subr.mxu0 0.0
        %7224 = vmatpush1.msra.mxu0 0.0
        %7225 = vmatprep.subr.mxu0 0.0
        %7226 = vmatpush1.msra.mxu0 0.0
        %7227 = vmatprep.subr.mxu0 0.0
        %7228 = vmatpush1.msra.mxu0 0.0
        %7229 = vmatprep.subr.mxu0 0.0
        %7230 = vmatpush1.msra.mxu0 0.0
        %7231 = vmatprep.subr.mxu0 0.0
        %7232 = vmatpush1.msra.mxu0 0.0
        %7233 = vmatprep.mubr.f32.mxu0 0.0
        %7234 = vmatmul.mubr.f32.gmra.mrb[0].mxu0 %v7167
        %v7235 = vpop.f32.mrb[0].mxu0
        %v7236 = vadd.f32 0.0, %v7235
        %v7237 = vpop.f32.mrb[0].mxu0
        %7238 = vdwg.mxu0
        %v7239 = vadd.f32 %v7162, %v7236
        %s7240 = scalar_lea.vmem %s5, 112
        %v7241 = vld [vmem:[%s7240] sm:$0xff]
        %v7242 = vld [vmem:[%s7240 + $0x8] sm:$0xff]
        %v7244 = vsel %vm6709, %v6695, 0
        %7246 = vmatprep.subr.mxu0 0.0
        %7247 = vmatpush1.msra.mxu0 %v7241
        %7248 = vmatprep.subr.mxu0 0.0
        %7249 = vmatpush1.msra.mxu0 %v7242
        %7250 = vmatprep.subr.mxu0 0.0
        %7251 = vmatpush1.msra.mxu0 0.0
        %7252 = vmatprep.subr.mxu0 0.0
        %7253 = vmatpush1.msra.mxu0 0.0
        %7254 = vmatprep.subr.mxu0 0.0
        %7255 = vmatpush1.msra.mxu0 0.0
        %7256 = vmatprep.subr.mxu0 0.0
        %7257 = vmatpush1.msra.mxu0 0.0
        %7258 = vmatprep.subr.mxu0 0.0
        %7259 = vmatpush1.msra.mxu0 0.0
        %7260 = vmatprep.subr.mxu0 0.0
        %7261 = vmatpush1.msra.mxu0 0.0
        %7262 = vmatprep.subr.mxu0 0.0
        %7263 = vmatpush1.msra.mxu0 0.0
        %7264 = vmatprep.subr.mxu0 0.0
        %7265 = vmatpush1.msra.mxu0 0.0
        %7266 = vmatprep.subr.mxu0 0.0
        %7267 = vmatpush1.msra.mxu0 0.0
        %7268 = vmatprep.subr.mxu0 0.0
        %7269 = vmatpush1.msra.mxu0 0.0
        %7270 = vmatprep.subr.mxu0 0.0
        %7271 = vmatpush1.msra.mxu0 0.0
        %7272 = vmatprep.subr.mxu0 0.0
        %7273 = vmatpush1.msra.mxu0 0.0
        %7274 = vmatprep.subr.mxu0 0.0
        %7275 = vmatpush1.msra.mxu0 0.0
        %7276 = vmatprep.subr.mxu0 0.0
        %7277 = vmatpush1.msra.mxu0 0.0
        %7278 = vmatprep.subr.mxu0 0.0
        %7279 = vmatpush1.msra.mxu0 0.0
        %7280 = vmatprep.subr.mxu0 0.0
        %7281 = vmatpush1.msra.mxu0 0.0
        %7282 = vmatprep.subr.mxu0 0.0
        %7283 = vmatpush1.msra.mxu0 0.0
        %7284 = vmatprep.subr.mxu0 0.0
        %7285 = vmatpush1.msra.mxu0 0.0
        %7286 = vmatprep.subr.mxu0 0.0
        %7287 = vmatpush1.msra.mxu0 0.0
        %7288 = vmatprep.subr.mxu0 0.0
        %7289 = vmatpush1.msra.mxu0 0.0
        %7290 = vmatprep.subr.mxu0 0.0
        %7291 = vmatpush1.msra.mxu0 0.0
        %7292 = vmatprep.subr.mxu0 0.0
        %7293 = vmatpush1.msra.mxu0 0.0
        %7294 = vmatprep.subr.mxu0 0.0
        %7295 = vmatpush1.msra.mxu0 0.0
        %7296 = vmatprep.subr.mxu0 0.0
        %7297 = vmatpush1.msra.mxu0 0.0
        %7298 = vmatprep.subr.mxu0 0.0
        %7299 = vmatpush1.msra.mxu0 0.0
        %7300 = vmatprep.subr.mxu0 0.0
        %7301 = vmatpush1.msra.mxu0 0.0
        %7302 = vmatprep.subr.mxu0 0.0
        %7303 = vmatpush1.msra.mxu0 0.0
        %7304 = vmatprep.subr.mxu0 0.0
        %7305 = vmatpush1.msra.mxu0 0.0
        %7306 = vmatprep.subr.mxu0 0.0
        %7307 = vmatpush1.msra.mxu0 0.0
        %7308 = vmatprep.subr.mxu0 0.0
        %7309 = vmatpush1.msra.mxu0 0.0
        %7310 = vmatprep.mubr.f32.mxu0 0.0
        %7311 = vmatmul.mubr.f32.gmra.mrb[0].mxu0 %v7244
        %v7312 = vpop.f32.mrb[0].mxu0
        %v7313 = vadd.f32 0.0, %v7312
        %v7314 = vpop.f32.mrb[0].mxu0
        %7315 = vdwg.mxu0
        %v7316 = vadd.f32 %v7239, %v7313
        %s7317 = scalar_lea.vmem %s5, 128
        %v7318 = vld [vmem:[%s7317] sm:$0xff]
        %v7319 = vld [vmem:[%s7317 + $0x8] sm:$0xff]
        %v7320 = vrot.slane %v6695, 2
        %v7321 = vsel %vm6709, %v7320, 0
        %7323 = vmatprep.subr.mxu0 0.0
        %7324 = vmatpush1.msra.mxu0 %v7318
        %7325 = vmatprep.subr.mxu0 0.0
        %7326 = vmatpush1.msra.mxu0 %v7319
        %7327 = vmatprep.subr.mxu0 0.0
        %7328 = vmatpush1.msra.mxu0 0.0
        %7329 = vmatprep.subr.mxu0 0.0
        %7330 = vmatpush1.msra.mxu0 0.0
        %7331 = vmatprep.subr.mxu0 0.0
        %7332 = vmatpush1.msra.mxu0 0.0
        %7333 = vmatprep.subr.mxu0 0.0
        %7334 = vmatpush1.msra.mxu0 0.0
        %7335 = vmatprep.subr.mxu0 0.0
        %7336 = vmatpush1.msra.mxu0 0.0
        %7337 = vmatprep.subr.mxu0 0.0
        %7338 = vmatpush1.msra.mxu0 0.0
        %7339 = vmatprep.subr.mxu0 0.0
        %7340 = vmatpush1.msra.mxu0 0.0
        %7341 = vmatprep.subr.mxu0 0.0
        %7342 = vmatpush1.msra.mxu0 0.0
        %7343 = vmatprep.subr.mxu0 0.0
        %7344 = vmatpush1.msra.mxu0 0.0
        %7345 = vmatprep.subr.mxu0 0.0
        %7346 = vmatpush1.msra.mxu0 0.0
        %7347 = vmatprep.subr.mxu0 0.0
        %7348 = vmatpush1.msra.mxu0 0.0
        %7349 = vmatprep.subr.mxu0 0.0
        %7350 = vmatpush1.msra.mxu0 0.0
        %7351 = vmatprep.subr.mxu0 0.0
        %7352 = vmatpush1.msra.mxu0 0.0
        %7353 = vmatprep.subr.mxu0 0.0
        %7354 = vmatpush1.msra.mxu0 0.0
        %7355 = vmatprep.subr.mxu0 0.0
        %7356 = vmatpush1.msra.mxu0 0.0
        %7357 = vmatprep.subr.mxu0 0.0
        %7358 = vmatpush1.msra.mxu0 0.0
        %7359 = vmatprep.subr.mxu0 0.0
        %7360 = vmatpush1.msra.mxu0 0.0
        %7361 = vmatprep.subr.mxu0 0.0
        %7362 = vmatpush1.msra.mxu0 0.0
        %7363 = vmatprep.subr.mxu0 0.0
        %7364 = vmatpush1.msra.mxu0 0.0
        %7365 = vmatprep.subr.mxu0 0.0
        %7366 = vmatpush1.msra.mxu0 0.0
        %7367 = vmatprep.subr.mxu0 0.0
        %7368 = vmatpush1.msra.mxu0 0.0
        %7369 = vmatprep.subr.mxu0 0.0
        %7370 = vmatpush1.msra.mxu0 0.0
        %7371 = vmatprep.subr.mxu0 0.0
        %7372 = vmatpush1.msra.mxu0 0.0
        %7373 = vmatprep.subr.mxu0 0.0
        %7374 = vmatpush1.msra.mxu0 0.0
        %7375 = vmatprep.subr.mxu0 0.0
        %7376 = vmatpush1.msra.mxu0 0.0
        %7377 = vmatprep.subr.mxu0 0.0
        %7378 = vmatpush1.msra.mxu0 0.0
        %7379 = vmatprep.subr.mxu0 0.0
        %7380 = vmatpush1.msra.mxu0 0.0
        %7381 = vmatprep.subr.mxu0 0.0
        %7382 = vmatpush1.msra.mxu0 0.0
        %7383 = vmatprep.subr.mxu0 0.0
        %7384 = vmatpush1.msra.mxu0 0.0
        %7385 = vmatprep.subr.mxu0 0.0
        %7386 = vmatpush1.msra.mxu0 0.0
        %7387 = vmatprep.mubr.f32.mxu0 0.0
        %7388 = vmatmul.mubr.f32.gmra.mrb[0].mxu0 %v7321
        %v7389 = vpop.f32.mrb[0].mxu0
        %v7390 = vadd.f32 0.0, %v7389
        %v7391 = vpop.f32.mrb[0].mxu0
        %7392 = vdwg.mxu0
        %v7393 = vadd.f32 %v7316, %v7390
        %s7394 = scalar_lea.vmem %s5, 144
        %v7395 = vld [vmem:[%s7394] sm:$0xff]
        %v7396 = vld [vmem:[%s7394 + $0x8] sm:$0xff]
        %v7397 = vrot.slane %v6695, 4
        %v7398 = vsel %vm6709, %v7397, 0
        %7400 = vmatprep.subr.mxu0 0.0
        %7401 = vmatpush1.msra.mxu0 %v7395
        %7402 = vmatprep.subr.mxu0 0.0
        %7403 = vmatpush1.msra.mxu0 %v7396
        %7404 = vmatprep.subr.mxu0 0.0
        %7405 = vmatpush1.msra.mxu0 0.0
        %7406 = vmatprep.subr.mxu0 0.0
        %7407 = vmatpush1.msra.mxu0 0.0
        %7408 = vmatprep.subr.mxu0 0.0
        %7409 = vmatpush1.msra.mxu0 0.0
        %7410 = vmatprep.subr.mxu0 0.0
        %7411 = vmatpush1.msra.mxu0 0.0
        %7412 = vmatprep.subr.mxu0 0.0
        %7413 = vmatpush1.msra.mxu0 0.0
        %7414 = vmatprep.subr.mxu0 0.0
        %7415 = vmatpush1.msra.mxu0 0.0
        %7416 = vmatprep.subr.mxu0 0.0
        %7417 = vmatpush1.msra.mxu0 0.0
        %7418 = vmatprep.subr.mxu0 0.0
        %7419 = vmatpush1.msra.mxu0 0.0
        %7420 = vmatprep.subr.mxu0 0.0
        %7421 = vmatpush1.msra.mxu0 0.0
        %7422 = vmatprep.subr.mxu0 0.0
        %7423 = vmatpush1.msra.mxu0 0.0
        %7424 = vmatprep.subr.mxu0 0.0
        %7425 = vmatpush1.msra.mxu0 0.0
        %7426 = vmatprep.subr.mxu0 0.0
        %7427 = vmatpush1.msra.mxu0 0.0
        %7428 = vmatprep.subr.mxu0 0.0
        %7429 = vmatpush1.msra.mxu0 0.0
        %7430 = vmatprep.subr.mxu0 0.0
        %7431 = vmatpush1.msra.mxu0 0.0
        %7432 = vmatprep.subr.mxu0 0.0
        %7433 = vmatpush1.msra.mxu0 0.0
        %7434 = vmatprep.subr.mxu0 0.0
        %7435 = vmatpush1.msra.mxu0 0.0
        %7436 = vmatprep.subr.mxu0 0.0
        %7437 = vmatpush1.msra.mxu0 0.0
        %7438 = vmatprep.subr.mxu0 0.0
        %7439 = vmatpush1.msra.mxu0 0.0
        %7440 = vmatprep.subr.mxu0 0.0
        %7441 = vmatpush1.msra.mxu0 0.0
        %7442 = vmatprep.subr.mxu0 0.0
        %7443 = vmatpush1.msra.mxu0 0.0
        %7444 = vmatprep.subr.mxu0 0.0
        %7445 = vmatpush1.msra.mxu0 0.0
        %7446 = vmatprep.subr.mxu0 0.0
        %7447 = vmatpush1.msra.mxu0 0.0
        %7448 = vmatprep.subr.mxu0 0.0
        %7449 = vmatpush1.msra.mxu0 0.0
        %7450 = vmatprep.subr.mxu0 0.0
        %7451 = vmatpush1.msra.mxu0 0.0
        %7452 = vmatprep.subr.mxu0 0.0
        %7453 = vmatpush1.msra.mxu0 0.0
        %7454 = vmatprep.subr.mxu0 0.0
        %7455 = vmatpush1.msra.mxu0 0.0
        %7456 = vmatprep.subr.mxu0 0.0
        %7457 = vmatpush1.msra.mxu0 0.0
        %7458 = vmatprep.subr.mxu0 0.0
        %7459 = vmatpush1.msra.mxu0 0.0
        %7460 = vmatprep.subr.mxu0 0.0
        %7461 = vmatpush1.msra.mxu0 0.0
        %7462 = vmatprep.subr.mxu0 0.0
        %7463 = vmatpush1.msra.mxu0 0.0
        %7464 = vmatprep.mubr.f32.mxu0 0.0
        %7465 = vmatmul.mubr.f32.gmra.mrb[0].mxu0 %v7398
        %v7466 = vpop.f32.mrb[0].mxu0
        %v7467 = vadd.f32 0.0, %v7466
        %v7468 = vpop.f32.mrb[0].mxu0
        %7469 = vdwg.mxu0
        %v7470 = vadd.f32 %v7393, %v7467
        %s7471 = scalar_lea.vmem %s5, 160
        %v7472 = vld [vmem:[%s7471] sm:$0xff]
        %v7473 = vld [vmem:[%s7471 + $0x8] sm:$0xff]
        %v7475 = vsel %vm6709, %v6696, 0
        %7477 = vmatprep.subr.mxu0 0.0
        %7478 = vmatpush1.msra.mxu0 %v7472
        %7479 = vmatprep.subr.mxu0 0.0
        %7480 = vmatpush1.msra.mxu0 %v7473
        %7481 = vmatprep.subr.mxu0 0.0
        %7482 = vmatpush1.msra.mxu0 0.0
        %7483 = vmatprep.subr.mxu0 0.0
        %7484 = vmatpush1.msra.mxu0 0.0
        %7485 = vmatprep.subr.mxu0 0.0
        %7486 = vmatpush1.msra.mxu0 0.0
        %7487 = vmatprep.subr.mxu0 0.0
        %7488 = vmatpush1.msra.mxu0 0.0
        %7489 = vmatprep.subr.mxu0 0.0
        %7490 = vmatpush1.msra.mxu0 0.0
        %7491 = vmatprep.subr.mxu0 0.0
        %7492 = vmatpush1.msra.mxu0 0.0
        %7493 = vmatprep.subr.mxu0 0.0
        %7494 = vmatpush1.msra.mxu0 0.0
        %7495 = vmatprep.subr.mxu0 0.0
        %7496 = vmatpush1.msra.mxu0 0.0
        %7497 = vmatprep.subr.mxu0 0.0
        %7498 = vmatpush1.msra.mxu0 0.0
        %7499 = vmatprep.subr.mxu0 0.0
        %7500 = vmatpush1.msra.mxu0 0.0
        %7501 = vmatprep.subr.mxu0 0.0
        %7502 = vmatpush1.msra.mxu0 0.0
        %7503 = vmatprep.subr.mxu0 0.0
        %7504 = vmatpush1.msra.mxu0 0.0
        %7505 = vmatprep.subr.mxu0 0.0
        %7506 = vmatpush1.msra.mxu0 0.0
        %7507 = vmatprep.subr.mxu0 0.0
        %7508 = vmatpush1.msra.mxu0 0.0
        %7509 = vmatprep.subr.mxu0 0.0
        %7510 = vmatpush1.msra.mxu0 0.0
        %7511 = vmatprep.subr.mxu0 0.0
        %7512 = vmatpush1.msra.mxu0 0.0
        %7513 = vmatprep.subr.mxu0 0.0
        %7514 = vmatpush1.msra.mxu0 0.0
        %7515 = vmatprep.subr.mxu0 0.0
        %7516 = vmatpush1.msra.mxu0 0.0
        %7517 = vmatprep.subr.mxu0 0.0
        %7518 = vmatpush1.msra.mxu0 0.0
        %7519 = vmatprep.subr.mxu0 0.0
        %7520 = vmatpush1.msra.mxu0 0.0
        %7521 = vmatprep.subr.mxu0 0.0
        %7522 = vmatpush1.msra.mxu0 0.0
        %7523 = vmatprep.subr.mxu0 0.0
        %7524 = vmatpush1.msra.mxu0 0.0
        %7525 = vmatprep.subr.mxu0 0.0
        %7526 = vmatpush1.msra.mxu0 0.0
        %7527 = vmatprep.subr.mxu0 0.0
        %7528 = vmatpush1.msra.mxu0 0.0
        %7529 = vmatprep.subr.mxu0 0.0
        %7530 = vmatpush1.msra.mxu0 0.0
        %7531 = vmatprep.subr.mxu0 0.0
        %7532 = vmatpush1.msra.mxu0 0.0
        %7533 = vmatprep.subr.mxu0 0.0
        %7534 = vmatpush1.msra.mxu0 0.0
        %7535 = vmatprep.subr.mxu0 0.0
        %7536 = vmatpush1.msra.mxu0 0.0
        %7537 = vmatprep.subr.mxu0 0.0
        %7538 = vmatpush1.msra.mxu0 0.0
        %7539 = vmatprep.subr.mxu0 0.0
        %7540 = vmatpush1.msra.mxu0 0.0
        %7541 = vmatprep.mubr.f32.mxu0 0.0
        %7542 = vmatmul.mubr.f32.gmra.mrb[0].mxu0 %v7475
        %v7543 = vpop.f32.mrb[0].mxu0
        %v7544 = vadd.f32 0.0, %v7543
        %v7545 = vpop.f32.mrb[0].mxu0
        %7546 = vdwg.mxu0
        %v7547 = vadd.f32 %v7470, %v7544
        %s7548 = scalar_lea.vmem %s5, 176
        %v7549 = vld [vmem:[%s7548] sm:$0xff]
        %v7550 = vld [vmem:[%s7548 + $0x8] sm:$0xff]
        %v7551 = vrot.slane %v6696, 2
        %v7552 = vsel %vm6709, %v7551, 0
        %7554 = vmatprep.subr.mxu0 0.0
        %7555 = vmatpush1.msra.mxu0 %v7549
        %7556 = vmatprep.subr.mxu0 0.0
        %7557 = vmatpush1.msra.mxu0 %v7550
        %7558 = vmatprep.subr.mxu0 0.0
        %7559 = vmatpush1.msra.mxu0 0.0
        %7560 = vmatprep.subr.mxu0 0.0
        %7561 = vmatpush1.msra.mxu0 0.0
        %7562 = vmatprep.subr.mxu0 0.0
        %7563 = vmatpush1.msra.mxu0 0.0
        %7564 = vmatprep.subr.mxu0 0.0
        %7565 = vmatpush1.msra.mxu0 0.0
        %7566 = vmatprep.subr.mxu0 0.0
        %7567 = vmatpush1.msra.mxu0 0.0
        %7568 = vmatprep.subr.mxu0 0.0
        %7569 = vmatpush1.msra.mxu0 0.0
        %7570 = vmatprep.subr.mxu0 0.0
        %7571 = vmatpush1.msra.mxu0 0.0
        %7572 = vmatprep.subr.mxu0 0.0
        %7573 = vmatpush1.msra.mxu0 0.0
        %7574 = vmatprep.subr.mxu0 0.0
        %7575 = vmatpush1.msra.mxu0 0.0
        %7576 = vmatprep.subr.mxu0 0.0
        %7577 = vmatpush1.msra.mxu0 0.0
        %7578 = vmatprep.subr.mxu0 0.0
        %7579 = vmatpush1.msra.mxu0 0.0
        %7580 = vmatprep.subr.mxu0 0.0
        %7581 = vmatpush1.msra.mxu0 0.0
        %7582 = vmatprep.subr.mxu0 0.0
        %7583 = vmatpush1.msra.mxu0 0.0
        %7584 = vmatprep.subr.mxu0 0.0
        %7585 = vmatpush1.msra.mxu0 0.0
        %7586 = vmatprep.subr.mxu0 0.0
        %7587 = vmatpush1.msra.mxu0 0.0
        %7588 = vmatprep.subr.mxu0 0.0
        %7589 = vmatpush1.msra.mxu0 0.0
        %7590 = vmatprep.subr.mxu0 0.0
        %7591 = vmatpush1.msra.mxu0 0.0
        %7592 = vmatprep.subr.mxu0 0.0
        %7593 = vmatpush1.msra.mxu0 0.0
        %7594 = vmatprep.subr.mxu0 0.0
        %7595 = vmatpush1.msra.mxu0 0.0
        %7596 = vmatprep.subr.mxu0 0.0
        %7597 = vmatpush1.msra.mxu0 0.0
        %7598 = vmatprep.subr.mxu0 0.0
        %7599 = vmatpush1.msra.mxu0 0.0
        %7600 = vmatprep.subr.mxu0 0.0
        %7601 = vmatpush1.msra.mxu0 0.0
        %7602 = vmatprep.subr.mxu0 0.0
        %7603 = vmatpush1.msra.mxu0 0.0
        %7604 = vmatprep.subr.mxu0 0.0
        %7605 = vmatpush1.msra.mxu0 0.0
        %7606 = vmatprep.subr.mxu0 0.0
        %7607 = vmatpush1.msra.mxu0 0.0
        %7608 = vmatprep.subr.mxu0 0.0
        %7609 = vmatpush1.msra.mxu0 0.0
        %7610 = vmatprep.subr.mxu0 0.0
        %7611 = vmatpush1.msra.mxu0 0.0
        %7612 = vmatprep.subr.mxu0 0.0
        %7613 = vmatpush1.msra.mxu0 0.0
        %7614 = vmatprep.subr.mxu0 0.0
        %7615 = vmatpush1.msra.mxu0 0.0
        %7616 = vmatprep.subr.mxu0 0.0
        %7617 = vmatpush1.msra.mxu0 0.0
        %7618 = vmatprep.mubr.f32.mxu0 0.0
        %7619 = vmatmul.mubr.f32.gmra.mrb[0].mxu0 %v7552
        %v7620 = vpop.f32.mrb[0].mxu0
        %v7621 = vadd.f32 0.0, %v7620
        %v7622 = vpop.f32.mrb[0].mxu0
        %7623 = vdwg.mxu0
        %v7624 = vadd.f32 %v7547, %v7621
        %s7625 = scalar_lea.vmem %s5, 192
        %v7626 = vld [vmem:[%s7625] sm:$0xff]
        %v7627 = vld [vmem:[%s7625 + $0x8] sm:$0xff]
        %v7628 = vrot.slane %v6696, 4
        %v7629 = vsel %vm6709, %v7628, 0
        %7631 = vmatprep.subr.mxu0 0.0
        %7632 = vmatpush1.msra.mxu0 %v7626
        %7633 = vmatprep.subr.mxu0 0.0
        %7634 = vmatpush1.msra.mxu0 %v7627
        %7635 = vmatprep.subr.mxu0 0.0
        %7636 = vmatpush1.msra.mxu0 0.0
        %7637 = vmatprep.subr.mxu0 0.0
        %7638 = vmatpush1.msra.mxu0 0.0
        %7639 = vmatprep.subr.mxu0 0.0
        %7640 = vmatpush1.msra.mxu0 0.0
        %7641 = vmatprep.subr.mxu0 0.0
        %7642 = vmatpush1.msra.mxu0 0.0
        %7643 = vmatprep.subr.mxu0 0.0
        %7644 = vmatpush1.msra.mxu0 0.0
        %7645 = vmatprep.subr.mxu0 0.0
        %7646 = vmatpush1.msra.mxu0 0.0
        %7647 = vmatprep.subr.mxu0 0.0
        %7648 = vmatpush1.msra.mxu0 0.0
        %7649 = vmatprep.subr.mxu0 0.0
        %7650 = vmatpush1.msra.mxu0 0.0
        %7651 = vmatprep.subr.mxu0 0.0
        %7652 = vmatpush1.msra.mxu0 0.0
        %7653 = vmatprep.subr.mxu0 0.0
        %7654 = vmatpush1.msra.mxu0 0.0
        %7655 = vmatprep.subr.mxu0 0.0
        %7656 = vmatpush1.msra.mxu0 0.0
        %7657 = vmatprep.subr.mxu0 0.0
        %7658 = vmatpush1.msra.mxu0 0.0
        %7659 = vmatprep.subr.mxu0 0.0
        %7660 = vmatpush1.msra.mxu0 0.0
        %7661 = vmatprep.subr.mxu0 0.0
        %7662 = vmatpush1.msra.mxu0 0.0
        %7663 = vmatprep.subr.mxu0 0.0
        %7664 = vmatpush1.msra.mxu0 0.0
        %7665 = vmatprep.subr.mxu0 0.0
        %7666 = vmatpush1.msra.mxu0 0.0
        %7667 = vmatprep.subr.mxu0 0.0
        %7668 = vmatpush1.msra.mxu0 0.0
        %7669 = vmatprep.subr.mxu0 0.0
        %7670 = vmatpush1.msra.mxu0 0.0
        %7671 = vmatprep.subr.mxu0 0.0
        %7672 = vmatpush1.msra.mxu0 0.0
        %7673 = vmatprep.subr.mxu0 0.0
        %7674 = vmatpush1.msra.mxu0 0.0
        %7675 = vmatprep.subr.mxu0 0.0
        %7676 = vmatpush1.msra.mxu0 0.0
        %7677 = vmatprep.subr.mxu0 0.0
        %7678 = vmatpush1.msra.mxu0 0.0
        %7679 = vmatprep.subr.mxu0 0.0
        %7680 = vmatpush1.msra.mxu0 0.0
        %7681 = vmatprep.subr.mxu0 0.0
        %7682 = vmatpush1.msra.mxu0 0.0
        %7683 = vmatprep.subr.mxu0 0.0
        %7684 = vmatpush1.msra.mxu0 0.0
        %7685 = vmatprep.subr.mxu0 0.0
        %7686 = vmatpush1.msra.mxu0 0.0
        %7687 = vmatprep.subr.mxu0 0.0
        %7688 = vmatpush1.msra.mxu0 0.0
        %7689 = vmatprep.subr.mxu0 0.0
        %7690 = vmatpush1.msra.mxu0 0.0
        %7691 = vmatprep.subr.mxu0 0.0
        %7692 = vmatpush1.msra.mxu0 0.0
        %7693 = vmatprep.subr.mxu0 0.0
        %7694 = vmatpush1.msra.mxu0 0.0
        %7695 = vmatprep.mubr.f32.mxu0 0.0
        %7696 = vmatmul.mubr.f32.gmra.mrb[0].mxu0 %v7629
        %v7697 = vpop.f32.mrb[0].mxu0
        %v7698 = vadd.f32 0.0, %v7697
        %v7699 = vpop.f32.mrb[0].mxu0
        %7700 = vdwg.mxu0
        %v7701 = vadd.f32 %v7624, %v7698
        %s7702 = scalar_lea.vmem %s5, 208
        %v7703 = vld [vmem:[%s7702] sm:$0xff]
        %v7704 = vld [vmem:[%s7702 + $0x8] sm:$0xff]
        %v7705 = vrot.slane %v6696, 6
        %v7706 = vsel %vm6709, %v7705, 0
        %7708 = vmatprep.subr.mxu0 0.0
        %7709 = vmatpush1.msra.mxu0 %v7703
        %7710 = vmatprep.subr.mxu0 0.0
        %7711 = vmatpush1.msra.mxu0 %v7704
        %7712 = vmatprep.subr.mxu0 0.0
        %7713 = vmatpush1.msra.mxu0 0.0
        %7714 = vmatprep.subr.mxu0 0.0
        %7715 = vmatpush1.msra.mxu0 0.0
        %7716 = vmatprep.subr.mxu0 0.0
        %7717 = vmatpush1.msra.mxu0 0.0
        %7718 = vmatprep.subr.mxu0 0.0
        %7719 = vmatpush1.msra.mxu0 0.0
        %7720 = vmatprep.subr.mxu0 0.0
        %7721 = vmatpush1.msra.mxu0 0.0
        %7722 = vmatprep.subr.mxu0 0.0
        %7723 = vmatpush1.msra.mxu0 0.0
        %7724 = vmatprep.subr.mxu0 0.0
        %7725 = vmatpush1.msra.mxu0 0.0
        %7726 = vmatprep.subr.mxu0 0.0
        %7727 = vmatpush1.msra.mxu0 0.0
        %7728 = vmatprep.subr.mxu0 0.0
        %7729 = vmatpush1.msra.mxu0 0.0
        %7730 = vmatprep.subr.mxu0 0.0
        %7731 = vmatpush1.msra.mxu0 0.0
        %7732 = vmatprep.subr.mxu0 0.0
        %7733 = vmatpush1.msra.mxu0 0.0
        %7734 = vmatprep.subr.mxu0 0.0
        %7735 = vmatpush1.msra.mxu0 0.0
        %7736 = vmatprep.subr.mxu0 0.0
        %7737 = vmatpush1.msra.mxu0 0.0
        %7738 = vmatprep.subr.mxu0 0.0
        %7739 = vmatpush1.msra.mxu0 0.0
        %7740 = vmatprep.subr.mxu0 0.0
        %7741 = vmatpush1.msra.mxu0 0.0
        %7742 = vmatprep.subr.mxu0 0.0
        %7743 = vmatpush1.msra.mxu0 0.0
        %7744 = vmatprep.subr.mxu0 0.0
        %7745 = vmatpush1.msra.mxu0 0.0
        %7746 = vmatprep.subr.mxu0 0.0
        %7747 = vmatpush1.msra.mxu0 0.0
        %7748 = vmatprep.subr.mxu0 0.0
        %7749 = vmatpush1.msra.mxu0 0.0
        %7750 = vmatprep.subr.mxu0 0.0
        %7751 = vmatpush1.msra.mxu0 0.0
        %7752 = vmatprep.subr.mxu0 0.0
        %7753 = vmatpush1.msra.mxu0 0.0
        %7754 = vmatprep.subr.mxu0 0.0
        %7755 = vmatpush1.msra.mxu0 0.0
        %7756 = vmatprep.subr.mxu0 0.0
        %7757 = vmatpush1.msra.mxu0 0.0
        %7758 = vmatprep.subr.mxu0 0.0
        %7759 = vmatpush1.msra.mxu0 0.0
        %7760 = vmatprep.subr.mxu0 0.0
        %7761 = vmatpush1.msra.mxu0 0.0
        %7762 = vmatprep.subr.mxu0 0.0
        %7763 = vmatpush1.msra.mxu0 0.0
        %7764 = vmatprep.subr.mxu0 0.0
        %7765 = vmatpush1.msra.mxu0 0.0
        %7766 = vmatprep.subr.mxu0 0.0
        %7767 = vmatpush1.msra.mxu0 0.0
        %7768 = vmatprep.subr.mxu0 0.0
        %7769 = vmatpush1.msra.mxu0 0.0
        %7770 = vmatprep.subr.mxu0 0.0
        %7771 = vmatpush1.msra.mxu0 0.0
        %7772 = vmatprep.mubr.f32.mxu0 0.0
        %7773 = vmatmul.mubr.f32.gmra.mrb[0].mxu0 %v7706
        %v7774 = vpop.f32.mrb[0].mxu0
        %v7775 = vadd.f32 0.0, %v7774
        %v7776 = vpop.f32.mrb[0].mxu0
        %7777 = vdwg.mxu0
        %v7778 = vadd.f32 %v7701, %v7775
        %s7779 = scalar_lea.vmem %s5, 224
        %v7780 = vld [vmem:[%s7779] sm:$0xff]
        %v7781 = vld [vmem:[%s7779 + $0x8] sm:$0xff]
        %v7783 = vsel %vm6709, %v6697, 0
        %7785 = vmatprep.subr.mxu0 0.0
        %7786 = vmatpush1.msra.mxu0 %v7780
        %7787 = vmatprep.subr.mxu0 0.0
        %7788 = vmatpush1.msra.mxu0 %v7781
        %7789 = vmatprep.subr.mxu0 0.0
        %7790 = vmatpush1.msra.mxu0 0.0
        %7791 = vmatprep.subr.mxu0 0.0
        %7792 = vmatpush1.msra.mxu0 0.0
        %7793 = vmatprep.subr.mxu0 0.0
        %7794 = vmatpush1.msra.mxu0 0.0
        %7795 = vmatprep.subr.mxu0 0.0
        %7796 = vmatpush1.msra.mxu0 0.0
        %7797 = vmatprep.subr.mxu0 0.0
        %7798 = vmatpush1.msra.mxu0 0.0
        %7799 = vmatprep.subr.mxu0 0.0
        %7800 = vmatpush1.msra.mxu0 0.0
        %7801 = vmatprep.subr.mxu0 0.0
        %7802 = vmatpush1.msra.mxu0 0.0
        %7803 = vmatprep.subr.mxu0 0.0
        %7804 = vmatpush1.msra.mxu0 0.0
        %7805 = vmatprep.subr.mxu0 0.0
        %7806 = vmatpush1.msra.mxu0 0.0
        %7807 = vmatprep.subr.mxu0 0.0
        %7808 = vmatpush1.msra.mxu0 0.0
        %7809 = vmatprep.subr.mxu0 0.0
        %7810 = vmatpush1.msra.mxu0 0.0
        %7811 = vmatprep.subr.mxu0 0.0
        %7812 = vmatpush1.msra.mxu0 0.0
        %7813 = vmatprep.subr.mxu0 0.0
        %7814 = vmatpush1.msra.mxu0 0.0
        %7815 = vmatprep.subr.mxu0 0.0
        %7816 = vmatpush1.msra.mxu0 0.0
        %7817 = vmatprep.subr.mxu0 0.0
        %7818 = vmatpush1.msra.mxu0 0.0
        %7819 = vmatprep.subr.mxu0 0.0
        %7820 = vmatpush1.msra.mxu0 0.0
        %7821 = vmatprep.subr.mxu0 0.0
        %7822 = vmatpush1.msra.mxu0 0.0
        %7823 = vmatprep.subr.mxu0 0.0
        %7824 = vmatpush1.msra.mxu0 0.0
        %7825 = vmatprep.subr.mxu0 0.0
        %7826 = vmatpush1.msra.mxu0 0.0
        %7827 = vmatprep.subr.mxu0 0.0
        %7828 = vmatpush1.msra.mxu0 0.0
        %7829 = vmatprep.subr.mxu0 0.0
        %7830 = vmatpush1.msra.mxu0 0.0
        %7831 = vmatprep.subr.mxu0 0.0
        %7832 = vmatpush1.msra.mxu0 0.0
        %7833 = vmatprep.subr.mxu0 0.0
        %7834 = vmatpush1.msra.mxu0 0.0
        %7835 = vmatprep.subr.mxu0 0.0
        %7836 = vmatpush1.msra.mxu0 0.0
        %7837 = vmatprep.subr.mxu0 0.0
        %7838 = vmatpush1.msra.mxu0 0.0
        %7839 = vmatprep.subr.mxu0 0.0
        %7840 = vmatpush1.msra.mxu0 0.0
        %7841 = vmatprep.subr.mxu0 0.0
        %7842 = vmatpush1.msra.mxu0 0.0
        %7843 = vmatprep.subr.mxu0 0.0
        %7844 = vmatpush1.msra.mxu0 0.0
        %7845 = vmatprep.subr.mxu0 0.0
        %7846 = vmatpush1.msra.mxu0 0.0
        %7847 = vmatprep.subr.mxu0 0.0
        %7848 = vmatpush1.msra.mxu0 0.0
        %7849 = vmatprep.mubr.f32.mxu0 0.0
        %7850 = vmatmul.mubr.f32.gmra.mrb[0].mxu0 %v7783
        %v7851 = vpop.f32.mrb[0].mxu0
        %v7852 = vadd.f32 0.0, %v7851
        %v7853 = vpop.f32.mrb[0].mxu0
        %7854 = vdwg.mxu0
        %v7855 = vadd.f32 %v7778, %v7852
        %s7856 = scalar_lea.vmem %s5, 240
        %v7857 = vld [vmem:[%s7856] sm:$0xff]
        %v7858 = vld [vmem:[%s7856 + $0x8] sm:$0xff]
        %v7860 = vrot.slane %v6698, 4
        %v7861 = vsel %vm6709, %v7860, 0
        %7863 = vmatprep.subr.mxu0 0.0
        %7864 = vmatpush1.msra.mxu0 %v7857
        %7865 = vmatprep.subr.mxu0 0.0
        %7866 = vmatpush1.msra.mxu0 %v7858
        %7867 = vmatprep.subr.mxu0 0.0
        %7868 = vmatpush1.msra.mxu0 0.0
        %7869 = vmatprep.subr.mxu0 0.0
        %7870 = vmatpush1.msra.mxu0 0.0
        %7871 = vmatprep.subr.mxu0 0.0
        %7872 = vmatpush1.msra.mxu0 0.0
        %7873 = vmatprep.subr.mxu0 0.0
        %7874 = vmatpush1.msra.mxu0 0.0
        %7875 = vmatprep.subr.mxu0 0.0
        %7876 = vmatpush1.msra.mxu0 0.0
        %7877 = vmatprep.subr.mxu0 0.0
        %7878 = vmatpush1.msra.mxu0 0.0
        %7879 = vmatprep.subr.mxu0 0.0
        %7880 = vmatpush1.msra.mxu0 0.0
        %7881 = vmatprep.subr.mxu0 0.0
        %7882 = vmatpush1.msra.mxu0 0.0
        %7883 = vmatprep.subr.mxu0 0.0
        %7884 = vmatpush1.msra.mxu0 0.0
        %7885 = vmatprep.subr.mxu0 0.0
        %7886 = vmatpush1.msra.mxu0 0.0
        %7887 = vmatprep.subr.mxu0 0.0
        %7888 = vmatpush1.msra.mxu0 0.0
        %7889 = vmatprep.subr.mxu0 0.0
        %7890 = vmatpush1.msra.mxu0 0.0
        %7891 = vmatprep.subr.mxu0 0.0
        %7892 = vmatpush1.msra.mxu0 0.0
        %7893 = vmatprep.subr.mxu0 0.0
        %7894 = vmatpush1.msra.mxu0 0.0
        %7895 = vmatprep.subr.mxu0 0.0
        %7896 = vmatpush1.msra.mxu0 0.0
        %7897 = vmatprep.subr.mxu0 0.0
        %7898 = vmatpush1.msra.mxu0 0.0
        %7899 = vmatprep.subr.mxu0 0.0
        %7900 = vmatpush1.msra.mxu0 0.0
        %7901 = vmatprep.subr.mxu0 0.0
        %7902 = vmatpush1.msra.mxu0 0.0
        %7903 = vmatprep.subr.mxu0 0.0
        %7904 = vmatpush1.msra.mxu0 0.0
        %7905 = vmatprep.subr.mxu0 0.0
        %7906 = vmatpush1.msra.mxu0 0.0
        %7907 = vmatprep.subr.mxu0 0.0
        %7908 = vmatpush1.msra.mxu0 0.0
        %7909 = vmatprep.subr.mxu0 0.0
        %7910 = vmatpush1.msra.mxu0 0.0
        %7911 = vmatprep.subr.mxu0 0.0
        %7912 = vmatpush1.msra.mxu0 0.0
        %7913 = vmatprep.subr.mxu0 0.0
        %7914 = vmatpush1.msra.mxu0 0.0
        %7915 = vmatprep.subr.mxu0 0.0
        %7916 = vmatpush1.msra.mxu0 0.0
        %7917 = vmatprep.subr.mxu0 0.0
        %7918 = vmatpush1.msra.mxu0 0.0
        %7919 = vmatprep.subr.mxu0 0.0
        %7920 = vmatpush1.msra.mxu0 0.0
        %7921 = vmatprep.subr.mxu0 0.0
        %7922 = vmatpush1.msra.mxu0 0.0
        %7923 = vmatprep.subr.mxu0 0.0
        %7924 = vmatpush1.msra.mxu0 0.0
        %7925 = vmatprep.subr.mxu0 0.0
        %7926 = vmatpush1.msra.mxu0 0.0
        %7927 = vmatprep.mubr.f32.mxu0 0.0
        %7928 = vmatmul.mubr.f32.gmra.mrb[0].mxu0 %v7861
        %v7929 = vpop.f32.mrb[0].mxu0
        %v7930 = vadd.f32 0.0, %v7929
        %v7931 = vpop.f32.mrb[0].mxu0
        %7932 = vdwg.mxu0
        %v7933 = vadd.f32 %v7855, %v7930
        %s7934 = scalar_lea.vmem %s5, 256
        %v7935 = vld [vmem:[%s7934] sm:$0xff]
        %v7936 = vld [vmem:[%s7934 + $0x8] sm:$0xff]
        %v7937 = vrot.slane %v6698, 6
        %v7938 = vsel %vm6709, %v7937, 0
        %7940 = vmatprep.subr.mxu0 0.0
        %7941 = vmatpush1.msra.mxu0 %v7935
        %7942 = vmatprep.subr.mxu0 0.0
        %7943 = vmatpush1.msra.mxu0 %v7936
        %7944 = vmatprep.subr.mxu0 0.0
        %7945 = vmatpush1.msra.mxu0 0.0
        %7946 = vmatprep.subr.mxu0 0.0
        %7947 = vmatpush1.msra.mxu0 0.0
        %7948 = vmatprep.subr.mxu0 0.0
        %7949 = vmatpush1.msra.mxu0 0.0
        %7950 = vmatprep.subr.mxu0 0.0
        %7951 = vmatpush1.msra.mxu0 0.0
        %7952 = vmatprep.subr.mxu0 0.0
        %7953 = vmatpush1.msra.mxu0 0.0
        %7954 = vmatprep.subr.mxu0 0.0
        %7955 = vmatpush1.msra.mxu0 0.0
        %7956 = vmatprep.subr.mxu0 0.0
        %7957 = vmatpush1.msra.mxu0 0.0
        %7958 = vmatprep.subr.mxu0 0.0
        %7959 = vmatpush1.msra.mxu0 0.0
        %7960 = vmatprep.subr.mxu0 0.0
        %7961 = vmatpush1.msra.mxu0 0.0
        %7962 = vmatprep.subr.mxu0 0.0
        %7963 = vmatpush1.msra.mxu0 0.0
        %7964 = vmatprep.subr.mxu0 0.0
        %7965 = vmatpush1.msra.mxu0 0.0
        %7966 = vmatprep.subr.mxu0 0.0
        %7967 = vmatpush1.msra.mxu0 0.0
        %7968 = vmatprep.subr.mxu0 0.0
        %7969 = vmatpush1.msra.mxu0 0.0
        %7970 = vmatprep.subr.mxu0 0.0
        %7971 = vmatpush1.msra.mxu0 0.0
        %7972 = vmatprep.subr.mxu0 0.0
        %7973 = vmatpush1.msra.mxu0 0.0
        %7974 = vmatprep.subr.mxu0 0.0
        %7975 = vmatpush1.msra.mxu0 0.0
        %7976 = vmatprep.subr.mxu0 0.0
        %7977 = vmatpush1.msra.mxu0 0.0
        %7978 = vmatprep.subr.mxu0 0.0
        %7979 = vmatpush1.msra.mxu0 0.0
        %7980 = vmatprep.subr.mxu0 0.0
        %7981 = vmatpush1.msra.mxu0 0.0
        %7982 = vmatprep.subr.mxu0 0.0
        %7983 = vmatpush1.msra.mxu0 0.0
        %7984 = vmatprep.subr.mxu0 0.0
        %7985 = vmatpush1.msra.mxu0 0.0
        %7986 = vmatprep.subr.mxu0 0.0
        %7987 = vmatpush1.msra.mxu0 0.0
        %7988 = vmatprep.subr.mxu0 0.0
        %7989 = vmatpush1.msra.mxu0 0.0
        %7990 = vmatprep.subr.mxu0 0.0
        %7991 = vmatpush1.msra.mxu0 0.0
        %7992 = vmatprep.subr.mxu0 0.0
        %7993 = vmatpush1.msra.mxu0 0.0
        %7994 = vmatprep.subr.mxu0 0.0
        %7995 = vmatpush1.msra.mxu0 0.0
        %7996 = vmatprep.subr.mxu0 0.0
        %7997 = vmatpush1.msra.mxu0 0.0
        %7998 = vmatprep.subr.mxu0 0.0
        %7999 = vmatpush1.msra.mxu0 0.0
        %8000 = vmatprep.subr.mxu0 0.0
        %8001 = vmatpush1.msra.mxu0 0.0
        %8002 = vmatprep.subr.mxu0 0.0
        %8003 = vmatpush1.msra.mxu0 0.0
        %8004 = vmatprep.mubr.f32.mxu0 0.0
        %8005 = vmatmul.mubr.f32.gmra.mrb[0].mxu0 %v7938
        %v8006 = vpop.f32.mrb[0].mxu0
        %v8007 = vadd.f32 0.0, %v8006
        %v8008 = vpop.f32.mrb[0].mxu0
        %8009 = vdwg.mxu0
        %v8010 = vadd.f32 %v7933, %v8007
        %s8011 = scalar_lea.vmem %s5, 272
        %v8012 = vld [vmem:[%s8011] sm:$0xff]
        %v8013 = vld [vmem:[%s8011 + $0x8] sm:$0xff]
        %v8015 = vsel %vm6709, %v6699, 0
        %8017 = vmatprep.subr.mxu0 0.0
        %8018 = vmatpush1.msra.mxu0 %v8012
        %8019 = vmatprep.subr.mxu0 0.0
        %8020 = vmatpush1.msra.mxu0 %v8013
        %8021 = vmatprep.subr.mxu0 0.0
        %8022 = vmatpush1.msra.mxu0 0.0
        %8023 = vmatprep.subr.mxu0 0.0
        %8024 = vmatpush1.msra.mxu0 0.0
        %8025 = vmatprep.subr.mxu0 0.0
        %8026 = vmatpush1.msra.mxu0 0.0
        %8027 = vmatprep.subr.mxu0 0.0
        %8028 = vmatpush1.msra.mxu0 0.0
        %8029 = vmatprep.subr.mxu0 0.0
        %8030 = vmatpush1.msra.mxu0 0.0
        %8031 = vmatprep.subr.mxu0 0.0
        %8032 = vmatpush1.msra.mxu0 0.0
        %8033 = vmatprep.subr.mxu0 0.0
        %8034 = vmatpush1.msra.mxu0 0.0
        %8035 = vmatprep.subr.mxu0 0.0
        %8036 = vmatpush1.msra.mxu0 0.0
        %8037 = vmatprep.subr.mxu0 0.0
        %8038 = vmatpush1.msra.mxu0 0.0
        %8039 = vmatprep.subr.mxu0 0.0
        %8040 = vmatpush1.msra.mxu0 0.0
        %8041 = vmatprep.subr.mxu0 0.0
        %8042 = vmatpush1.msra.mxu0 0.0
        %8043 = vmatprep.subr.mxu0 0.0
        %8044 = vmatpush1.msra.mxu0 0.0
        %8045 = vmatprep.subr.mxu0 0.0
        %8046 = vmatpush1.msra.mxu0 0.0
        %8047 = vmatprep.subr.mxu0 0.0
        %8048 = vmatpush1.msra.mxu0 0.0
        %8049 = vmatprep.subr.mxu0 0.0
        %8050 = vmatpush1.msra.mxu0 0.0
        %8051 = vmatprep.subr.mxu0 0.0
        %8052 = vmatpush1.msra.mxu0 0.0
        %8053 = vmatprep.subr.mxu0 0.0
        %8054 = vmatpush1.msra.mxu0 0.0
        %8055 = vmatprep.subr.mxu0 0.0
        %8056 = vmatpush1.msra.mxu0 0.0
        %8057 = vmatprep.subr.mxu0 0.0
        %8058 = vmatpush1.msra.mxu0 0.0
        %8059 = vmatprep.subr.mxu0 0.0
        %8060 = vmatpush1.msra.mxu0 0.0
        %8061 = vmatprep.subr.mxu0 0.0
        %8062 = vmatpush1.msra.mxu0 0.0
        %8063 = vmatprep.subr.mxu0 0.0
        %8064 = vmatpush1.msra.mxu0 0.0
        %8065 = vmatprep.subr.mxu0 0.0
        %8066 = vmatpush1.msra.mxu0 0.0
        %8067 = vmatprep.subr.mxu0 0.0
        %8068 = vmatpush1.msra.mxu0 0.0
        %8069 = vmatprep.subr.mxu0 0.0
        %8070 = vmatpush1.msra.mxu0 0.0
        %8071 = vmatprep.subr.mxu0 0.0
        %8072 = vmatpush1.msra.mxu0 0.0
        %8073 = vmatprep.subr.mxu0 0.0
        %8074 = vmatpush1.msra.mxu0 0.0
        %8075 = vmatprep.subr.mxu0 0.0
        %8076 = vmatpush1.msra.mxu0 0.0
        %8077 = vmatprep.subr.mxu0 0.0
        %8078 = vmatpush1.msra.mxu0 0.0
        %8079 = vmatprep.subr.mxu0 0.0
        %8080 = vmatpush1.msra.mxu0 0.0
        %8081 = vmatprep.mubr.f32.mxu0 0.0
        %8082 = vmatmul.mubr.f32.gmra.mrb[0].mxu0 %v8015
        %v8083 = vpop.f32.mrb[0].mxu0
        %v8084 = vadd.f32 0.0, %v8083
        %v8085 = vpop.f32.mrb[0].mxu0
        %8086 = vdwg.mxu0
        %v8087 = vadd.f32 %v8010, %v8084
        %s8088 = scalar_lea.vmem %s5, 288
        %v8089 = vld [vmem:[%s8088] sm:$0xff]
        %v8090 = vld [vmem:[%s8088 + $0x8] sm:$0xff]
        %v8091 = vrot.slane %v6699, 2
        %v8092 = vsel %vm6709, %v8091, 0
        %8094 = vmatprep.subr.mxu0 0.0
        %8095 = vmatpush1.msra.mxu0 %v8089
        %8096 = vmatprep.subr.mxu0 0.0
        %8097 = vmatpush1.msra.mxu0 %v8090
        %8098 = vmatprep.subr.mxu0 0.0
        %8099 = vmatpush1.msra.mxu0 0.0
        %8100 = vmatprep.subr.mxu0 0.0
        %8101 = vmatpush1.msra.mxu0 0.0
        %8102 = vmatprep.subr.mxu0 0.0
        %8103 = vmatpush1.msra.mxu0 0.0
        %8104 = vmatprep.subr.mxu0 0.0
        %8105 = vmatpush1.msra.mxu0 0.0
        %8106 = vmatprep.subr.mxu0 0.0
        %8107 = vmatpush1.msra.mxu0 0.0
        %8108 = vmatprep.subr.mxu0 0.0
        %8109 = vmatpush1.msra.mxu0 0.0
        %8110 = vmatprep.subr.mxu0 0.0
        %8111 = vmatpush1.msra.mxu0 0.0
        %8112 = vmatprep.subr.mxu0 0.0
        %8113 = vmatpush1.msra.mxu0 0.0
        %8114 = vmatprep.subr.mxu0 0.0
        %8115 = vmatpush1.msra.mxu0 0.0
        %8116 = vmatprep.subr.mxu0 0.0
        %8117 = vmatpush1.msra.mxu0 0.0
        %8118 = vmatprep.subr.mxu0 0.0
        %8119 = vmatpush1.msra.mxu0 0.0
        %8120 = vmatprep.subr.mxu0 0.0
        %8121 = vmatpush1.msra.mxu0 0.0
        %8122 = vmatprep.subr.mxu0 0.0
        %8123 = vmatpush1.msra.mxu0 0.0
        %8124 = vmatprep.subr.mxu0 0.0
        %8125 = vmatpush1.msra.mxu0 0.0
        %8126 = vmatprep.subr.mxu0 0.0
        %8127 = vmatpush1.msra.mxu0 0.0
        %8128 = vmatprep.subr.mxu0 0.0
        %8129 = vmatpush1.msra.mxu0 0.0
        %8130 = vmatprep.subr.mxu0 0.0
        %8131 = vmatpush1.msra.mxu0 0.0
        %8132 = vmatprep.subr.mxu0 0.0
        %8133 = vmatpush1.msra.mxu0 0.0
        %8134 = vmatprep.subr.mxu0 0.0
        %8135 = vmatpush1.msra.mxu0 0.0
        %8136 = vmatprep.subr.mxu0 0.0
        %8137 = vmatpush1.msra.mxu0 0.0
        %8138 = vmatprep.subr.mxu0 0.0
        %8139 = vmatpush1.msra.mxu0 0.0
        %8140 = vmatprep.subr.mxu0 0.0
        %8141 = vmatpush1.msra.mxu0 0.0
        %8142 = vmatprep.subr.mxu0 0.0
        %8143 = vmatpush1.msra.mxu0 0.0
        %8144 = vmatprep.subr.mxu0 0.0
        %8145 = vmatpush1.msra.mxu0 0.0
        %8146 = vmatprep.subr.mxu0 0.0
        %8147 = vmatpush1.msra.mxu0 0.0
        %8148 = vmatprep.subr.mxu0 0.0
        %8149 = vmatpush1.msra.mxu0 0.0
        %8150 = vmatprep.subr.mxu0 0.0
        %8151 = vmatpush1.msra.mxu0 0.0
        %8152 = vmatprep.subr.mxu0 0.0
        %8153 = vmatpush1.msra.mxu0 0.0
        %8154 = vmatprep.subr.mxu0 0.0
        %8155 = vmatpush1.msra.mxu0 0.0
        %8156 = vmatprep.subr.mxu0 0.0
        %8157 = vmatpush1.msra.mxu0 0.0
        %8158 = vmatprep.mubr.f32.mxu0 0.0
        %8159 = vmatmul.mubr.f32.gmra.mrb[0].mxu0 %v8092
        %v8160 = vpop.f32.mrb[0].mxu0
        %v8161 = vadd.f32 0.0, %v8160
        %v8162 = vpop.f32.mrb[0].mxu0
        %8163 = vdwg.mxu0
        %v8164 = vadd.f32 %v8087, %v8161
        %s8165 = scalar_lea.vmem %s5, 304
        %v8166 = vld [vmem:[%s8165] sm:$0xff]
        %v8167 = vld [vmem:[%s8165 + $0x8] sm:$0xff]
        %v8168 = vrot.slane %v6699, 4
        %v8169 = vsel %vm6709, %v8168, 0
        %8171 = vmatprep.subr.mxu0 0.0
        %8172 = vmatpush1.msra.mxu0 %v8166
        %8173 = vmatprep.subr.mxu0 0.0
        %8174 = vmatpush1.msra.mxu0 %v8167
        %8175 = vmatprep.subr.mxu0 0.0
        %8176 = vmatpush1.msra.mxu0 0.0
        %8177 = vmatprep.subr.mxu0 0.0
        %8178 = vmatpush1.msra.mxu0 0.0
        %8179 = vmatprep.subr.mxu0 0.0
        %8180 = vmatpush1.msra.mxu0 0.0
        %8181 = vmatprep.subr.mxu0 0.0
        %8182 = vmatpush1.msra.mxu0 0.0
        %8183 = vmatprep.subr.mxu0 0.0
        %8184 = vmatpush1.msra.mxu0 0.0
        %8185 = vmatprep.subr.mxu0 0.0
        %8186 = vmatpush1.msra.mxu0 0.0
        %8187 = vmatprep.subr.mxu0 0.0
        %8188 = vmatpush1.msra.mxu0 0.0
        %8189 = vmatprep.subr.mxu0 0.0
        %8190 = vmatpush1.msra.mxu0 0.0
        %8191 = vmatprep.subr.mxu0 0.0
        %8192 = vmatpush1.msra.mxu0 0.0
        %8193 = vmatprep.subr.mxu0 0.0
        %8194 = vmatpush1.msra.mxu0 0.0
        %8195 = vmatprep.subr.mxu0 0.0
        %8196 = vmatpush1.msra.mxu0 0.0
        %8197 = vmatprep.subr.mxu0 0.0
        %8198 = vmatpush1.msra.mxu0 0.0
        %8199 = vmatprep.subr.mxu0 0.0
        %8200 = vmatpush1.msra.mxu0 0.0
        %8201 = vmatprep.subr.mxu0 0.0
        %8202 = vmatpush1.msra.mxu0 0.0
        %8203 = vmatprep.subr.mxu0 0.0
        %8204 = vmatpush1.msra.mxu0 0.0
        %8205 = vmatprep.subr.mxu0 0.0
        %8206 = vmatpush1.msra.mxu0 0.0
        %8207 = vmatprep.subr.mxu0 0.0
        %8208 = vmatpush1.msra.mxu0 0.0
        %8209 = vmatprep.subr.mxu0 0.0
        %8210 = vmatpush1.msra.mxu0 0.0
        %8211 = vmatprep.subr.mxu0 0.0
        %8212 = vmatpush1.msra.mxu0 0.0
        %8213 = vmatprep.subr.mxu0 0.0
        %8214 = vmatpush1.msra.mxu0 0.0
        %8215 = vmatprep.subr.mxu0 0.0
        %8216 = vmatpush1.msra.mxu0 0.0
        %8217 = vmatprep.subr.mxu0 0.0
        %8218 = vmatpush1.msra.mxu0 0.0
        %8219 = vmatprep.subr.mxu0 0.0
        %8220 = vmatpush1.msra.mxu0 0.0
        %8221 = vmatprep.subr.mxu0 0.0
        %8222 = vmatpush1.msra.mxu0 0.0
        %8223 = vmatprep.subr.mxu0 0.0
        %8224 = vmatpush1.msra.mxu0 0.0
        %8225 = vmatprep.subr.mxu0 0.0
        %8226 = vmatpush1.msra.mxu0 0.0
        %8227 = vmatprep.subr.mxu0 0.0
        %8228 = vmatpush1.msra.mxu0 0.0
        %8229 = vmatprep.subr.mxu0 0.0
        %8230 = vmatpush1.msra.mxu0 0.0
        %8231 = vmatprep.subr.mxu0 0.0
        %8232 = vmatpush1.msra.mxu0 0.0
        %8233 = vmatprep.subr.mxu0 0.0
        %8234 = vmatpush1.msra.mxu0 0.0
        %8235 = vmatprep.mubr.f32.mxu0 0.0
        %8236 = vmatmul.mubr.f32.gmra.mrb[0].mxu0 %v8169
        %v8237 = vpop.f32.mrb[0].mxu0
        %v8238 = vadd.f32 0.0, %v8237
        %v8239 = vpop.f32.mrb[0].mxu0
        %8240 = vdwg.mxu0
        %v8241 = vadd.f32 %v8164, %v8238
        %s8242 = scalar_lea.vmem %s5, 320
        %v8243 = vld [vmem:[%s8242] sm:$0xff]
        %v8244 = vld [vmem:[%s8242 + $0x8] sm:$0xff]
        %v8246 = vsel %vm6709, %v6700, 0
        %8248 = vmatprep.subr.mxu0 0.0
        %8249 = vmatpush1.msra.mxu0 %v8243
        %8250 = vmatprep.subr.mxu0 0.0
        %8251 = vmatpush1.msra.mxu0 %v8244
        %8252 = vmatprep.subr.mxu0 0.0
        %8253 = vmatpush1.msra.mxu0 0.0
        %8254 = vmatprep.subr.mxu0 0.0
        %8255 = vmatpush1.msra.mxu0 0.0
        %8256 = vmatprep.subr.mxu0 0.0
        %8257 = vmatpush1.msra.mxu0 0.0
        %8258 = vmatprep.subr.mxu0 0.0
        %8259 = vmatpush1.msra.mxu0 0.0
        %8260 = vmatprep.subr.mxu0 0.0
        %8261 = vmatpush1.msra.mxu0 0.0
        %8262 = vmatprep.subr.mxu0 0.0
        %8263 = vmatpush1.msra.mxu0 0.0
        %8264 = vmatprep.subr.mxu0 0.0
        %8265 = vmatpush1.msra.mxu0 0.0
        %8266 = vmatprep.subr.mxu0 0.0
        %8267 = vmatpush1.msra.mxu0 0.0
        %8268 = vmatprep.subr.mxu0 0.0
        %8269 = vmatpush1.msra.mxu0 0.0
        %8270 = vmatprep.subr.mxu0 0.0
        %8271 = vmatpush1.msra.mxu0 0.0
        %8272 = vmatprep.subr.mxu0 0.0
        %8273 = vmatpush1.msra.mxu0 0.0
        %8274 = vmatprep.subr.mxu0 0.0
        %8275 = vmatpush1.msra.mxu0 0.0
        %8276 = vmatprep.subr.mxu0 0.0
        %8277 = vmatpush1.msra.mxu0 0.0
        %8278 = vmatprep.subr.mxu0 0.0
        %8279 = vmatpush1.msra.mxu0 0.0
        %8280 = vmatprep.subr.mxu0 0.0
        %8281 = vmatpush1.msra.mxu0 0.0
        %8282 = vmatprep.subr.mxu0 0.0
        %8283 = vmatpush1.msra.mxu0 0.0
        %8284 = vmatprep.subr.mxu0 0.0
        %8285 = vmatpush1.msra.mxu0 0.0
        %8286 = vmatprep.subr.mxu0 0.0
        %8287 = vmatpush1.msra.mxu0 0.0
        %8288 = vmatprep.subr.mxu0 0.0
        %8289 = vmatpush1.msra.mxu0 0.0
        %8290 = vmatprep.subr.mxu0 0.0
        %8291 = vmatpush1.msra.mxu0 0.0
        %8292 = vmatprep.subr.mxu0 0.0
        %8293 = vmatpush1.msra.mxu0 0.0
        %8294 = vmatprep.subr.mxu0 0.0
        %8295 = vmatpush1.msra.mxu0 0.0
        %8296 = vmatprep.subr.mxu0 0.0
        %8297 = vmatpush1.msra.mxu0 0.0
        %8298 = vmatprep.subr.mxu0 0.0
        %8299 = vmatpush1.msra.mxu0 0.0
        %8300 = vmatprep.subr.mxu0 0.0
        %8301 = vmatpush1.msra.mxu0 0.0
        %8302 = vmatprep.subr.mxu0 0.0
        %8303 = vmatpush1.msra.mxu0 0.0
        %8304 = vmatprep.subr.mxu0 0.0
        %8305 = vmatpush1.msra.mxu0 0.0
        %8306 = vmatprep.subr.mxu0 0.0
        %8307 = vmatpush1.msra.mxu0 0.0
        %8308 = vmatprep.subr.mxu0 0.0
        %8309 = vmatpush1.msra.mxu0 0.0
        %8310 = vmatprep.subr.mxu0 0.0
        %8311 = vmatpush1.msra.mxu0 0.0
        %8312 = vmatprep.mubr.f32.mxu0 0.0
        %8313 = vmatmul.mubr.f32.gmra.mrb[0].mxu0 %v8246
        %v8314 = vpop.f32.mrb[0].mxu0
        %v8315 = vadd.f32 0.0, %v8314
        %v8316 = vpop.f32.mrb[0].mxu0
        %8317 = vdwg.mxu0
        %v8318 = vadd.f32 %v8241, %v8315
        %s8319 = scalar_lea.vmem %s5, 336
        %v8320 = vld [vmem:[%s8319] sm:$0xff]
        %v8321 = vld [vmem:[%s8319 + $0x8] sm:$0xff]
        %v8322 = vrot.slane %v6700, 2
        %v8323 = vsel %vm6709, %v8322, 0
        %8325 = vmatprep.subr.mxu0 0.0
        %8326 = vmatpush1.msra.mxu0 %v8320
        %8327 = vmatprep.subr.mxu0 0.0
        %8328 = vmatpush1.msra.mxu0 %v8321
        %8329 = vmatprep.subr.mxu0 0.0
        %8330 = vmatpush1.msra.mxu0 0.0
        %8331 = vmatprep.subr.mxu0 0.0
        %8332 = vmatpush1.msra.mxu0 0.0
        %8333 = vmatprep.subr.mxu0 0.0
        %8334 = vmatpush1.msra.mxu0 0.0
        %8335 = vmatprep.subr.mxu0 0.0
        %8336 = vmatpush1.msra.mxu0 0.0
        %8337 = vmatprep.subr.mxu0 0.0
        %8338 = vmatpush1.msra.mxu0 0.0
        %8339 = vmatprep.subr.mxu0 0.0
        %8340 = vmatpush1.msra.mxu0 0.0
        %8341 = vmatprep.subr.mxu0 0.0
        %8342 = vmatpush1.msra.mxu0 0.0
        %8343 = vmatprep.subr.mxu0 0.0
        %8344 = vmatpush1.msra.mxu0 0.0
        %8345 = vmatprep.subr.mxu0 0.0
        %8346 = vmatpush1.msra.mxu0 0.0
        %8347 = vmatprep.subr.mxu0 0.0
        %8348 = vmatpush1.msra.mxu0 0.0
        %8349 = vmatprep.subr.mxu0 0.0
        %8350 = vmatpush1.msra.mxu0 0.0
        %8351 = vmatprep.subr.mxu0 0.0
        %8352 = vmatpush1.msra.mxu0 0.0
        %8353 = vmatprep.subr.mxu0 0.0
        %8354 = vmatpush1.msra.mxu0 0.0
        %8355 = vmatprep.subr.mxu0 0.0
        %8356 = vmatpush1.msra.mxu0 0.0
        %8357 = vmatprep.subr.mxu0 0.0
        %8358 = vmatpush1.msra.mxu0 0.0
        %8359 = vmatprep.subr.mxu0 0.0
        %8360 = vmatpush1.msra.mxu0 0.0
        %8361 = vmatprep.subr.mxu0 0.0
        %8362 = vmatpush1.msra.mxu0 0.0
        %8363 = vmatprep.subr.mxu0 0.0
        %8364 = vmatpush1.msra.mxu0 0.0
        %8365 = vmatprep.subr.mxu0 0.0
        %8366 = vmatpush1.msra.mxu0 0.0
        %8367 = vmatprep.subr.mxu0 0.0
        %8368 = vmatpush1.msra.mxu0 0.0
        %8369 = vmatprep.subr.mxu0 0.0
        %8370 = vmatpush1.msra.mxu0 0.0
        %8371 = vmatprep.subr.mxu0 0.0
        %8372 = vmatpush1.msra.mxu0 0.0
        %8373 = vmatprep.subr.mxu0 0.0
        %8374 = vmatpush1.msra.mxu0 0.0
        %8375 = vmatprep.subr.mxu0 0.0
        %8376 = vmatpush1.msra.mxu0 0.0
        %8377 = vmatprep.subr.mxu0 0.0
        %8378 = vmatpush1.msra.mxu0 0.0
        %8379 = vmatprep.subr.mxu0 0.0
        %8380 = vmatpush1.msra.mxu0 0.0
        %8381 = vmatprep.subr.mxu0 0.0
        %8382 = vmatpush1.msra.mxu0 0.0
        %8383 = vmatprep.subr.mxu0 0.0
        %8384 = vmatpush1.msra.mxu0 0.0
        %8385 = vmatprep.subr.mxu0 0.0
        %8386 = vmatpush1.msra.mxu0 0.0
        %8387 = vmatprep.subr.mxu0 0.0
        %8388 = vmatpush1.msra.mxu0 0.0
        %8389 = vmatprep.mubr.f32.mxu0 0.0
        %8390 = vmatmul.mubr.f32.gmra.mrb[0].mxu0 %v8323
        %v8391 = vpop.f32.mrb[0].mxu0
        %v8392 = vadd.f32 0.0, %v8391
        %v8393 = vpop.f32.mrb[0].mxu0
        %8394 = vdwg.mxu0
        %v8395 = vadd.f32 %v8318, %v8392
        %s8396 = scalar_lea.vmem %s5, 352
        %v8397 = vld [vmem:[%s8396] sm:$0xff]
        %v8398 = vld [vmem:[%s8396 + $0x8] sm:$0xff]
        %v8399 = vrot.slane %v6700, 4
        %v8400 = vsel %vm6709, %v8399, 0
        %8402 = vmatprep.subr.mxu0 0.0
        %8403 = vmatpush1.msra.mxu0 %v8397
        %8404 = vmatprep.subr.mxu0 0.0
        %8405 = vmatpush1.msra.mxu0 %v8398
        %8406 = vmatprep.subr.mxu0 0.0
        %8407 = vmatpush1.msra.mxu0 0.0
        %8408 = vmatprep.subr.mxu0 0.0
        %8409 = vmatpush1.msra.mxu0 0.0
        %8410 = vmatprep.subr.mxu0 0.0
        %8411 = vmatpush1.msra.mxu0 0.0
        %8412 = vmatprep.subr.mxu0 0.0
        %8413 = vmatpush1.msra.mxu0 0.0
        %8414 = vmatprep.subr.mxu0 0.0
        %8415 = vmatpush1.msra.mxu0 0.0
        %8416 = vmatprep.subr.mxu0 0.0
        %8417 = vmatpush1.msra.mxu0 0.0
        %8418 = vmatprep.subr.mxu0 0.0
        %8419 = vmatpush1.msra.mxu0 0.0
        %8420 = vmatprep.subr.mxu0 0.0
        %8421 = vmatpush1.msra.mxu0 0.0
        %8422 = vmatprep.subr.mxu0 0.0
        %8423 = vmatpush1.msra.mxu0 0.0
        %8424 = vmatprep.subr.mxu0 0.0
        %8425 = vmatpush1.msra.mxu0 0.0
        %8426 = vmatprep.subr.mxu0 0.0
        %8427 = vmatpush1.msra.mxu0 0.0
        %8428 = vmatprep.subr.mxu0 0.0
        %8429 = vmatpush1.msra.mxu0 0.0
        %8430 = vmatprep.subr.mxu0 0.0
        %8431 = vmatpush1.msra.mxu0 0.0
        %8432 = vmatprep.subr.mxu0 0.0
        %8433 = vmatpush1.msra.mxu0 0.0
        %8434 = vmatprep.subr.mxu0 0.0
        %8435 = vmatpush1.msra.mxu0 0.0
        %8436 = vmatprep.subr.mxu0 0.0
        %8437 = vmatpush1.msra.mxu0 0.0
        %8438 = vmatprep.subr.mxu0 0.0
        %8439 = vmatpush1.msra.mxu0 0.0
        %8440 = vmatprep.subr.mxu0 0.0
        %8441 = vmatpush1.msra.mxu0 0.0
        %8442 = vmatprep.subr.mxu0 0.0
        %8443 = vmatpush1.msra.mxu0 0.0
        %8444 = vmatprep.subr.mxu0 0.0
        %8445 = vmatpush1.msra.mxu0 0.0
        %8446 = vmatprep.subr.mxu0 0.0
        %8447 = vmatpush1.msra.mxu0 0.0
        %8448 = vmatprep.subr.mxu0 0.0
        %8449 = vmatpush1.msra.mxu0 0.0
        %8450 = vmatprep.subr.mxu0 0.0
        %8451 = vmatpush1.msra.mxu0 0.0
        %8452 = vmatprep.subr.mxu0 0.0
        %8453 = vmatpush1.msra.mxu0 0.0
        %8454 = vmatprep.subr.mxu0 0.0
        %8455 = vmatpush1.msra.mxu0 0.0
        %8456 = vmatprep.subr.mxu0 0.0
        %8457 = vmatpush1.msra.mxu0 0.0
        %8458 = vmatprep.subr.mxu0 0.0
        %8459 = vmatpush1.msra.mxu0 0.0
        %8460 = vmatprep.subr.mxu0 0.0
        %8461 = vmatpush1.msra.mxu0 0.0
        %8462 = vmatprep.subr.mxu0 0.0
        %8463 = vmatpush1.msra.mxu0 0.0
        %8464 = vmatprep.subr.mxu0 0.0
        %8465 = vmatpush1.msra.mxu0 0.0
        %8466 = vmatprep.mubr.f32.mxu0 0.0
        %8467 = vmatmul.mubr.f32.gmra.mrb[0].mxu0 %v8400
        %v8468 = vpop.f32.mrb[0].mxu0
        %v8469 = vadd.f32 0.0, %v8468
        %v8470 = vpop.f32.mrb[0].mxu0
        %8471 = vdwg.mxu0
        %v8472 = vadd.f32 %v8395, %v8469
        %s8473 = scalar_lea.vmem %s5, 368
        %v8474 = vld [vmem:[%s8473] sm:$0xff]
        %v8475 = vld [vmem:[%s8473 + $0x8] sm:$0xff]
        %v8476 = vrot.slane %v6700, 6
        %v8477 = vsel %vm6709, %v8476, 0
        %8479 = vmatprep.subr.mxu0 0.0
        %8480 = vmatpush1.msra.mxu0 %v8474
        %8481 = vmatprep.subr.mxu0 0.0
        %8482 = vmatpush1.msra.mxu0 %v8475
        %8483 = vmatprep.subr.mxu0 0.0
        %8484 = vmatpush1.msra.mxu0 0.0
        %8485 = vmatprep.subr.mxu0 0.0
        %8486 = vmatpush1.msra.mxu0 0.0
        %8487 = vmatprep.subr.mxu0 0.0
        %8488 = vmatpush1.msra.mxu0 0.0
        %8489 = vmatprep.subr.mxu0 0.0
        %8490 = vmatpush1.msra.mxu0 0.0
        %8491 = vmatprep.subr.mxu0 0.0
        %8492 = vmatpush1.msra.mxu0 0.0
        %8493 = vmatprep.subr.mxu0 0.0
        %8494 = vmatpush1.msra.mxu0 0.0
        %8495 = vmatprep.subr.mxu0 0.0
        %8496 = vmatpush1.msra.mxu0 0.0
        %8497 = vmatprep.subr.mxu0 0.0
        %8498 = vmatpush1.msra.mxu0 0.0
        %8499 = vmatprep.subr.mxu0 0.0
        %8500 = vmatpush1.msra.mxu0 0.0
        %8501 = vmatprep.subr.mxu0 0.0
        %8502 = vmatpush1.msra.mxu0 0.0
        %8503 = vmatprep.subr.mxu0 0.0
        %8504 = vmatpush1.msra.mxu0 0.0
        %8505 = vmatprep.subr.mxu0 0.0
        %8506 = vmatpush1.msra.mxu0 0.0
        %8507 = vmatprep.subr.mxu0 0.0
        %8508 = vmatpush1.msra.mxu0 0.0
        %8509 = vmatprep.subr.mxu0 0.0
        %8510 = vmatpush1.msra.mxu0 0.0
        %8511 = vmatprep.subr.mxu0 0.0
        %8512 = vmatpush1.msra.mxu0 0.0
        %8513 = vmatprep.subr.mxu0 0.0
        %8514 = vmatpush1.msra.mxu0 0.0
        %8515 = vmatprep.subr.mxu0 0.0
        %8516 = vmatpush1.msra.mxu0 0.0
        %8517 = vmatprep.subr.mxu0 0.0
        %8518 = vmatpush1.msra.mxu0 0.0
        %8519 = vmatprep.subr.mxu0 0.0
        %8520 = vmatpush1.msra.mxu0 0.0
        %8521 = vmatprep.subr.mxu0 0.0
        %8522 = vmatpush1.msra.mxu0 0.0
        %8523 = vmatprep.subr.mxu0 0.0
        %8524 = vmatpush1.msra.mxu0 0.0
        %8525 = vmatprep.subr.mxu0 0.0
        %8526 = vmatpush1.msra.mxu0 0.0
        %8527 = vmatprep.subr.mxu0 0.0
        %8528 = vmatpush1.msra.mxu0 0.0
        %8529 = vmatprep.subr.mxu0 0.0
        %8530 = vmatpush1.msra.mxu0 0.0
        %8531 = vmatprep.subr.mxu0 0.0
        %8532 = vmatpush1.msra.mxu0 0.0
        %8533 = vmatprep.subr.mxu0 0.0
        %8534 = vmatpush1.msra.mxu0 0.0
        %8535 = vmatprep.subr.mxu0 0.0
        %8536 = vmatpush1.msra.mxu0 0.0
        %8537 = vmatprep.subr.mxu0 0.0
        %8538 = vmatpush1.msra.mxu0 0.0
        %8539 = vmatprep.subr.mxu0 0.0
        %8540 = vmatpush1.msra.mxu0 0.0
        %8541 = vmatprep.subr.mxu0 0.0
        %8542 = vmatpush1.msra.mxu0 0.0
        %8543 = vmatprep.mubr.f32.mxu0 0.0
        %8544 = vmatmul.mubr.f32.gmra.mrb[0].mxu0 %v8477
        %v8545 = vpop.f32.mrb[0].mxu0
        %v8546 = vadd.f32 0.0, %v8545
        %v8547 = vpop.f32.mrb[0].mxu0
        %8548 = vdwg.mxu0
        %v8549 = vadd.f32 %v8472, %v8546
        %s8550 = scalar_lea.vmem %s5, 384
        %v8551 = vld [vmem:[%s8550] sm:$0xff]
        %v8552 = vld [vmem:[%s8550 + $0x8] sm:$0xff]
        %v8554 = vsel %vm6709, %v6701, 0
        %8556 = vmatprep.subr.mxu0 0.0
        %8557 = vmatpush1.msra.mxu0 %v8551
        %8558 = vmatprep.subr.mxu0 0.0
        %8559 = vmatpush1.msra.mxu0 %v8552
        %8560 = vmatprep.subr.mxu0 0.0
        %8561 = vmatpush1.msra.mxu0 0.0
        %8562 = vmatprep.subr.mxu0 0.0
        %8563 = vmatpush1.msra.mxu0 0.0
        %8564 = vmatprep.subr.mxu0 0.0
        %8565 = vmatpush1.msra.mxu0 0.0
        %8566 = vmatprep.subr.mxu0 0.0
        %8567 = vmatpush1.msra.mxu0 0.0
        %8568 = vmatprep.subr.mxu0 0.0
        %8569 = vmatpush1.msra.mxu0 0.0
        %8570 = vmatprep.subr.mxu0 0.0
        %8571 = vmatpush1.msra.mxu0 0.0
        %8572 = vmatprep.subr.mxu0 0.0
        %8573 = vmatpush1.msra.mxu0 0.0
        %8574 = vmatprep.subr.mxu0 0.0
        %8575 = vmatpush1.msra.mxu0 0.0
        %8576 = vmatprep.subr.mxu0 0.0
        %8577 = vmatpush1.msra.mxu0 0.0
        %8578 = vmatprep.subr.mxu0 0.0
        %8579 = vmatpush1.msra.mxu0 0.0
        %8580 = vmatprep.subr.mxu0 0.0
        %8581 = vmatpush1.msra.mxu0 0.0
        %8582 = vmatprep.subr.mxu0 0.0
        %8583 = vmatpush1.msra.mxu0 0.0
        %8584 = vmatprep.subr.mxu0 0.0
        %8585 = vmatpush1.msra.mxu0 0.0
        %8586 = vmatprep.subr.mxu0 0.0
        %8587 = vmatpush1.msra.mxu0 0.0
        %8588 = vmatprep.subr.mxu0 0.0
        %8589 = vmatpush1.msra.mxu0 0.0
        %8590 = vmatprep.subr.mxu0 0.0
        %8591 = vmatpush1.msra.mxu0 0.0
        %8592 = vmatprep.subr.mxu0 0.0
        %8593 = vmatpush1.msra.mxu0 0.0
        %8594 = vmatprep.subr.mxu0 0.0
        %8595 = vmatpush1.msra.mxu0 0.0
        %8596 = vmatprep.subr.mxu0 0.0
        %8597 = vmatpush1.msra.mxu0 0.0
        %8598 = vmatprep.subr.mxu0 0.0
        %8599 = vmatpush1.msra.mxu0 0.0
        %8600 = vmatprep.subr.mxu0 0.0
        %8601 = vmatpush1.msra.mxu0 0.0
        %8602 = vmatprep.subr.mxu0 0.0
        %8603 = vmatpush1.msra.mxu0 0.0
        %8604 = vmatprep.subr.mxu0 0.0
        %8605 = vmatpush1.msra.mxu0 0.0
        %8606 = vmatprep.subr.mxu0 0.0
        %8607 = vmatpush1.msra.mxu0 0.0
        %8608 = vmatprep.subr.mxu0 0.0
        %8609 = vmatpush1.msra.mxu0 0.0
        %8610 = vmatprep.subr.mxu0 0.0
        %8611 = vmatpush1.msra.mxu0 0.0
        %8612 = vmatprep.subr.mxu0 0.0
        %8613 = vmatpush1.msra.mxu0 0.0
        %8614 = vmatprep.subr.mxu0 0.0
        %8615 = vmatpush1.msra.mxu0 0.0
        %8616 = vmatprep.subr.mxu0 0.0
        %8617 = vmatpush1.msra.mxu0 0.0
        %8618 = vmatprep.subr.mxu0 0.0
        %8619 = vmatpush1.msra.mxu0 0.0
        %8620 = vmatprep.mubr.f32.mxu0 0.0
        %8621 = vmatmul.mubr.f32.gmra.mrb[0].mxu0 %v8554
        %v8622 = vpop.f32.mrb[0].mxu0
        %v8623 = vadd.f32 0.0, %v8622
        %v8624 = vpop.f32.mrb[0].mxu0
        %8625 = vdwg.mxu0
        %v8626 = vadd.f32 %v8549, %v8623
        %v8627 = vld [vmem:[%s6] sm:$0x1]
        %v8628 = vadd.f32 %v8626, %v8627
        %v8629 = vmax.f32 %v8628, 0.0
        %v8630 = vld [vmem:[%s7] sm:$0xff]
        %v8631 = vld [vmem:[%s7 + $0x8] sm:$0xff]
        %v8632 = vld [vmem:[%s7 + $0x10] sm:$0xff]
        %v8633 = vld [vmem:[%s7 + $0x18] sm:$0xff]
        %v8634 = vld [vmem:[%s7 + $0x20] sm:$0xff]
        %v8635 = vld [vmem:[%s7 + $0x28] sm:$0xff]
        %v8636 = vld [vmem:[%s7 + $0x30] sm:$0xff]
        %v8637 = vld [vmem:[%s7 + $0x38] sm:$0xff]
        %v8638 = vld [vmem:[%s7 + $0x40] sm:$0xff]
        %v8639 = vld [vmem:[%s7 + $0x48] sm:$0xff]
        %v8640 = vld [vmem:[%s7 + $0x50] sm:$0xff]
        %v8641 = vld [vmem:[%s7 + $0x58] sm:$0xff]
        %v8642 = vld [vmem:[%s7 + $0x60] sm:$0xff]
        %v8643 = vld [vmem:[%s7 + $0x68] sm:$0xff]
        %v8644 = vld [vmem:[%s7 + $0x70] sm:$0xff]
        %v8645 = vld [vmem:[%s8] sm:$0x1]
        %vm8646 = vcmask 982016
        %v8648 = vsel %vm8646, %v8629, 0
        %8650 = vmatprep.subr.mxu0 0.0
        %8651 = vmatpush1.msra.mxu0 %v8630
        %8652 = vmatprep.subr.mxu0 0.0
        %8653 = vmatpush1.msra.mxu0 %v8631
        %8654 = vmatprep.subr.mxu0 0.0
        %8655 = vmatpush1.msra.mxu0 %v8632
        %8656 = vmatprep.subr.mxu0 0.0
        %8657 = vmatpush1.msra.mxu0 %v8633
        %8658 = vmatprep.subr.mxu0 0.0
        %8659 = vmatpush1.msra.mxu0 %v8634
        %8660 = vmatprep.subr.mxu0 0.0
        %8661 = vmatpush1.msra.mxu0 %v8635
        %8662 = vmatprep.subr.mxu0 0.0
        %8663 = vmatpush1.msra.mxu0 %v8636
        %8664 = vmatprep.subr.mxu0 0.0
        %8665 = vmatpush1.msra.mxu0 %v8637
        %8666 = vmatprep.subr.mxu0 0.0
        %8667 = vmatpush1.msra.mxu0 %v8638
        %8668 = vmatprep.subr.mxu0 0.0
        %8669 = vmatpush1.msra.mxu0 %v8639
        %8670 = vmatprep.subr.mxu0 0.0
        %8671 = vmatpush1.msra.mxu0 %v8640
        %8672 = vmatprep.subr.mxu0 0.0
        %8673 = vmatpush1.msra.mxu0 %v8641
        %8674 = vmatprep.subr.mxu0 0.0
        %8675 = vmatpush1.msra.mxu0 %v8642
        %8676 = vmatprep.subr.mxu0 0.0
        %8677 = vmatpush1.msra.mxu0 %v8643
        %8678 = vmatprep.subr.mxu0 0.0
        %8679 = vmatpush1.msra.mxu0 %v8644
        %8680 = vmatprep.subr.mxu0 0.0
        %8681 = vmatpush1.msra.mxu0 0.0
        %8682 = vmatprep.subr.mxu0 0.0
        %8683 = vmatpush1.msra.mxu0 0.0
        %8684 = vmatprep.subr.mxu0 0.0
        %8685 = vmatpush1.msra.mxu0 0.0
        %8686 = vmatprep.subr.mxu0 0.0
        %8687 = vmatpush1.msra.mxu0 0.0
        %8688 = vmatprep.subr.mxu0 0.0
        %8689 = vmatpush1.msra.mxu0 0.0
        %8690 = vmatprep.subr.mxu0 0.0
        %8691 = vmatpush1.msra.mxu0 0.0
        %8692 = vmatprep.subr.mxu0 0.0
        %8693 = vmatpush1.msra.mxu0 0.0
        %8694 = vmatprep.subr.mxu0 0.0
        %8695 = vmatpush1.msra.mxu0 0.0
        %8696 = vmatprep.subr.mxu0 0.0
        %8697 = vmatpush1.msra.mxu0 0.0
        %8698 = vmatprep.subr.mxu0 0.0
        %8699 = vmatpush1.msra.mxu0 0.0
        %8700 = vmatprep.subr.mxu0 0.0
        %8701 = vmatpush1.msra.mxu0 0.0
        %8702 = vmatprep.subr.mxu0 0.0
        %8703 = vmatpush1.msra.mxu0 0.0
        %8704 = vmatprep.subr.mxu0 0.0
        %8705 = vmatpush1.msra.mxu0 0.0
        %8706 = vmatprep.subr.mxu0 0.0
        %8707 = vmatpush1.msra.mxu0 0.0
        %8708 = vmatprep.subr.mxu0 0.0
        %8709 = vmatpush1.msra.mxu0 0.0
        %8710 = vmatprep.subr.mxu0 0.0
        %8711 = vmatpush1.msra.mxu0 0.0
        %8712 = vmatprep.subr.mxu0 0.0
        %8713 = vmatpush1.msra.mxu0 0.0
        %8714 = vmatprep.mubr.f32.mxu0 0.0
        %8715 = vmatmul.mubr.f32.gmra.mrb[0].mxu0 %v8648
        %v8716 = vpop.f32.mrb[0].mxu0
        %v8717 = vadd.f32 %v8645, %v8716
        %v8718 = vpop.f32.mrb[0].mxu0
        %8719 = vdwg.mxu0
        %v8720 = vmax.f32 %v8717, 0.0
        %v8721 = vld [vmem:[%s9] sm:$0xff]
        %v8722 = vld [vmem:[%s9 + $0x8] sm:$0xff]
        %v8723 = vld [vmem:[%s9 + $0x10] sm:$0xff]
        %v8724 = vld [vmem:[%s9 + $0x18] sm:$0xff]
        %v8725 = vld [vmem:[%s9 + $0x20] sm:$0xff]
        %v8726 = vld [vmem:[%s9 + $0x28] sm:$0xff]
        %v8727 = vld [vmem:[%s9 + $0x30] sm:$0xff]
        %v8728 = vld [vmem:[%s9 + $0x38] sm:$0xff]
        %v8729 = vld [vmem:[%s9 + $0x40] sm:$0xff]
        %v8730 = vld [vmem:[%s9 + $0x48] sm:$0xff]
        %v8731 = vld [vmem:[%s9 + $0x50] sm:$0xf]
        %v8732 = vld [vmem:[%s10] sm:$0x1]
        %vm8733 = vcmask 687104
        %v8735 = vsel %vm8733, %v8720, 0
        %v8738 = vsel %vm2464, %v8731, 0
        %8740 = vmatprep.subr.mxu0 0.0
        %8741 = vmatpush1.msra.mxu0 %v8721
        %8742 = vmatprep.subr.mxu0 0.0
        %8743 = vmatpush1.msra.mxu0 %v8722
        %8744 = vmatprep.subr.mxu0 0.0
        %8745 = vmatpush1.msra.mxu0 %v8723
        %8746 = vmatprep.subr.mxu0 0.0
        %8747 = vmatpush1.msra.mxu0 %v8724
        %8748 = vmatprep.subr.mxu0 0.0
        %8749 = vmatpush1.msra.mxu0 %v8725
        %8750 = vmatprep.subr.mxu0 0.0
        %8751 = vmatpush1.msra.mxu0 %v8726
        %8752 = vmatprep.subr.mxu0 0.0
        %8753 = vmatpush1.msra.mxu0 %v8727
        %8754 = vmatprep.subr.mxu0 0.0
        %8755 = vmatpush1.msra.mxu0 %v8728
        %8756 = vmatprep.subr.mxu0 0.0
        %8757 = vmatpush1.msra.mxu0 %v8729
        %8758 = vmatprep.subr.mxu0 0.0
        %8759 = vmatpush1.msra.mxu0 %v8730
        %8760 = vmatprep.subr.mxu0 0.0
        %8761 = vmatpush1.msra.mxu0 %v8738
        %8762 = vmatprep.subr.mxu0 0.0
        %8763 = vmatpush1.msra.mxu0 0.0
        %8764 = vmatprep.subr.mxu0 0.0
        %8765 = vmatpush1.msra.mxu0 0.0
        %8766 = vmatprep.subr.mxu0 0.0
        %8767 = vmatpush1.msra.mxu0 0.0
        %8768 = vmatprep.subr.mxu0 0.0
        %8769 = vmatpush1.msra.mxu0 0.0
        %8770 = vmatprep.subr.mxu0 0.0
        %8771 = vmatpush1.msra.mxu0 0.0
        %8772 = vmatprep.subr.mxu0 0.0
        %8773 = vmatpush1.msra.mxu0 0.0
        %8774 = vmatprep.subr.mxu0 0.0
        %8775 = vmatpush1.msra.mxu0 0.0
        %8776 = vmatprep.subr.mxu0 0.0
        %8777 = vmatpush1.msra.mxu0 0.0
        %8778 = vmatprep.subr.mxu0 0.0
        %8779 = vmatpush1.msra.mxu0 0.0
        %8780 = vmatprep.subr.mxu0 0.0
        %8781 = vmatpush1.msra.mxu0 0.0
        %8782 = vmatprep.subr.mxu0 0.0
        %8783 = vmatpush1.msra.mxu0 0.0
        %8784 = vmatprep.subr.mxu0 0.0
        %8785 = vmatpush1.msra.mxu0 0.0
        %8786 = vmatprep.subr.mxu0 0.0
        %8787 = vmatpush1.msra.mxu0 0.0
        %8788 = vmatprep.subr.mxu0 0.0
        %8789 = vmatpush1.msra.mxu0 0.0
        %8790 = vmatprep.subr.mxu0 0.0
        %8791 = vmatpush1.msra.mxu0 0.0
        %8792 = vmatprep.subr.mxu0 0.0
        %8793 = vmatpush1.msra.mxu0 0.0
        %8794 = vmatprep.subr.mxu0 0.0
        %8795 = vmatpush1.msra.mxu0 0.0
        %8796 = vmatprep.subr.mxu0 0.0
        %8797 = vmatpush1.msra.mxu0 0.0
        %8798 = vmatprep.subr.mxu0 0.0
        %8799 = vmatpush1.msra.mxu0 0.0
        %8800 = vmatprep.subr.mxu0 0.0
        %8801 = vmatpush1.msra.mxu0 0.0
        %8802 = vmatprep.subr.mxu0 0.0
        %8803 = vmatpush1.msra.mxu0 0.0
        %8804 = vmatprep.mubr.f32.mxu0 0.0
        %8805 = vmatmul.mubr.f32.gmra.mrb[0].mxu0 %v8735
        %v8806 = vpop.f32.mrb[0].mxu0
        %v8807 = vadd.f32 %v8732, %v8806
        %v8808 = vpop.f32.mrb[0].mxu0
        %8809 = vdwg.mxu0
        %vm8810 = vcmask 16384
        %8811 = vst.msk [vmem:[%s378] sm:$0x1] %vm8810, %v8807
        %s8812 = sand.u32 %s269, 1
        %s8813 = scalar_lea.sflag [#allocation3], %s8812
        %s8814 = sand.u32 %s269, 1
        %s8815 = scalar_lea.vmem [#allocation2], %s8814
        // Predicated region
        $region65: #{net_forward.1} parent=63 // pred_check
          %p8816 = pneg %p279
        $region66: #{net_forward.1} parent=63 // pred_check_branch
          %8818 = sbr.rel (%p8816) target = $region68
        $region67: #{net_forward.1} parent=63 // pred_region
          %s8820 = ssub.s32 16, 16
          %8821 = vsyncadd %s8813, %s8820
          %s8822 = smul.addr %s25, 16
          %s8823 = scalar_lea.hbm %s11, %s8822
          %s8825 = sshll.u32 %s8815, 4
          %s8826 = int_to_ptr.vmem [resolvable:$true] %s8825
          %8828 = dma.vmem_to_hbm [thread:$0]  %s8826, 16, %s8823, %s8813
        $region68: #{net_forward.1} parent=63 // pred_fallthru
          _
      $region64: #{net_forward.1} parent=5 // pred_fallthru
        _
      %p8829 = scmp.le.s32.totalorder 2, %s20
      // Predicated region
      $region69: #{net_forward.1} parent=5 // pred_check
        %p8830 = pneg %p8829
      $region70: #{net_forward.1} parent=5 // pred_check_branch
        %8832 = sbr.rel (%p8830) target = $region72
      $region71: #{net_forward.1} parent=5 // pred_region
        %s8833 = ssub.s32 %s20, 2
        // Predicated region
        $region73: #{net_forward.1} parent=71 // pred_check
          %p8834 = pneg %p285
        $region74: #{net_forward.1} parent=71 // pred_check_branch
          %8836 = sbr.rel (%p8834) target = $region76
        $region75: #{net_forward.1} parent=71 // pred_region
          %s8837 = sand.u32 %s270, 1
          %s8838 = scalar_lea.sflag [#allocation3], %s8837
          %s8839 = sand.u32 %s270, 1
          %s8840 = scalar_lea.vmem [#allocation2], %s8839
          %8841 = dma.done %s8838, 16
        $region76: #{net_forward.1} parent=71 // pred_fallthru
          _
      $region72: #{net_forward.1} parent=5 // pred_fallthru
        _
    $region6: #{net_forward.1} parent=1 // loop_footer
      %s24 = sadd.s32 1, %s20
    $region7: #{net_forward.1} parent=1 // loop_footer_branch
      %19 = sbr.rel target = $region3
    $region8: #{net_forward.1} parent=1 // loop_exit
      _
    %8842 = vsyncpa [#allocation3], 1
    %s8843 = scalar_lea.sflag [#allocation3], 1
    %8844 = vsyncpa %s8843, 1

</llo_original>
